<compile_context>
chip_gen: v7x
topology: tpu7x:2x2x1
jax: 0.10.0
libtpu: 0.0.40
codegen_flags: <defaults>
</compile_context>

<pallas_src>
import functools
import math

import jax
import jax.numpy as jnp
from jax.experimental import pallas as pl
from jax.experimental.pallas import tpu as pltpu


def _cdiv(a, b):
    return -(-a // b)


def _round_up(a, b):
    return _cdiv(a, b) * b


# ------------------------------ Pallas kernel ------------------------------ #


def _roll_lanes(a, shift, use_xlu_roll):
    """Roll along the lane (last) axis; out[..., p] = a[..., p - shift]."""
    shift = shift % a.shape[-1]
    if shift == 0:
        return a
    if use_xlu_roll:
        return pltpu.roll(a, shift, 1)          # XLU rotate slot
    return jnp.roll(a, shift, axis=1)           # lane slices + concat fallback


def _gru_stage_kernel(h_ref, x_ref, w_zrq_ref, w_hq_ref, b_ref, out_ref,
                      col_ref, *, ch, cx, cx_pad, conv_len, mm_dtype,
                      use_xlu_roll):
    """One separable-conv GRU update (length-5 conv along the lane axis).

    Per-block layouts (Mb = rows_per_block * conv_len lanes; Mb % conv_len == 0
    so rows never straddle a block, Mb % 128 == 0 so stores are lane-dense):
      h_ref   : (Ch, Mb)      hidden state, channels on sublanes
      x_ref   : (Cx, Mb)      input features
      w_zrq   : (3*Ch, 5*Ch + 5*Cx_pad)  fused [z; r; q] weights; column
                k*Ch + c applies to h tap k / channel c, column
                5*Ch + k*Cx_pad + c to x tap k / channel c; the q/h block is
                zero (q uses r*h via the second matmul instead).
      w_hq    : (Ch, 5*Ch)    q taps applied to r*h
      b_ref   : (3*Ch, 1)     packed biases [bz; br; bq]
      out_ref : (Ch, Mb)      new hidden state
      col_ref : (5*Ch + 5*Cx_pad, Mb) persistent VMEM im2col scratch
    """
    mb = out_ref.shape[1]
    h = h_ref[...].astype(jnp.float32)

    # Lane column index within each length-`conv_len` row.  Taps that would
    # read across a row boundary are zeroed (== the conv's zero padding); the
    # roll wrap-around at the block edge only lands on masked positions.
    col_idx = jax.lax.broadcasted_iota(jnp.int32, (1, mb), 1) % conv_len
    masks = {d: (col_idx < conv_len - d) if d > 0 else (col_idx >= -d)
             for d in (-2, -1, 1, 2)}

    def write_taps(a, row0, stride):
        """col[row0 + k*stride + c, p] = a[c, p + (k - 2)] (0 outside the row)."""
        n = a.shape[0]
        for k in range(5):
            d = k - 2
            if d == 0:
                tap = a
            else:
                tap = jnp.where(masks[d], _roll_lanes(a, -d, use_xlu_roll),
                                jnp.zeros_like(a))
            tap = tap.astype(mm_dtype)
            if stride > n:                       # bf16 sublane-tile padding rows
                tap = jnp.concatenate(
                    [tap, jnp.zeros((stride - n, mb), mm_dtype)], axis=0)
            col_ref[pl.ds(row0 + k * stride, stride), :] = tap

    write_taps(h, 0, ch)                         # h taps -> rows [0, 5*Ch)
    write_taps(x_ref[...], 5 * ch, cx_pad)       # x taps -> rows [5*Ch, K)

    # One fused MXU matmul gives z, r (h + x parts) and q's x part.
    zrq = jnp.dot(w_zrq_ref[...], col_ref[...],
                  preferred_element_type=jnp.float32) + b_ref[...]
    z = jax.nn.sigmoid(zrq[:ch])
    r = jax.nn.sigmoid(zrq[ch:2 * ch])

    # Reuse the h rows of the scratch for the (r*h) taps.
    write_taps(r * h, 0, ch)
    q = jnp.tanh(jnp.dot(w_hq_ref[...], col_ref[pl.ds(0, 5 * ch), :],
                         preferred_element_type=jnp.float32) + zrq[2 * ch:])

    out_ref[...] = ((1.0 - z) * h + z * q).astype(out_ref.dtype)


# --------------------------- block-size selection --------------------------- #


def _default_vmem_limit_bytes():
    try:
        phys = int(pltpu.get_tpu_info().vmem_capacity_bytes)
    except Exception:
        phys = 64 << 20                          # conservative (v7x-sized) guess
    # ~half the physical VMEM: 64 MiB on v5e/v6e (128 MiB phys), 32 MiB on v7x.
    return max(32 << 20, min(phys // 2, 96 << 20))


def _bytes_per_lane(ch, cx, cx_pad, x_bytes, mm_bytes):
    io = 2 * (ch * 4 + cx * x_bytes) + 2 * ch * 4    # double-buffered h/x in, out
    col = (5 * ch + 5 * cx_pad) * mm_bytes           # im2col scratch (single)
    work = (12 * ch + 2 * cx) * 4                    # live f32 intermediates
    return io + col + work


def _choose_rows_per_block(n_rows, conv_len, rows_unit, bytes_per_lane,
                           block_budget_bytes):
    """Rows per block such that the block lane width nb*conv_len is a multiple
    of both 128 (lane-dense stores) and conv_len (rows aligned to blocks), the
    block footprint stays within the budget, and a multi-step grid prefers an
    even number of steps (v7x megacore sharding across 2 TensorCores)."""
    budget_rows = block_budget_bytes // (bytes_per_lane * conv_len)
    budget_rows = max(rows_unit, (budget_rows // rows_unit) * rows_unit)
    nb = min(budget_rows, _round_up(n_rows, rows_unit))
    n_blocks = _cdiv(n_rows, nb)
    if n_blocks > 1 and n_blocks % 2 == 1:
        alt = _round_up(_cdiv(n_rows, n_blocks + 1), rows_unit)
        if alt >= rows_unit and _cdiv(n_rows, alt) % 2 == 0:
            nb = alt
    return nb


# ------------------------------ stage launcher ------------------------------ #


def _gru_stage(h_flat, x_flat, w_zrq, w_hq, bias, *, rows_per_block, conv_len,
               ch, cx, cx_pad, mm_dtype, use_xlu_roll, vmem_limit_bytes):
    m_total = h_flat.shape[1]
    mb = rows_per_block * conv_len
    assert mb % 128 == 0 and mb % conv_len == 0 and m_total % mb == 0
    k_rows = 5 * ch + 5 * cx_pad

    kernel = functools.partial(
        _gru_stage_kernel, ch=ch, cx=cx, cx_pad=cx_pad, conv_len=conv_len,
        mm_dtype=mm_dtype, use_xlu_roll=use_xlu_roll)

    def row_spec(c):
        return pl.BlockSpec((c, mb), lambda i: (0, i))

    def full_spec(shape):
        return pl.BlockSpec(shape, lambda i: (0, 0))

    return pl.pallas_call(
        kernel,
        out_shape=jax.ShapeDtypeStruct((ch, m_total), h_flat.dtype),
        grid_spec=pltpu.PrefetchScalarGridSpec(
            num_scalar_prefetch=0,
            grid=(m_total // mb,),
            in_specs=[row_spec(ch), row_spec(cx),
                      full_spec(w_zrq.shape), full_spec(w_hq.shape),
                      full_spec(bias.shape)],
            out_specs=row_spec(ch),
            scratch_shapes=[pltpu.VMEM((k_rows, mb), mm_dtype)]),
        input_output_aliases={0: 0},             # reuse the (transient) h buffer
        compiler_params=pltpu.CompilerParams(
            dimension_semantics=("parallel",),
            vmem_limit_bytes=int(vmem_limit_bytes)),
    )(h_flat, x_flat, w_zrq, w_hq, bias)


# ------------------------------- JAX wrapper -------------------------------- #

_NCDHW = "BCTHW"
# Per-stage layout: channels first, the conv axis last (W, then H, then T).
_STAGE_ORDERS = ("CBTHW", "CBTWH", "CBHWT")


def _permute(a, src, dst):
    return jnp.transpose(a, tuple(src.index(d) for d in dst))


def _pack_stage_params(params, stage, ch, cx_pad, mm_dtype):
    """Pack canonical per-gate taps (5, Ch+Cx, Ch) into fused matmul weights."""
    wz, wr, wq = (params[f"w{g}{stage}"] for g in ("z", "r", "q"))

    def pack(w_part, cpad):                      # (5, Cpart, Ch) -> (Ch, 5*cpad)
        c = w_part.shape[1]
        w = jnp.transpose(w_part, (2, 0, 1))     # (Ch, 5, Cpart)
        if cpad > c:
            w = jnp.pad(w, ((0, 0), (0, 0), (0, cpad - c)))
        return w.reshape(ch, 5 * cpad)

    zeros_hq = jnp.zeros((ch, 5 * ch), jnp.float32)
    w_zrq = jnp.concatenate([
        jnp.concatenate([pack(wz[:, :ch], ch), pack(wz[:, ch:], cx_pad)], 1),
        jnp.concatenate([pack(wr[:, :ch], ch), pack(wr[:, ch:], cx_pad)], 1),
        jnp.concatenate([zeros_hq,             pack(wq[:, ch:], cx_pad)], 1),
    ], axis=0)
    w_hq = pack(wq[:, :ch], ch)
    bias = jnp.concatenate([params[f"b{g}{stage}"] for g in ("z", "r", "q")])
    return (w_zrq.astype(mm_dtype), w_hq.astype(mm_dtype),
            bias.reshape(-1, 1).astype(jnp.float32))


def sep_conv_gru3d_forward(h, x, params, *, mm_dtype=jnp.float32,
                           use_xlu_roll=True, block_budget_bytes=None,
                           vmem_limit_bytes=None):
    """h: (B, Ch, T, H, W), x: (B, Cx, T, H, W) -> (B, Ch, T, H, W)."""
    ch, cx = h.shape[1], x.shape[1]
    mm_bytes = jnp.dtype(mm_dtype).itemsize
    sub = 8 * (4 // mm_bytes)                    # sublane tile: 8 (f32) / 16 (bf16)
    assert ch % sub == 0, "hidden_dim must be a multiple of the sublane tile"
    cx_pad = _round_up(cx, sub)

    if vmem_limit_bytes is None:
        vmem_limit_bytes = _default_vmem_limit_bytes()
    if block_budget_bytes is None:
        block_budget_bytes = vmem_limit_bytes // 4

    # Cast x once in the wrapper for the bf16 MXU path: halves its HBM traffic.
    x_in = x.astype(mm_dtype) if mm_bytes < 4 else x
    bpl = _bytes_per_lane(ch, cx, cx_pad, jnp.dtype(x_in.dtype).itemsize,
                          mm_bytes)

    h5 = _permute(h, _NCDHW, _STAGE_ORDERS[0])
    for idx, order in enumerate(_STAGE_ORDERS):
        stage = idx + 1
        x5 = _permute(x_in, _NCDHW, order)                 # (Cx, B, A1, A2, L)
        _, b_, a1, a2, length = x5.shape
        n_rows = b_ * a1 * a2
        rows_unit = (length * 128 // math.gcd(length, 128)) // length
        nb = _choose_rows_per_block(n_rows, length, rows_unit, bpl,
                                    block_budget_bytes)
        n_pad = _cdiv(n_rows, nb) * nb

        def prep(t5, c):
            t = t5.reshape(c, n_rows, length)
            if n_pad != n_rows:
                t = jnp.pad(t, ((0, 0), (0, n_pad - n_rows), (0, 0)))
            return t.reshape(c, n_pad * length)

        w_zrq, w_hq, bias = _pack_stage_params(params, stage, ch, cx_pad,
                                               mm_dtype)
        out_flat = _gru_stage(prep(h5, ch), prep(x5, cx), w_zrq, w_hq, bias,
                              rows_per_block=nb, conv_len=length, ch=ch, cx=cx,
                              cx_pad=cx_pad, mm_dtype=mm_dtype,
                              use_xlu_roll=use_xlu_roll,
                              vmem_limit_bytes=vmem_limit_bytes)
        h_rows = out_flat.reshape(ch, n_pad, length)
        if n_pad != n_rows:
            h_rows = h_rows[:, :n_rows]
        h5 = h_rows.reshape(ch, b_, a1, a2, length)
        next_order = _STAGE_ORDERS[idx + 1] if stage < 3 else _NCDHW
        h5 = _permute(h5, order, next_order)               # one inter-stage relayout
    return h5


# ---------------------------- pure-JAX reference ----------------------------- #


def _ref_conv3d(x, w_5io, b, axis):
    cin, cout = w_5io.shape[1], w_5io.shape[2]
    w_oi = jnp.transpose(w_5io, (2, 1, 0))                 # (Cout, Cin, 5)
    if axis == 4:
        wk, pad = w_oi.reshape(cout, cin, 1, 1, 5), [(0, 0), (0, 0), (2, 2)]
    elif axis == 3:
        wk, pad = w_oi.reshape(cout, cin, 1, 5, 1), [(0, 0), (2, 2), (0, 0)]
    else:
        wk, pad = w_oi.reshape(cout, cin, 5, 1, 1), [(2, 2), (0, 0), (0, 0)]
    y = jax.lax.conv_general_dilated(
        x, wk, window_strides=(1, 1, 1), padding=pad,
        dimension_numbers=("NCDHW", "OIDHW", "NCDHW"),
        precision=jax.lax.Precision.HIGHEST)
    return y + b.reshape(1, cout, 1, 1, 1)


def sep_conv_gru3d_reference(h, x, params):
    for stage, axis in ((1, 4), (2, 3), (3, 2)):
        hx = jnp.concatenate([h, x], axis=1)
        z = jax.nn.sigmoid(_ref_conv3d(hx, params[f"wz{stage}"],
                                       params[f"bz{stage}"], axis))
        r = jax.nn.sigmoid(_ref_conv3d(hx, params[f"wr{stage}"],
                                       params[f"br{stage}"], axis))
        rhx = jnp.concatenate([r * h, x], axis=1)
        q = jnp.tanh(_ref_conv3d(rhx, params[f"wq{stage}"],
                                 params[f"bq{stage}"], axis))
        h = (1.0 - z) * h + z * q
    return h


# ----------------------------------- main ------------------------------------ #

if __name__ == "__main__":
    hidden_dim, input_dim = 16, 24
    B, T, H, W = 2, 4, 8, 8
    cin = hidden_dim + input_dim

    key = jax.random.PRNGKey(0)
    k_h, k_x, k_w = jax.random.split(key, 3)
    h0 = jax.random.normal(k_h, (B, hidden_dim, T, H, W), jnp.float32) * 0.5
    x0 = jax.random.normal(k_x, (B, input_dim, T, H, W), jnp.float32) * 0.5

    # Deterministic synthetic parameters.  Weights stored as (5, Cin, Ch) taps
    # (tap k <-> PyTorch Conv3d weight[co, ci, ..., k, ...]); biases as (Ch,).
    params = {}
    wkeys = jax.random.split(k_w, 9)
    names = ["wz1", "wr1", "wq1", "wz2", "wr2", "wq2", "wz3", "wr3", "wq3"]
    for i, name in enumerate(names):
        params[name] = jax.random.normal(
            wkeys[i], (5, cin, hidden_dim), jnp.float32) * 0.05
    for stage in (1, 2, 3):
        for g in ("z", "r", "q"):
            params[f"b{g}{stage}"] = jnp.full((hidden_dim,), 0.01 * stage,
                                              jnp.float32)

    ref = jax.block_until_ready(sep_conv_gru3d_reference(h0, x0, params))

    def run_checked(mm_dtype, tol):
        last = None
        for use_xlu in (True, False):    # jnp.roll fallback if XLU roll misbehaves
            try:
                fwd = jax.jit(functools.partial(
                    sep_conv_gru3d_forward, mm_dtype=mm_dtype,
                    use_xlu_roll=use_xlu))
                out = jax.block_until_ready(fwd(h0, x0, params))
                err = float(jnp.max(jnp.abs(out.astype(jnp.float32) - ref)))
                if out.shape == ref.shape and err < tol:
                    return out
                last = AssertionError(
                    f"mm_dtype={mm_dtype} use_xlu_roll={use_xlu}: err={err}")
            except Exception as e:  # lowering failure -> try jnp.roll path
                last = e
        raise last

    run_checked(jnp.float32, 2e-2)    # f32 MXU-operand path
    run_checked(jnp.bfloat16, 7e-2)   # bf16 MXU-operand path (f32 accumulate)
    print("KERNEL_OK")
</pallas_src>

<mosaic_0001>
module attributes {stable_mosaic.version = 11 : i64} {
  func.func @_gru_stage_kernel(%arg0: i32, %arg1: memref<16x512xf32, #tpu.memory_space<vmem>>, %arg2: memref<24x512xf32, #tpu.memory_space<vmem>>, %arg3: memref<48x200xf32, #tpu.memory_space<vmem>>, %arg4: memref<16x80xf32, #tpu.memory_space<vmem>>, %arg5: memref<48x1xf32, #tpu.memory_space<vmem>>, %arg6: memref<16x512xf32, #tpu.memory_space<vmem>>, %arg7: memref<200x512xf32, #tpu.memory_space<vmem>>) attributes {dimension_semantics = [#tpu.dimension_semantics<parallel>], iteration_bounds = array<i64: 1>, scalar_prefetch = 0 : i64, scratch_operands = 1 : i64, tpu.core_type = #tpu.core_type<tc>, window_params = [{transform_indices = @transform_0, window_bounds = array<i64: 16, 512>}, {transform_indices = @transform_1, window_bounds = array<i64: 24, 512>}, {pipeline_mode = #tpu.pipeline_mode<synchronous>, transform_indices = @transform_2, window_bounds = array<i64: 48, 200>}, {pipeline_mode = #tpu.pipeline_mode<synchronous>, transform_indices = @transform_3, window_bounds = array<i64: 16, 80>}, {pipeline_mode = #tpu.pipeline_mode<synchronous>, transform_indices = @transform_4, window_bounds = array<i64: 48, 1>}, {transform_indices = @transform_5, window_bounds = array<i64: 16, 512>}]} {
    %c0 = arith.constant 0 : index
    %c0_0 = arith.constant 0 : index
    %0 = vector.load %arg1[%c0, %c0_0] : memref<16x512xf32, #tpu.memory_space<vmem>>, vector<16x512xf32>
    %1 = tpu.iota {dimensions = array<i32: 1>} : vector<1x512xi32>
    %c8_i32 = arith.constant 8 : i32
    %c0_i32 = arith.constant 0 : i32
    %2 = arith.cmpi eq, %c8_i32, %c0_i32 : i32
    %c1_i32 = arith.constant 1 : i32
    %3 = arith.select %2, %c1_i32, %c8_i32 : i32
    %4 = vector.broadcast %3 : i32 to vector<1x512xi32>
    %5 = arith.remsi %1, %4 : vector<1x512xi32>
    %c0_i32_1 = arith.constant 0 : i32
    %6 = vector.broadcast %c0_i32_1 : i32 to vector<1x512xi32>
    %7 = arith.cmpi ne, %5, %6 : vector<1x512xi32>
    %c0_i32_2 = arith.constant 0 : i32
    %8 = vector.broadcast %c0_i32_2 : i32 to vector<1x512xi32>
    %9 = arith.cmpi slt, %5, %8 : vector<1x512xi32>
    %c0_i32_3 = arith.constant 0 : i32
    %10 = arith.cmpi slt, %3, %c0_i32_3 : i32
    %11 = vector.broadcast %10 : i1 to vector<1x512xi1>
    %12 = vector.broadcast %11 : vector<1x512xi1> to vector<1x512xi1>
    %13 = arith.xori %9, %12 : vector<1x512xi1>
    %14 = arith.andi %13, %7 : vector<1x512xi1>
    %15 = vector.broadcast %3 : i32 to vector<1x512xi32>
    %16 = arith.addi %5, %15 : vector<1x512xi32>
    %17 = arith.select %14, %16, %5 : vector<1x512xi1>, vector<1x512xi32>
    %c2_i32 = arith.constant 2 : i32
    %18 = vector.broadcast %c2_i32 : i32 to vector<1x512xi32>
    %19 = arith.cmpi sge, %17, %18 : vector<1x512xi32>
    %c1_i32_4 = arith.constant 1 : i32
    %20 = vector.broadcast %c1_i32_4 : i32 to vector<1x512xi32>
    %21 = arith.cmpi sge, %17, %20 : vector<1x512xi32>
    %c7_i32 = arith.constant 7 : i32
    %22 = vector.broadcast %c7_i32 : i32 to vector<1x512xi32>
    %23 = arith.cmpi slt, %17, %22 : vector<1x512xi32>
    %c6_i32 = arith.constant 6 : i32
    %24 = vector.broadcast %c6_i32 : i32 to vector<1x512xi32>
    %25 = arith.cmpi slt, %17, %24 : vector<1x512xi32>
    %c2_i32_5 = arith.constant 2 : i32
    %26 = tpu.dynamic_rotate %0 by %c2_i32_5 dim 1 : vector<16x512xf32>, i32 -> vector<16x512xf32>
    %cst = arith.constant 0.000000e+00 : f32
    %27 = vector.broadcast %cst : f32 to vector<16x512xf32>
    %28 = vector.shape_cast %19 : vector<1x512xi1> to vector<1x512xi1>
    %29 = vector.broadcast %28 : vector<1x512xi1> to vector<16x512xi1>
    %30 = arith.select %29, %26, %27 : vector<16x512xi1>, vector<16x512xf32>
    %c0_6 = arith.constant 0 : index
    %c0_7 = arith.constant 0 : index
    %31 = vector.load %arg7[%c0_6, %c0_7] : memref<200x512xf32, #tpu.memory_space<vmem>>, vector<16x512xf32>
    tpu.vector_store %arg7[%c0_6, %c0_7], %30 {strides = array<i32>} : memref<200x512xf32, #tpu.memory_space<vmem>>, vector<16x512xf32>,
    %c1_i32_8 = arith.constant 1 : i32
    %32 = tpu.dynamic_rotate %0 by %c1_i32_8 dim 1 : vector<16x512xf32>, i32 -> vector<16x512xf32>
    %cst_9 = arith.constant 0.000000e+00 : f32
    %33 = vector.broadcast %cst_9 : f32 to vector<16x512xf32>
    %34 = vector.shape_cast %21 : vector<1x512xi1> to vector<1x512xi1>
    %35 = vector.broadcast %34 : vector<1x512xi1> to vector<16x512xi1>
    %36 = arith.select %35, %32, %33 : vector<16x512xi1>, vector<16x512xf32>
    %c16 = arith.constant 16 : index
    %c0_10 = arith.constant 0 : index
    %37 = vector.load %arg7[%c16, %c0_10] : memref<200x512xf32, #tpu.memory_space<vmem>>, vector<16x512xf32>
    tpu.vector_store %arg7[%c16, %c0_10], %36 {strides = array<i32>} : memref<200x512xf32, #tpu.memory_space<vmem>>, vector<16x512xf32>,
    %c32 = arith.constant 32 : index
    %c0_11 = arith.constant 0 : index
    %38 = vector.load %arg7[%c32, %c0_11] : memref<200x512xf32, #tpu.memory_space<vmem>>, vector<16x512xf32>
    tpu.vector_store %arg7[%c32, %c0_11], %0 {strides = array<i32>} : memref<200x512xf32, #tpu.memory_space<vmem>>, vector<16x512xf32>,
    %c511_i32 = arith.constant 511 : i32
    %39 = tpu.dynamic_rotate %0 by %c511_i32 dim 1 : vector<16x512xf32>, i32 -> vector<16x512xf32>
    %cst_12 = arith.constant 0.000000e+00 : f32
    %40 = vector.broadcast %cst_12 : f32 to vector<16x512xf32>
    %41 = vector.shape_cast %23 : vector<1x512xi1> to vector<1x512xi1>
    %42 = vector.broadcast %41 : vector<1x512xi1> to vector<16x512xi1>
    %43 = arith.select %42, %39, %40 : vector<16x512xi1>, vector<16x512xf32>
    %c48 = arith.constant 48 : index
    %c0_13 = arith.constant 0 : index
    %44 = vector.load %arg7[%c48, %c0_13] : memref<200x512xf32, #tpu.memory_space<vmem>>, vector<16x512xf32>
    tpu.vector_store %arg7[%c48, %c0_13], %43 {strides = array<i32>} : memref<200x512xf32, #tpu.memory_space<vmem>>, vector<16x512xf32>,
    %c510_i32 = arith.constant 510 : i32
    %45 = tpu.dynamic_rotate %0 by %c510_i32 dim 1 : vector<16x512xf32>, i32 -> vector<16x512xf32>
    %cst_14 = arith.constant 0.000000e+00 : f32
    %46 = vector.broadcast %cst_14 : f32 to vector<16x512xf32>
    %47 = vector.shape_cast %25 : vector<1x512xi1> to vector<1x512xi1>
    %48 = vector.broadcast %47 : vector<1x512xi1> to vector<16x512xi1>
    %49 = arith.select %48, %45, %46 : vector<16x512xi1>, vector<16x512xf32>
    %c64 = arith.constant 64 : index
    %c0_15 = arith.constant 0 : index
    %50 = vector.load %arg7[%c64, %c0_15] : memref<200x512xf32, #tpu.memory_space<vmem>>, vector<16x512xf32>
    tpu.vector_store %arg7[%c64, %c0_15], %49 {strides = array<i32>} : memref<200x512xf32, #tpu.memory_space<vmem>>, vector<16x512xf32>,
    %c0_16 = arith.constant 0 : index
    %c0_17 = arith.constant 0 : index
    %51 = vector.load %arg2[%c0_16, %c0_17] : memref<24x512xf32, #tpu.memory_space<vmem>>, vector<24x512xf32>
    %c2_i32_18 = arith.constant 2 : i32
    %52 = tpu.dynamic_rotate %51 by %c2_i32_18 dim 1 : vector<24x512xf32>, i32 -> vector<24x512xf32>
    %cst_19 = arith.constant 0.000000e+00 : f32
    %53 = vector.broadcast %cst_19 : f32 to vector<24x512xf32>
    %54 = vector.shape_cast %19 : vector<1x512xi1> to vector<1x512xi1>
    %55 = vector.broadcast %54 : vector<1x512xi1> to vector<24x512xi1>
    %56 = arith.select %55, %52, %53 : vector<24x512xi1>, vector<24x512xf32>
    %c80 = arith.constant 80 : index
    %c0_20 = arith.constant 0 : index
    %57 = vector.load %arg7[%c80, %c0_20] : memref<200x512xf32, #tpu.memory_space<vmem>>, vector<24x512xf32>
    tpu.vector_store %arg7[%c80, %c0_20], %56 {strides = array<i32>} : memref<200x512xf32, #tpu.memory_space<vmem>>, vector<24x512xf32>,
    %c1_i32_21 = arith.constant 1 : i32
    %58 = tpu.dynamic_rotate %51 by %c1_i32_21 dim 1 : vector<24x512xf32>, i32 -> vector<24x512xf32>
    %cst_22 = arith.constant 0.000000e+00 : f32
    %59 = vector.broadcast %cst_22 : f32 to vector<24x512xf32>
    %60 = vector.shape_cast %21 : vector<1x512xi1> to vector<1x512xi1>
    %61 = vector.broadcast %60 : vector<1x512xi1> to vector<24x512xi1>
    %62 = arith.select %61, %58, %59 : vector<24x512xi1>, vector<24x512xf32>
    %c104 = arith.constant 104 : index
    %c0_23 = arith.constant 0 : index
    %63 = vector.load %arg7[%c104, %c0_23] : memref<200x512xf32, #tpu.memory_space<vmem>>, vector<24x512xf32>
    tpu.vector_store %arg7[%c104, %c0_23], %62 {strides = array<i32>} : memref<200x512xf32, #tpu.memory_space<vmem>>, vector<24x512xf32>,
    %c128 = arith.constant 128 : index
    %c0_24 = arith.constant 0 : index
    %64 = vector.load %arg7[%c128, %c0_24] : memref<200x512xf32, #tpu.memory_space<vmem>>, vector<24x512xf32>
    tpu.vector_store %arg7[%c128, %c0_24], %51 {strides = array<i32>} : memref<200x512xf32, #tpu.memory_space<vmem>>, vector<24x512xf32>,
    %c511_i32_25 = arith.constant 511 : i32
    %65 = tpu.dynamic_rotate %51 by %c511_i32_25 dim 1 : vector<24x512xf32>, i32 -> vector<24x512xf32>
    %cst_26 = arith.constant 0.000000e+00 : f32
    %66 = vector.broadcast %cst_26 : f32 to vector<24x512xf32>
    %67 = vector.shape_cast %23 : vector<1x512xi1> to vector<1x512xi1>
    %68 = vector.broadcast %67 : vector<1x512xi1> to vector<24x512xi1>
    %69 = arith.select %68, %65, %66 : vector<24x512xi1>, vector<24x512xf32>
    %c152 = arith.constant 152 : index
    %c0_27 = arith.constant 0 : index
    %70 = vector.load %arg7[%c152, %c0_27] : memref<200x512xf32, #tpu.memory_space<vmem>>, vector<24x512xf32>
    tpu.vector_store %arg7[%c152, %c0_27], %69 {strides = array<i32>} : memref<200x512xf32, #tpu.memory_space<vmem>>, vector<24x512xf32>,
    %c510_i32_28 = arith.constant 510 : i32
    %71 = tpu.dynamic_rotate %51 by %c510_i32_28 dim 1 : vector<24x512xf32>, i32 -> vector<24x512xf32>
    %cst_29 = arith.constant 0.000000e+00 : f32
    %72 = vector.broadcast %cst_29 : f32 to vector<24x512xf32>
    %73 = vector.shape_cast %25 : vector<1x512xi1> to vector<1x512xi1>
    %74 = vector.broadcast %73 : vector<1x512xi1> to vector<24x512xi1>
    %75 = arith.select %74, %71, %72 : vector<24x512xi1>, vector<24x512xf32>
    %c176 = arith.constant 176 : index
    %c0_30 = arith.constant 0 : index
    %76 = vector.load %arg7[%c176, %c0_30] : memref<200x512xf32, #tpu.memory_space<vmem>>, vector<24x512xf32>
    tpu.vector_store %arg7[%c176, %c0_30], %75 {strides = array<i32>} : memref<200x512xf32, #tpu.memory_space<vmem>>, vector<24x512xf32>,
    %c0_31 = arith.constant 0 : index
    %c0_32 = arith.constant 0 : index
    %77 = vector.load %arg3[%c0_31, %c0_32] : memref<48x200xf32, #tpu.memory_space<vmem>>, vector<48x200xf32>
    %c0_33 = arith.constant 0 : index
    %c0_34 = arith.constant 0 : index
    %78 = vector.load %arg7[%c0_33, %c0_34] : memref<200x512xf32, #tpu.memory_space<vmem>>, vector<200x512xf32>
    %cst_35 = arith.constant dense<0.000000e+00> : vector<48x512xf32>
    %79 = tpu.matmul %77, %78, %cst_35 {dimension_numbers = #tpu.dot_dimension_numbers<[1], [0], [0], [1], [0, 0, 1, 1], [], []>} : vector<48x200xf32>, vector<200x512xf32>, vector<48x512xf32> -> vector<48x512xf32>
    %c0_36 = arith.constant 0 : index
    %c0_37 = arith.constant 0 : index
    %80 = vector.load %arg5[%c0_36, %c0_37] : memref<48x1xf32, #tpu.memory_space<vmem>>, vector<48x1xf32>
    %81 = vector.broadcast %80 : vector<48x1xf32> to vector<48x512xf32>
    %82 = arith.addf %79, %81 : vector<48x512xf32>
    %83 = vector.extract_strided_slice %82 {offsets = [0, 0], sizes = [16, 512], strides = [1, 1]} : vector<48x512xf32> to vector<16x512xf32>
    %84 = arith.negf %83 : vector<16x512xf32>
    %85 = math.exp %84 : vector<16x512xf32>
    %cst_38 = arith.constant 1.000000e+00 : f32
    %86 = vector.broadcast %cst_38 : f32 to vector<16x512xf32>
    %87 = arith.addf %86, %85 : vector<16x512xf32>
    %88 = arith.divf %86, %87 : vector<16x512xf32>
    %89 = vector.extract_strided_slice %82 {offsets = [16, 0], sizes = [16, 512], strides = [1, 1]} : vector<48x512xf32> to vector<16x512xf32>
    %90 = arith.negf %89 : vector<16x512xf32>
    %91 = math.exp %90 : vector<16x512xf32>
    %cst_39 = arith.constant 1.000000e+00 : f32
    %92 = vector.broadcast %cst_39 : f32 to vector<16x512xf32>
    %93 = arith.addf %92, %91 : vector<16x512xf32>
    %94 = arith.divf %92, %93 : vector<16x512xf32>
    %95 = arith.mulf %94, %0 : vector<16x512xf32>
    %c2_i32_40 = arith.constant 2 : i32
    %96 = tpu.dynamic_rotate %95 by %c2_i32_40 dim 1 : vector<16x512xf32>, i32 -> vector<16x512xf32>
    %cst_41 = arith.constant 0.000000e+00 : f32
    %97 = vector.broadcast %cst_41 : f32 to vector<16x512xf32>
    %98 = vector.shape_cast %19 : vector<1x512xi1> to vector<1x512xi1>
    %99 = vector.broadcast %98 : vector<1x512xi1> to vector<16x512xi1>
    %100 = arith.select %99, %96, %97 : vector<16x512xi1>, vector<16x512xf32>
    %c0_42 = arith.constant 0 : index
    %c0_43 = arith.constant 0 : index
    %101 = vector.load %arg7[%c0_42, %c0_43] : memref<200x512xf32, #tpu.memory_space<vmem>>, vector<16x512xf32>
    tpu.vector_store %arg7[%c0_42, %c0_43], %100 {strides = array<i32>} : memref<200x512xf32, #tpu.memory_space<vmem>>, vector<16x512xf32>,
    %c1_i32_44 = arith.constant 1 : i32
    %102 = tpu.dynamic_rotate %95 by %c1_i32_44 dim 1 : vector<16x512xf32>, i32 -> vector<16x512xf32>
    %cst_45 = arith.constant 0.000000e+00 : f32
    %103 = vector.broadcast %cst_45 : f32 to vector<16x512xf32>
    %104 = vector.shape_cast %21 : vector<1x512xi1> to vector<1x512xi1>
    %105 = vector.broadcast %104 : vector<1x512xi1> to vector<16x512xi1>
    %106 = arith.select %105, %102, %103 : vector<16x512xi1>, vector<16x512xf32>
    %c16_46 = arith.constant 16 : index
    %c0_47 = arith.constant 0 : index
    %107 = vector.load %arg7[%c16_46, %c0_47] : memref<200x512xf32, #tpu.memory_space<vmem>>, vector<16x512xf32>
    tpu.vector_store %arg7[%c16_46, %c0_47], %106 {strides = array<i32>} : memref<200x512xf32, #tpu.memory_space<vmem>>, vector<16x512xf32>,
    %c32_48 = arith.constant 32 : index
    %c0_49 = arith.constant 0 : index
    %108 = vector.load %arg7[%c32_48, %c0_49] : memref<200x512xf32, #tpu.memory_space<vmem>>, vector<16x512xf32>
    tpu.vector_store %arg7[%c32_48, %c0_49], %95 {strides = array<i32>} : memref<200x512xf32, #tpu.memory_space<vmem>>, vector<16x512xf32>,
    %c511_i32_50 = arith.constant 511 : i32
    %109 = tpu.dynamic_rotate %95 by %c511_i32_50 dim 1 : vector<16x512xf32>, i32 -> vector<16x512xf32>
    %cst_51 = arith.constant 0.000000e+00 : f32
    %110 = vector.broadcast %cst_51 : f32 to vector<16x512xf32>
    %111 = vector.shape_cast %23 : vector<1x512xi1> to vector<1x512xi1>
    %112 = vector.broadcast %111 : vector<1x512xi1> to vector<16x512xi1>
    %113 = arith.select %112, %109, %110 : vector<16x512xi1>, vector<16x512xf32>
    %c48_52 = arith.constant 48 : index
    %c0_53 = arith.constant 0 : index
    %114 = vector.load %arg7[%c48_52, %c0_53] : memref<200x512xf32, #tpu.memory_space<vmem>>, vector<16x512xf32>
    tpu.vector_store %arg7[%c48_52, %c0_53], %113 {strides = array<i32>} : memref<200x512xf32, #tpu.memory_space<vmem>>, vector<16x512xf32>,
    %c510_i32_54 = arith.constant 510 : i32
    %115 = tpu.dynamic_rotate %95 by %c510_i32_54 dim 1 : vector<16x512xf32>, i32 -> vector<16x512xf32>
    %cst_55 = arith.constant 0.000000e+00 : f32
    %116 = vector.broadcast %cst_55 : f32 to vector<16x512xf32>
    %117 = vector.shape_cast %25 : vector<1x512xi1> to vector<1x512xi1>
    %118 = vector.broadcast %117 : vector<1x512xi1> to vector<16x512xi1>
    %119 = arith.select %118, %115, %116 : vector<16x512xi1>, vector<16x512xf32>
    %c64_56 = arith.constant 64 : index
    %c0_57 = arith.constant 0 : index
    %120 = vector.load %arg7[%c64_56, %c0_57] : memref<200x512xf32, #tpu.memory_space<vmem>>, vector<16x512xf32>
    tpu.vector_store %arg7[%c64_56, %c0_57], %119 {strides = array<i32>} : memref<200x512xf32, #tpu.memory_space<vmem>>, vector<16x512xf32>,
    %c0_58 = arith.constant 0 : index
    %c0_59 = arith.constant 0 : index
    %121 = vector.load %arg4[%c0_58, %c0_59] : memref<16x80xf32, #tpu.memory_space<vmem>>, vector<16x80xf32>
    %c0_60 = arith.constant 0 : index
    %c0_61 = arith.constant 0 : index
    %122 = vector.load %arg7[%c0_60, %c0_61] : memref<200x512xf32, #tpu.memory_space<vmem>>, vector<80x512xf32>
    %cst_62 = arith.constant dense<0.000000e+00> : vector<16x512xf32>
    %123 = tpu.matmul %121, %122, %cst_62 {dimension_numbers = #tpu.dot_dimension_numbers<[1], [0], [0], [1], [0, 0, 1, 1], [], []>} : vector<16x80xf32>, vector<80x512xf32>, vector<16x512xf32> -> vector<16x512xf32>
    %124 = vector.extract_strided_slice %82 {offsets = [32, 0], sizes = [16, 512], strides = [1, 1]} : vector<48x512xf32> to vector<16x512xf32>
    %125 = arith.addf %123, %124 : vector<16x512xf32>
    %126 = math.tanh %125 : vector<16x512xf32>
    %cst_63 = arith.constant 1.000000e+00 : f32
    %127 = vector.broadcast %cst_63 : f32 to vector<16x512xf32>
    %128 = arith.subf %127, %88 : vector<16x512xf32>
    %129 = arith.mulf %128, %0 : vector<16x512xf32>
    %130 = arith.mulf %88, %126 : vector<16x512xf32>
    %131 = arith.addf %129, %130 : vector<16x512xf32>
    %c0_64 = arith.constant 0 : index
    %c0_65 = arith.constant 0 : index
    %132 = vector.load %arg6[%c0_64, %c0_65] : memref<16x512xf32, #tpu.memory_space<vmem>>, vector<16x512xf32>
    tpu.vector_store %arg6[%c0_64, %c0_65], %131 {strides = array<i32>} : memref<16x512xf32, #tpu.memory_space<vmem>>, vector<16x512xf32>,
    return
  }
  func.func @transform_0(%arg0: i32) -> (i32, i32) {
    %c0_i32 = arith.constant 0 : i32
    %c0_i32_0 = arith.constant 0 : i32
    return %c0_i32, %arg0 : i32, i32
  }
  func.func @transform_1(%arg0: i32) -> (i32, i32) {
    %c0_i32 = arith.constant 0 : i32
    %c0_i32_0 = arith.constant 0 : i32
    return %c0_i32, %arg0 : i32, i32
  }
  func.func @transform_2(%arg0: i32) -> (i32, i32) {
    %c0_i32 = arith.constant 0 : i32
    %c0_i32_0 = arith.constant 0 : i32
    %c0_i32_1 = arith.constant 0 : i32
    return %c0_i32, %c0_i32_0 : i32, i32
  }
  func.func @transform_3(%arg0: i32) -> (i32, i32) {
    %c0_i32 = arith.constant 0 : i32
    %c0_i32_0 = arith.constant 0 : i32
    %c0_i32_1 = arith.constant 0 : i32
    return %c0_i32, %c0_i32_0 : i32, i32
  }
  func.func @transform_4(%arg0: i32) -> (i32, i32) {
    %c0_i32 = arith.constant 0 : i32
    %c0_i32_0 = arith.constant 0 : i32
    %c0_i32_1 = arith.constant 0 : i32
    return %c0_i32, %c0_i32_0 : i32, i32
  }
  func.func @transform_5(%arg0: i32) -> (i32, i32) {
    %c0_i32 = arith.constant 0 : i32
    %c0_i32_0 = arith.constant 0 : i32
    return %c0_i32, %arg0 : i32, i32
  }
}

module attributes {stable_mosaic.version = 11 : i64} {
  func.func @_gru_stage_kernel(%arg0: i32, %arg1: memref<16x512xf32, #tpu.memory_space<vmem>>, %arg2: memref<24x512xf32, #tpu.memory_space<vmem>>, %arg3: memref<48x200xf32, #tpu.memory_space<vmem>>, %arg4: memref<16x80xf32, #tpu.memory_space<vmem>>, %arg5: memref<48x1xf32, #tpu.memory_space<vmem>>, %arg6: memref<16x512xf32, #tpu.memory_space<vmem>>, %arg7: memref<200x512xf32, #tpu.memory_space<vmem>>) attributes {dimension_semantics = [#tpu.dimension_semantics<parallel>], iteration_bounds = array<i64: 1>, scalar_prefetch = 0 : i64, scratch_operands = 1 : i64, tpu.core_type = #tpu.core_type<tc>, window_params = [{transform_indices = @transform_0, window_bounds = array<i64: 16, 512>}, {transform_indices = @transform_1, window_bounds = array<i64: 24, 512>}, {pipeline_mode = #tpu.pipeline_mode<synchronous>, transform_indices = @transform_2, window_bounds = array<i64: 48, 200>}, {pipeline_mode = #tpu.pipeline_mode<synchronous>, transform_indices = @transform_3, window_bounds = array<i64: 16, 80>}, {pipeline_mode = #tpu.pipeline_mode<synchronous>, transform_indices = @transform_4, window_bounds = array<i64: 48, 1>}, {transform_indices = @transform_5, window_bounds = array<i64: 16, 512>}]} {
    %c0 = arith.constant 0 : index
    %c0_0 = arith.constant 0 : index
    %0 = vector.load %arg1[%c0, %c0_0] : memref<16x512xf32, #tpu.memory_space<vmem>>, vector<16x512xf32>
    %1 = tpu.iota {dimensions = array<i32: 1>} : vector<1x512xi32>
    %c4_i32 = arith.constant 4 : i32
    %c0_i32 = arith.constant 0 : i32
    %2 = arith.cmpi eq, %c4_i32, %c0_i32 : i32
    %c1_i32 = arith.constant 1 : i32
    %3 = arith.select %2, %c1_i32, %c4_i32 : i32
    %4 = vector.broadcast %3 : i32 to vector<1x512xi32>
    %5 = arith.remsi %1, %4 : vector<1x512xi32>
    %c0_i32_1 = arith.constant 0 : i32
    %6 = vector.broadcast %c0_i32_1 : i32 to vector<1x512xi32>
    %7 = arith.cmpi ne, %5, %6 : vector<1x512xi32>
    %c0_i32_2 = arith.constant 0 : i32
    %8 = vector.broadcast %c0_i32_2 : i32 to vector<1x512xi32>
    %9 = arith.cmpi slt, %5, %8 : vector<1x512xi32>
    %c0_i32_3 = arith.constant 0 : i32
    %10 = arith.cmpi slt, %3, %c0_i32_3 : i32
    %11 = vector.broadcast %10 : i1 to vector<1x512xi1>
    %12 = vector.broadcast %11 : vector<1x512xi1> to vector<1x512xi1>
    %13 = arith.xori %9, %12 : vector<1x512xi1>
    %14 = arith.andi %13, %7 : vector<1x512xi1>
    %15 = vector.broadcast %3 : i32 to vector<1x512xi32>
    %16 = arith.addi %5, %15 : vector<1x512xi32>
    %17 = arith.select %14, %16, %5 : vector<1x512xi1>, vector<1x512xi32>
    %c2_i32 = arith.constant 2 : i32
    %18 = vector.broadcast %c2_i32 : i32 to vector<1x512xi32>
    %19 = arith.cmpi sge, %17, %18 : vector<1x512xi32>
    %c1_i32_4 = arith.constant 1 : i32
    %20 = vector.broadcast %c1_i32_4 : i32 to vector<1x512xi32>
    %21 = arith.cmpi sge, %17, %20 : vector<1x512xi32>
    %c3_i32 = arith.constant 3 : i32
    %22 = vector.broadcast %c3_i32 : i32 to vector<1x512xi32>
    %23 = arith.cmpi slt, %17, %22 : vector<1x512xi32>
    %c2_i32_5 = arith.constant 2 : i32
    %24 = vector.broadcast %c2_i32_5 : i32 to vector<1x512xi32>
    %25 = arith.cmpi slt, %17, %24 : vector<1x512xi32>
    %c2_i32_6 = arith.constant 2 : i32
    %26 = tpu.dynamic_rotate %0 by %c2_i32_6 dim 1 : vector<16x512xf32>, i32 -> vector<16x512xf32>
    %cst = arith.constant 0.000000e+00 : f32
    %27 = vector.broadcast %cst : f32 to vector<16x512xf32>
    %28 = vector.shape_cast %19 : vector<1x512xi1> to vector<1x512xi1>
    %29 = vector.broadcast %28 : vector<1x512xi1> to vector<16x512xi1>
    %30 = arith.select %29, %26, %27 : vector<16x512xi1>, vector<16x512xf32>
    %c0_7 = arith.constant 0 : index
    %c0_8 = arith.constant 0 : index
    %31 = vector.load %arg7[%c0_7, %c0_8] : memref<200x512xf32, #tpu.memory_space<vmem>>, vector<16x512xf32>
    tpu.vector_store %arg7[%c0_7, %c0_8], %30 {strides = array<i32>} : memref<200x512xf32, #tpu.memory_space<vmem>>, vector<16x512xf32>,
    %c1_i32_9 = arith.constant 1 : i32
    %32 = tpu.dynamic_rotate %0 by %c1_i32_9 dim 1 : vector<16x512xf32>, i32 -> vector<16x512xf32>
    %cst_10 = arith.constant 0.000000e+00 : f32
    %33 = vector.broadcast %cst_10 : f32 to vector<16x512xf32>
    %34 = vector.shape_cast %21 : vector<1x512xi1> to vector<1x512xi1>
    %35 = vector.broadcast %34 : vector<1x512xi1> to vector<16x512xi1>
    %36 = arith.select %35, %32, %33 : vector<16x512xi1>, vector<16x512xf32>
    %c16 = arith.constant 16 : index
    %c0_11 = arith.constant 0 : index
    %37 = vector.load %arg7[%c16, %c0_11] : memref<200x512xf32, #tpu.memory_space<vmem>>, vector<16x512xf32>
    tpu.vector_store %arg7[%c16, %c0_11], %36 {strides = array<i32>} : memref<200x512xf32, #tpu.memory_space<vmem>>, vector<16x512xf32>,
    %c32 = arith.constant 32 : index
    %c0_12 = arith.constant 0 : index
    %38 = vector.load %arg7[%c32, %c0_12] : memref<200x512xf32, #tpu.memory_space<vmem>>, vector<16x512xf32>
    tpu.vector_store %arg7[%c32, %c0_12], %0 {strides = array<i32>} : memref<200x512xf32, #tpu.memory_space<vmem>>, vector<16x512xf32>,
    %c511_i32 = arith.constant 511 : i32
    %39 = tpu.dynamic_rotate %0 by %c511_i32 dim 1 : vector<16x512xf32>, i32 -> vector<16x512xf32>
    %cst_13 = arith.constant 0.000000e+00 : f32
    %40 = vector.broadcast %cst_13 : f32 to vector<16x512xf32>
    %41 = vector.shape_cast %23 : vector<1x512xi1> to vector<1x512xi1>
    %42 = vector.broadcast %41 : vector<1x512xi1> to vector<16x512xi1>
    %43 = arith.select %42, %39, %40 : vector<16x512xi1>, vector<16x512xf32>
    %c48 = arith.constant 48 : index
    %c0_14 = arith.constant 0 : index
    %44 = vector.load %arg7[%c48, %c0_14] : memref<200x512xf32, #tpu.memory_space<vmem>>, vector<16x512xf32>
    tpu.vector_store %arg7[%c48, %c0_14], %43 {strides = array<i32>} : memref<200x512xf32, #tpu.memory_space<vmem>>, vector<16x512xf32>,
    %c510_i32 = arith.constant 510 : i32
    %45 = tpu.dynamic_rotate %0 by %c510_i32 dim 1 : vector<16x512xf32>, i32 -> vector<16x512xf32>
    %cst_15 = arith.constant 0.000000e+00 : f32
    %46 = vector.broadcast %cst_15 : f32 to vector<16x512xf32>
    %47 = vector.shape_cast %25 : vector<1x512xi1> to vector<1x512xi1>
    %48 = vector.broadcast %47 : vector<1x512xi1> to vector<16x512xi1>
    %49 = arith.select %48, %45, %46 : vector<16x512xi1>, vector<16x512xf32>
    %c64 = arith.constant 64 : index
    %c0_16 = arith.constant 0 : index
    %50 = vector.load %arg7[%c64, %c0_16] : memref<200x512xf32, #tpu.memory_space<vmem>>, vector<16x512xf32>
    tpu.vector_store %arg7[%c64, %c0_16], %49 {strides = array<i32>} : memref<200x512xf32, #tpu.memory_space<vmem>>, vector<16x512xf32>,
    %c0_17 = arith.constant 0 : index
    %c0_18 = arith.constant 0 : index
    %51 = vector.load %arg2[%c0_17, %c0_18] : memref<24x512xf32, #tpu.memory_space<vmem>>, vector<24x512xf32>
    %c2_i32_19 = arith.constant 2 : i32
    %52 = tpu.dynamic_rotate %51 by %c2_i32_19 dim 1 : vector<24x512xf32>, i32 -> vector<24x512xf32>
    %cst_20 = arith.constant 0.000000e+00 : f32
    %53 = vector.broadcast %cst_20 : f32 to vector<24x512xf32>
    %54 = vector.shape_cast %19 : vector<1x512xi1> to vector<1x512xi1>
    %55 = vector.broadcast %54 : vector<1x512xi1> to vector<24x512xi1>
    %56 = arith.select %55, %52, %53 : vector<24x512xi1>, vector<24x512xf32>
    %c80 = arith.constant 80 : index
    %c0_21 = arith.constant 0 : index
    %57 = vector.load %arg7[%c80, %c0_21] : memref<200x512xf32, #tpu.memory_space<vmem>>, vector<24x512xf32>
    tpu.vector_store %arg7[%c80, %c0_21], %56 {strides = array<i32>} : memref<200x512xf32, #tpu.memory_space<vmem>>, vector<24x512xf32>,
    %c1_i32_22 = arith.constant 1 : i32
    %58 = tpu.dynamic_rotate %51 by %c1_i32_22 dim 1 : vector<24x512xf32>, i32 -> vector<24x512xf32>
    %cst_23 = arith.constant 0.000000e+00 : f32
    %59 = vector.broadcast %cst_23 : f32 to vector<24x512xf32>
    %60 = vector.shape_cast %21 : vector<1x512xi1> to vector<1x512xi1>
    %61 = vector.broadcast %60 : vector<1x512xi1> to vector<24x512xi1>
    %62 = arith.select %61, %58, %59 : vector<24x512xi1>, vector<24x512xf32>
    %c104 = arith.constant 104 : index
    %c0_24 = arith.constant 0 : index
    %63 = vector.load %arg7[%c104, %c0_24] : memref<200x512xf32, #tpu.memory_space<vmem>>, vector<24x512xf32>
    tpu.vector_store %arg7[%c104, %c0_24], %62 {strides = array<i32>} : memref<200x512xf32, #tpu.memory_space<vmem>>, vector<24x512xf32>,
    %c128 = arith.constant 128 : index
    %c0_25 = arith.constant 0 : index
    %64 = vector.load %arg7[%c128, %c0_25] : memref<200x512xf32, #tpu.memory_space<vmem>>, vector<24x512xf32>
    tpu.vector_store %arg7[%c128, %c0_25], %51 {strides = array<i32>} : memref<200x512xf32, #tpu.memory_space<vmem>>, vector<24x512xf32>,
    %c511_i32_26 = arith.constant 511 : i32
    %65 = tpu.dynamic_rotate %51 by %c511_i32_26 dim 1 : vector<24x512xf32>, i32 -> vector<24x512xf32>
    %cst_27 = arith.constant 0.000000e+00 : f32
    %66 = vector.broadcast %cst_27 : f32 to vector<24x512xf32>
    %67 = vector.shape_cast %23 : vector<1x512xi1> to vector<1x512xi1>
    %68 = vector.broadcast %67 : vector<1x512xi1> to vector<24x512xi1>
    %69 = arith.select %68, %65, %66 : vector<24x512xi1>, vector<24x512xf32>
    %c152 = arith.constant 152 : index
    %c0_28 = arith.constant 0 : index
    %70 = vector.load %arg7[%c152, %c0_28] : memref<200x512xf32, #tpu.memory_space<vmem>>, vector<24x512xf32>
    tpu.vector_store %arg7[%c152, %c0_28], %69 {strides = array<i32>} : memref<200x512xf32, #tpu.memory_space<vmem>>, vector<24x512xf32>,
    %c510_i32_29 = arith.constant 510 : i32
    %71 = tpu.dynamic_rotate %51 by %c510_i32_29 dim 1 : vector<24x512xf32>, i32 -> vector<24x512xf32>
    %cst_30 = arith.constant 0.000000e+00 : f32
    %72 = vector.broadcast %cst_30 : f32 to vector<24x512xf32>
    %73 = vector.shape_cast %25 : vector<1x512xi1> to vector<1x512xi1>
    %74 = vector.broadcast %73 : vector<1x512xi1> to vector<24x512xi1>
    %75 = arith.select %74, %71, %72 : vector<24x512xi1>, vector<24x512xf32>
    %c176 = arith.constant 176 : index
    %c0_31 = arith.constant 0 : index
    %76 = vector.load %arg7[%c176, %c0_31] : memref<200x512xf32, #tpu.memory_space<vmem>>, vector<24x512xf32>
    tpu.vector_store %arg7[%c176, %c0_31], %75 {strides = array<i32>} : memref<200x512xf32, #tpu.memory_space<vmem>>, vector<24x512xf32>,
    %c0_32 = arith.constant 0 : index
    %c0_33 = arith.constant 0 : index
    %77 = vector.load %arg3[%c0_32, %c0_33] : memref<48x200xf32, #tpu.memory_space<vmem>>, vector<48x200xf32>
    %c0_34 = arith.constant 0 : index
    %c0_35 = arith.constant 0 : index
    %78 = vector.load %arg7[%c0_34, %c0_35] : memref<200x512xf32, #tpu.memory_space<vmem>>, vector<200x512xf32>
    %cst_36 = arith.constant dense<0.000000e+00> : vector<48x512xf32>
    %79 = tpu.matmul %77, %78, %cst_36 {dimension_numbers = #tpu.dot_dimension_numbers<[1], [0], [0], [1], [0, 0, 1, 1], [], []>} : vector<48x200xf32>, vector<200x512xf32>, vector<48x512xf32> -> vector<48x512xf32>
    %c0_37 = arith.constant 0 : index
    %c0_38 = arith.constant 0 : index
    %80 = vector.load %arg5[%c0_37, %c0_38] : memref<48x1xf32, #tpu.memory_space<vmem>>, vector<48x1xf32>
    %81 = vector.broadcast %80 : vector<48x1xf32> to vector<48x512xf32>
    %82 = arith.addf %79, %81 : vector<48x512xf32>
    %83 = vector.extract_strided_slice %82 {offsets = [0, 0], sizes = [16, 512], strides = [1, 1]} : vector<48x512xf32> to vector<16x512xf32>
    %84 = arith.negf %83 : vector<16x512xf32>
    %85 = math.exp %84 : vector<16x512xf32>
    %cst_39 = arith.constant 1.000000e+00 : f32
    %86 = vector.broadcast %cst_39 : f32 to vector<16x512xf32>
    %87 = arith.addf %86, %85 : vector<16x512xf32>
    %88 = arith.divf %86, %87 : vector<16x512xf32>
    %89 = vector.extract_strided_slice %82 {offsets = [16, 0], sizes = [16, 512], strides = [1, 1]} : vector<48x512xf32> to vector<16x512xf32>
    %90 = arith.negf %89 : vector<16x512xf32>
    %91 = math.exp %90 : vector<16x512xf32>
    %cst_40 = arith.constant 1.000000e+00 : f32
    %92 = vector.broadcast %cst_40 : f32 to vector<16x512xf32>
    %93 = arith.addf %92, %91 : vector<16x512xf32>
    %94 = arith.divf %92, %93 : vector<16x512xf32>
    %95 = arith.mulf %94, %0 : vector<16x512xf32>
    %c2_i32_41 = arith.constant 2 : i32
    %96 = tpu.dynamic_rotate %95 by %c2_i32_41 dim 1 : vector<16x512xf32>, i32 -> vector<16x512xf32>
    %cst_42 = arith.constant 0.000000e+00 : f32
    %97 = vector.broadcast %cst_42 : f32 to vector<16x512xf32>
    %98 = vector.shape_cast %19 : vector<1x512xi1> to vector<1x512xi1>
    %99 = vector.broadcast %98 : vector<1x512xi1> to vector<16x512xi1>
    %100 = arith.select %99, %96, %97 : vector<16x512xi1>, vector<16x512xf32>
    %c0_43 = arith.constant 0 : index
    %c0_44 = arith.constant 0 : index
    %101 = vector.load %arg7[%c0_43, %c0_44] : memref<200x512xf32, #tpu.memory_space<vmem>>, vector<16x512xf32>
    tpu.vector_store %arg7[%c0_43, %c0_44], %100 {strides = array<i32>} : memref<200x512xf32, #tpu.memory_space<vmem>>, vector<16x512xf32>,
    %c1_i32_45 = arith.constant 1 : i32
    %102 = tpu.dynamic_rotate %95 by %c1_i32_45 dim 1 : vector<16x512xf32>, i32 -> vector<16x512xf32>
    %cst_46 = arith.constant 0.000000e+00 : f32
    %103 = vector.broadcast %cst_46 : f32 to vector<16x512xf32>
    %104 = vector.shape_cast %21 : vector<1x512xi1> to vector<1x512xi1>
    %105 = vector.broadcast %104 : vector<1x512xi1> to vector<16x512xi1>
    %106 = arith.select %105, %102, %103 : vector<16x512xi1>, vector<16x512xf32>
    %c16_47 = arith.constant 16 : index
    %c0_48 = arith.constant 0 : index
    %107 = vector.load %arg7[%c16_47, %c0_48] : memref<200x512xf32, #tpu.memory_space<vmem>>, vector<16x512xf32>
    tpu.vector_store %arg7[%c16_47, %c0_48], %106 {strides = array<i32>} : memref<200x512xf32, #tpu.memory_space<vmem>>, vector<16x512xf32>,
    %c32_49 = arith.constant 32 : index
    %c0_50 = arith.constant 0 : index
    %108 = vector.load %arg7[%c32_49, %c0_50] : memref<200x512xf32, #tpu.memory_space<vmem>>, vector<16x512xf32>
    tpu.vector_store %arg7[%c32_49, %c0_50], %95 {strides = array<i32>} : memref<200x512xf32, #tpu.memory_space<vmem>>, vector<16x512xf32>,
    %c511_i32_51 = arith.constant 511 : i32
    %109 = tpu.dynamic_rotate %95 by %c511_i32_51 dim 1 : vector<16x512xf32>, i32 -> vector<16x512xf32>
    %cst_52 = arith.constant 0.000000e+00 : f32
    %110 = vector.broadcast %cst_52 : f32 to vector<16x512xf32>
    %111 = vector.shape_cast %23 : vector<1x512xi1> to vector<1x512xi1>
    %112 = vector.broadcast %111 : vector<1x512xi1> to vector<16x512xi1>
    %113 = arith.select %112, %109, %110 : vector<16x512xi1>, vector<16x512xf32>
    %c48_53 = arith.constant 48 : index
    %c0_54 = arith.constant 0 : index
    %114 = vector.load %arg7[%c48_53, %c0_54] : memref<200x512xf32, #tpu.memory_space<vmem>>, vector<16x512xf32>
    tpu.vector_store %arg7[%c48_53, %c0_54], %113 {strides = array<i32>} : memref<200x512xf32, #tpu.memory_space<vmem>>, vector<16x512xf32>,
    %c510_i32_55 = arith.constant 510 : i32
    %115 = tpu.dynamic_rotate %95 by %c510_i32_55 dim 1 : vector<16x512xf32>, i32 -> vector<16x512xf32>
    %cst_56 = arith.constant 0.000000e+00 : f32
    %116 = vector.broadcast %cst_56 : f32 to vector<16x512xf32>
    %117 = vector.shape_cast %25 : vector<1x512xi1> to vector<1x512xi1>
    %118 = vector.broadcast %117 : vector<1x512xi1> to vector<16x512xi1>
    %119 = arith.select %118, %115, %116 : vector<16x512xi1>, vector<16x512xf32>
    %c64_57 = arith.constant 64 : index
    %c0_58 = arith.constant 0 : index
    %120 = vector.load %arg7[%c64_57, %c0_58] : memref<200x512xf32, #tpu.memory_space<vmem>>, vector<16x512xf32>
    tpu.vector_store %arg7[%c64_57, %c0_58], %119 {strides = array<i32>} : memref<200x512xf32, #tpu.memory_space<vmem>>, vector<16x512xf32>,
    %c0_59 = arith.constant 0 : index
    %c0_60 = arith.constant 0 : index
    %121 = vector.load %arg4[%c0_59, %c0_60] : memref<16x80xf32, #tpu.memory_space<vmem>>, vector<16x80xf32>
    %c0_61 = arith.constant 0 : index
    %c0_62 = arith.constant 0 : index
    %122 = vector.load %arg7[%c0_61, %c0_62] : memref<200x512xf32, #tpu.memory_space<vmem>>, vector<80x512xf32>
    %cst_63 = arith.constant dense<0.000000e+00> : vector<16x512xf32>
    %123 = tpu.matmul %121, %122, %cst_63 {dimension_numbers = #tpu.dot_dimension_numbers<[1], [0], [0], [1], [0, 0, 1, 1], [], []>} : vector<16x80xf32>, vector<80x512xf32>, vector<16x512xf32> -> vector<16x512xf32>
    %124 = vector.extract_strided_slice %82 {offsets = [32, 0], sizes = [16, 512], strides = [1, 1]} : vector<48x512xf32> to vector<16x512xf32>
    %125 = arith.addf %123, %124 : vector<16x512xf32>
    %126 = math.tanh %125 : vector<16x512xf32>
    %cst_64 = arith.constant 1.000000e+00 : f32
    %127 = vector.broadcast %cst_64 : f32 to vector<16x512xf32>
    %128 = arith.subf %127, %88 : vector<16x512xf32>
    %129 = arith.mulf %128, %0 : vector<16x512xf32>
    %130 = arith.mulf %88, %126 : vector<16x512xf32>
    %131 = arith.addf %129, %130 : vector<16x512xf32>
    %c0_65 = arith.constant 0 : index
    %c0_66 = arith.constant 0 : index
    %132 = vector.load %arg6[%c0_65, %c0_66] : memref<16x512xf32, #tpu.memory_space<vmem>>, vector<16x512xf32>
    tpu.vector_store %arg6[%c0_65, %c0_66], %131 {strides = array<i32>} : memref<16x512xf32, #tpu.memory_space<vmem>>, vector<16x512xf32>,
    return
  }
  func.func @transform_0(%arg0: i32) -> (i32, i32) {
    %c0_i32 = arith.constant 0 : i32
    %c0_i32_0 = arith.constant 0 : i32
    return %c0_i32, %arg0 : i32, i32
  }
  func.func @transform_1(%arg0: i32) -> (i32, i32) {
    %c0_i32 = arith.constant 0 : i32
    %c0_i32_0 = arith.constant 0 : i32
    return %c0_i32, %arg0 : i32, i32
  }
  func.func @transform_2(%arg0: i32) -> (i32, i32) {
    %c0_i32 = arith.constant 0 : i32
    %c0_i32_0 = arith.constant 0 : i32
    %c0_i32_1 = arith.constant 0 : i32
    return %c0_i32, %c0_i32_0 : i32, i32
  }
  func.func @transform_3(%arg0: i32) -> (i32, i32) {
    %c0_i32 = arith.constant 0 : i32
    %c0_i32_0 = arith.constant 0 : i32
    %c0_i32_1 = arith.constant 0 : i32
    return %c0_i32, %c0_i32_0 : i32, i32
  }
  func.func @transform_4(%arg0: i32) -> (i32, i32) {
    %c0_i32 = arith.constant 0 : i32
    %c0_i32_0 = arith.constant 0 : i32
    %c0_i32_1 = arith.constant 0 : i32
    return %c0_i32, %c0_i32_0 : i32, i32
  }
  func.func @transform_5(%arg0: i32) -> (i32, i32) {
    %c0_i32 = arith.constant 0 : i32
    %c0_i32_0 = arith.constant 0 : i32
    return %c0_i32, %arg0 : i32, i32
  }
}

module attributes {stable_mosaic.version = 11 : i64} {
  func.func @_gru_stage_kernel(%arg0: i32, %arg1: memref<16x512xf32, #tpu.memory_space<vmem>>, %arg2: memref<24x512xf32, #tpu.memory_space<vmem>>, %arg3: memref<48x200xf32, #tpu.memory_space<vmem>>, %arg4: memref<16x80xf32, #tpu.memory_space<vmem>>, %arg5: memref<48x1xf32, #tpu.memory_space<vmem>>, %arg6: memref<16x512xf32, #tpu.memory_space<vmem>>, %arg7: memref<200x512xf32, #tpu.memory_space<vmem>>) attributes {dimension_semantics = [#tpu.dimension_semantics<parallel>], iteration_bounds = array<i64: 1>, scalar_prefetch = 0 : i64, scratch_operands = 1 : i64, tpu.core_type = #tpu.core_type<tc>, window_params = [{transform_indices = @transform_0, window_bounds = array<i64: 16, 512>}, {transform_indices = @transform_1, window_bounds = array<i64: 24, 512>}, {pipeline_mode = #tpu.pipeline_mode<synchronous>, transform_indices = @transform_2, window_bounds = array<i64: 48, 200>}, {pipeline_mode = #tpu.pipeline_mode<synchronous>, transform_indices = @transform_3, window_bounds = array<i64: 16, 80>}, {pipeline_mode = #tpu.pipeline_mode<synchronous>, transform_indices = @transform_4, window_bounds = array<i64: 48, 1>}, {transform_indices = @transform_5, window_bounds = array<i64: 16, 512>}]} {
    %c0 = arith.constant 0 : index
    %c0_0 = arith.constant 0 : index
    %0 = vector.load %arg1[%c0, %c0_0] : memref<16x512xf32, #tpu.memory_space<vmem>>, vector<16x512xf32>
    %1 = tpu.iota {dimensions = array<i32: 1>} : vector<1x512xi32>
    %c8_i32 = arith.constant 8 : i32
    %c0_i32 = arith.constant 0 : i32
    %2 = arith.cmpi eq, %c8_i32, %c0_i32 : i32
    %c1_i32 = arith.constant 1 : i32
    %3 = arith.select %2, %c1_i32, %c8_i32 : i32
    %4 = vector.broadcast %3 : i32 to vector<1x512xi32>
    %5 = arith.remsi %1, %4 : vector<1x512xi32>
    %c0_i32_1 = arith.constant 0 : i32
    %6 = vector.broadcast %c0_i32_1 : i32 to vector<1x512xi32>
    %7 = arith.cmpi ne, %5, %6 : vector<1x512xi32>
    %c0_i32_2 = arith.constant 0 : i32
    %8 = vector.broadcast %c0_i32_2 : i32 to vector<1x512xi32>
    %9 = arith.cmpi slt, %5, %8 : vector<1x512xi32>
    %c0_i32_3 = arith.constant 0 : i32
    %10 = arith.cmpi slt, %3, %c0_i32_3 : i32
    %11 = vector.broadcast %10 : i1 to vector<1x512xi1>
    %12 = vector.broadcast %11 : vector<1x512xi1> to vector<1x512xi1>
    %13 = arith.xori %9, %12 : vector<1x512xi1>
    %14 = arith.andi %13, %7 : vector<1x512xi1>
    %15 = vector.broadcast %3 : i32 to vector<1x512xi32>
    %16 = arith.addi %5, %15 : vector<1x512xi32>
    %17 = arith.select %14, %16, %5 : vector<1x512xi1>, vector<1x512xi32>
    %c2_i32 = arith.constant 2 : i32
    %18 = vector.broadcast %c2_i32 : i32 to vector<1x512xi32>
    %19 = arith.cmpi sge, %17, %18 : vector<1x512xi32>
    %c1_i32_4 = arith.constant 1 : i32
    %20 = vector.broadcast %c1_i32_4 : i32 to vector<1x512xi32>
    %21 = arith.cmpi sge, %17, %20 : vector<1x512xi32>
    %c7_i32 = arith.constant 7 : i32
    %22 = vector.broadcast %c7_i32 : i32 to vector<1x512xi32>
    %23 = arith.cmpi slt, %17, %22 : vector<1x512xi32>
    %c6_i32 = arith.constant 6 : i32
    %24 = vector.broadcast %c6_i32 : i32 to vector<1x512xi32>
    %25 = arith.cmpi slt, %17, %24 : vector<1x512xi32>
    %26 = vector.extract_strided_slice %0 {offsets = [0, 510], sizes = [16, 2], strides = [1, 1]} : vector<16x512xf32> to vector<16x2xf32>
    %27 = vector.extract_strided_slice %0 {offsets = [0, 0], sizes = [16, 510], strides = [1, 1]} : vector<16x512xf32> to vector<16x510xf32>
    %28 = tpu.concatenate %26, %27 in 1 : vector<16x2xf32>, vector<16x510xf32> -> vector<16x512xf32>
    %cst = arith.constant 0.000000e+00 : f32
    %29 = vector.broadcast %cst : f32 to vector<16x512xf32>
    %30 = vector.shape_cast %19 : vector<1x512xi1> to vector<1x512xi1>
    %31 = vector.broadcast %30 : vector<1x512xi1> to vector<16x512xi1>
    %32 = arith.select %31, %28, %29 : vector<16x512xi1>, vector<16x512xf32>
    %c0_5 = arith.constant 0 : index
    %c0_6 = arith.constant 0 : index
    %33 = vector.load %arg7[%c0_5, %c0_6] : memref<200x512xf32, #tpu.memory_space<vmem>>, vector<16x512xf32>
    tpu.vector_store %arg7[%c0_5, %c0_6], %32 {strides = array<i32>} : memref<200x512xf32, #tpu.memory_space<vmem>>, vector<16x512xf32>,
    %34 = vector.extract_strided_slice %0 {offsets = [0, 511], sizes = [16, 1], strides = [1, 1]} : vector<16x512xf32> to vector<16x1xf32>
    %35 = vector.extract_strided_slice %0 {offsets = [0, 0], sizes = [16, 511], strides = [1, 1]} : vector<16x512xf32> to vector<16x511xf32>
    %36 = tpu.concatenate %34, %35 in 1 : vector<16x1xf32>, vector<16x511xf32> -> vector<16x512xf32>
    %cst_7 = arith.constant 0.000000e+00 : f32
    %37 = vector.broadcast %cst_7 : f32 to vector<16x512xf32>
    %38 = vector.shape_cast %21 : vector<1x512xi1> to vector<1x512xi1>
    %39 = vector.broadcast %38 : vector<1x512xi1> to vector<16x512xi1>
    %40 = arith.select %39, %36, %37 : vector<16x512xi1>, vector<16x512xf32>
    %c16 = arith.constant 16 : index
    %c0_8 = arith.constant 0 : index
    %41 = vector.load %arg7[%c16, %c0_8] : memref<200x512xf32, #tpu.memory_space<vmem>>, vector<16x512xf32>
    tpu.vector_store %arg7[%c16, %c0_8], %40 {strides = array<i32>} : memref<200x512xf32, #tpu.memory_space<vmem>>, vector<16x512xf32>,
    %c32 = arith.constant 32 : index
    %c0_9 = arith.constant 0 : index
    %42 = vector.load %arg7[%c32, %c0_9] : memref<200x512xf32, #tpu.memory_space<vmem>>, vector<16x512xf32>
    tpu.vector_store %arg7[%c32, %c0_9], %0 {strides = array<i32>} : memref<200x512xf32, #tpu.memory_space<vmem>>, vector<16x512xf32>,
    %43 = vector.extract_strided_slice %0 {offsets = [0, 1], sizes = [16, 511], strides = [1, 1]} : vector<16x512xf32> to vector<16x511xf32>
    %44 = vector.extract_strided_slice %0 {offsets = [0, 0], sizes = [16, 1], strides = [1, 1]} : vector<16x512xf32> to vector<16x1xf32>
    %45 = tpu.concatenate %43, %44 in 1 : vector<16x511xf32>, vector<16x1xf32> -> vector<16x512xf32>
    %cst_10 = arith.constant 0.000000e+00 : f32
    %46 = vector.broadcast %cst_10 : f32 to vector<16x512xf32>
    %47 = vector.shape_cast %23 : vector<1x512xi1> to vector<1x512xi1>
    %48 = vector.broadcast %47 : vector<1x512xi1> to vector<16x512xi1>
    %49 = arith.select %48, %45, %46 : vector<16x512xi1>, vector<16x512xf32>
    %c48 = arith.constant 48 : index
    %c0_11 = arith.constant 0 : index
    %50 = vector.load %arg7[%c48, %c0_11] : memref<200x512xf32, #tpu.memory_space<vmem>>, vector<16x512xf32>
    tpu.vector_store %arg7[%c48, %c0_11], %49 {strides = array<i32>} : memref<200x512xf32, #tpu.memory_space<vmem>>, vector<16x512xf32>,
    %51 = vector.extract_strided_slice %0 {offsets = [0, 2], sizes = [16, 510], strides = [1, 1]} : vector<16x512xf32> to vector<16x510xf32>
    %52 = vector.extract_strided_slice %0 {offsets = [0, 0], sizes = [16, 2], strides = [1, 1]} : vector<16x512xf32> to vector<16x2xf32>
    %53 = tpu.concatenate %51, %52 in 1 : vector<16x510xf32>, vector<16x2xf32> -> vector<16x512xf32>
    %cst_12 = arith.constant 0.000000e+00 : f32
    %54 = vector.broadcast %cst_12 : f32 to vector<16x512xf32>
    %55 = vector.shape_cast %25 : vector<1x512xi1> to vector<1x512xi1>
    %56 = vector.broadcast %55 : vector<1x512xi1> to vector<16x512xi1>
    %57 = arith.select %56, %53, %54 : vector<16x512xi1>, vector<16x512xf32>
    %c64 = arith.constant 64 : index
    %c0_13 = arith.constant 0 : index
    %58 = vector.load %arg7[%c64, %c0_13] : memref<200x512xf32, #tpu.memory_space<vmem>>, vector<16x512xf32>
    tpu.vector_store %arg7[%c64, %c0_13], %57 {strides = array<i32>} : memref<200x512xf32, #tpu.memory_space<vmem>>, vector<16x512xf32>,
    %c0_14 = arith.constant 0 : index
    %c0_15 = arith.constant 0 : index
    %59 = vector.load %arg2[%c0_14, %c0_15] : memref<24x512xf32, #tpu.memory_space<vmem>>, vector<24x512xf32>
    %60 = vector.extract_strided_slice %59 {offsets = [0, 510], sizes = [24, 2], strides = [1, 1]} : vector<24x512xf32> to vector<24x2xf32>
    %61 = vector.extract_strided_slice %59 {offsets = [0, 0], sizes = [24, 510], strides = [1, 1]} : vector<24x512xf32> to vector<24x510xf32>
    %62 = tpu.concatenate %60, %61 in 1 : vector<24x2xf32>, vector<24x510xf32> -> vector<24x512xf32>
    %cst_16 = arith.constant 0.000000e+00 : f32
    %63 = vector.broadcast %cst_16 : f32 to vector<24x512xf32>
    %64 = vector.shape_cast %19 : vector<1x512xi1> to vector<1x512xi1>
    %65 = vector.broadcast %64 : vector<1x512xi1> to vector<24x512xi1>
    %66 = arith.select %65, %62, %63 : vector<24x512xi1>, vector<24x512xf32>
    %c80 = arith.constant 80 : index
    %c0_17 = arith.constant 0 : index
    %67 = vector.load %arg7[%c80, %c0_17] : memref<200x512xf32, #tpu.memory_space<vmem>>, vector<24x512xf32>
    tpu.vector_store %arg7[%c80, %c0_17], %66 {strides = array<i32>} : memref<200x512xf32, #tpu.memory_space<vmem>>, vector<24x512xf32>,
    %68 = vector.extract_strided_slice %59 {offsets = [0, 511], sizes = [24, 1], strides = [1, 1]} : vector<24x512xf32> to vector<24x1xf32>
    %69 = vector.extract_strided_slice %59 {offsets = [0, 0], sizes = [24, 511], strides = [1, 1]} : vector<24x512xf32> to vector<24x511xf32>
    %70 = tpu.concatenate %68, %69 in 1 : vector<24x1xf32>, vector<24x511xf32> -> vector<24x512xf32>
    %cst_18 = arith.constant 0.000000e+00 : f32
    %71 = vector.broadcast %cst_18 : f32 to vector<24x512xf32>
    %72 = vector.shape_cast %21 : vector<1x512xi1> to vector<1x512xi1>
    %73 = vector.broadcast %72 : vector<1x512xi1> to vector<24x512xi1>
    %74 = arith.select %73, %70, %71 : vector<24x512xi1>, vector<24x512xf32>
    %c104 = arith.constant 104 : index
    %c0_19 = arith.constant 0 : index
    %75 = vector.load %arg7[%c104, %c0_19] : memref<200x512xf32, #tpu.memory_space<vmem>>, vector<24x512xf32>
    tpu.vector_store %arg7[%c104, %c0_19], %74 {strides = array<i32>} : memref<200x512xf32, #tpu.memory_space<vmem>>, vector<24x512xf32>,
    %c128 = arith.constant 128 : index
    %c0_20 = arith.constant 0 : index
    %76 = vector.load %arg7[%c128, %c0_20] : memref<200x512xf32, #tpu.memory_space<vmem>>, vector<24x512xf32>
    tpu.vector_store %arg7[%c128, %c0_20], %59 {strides = array<i32>} : memref<200x512xf32, #tpu.memory_space<vmem>>, vector<24x512xf32>,
    %77 = vector.extract_strided_slice %59 {offsets = [0, 1], sizes = [24, 511], strides = [1, 1]} : vector<24x512xf32> to vector<24x511xf32>
    %78 = vector.extract_strided_slice %59 {offsets = [0, 0], sizes = [24, 1], strides = [1, 1]} : vector<24x512xf32> to vector<24x1xf32>
    %79 = tpu.concatenate %77, %78 in 1 : vector<24x511xf32>, vector<24x1xf32> -> vector<24x512xf32>
    %cst_21 = arith.constant 0.000000e+00 : f32
    %80 = vector.broadcast %cst_21 : f32 to vector<24x512xf32>
    %81 = vector.shape_cast %23 : vector<1x512xi1> to vector<1x512xi1>
    %82 = vector.broadcast %81 : vector<1x512xi1> to vector<24x512xi1>
    %83 = arith.select %82, %79, %80 : vector<24x512xi1>, vector<24x512xf32>
    %c152 = arith.constant 152 : index
    %c0_22 = arith.constant 0 : index
    %84 = vector.load %arg7[%c152, %c0_22] : memref<200x512xf32, #tpu.memory_space<vmem>>, vector<24x512xf32>
    tpu.vector_store %arg7[%c152, %c0_22], %83 {strides = array<i32>} : memref<200x512xf32, #tpu.memory_space<vmem>>, vector<24x512xf32>,
    %85 = vector.extract_strided_slice %59 {offsets = [0, 2], sizes = [24, 510], strides = [1, 1]} : vector<24x512xf32> to vector<24x510xf32>
    %86 = vector.extract_strided_slice %59 {offsets = [0, 0], sizes = [24, 2], strides = [1, 1]} : vector<24x512xf32> to vector<24x2xf32>
    %87 = tpu.concatenate %85, %86 in 1 : vector<24x510xf32>, vector<24x2xf32> -> vector<24x512xf32>
    %cst_23 = arith.constant 0.000000e+00 : f32
    %88 = vector.broadcast %cst_23 : f32 to vector<24x512xf32>
    %89 = vector.shape_cast %25 : vector<1x512xi1> to vector<1x512xi1>
    %90 = vector.broadcast %89 : vector<1x512xi1> to vector<24x512xi1>
    %91 = arith.select %90, %87, %88 : vector<24x512xi1>, vector<24x512xf32>
    %c176 = arith.constant 176 : index
    %c0_24 = arith.constant 0 : index
    %92 = vector.load %arg7[%c176, %c0_24] : memref<200x512xf32, #tpu.memory_space<vmem>>, vector<24x512xf32>
    tpu.vector_store %arg7[%c176, %c0_24], %91 {strides = array<i32>} : memref<200x512xf32, #tpu.memory_space<vmem>>, vector<24x512xf32>,
    %c0_25 = arith.constant 0 : index
    %c0_26 = arith.constant 0 : index
    %93 = vector.load %arg3[%c0_25, %c0_26] : memref<48x200xf32, #tpu.memory_space<vmem>>, vector<48x200xf32>
    %c0_27 = arith.constant 0 : index
    %c0_28 = arith.constant 0 : index
    %94 = vector.load %arg7[%c0_27, %c0_28] : memref<200x512xf32, #tpu.memory_space<vmem>>, vector<200x512xf32>
    %cst_29 = arith.constant dense<0.000000e+00> : vector<48x512xf32>
    %95 = tpu.matmul %93, %94, %cst_29 {dimension_numbers = #tpu.dot_dimension_numbers<[1], [0], [0], [1], [0, 0, 1, 1], [], []>} : vector<48x200xf32>, vector<200x512xf32>, vector<48x512xf32> -> vector<48x512xf32>
    %c0_30 = arith.constant 0 : index
    %c0_31 = arith.constant 0 : index
    %96 = vector.load %arg5[%c0_30, %c0_31] : memref<48x1xf32, #tpu.memory_space<vmem>>, vector<48x1xf32>
    %97 = vector.broadcast %96 : vector<48x1xf32> to vector<48x512xf32>
    %98 = arith.addf %95, %97 : vector<48x512xf32>
    %99 = vector.extract_strided_slice %98 {offsets = [0, 0], sizes = [16, 512], strides = [1, 1]} : vector<48x512xf32> to vector<16x512xf32>
    %100 = arith.negf %99 : vector<16x512xf32>
    %101 = math.exp %100 : vector<16x512xf32>
    %cst_32 = arith.constant 1.000000e+00 : f32
    %102 = vector.broadcast %cst_32 : f32 to vector<16x512xf32>
    %103 = arith.addf %102, %101 : vector<16x512xf32>
    %104 = arith.divf %102, %103 : vector<16x512xf32>
    %105 = vector.extract_strided_slice %98 {offsets = [16, 0], sizes = [16, 512], strides = [1, 1]} : vector<48x512xf32> to vector<16x512xf32>
    %106 = arith.negf %105 : vector<16x512xf32>
    %107 = math.exp %106 : vector<16x512xf32>
    %cst_33 = arith.constant 1.000000e+00 : f32
    %108 = vector.broadcast %cst_33 : f32 to vector<16x512xf32>
    %109 = arith.addf %108, %107 : vector<16x512xf32>
    %110 = arith.divf %108, %109 : vector<16x512xf32>
    %111 = arith.mulf %110, %0 : vector<16x512xf32>
    %112 = vector.extract_strided_slice %111 {offsets = [0, 510], sizes = [16, 2], strides = [1, 1]} : vector<16x512xf32> to vector<16x2xf32>
    %113 = vector.extract_strided_slice %111 {offsets = [0, 0], sizes = [16, 510], strides = [1, 1]} : vector<16x512xf32> to vector<16x510xf32>
    %114 = tpu.concatenate %112, %113 in 1 : vector<16x2xf32>, vector<16x510xf32> -> vector<16x512xf32>
    %cst_34 = arith.constant 0.000000e+00 : f32
    %115 = vector.broadcast %cst_34 : f32 to vector<16x512xf32>
    %116 = vector.shape_cast %19 : vector<1x512xi1> to vector<1x512xi1>
    %117 = vector.broadcast %116 : vector<1x512xi1> to vector<16x512xi1>
    %118 = arith.select %117, %114, %115 : vector<16x512xi1>, vector<16x512xf32>
    %c0_35 = arith.constant 0 : index
    %c0_36 = arith.constant 0 : index
    %119 = vector.load %arg7[%c0_35, %c0_36] : memref<200x512xf32, #tpu.memory_space<vmem>>, vector<16x512xf32>
    tpu.vector_store %arg7[%c0_35, %c0_36], %118 {strides = array<i32>} : memref<200x512xf32, #tpu.memory_space<vmem>>, vector<16x512xf32>,
    %120 = vector.extract_strided_slice %111 {offsets = [0, 511], sizes = [16, 1], strides = [1, 1]} : vector<16x512xf32> to vector<16x1xf32>
    %121 = vector.extract_strided_slice %111 {offsets = [0, 0], sizes = [16, 511], strides = [1, 1]} : vector<16x512xf32> to vector<16x511xf32>
    %122 = tpu.concatenate %120, %121 in 1 : vector<16x1xf32>, vector<16x511xf32> -> vector<16x512xf32>
    %cst_37 = arith.constant 0.000000e+00 : f32
    %123 = vector.broadcast %cst_37 : f32 to vector<16x512xf32>
    %124 = vector.shape_cast %21 : vector<1x512xi1> to vector<1x512xi1>
    %125 = vector.broadcast %124 : vector<1x512xi1> to vector<16x512xi1>
    %126 = arith.select %125, %122, %123 : vector<16x512xi1>, vector<16x512xf32>
    %c16_38 = arith.constant 16 : index
    %c0_39 = arith.constant 0 : index
    %127 = vector.load %arg7[%c16_38, %c0_39] : memref<200x512xf32, #tpu.memory_space<vmem>>, vector<16x512xf32>
    tpu.vector_store %arg7[%c16_38, %c0_39], %126 {strides = array<i32>} : memref<200x512xf32, #tpu.memory_space<vmem>>, vector<16x512xf32>,
    %c32_40 = arith.constant 32 : index
    %c0_41 = arith.constant 0 : index
    %128 = vector.load %arg7[%c32_40, %c0_41] : memref<200x512xf32, #tpu.memory_space<vmem>>, vector<16x512xf32>
    tpu.vector_store %arg7[%c32_40, %c0_41], %111 {strides = array<i32>} : memref<200x512xf32, #tpu.memory_space<vmem>>, vector<16x512xf32>,
    %129 = vector.extract_strided_slice %111 {offsets = [0, 1], sizes = [16, 511], strides = [1, 1]} : vector<16x512xf32> to vector<16x511xf32>
    %130 = vector.extract_strided_slice %111 {offsets = [0, 0], sizes = [16, 1], strides = [1, 1]} : vector<16x512xf32> to vector<16x1xf32>
    %131 = tpu.concatenate %129, %130 in 1 : vector<16x511xf32>, vector<16x1xf32> -> vector<16x512xf32>
    %cst_42 = arith.constant 0.000000e+00 : f32
    %132 = vector.broadcast %cst_42 : f32 to vector<16x512xf32>
    %133 = vector.shape_cast %23 : vector<1x512xi1> to vector<1x512xi1>
    %134 = vector.broadcast %133 : vector<1x512xi1> to vector<16x512xi1>
    %135 = arith.select %134, %131, %132 : vector<16x512xi1>, vector<16x512xf32>
    %c48_43 = arith.constant 48 : index
    %c0_44 = arith.constant 0 : index
    %136 = vector.load %arg7[%c48_43, %c0_44] : memref<200x512xf32, #tpu.memory_space<vmem>>, vector<16x512xf32>
    tpu.vector_store %arg7[%c48_43, %c0_44], %135 {strides = array<i32>} : memref<200x512xf32, #tpu.memory_space<vmem>>, vector<16x512xf32>,
    %137 = vector.extract_strided_slice %111 {offsets = [0, 2], sizes = [16, 510], strides = [1, 1]} : vector<16x512xf32> to vector<16x510xf32>
    %138 = vector.extract_strided_slice %111 {offsets = [0, 0], sizes = [16, 2], strides = [1, 1]} : vector<16x512xf32> to vector<16x2xf32>
    %139 = tpu.concatenate %137, %138 in 1 : vector<16x510xf32>, vector<16x2xf32> -> vector<16x512xf32>
    %cst_45 = arith.constant 0.000000e+00 : f32
    %140 = vector.broadcast %cst_45 : f32 to vector<16x512xf32>
    %141 = vector.shape_cast %25 : vector<1x512xi1> to vector<1x512xi1>
    %142 = vector.broadcast %141 : vector<1x512xi1> to vector<16x512xi1>
    %143 = arith.select %142, %139, %140 : vector<16x512xi1>, vector<16x512xf32>
    %c64_46 = arith.constant 64 : index
    %c0_47 = arith.constant 0 : index
    %144 = vector.load %arg7[%c64_46, %c0_47] : memref<200x512xf32, #tpu.memory_space<vmem>>, vector<16x512xf32>
    tpu.vector_store %arg7[%c64_46, %c0_47], %143 {strides = array<i32>} : memref<200x512xf32, #tpu.memory_space<vmem>>, vector<16x512xf32>,
    %c0_48 = arith.constant 0 : index
    %c0_49 = arith.constant 0 : index
    %145 = vector.load %arg4[%c0_48, %c0_49] : memref<16x80xf32, #tpu.memory_space<vmem>>, vector<16x80xf32>
    %c0_50 = arith.constant 0 : index
    %c0_51 = arith.constant 0 : index
    %146 = vector.load %arg7[%c0_50, %c0_51] : memref<200x512xf32, #tpu.memory_space<vmem>>, vector<80x512xf32>
    %cst_52 = arith.constant dense<0.000000e+00> : vector<16x512xf32>
    %147 = tpu.matmul %145, %146, %cst_52 {dimension_numbers = #tpu.dot_dimension_numbers<[1], [0], [0], [1], [0, 0, 1, 1], [], []>} : vector<16x80xf32>, vector<80x512xf32>, vector<16x512xf32> -> vector<16x512xf32>
    %148 = vector.extract_strided_slice %98 {offsets = [32, 0], sizes = [16, 512], strides = [1, 1]} : vector<48x512xf32> to vector<16x512xf32>
    %149 = arith.addf %147, %148 : vector<16x512xf32>
    %150 = math.tanh %149 : vector<16x512xf32>
    %cst_53 = arith.constant 1.000000e+00 : f32
    %151 = vector.broadcast %cst_53 : f32 to vector<16x512xf32>
    %152 = arith.subf %151, %104 : vector<16x512xf32>
    %153 = arith.mulf %152, %0 : vector<16x512xf32>
    %154 = arith.mulf %104, %150 : vector<16x512xf32>
    %155 = arith.addf %153, %154 : vector<16x512xf32>
    %c0_54 = arith.constant 0 : index
    %c0_55 = arith.constant 0 : index
    %156 = vector.load %arg6[%c0_54, %c0_55] : memref<16x512xf32, #tpu.memory_space<vmem>>, vector<16x512xf32>
    tpu.vector_store %arg6[%c0_54, %c0_55], %155 {strides = array<i32>} : memref<16x512xf32, #tpu.memory_space<vmem>>, vector<16x512xf32>,
    return
  }
  func.func @transform_0(%arg0: i32) -> (i32, i32) {
    %c0_i32 = arith.constant 0 : i32
    %c0_i32_0 = arith.constant 0 : i32
    return %c0_i32, %arg0 : i32, i32
  }
  func.func @transform_1(%arg0: i32) -> (i32, i32) {
    %c0_i32 = arith.constant 0 : i32
    %c0_i32_0 = arith.constant 0 : i32
    return %c0_i32, %arg0 : i32, i32
  }
  func.func @transform_2(%arg0: i32) -> (i32, i32) {
    %c0_i32 = arith.constant 0 : i32
    %c0_i32_0 = arith.constant 0 : i32
    %c0_i32_1 = arith.constant 0 : i32
    return %c0_i32, %c0_i32_0 : i32, i32
  }
  func.func @transform_3(%arg0: i32) -> (i32, i32) {
    %c0_i32 = arith.constant 0 : i32
    %c0_i32_0 = arith.constant 0 : i32
    %c0_i32_1 = arith.constant 0 : i32
    return %c0_i32, %c0_i32_0 : i32, i32
  }
  func.func @transform_4(%arg0: i32) -> (i32, i32) {
    %c0_i32 = arith.constant 0 : i32
    %c0_i32_0 = arith.constant 0 : i32
    %c0_i32_1 = arith.constant 0 : i32
    return %c0_i32, %c0_i32_0 : i32, i32
  }
  func.func @transform_5(%arg0: i32) -> (i32, i32) {
    %c0_i32 = arith.constant 0 : i32
    %c0_i32_0 = arith.constant 0 : i32
    return %c0_i32, %arg0 : i32, i32
  }
}

module attributes {stable_mosaic.version = 11 : i64} {
  func.func @_gru_stage_kernel(%arg0: i32, %arg1: memref<16x512xf32, #tpu.memory_space<vmem>>, %arg2: memref<24x512xf32, #tpu.memory_space<vmem>>, %arg3: memref<48x200xf32, #tpu.memory_space<vmem>>, %arg4: memref<16x80xf32, #tpu.memory_space<vmem>>, %arg5: memref<48x1xf32, #tpu.memory_space<vmem>>, %arg6: memref<16x512xf32, #tpu.memory_space<vmem>>, %arg7: memref<200x512xf32, #tpu.memory_space<vmem>>) attributes {dimension_semantics = [#tpu.dimension_semantics<parallel>], iteration_bounds = array<i64: 1>, scalar_prefetch = 0 : i64, scratch_operands = 1 : i64, tpu.core_type = #tpu.core_type<tc>, window_params = [{transform_indices = @transform_0, window_bounds = array<i64: 16, 512>}, {transform_indices = @transform_1, window_bounds = array<i64: 24, 512>}, {pipeline_mode = #tpu.pipeline_mode<synchronous>, transform_indices = @transform_2, window_bounds = array<i64: 48, 200>}, {pipeline_mode = #tpu.pipeline_mode<synchronous>, transform_indices = @transform_3, window_bounds = array<i64: 16, 80>}, {pipeline_mode = #tpu.pipeline_mode<synchronous>, transform_indices = @transform_4, window_bounds = array<i64: 48, 1>}, {transform_indices = @transform_5, window_bounds = array<i64: 16, 512>}]} {
    %c0 = arith.constant 0 : index
    %c0_0 = arith.constant 0 : index
    %0 = vector.load %arg1[%c0, %c0_0] : memref<16x512xf32, #tpu.memory_space<vmem>>, vector<16x512xf32>
    %1 = tpu.iota {dimensions = array<i32: 1>} : vector<1x512xi32>
    %c4_i32 = arith.constant 4 : i32
    %c0_i32 = arith.constant 0 : i32
    %2 = arith.cmpi eq, %c4_i32, %c0_i32 : i32
    %c1_i32 = arith.constant 1 : i32
    %3 = arith.select %2, %c1_i32, %c4_i32 : i32
    %4 = vector.broadcast %3 : i32 to vector<1x512xi32>
    %5 = arith.remsi %1, %4 : vector<1x512xi32>
    %c0_i32_1 = arith.constant 0 : i32
    %6 = vector.broadcast %c0_i32_1 : i32 to vector<1x512xi32>
    %7 = arith.cmpi ne, %5, %6 : vector<1x512xi32>
    %c0_i32_2 = arith.constant 0 : i32
    %8 = vector.broadcast %c0_i32_2 : i32 to vector<1x512xi32>
    %9 = arith.cmpi slt, %5, %8 : vector<1x512xi32>
    %c0_i32_3 = arith.constant 0 : i32
    %10 = arith.cmpi slt, %3, %c0_i32_3 : i32
    %11 = vector.broadcast %10 : i1 to vector<1x512xi1>
    %12 = vector.broadcast %11 : vector<1x512xi1> to vector<1x512xi1>
    %13 = arith.xori %9, %12 : vector<1x512xi1>
    %14 = arith.andi %13, %7 : vector<1x512xi1>
    %15 = vector.broadcast %3 : i32 to vector<1x512xi32>
    %16 = arith.addi %5, %15 : vector<1x512xi32>
    %17 = arith.select %14, %16, %5 : vector<1x512xi1>, vector<1x512xi32>
    %c2_i32 = arith.constant 2 : i32
    %18 = vector.broadcast %c2_i32 : i32 to vector<1x512xi32>
    %19 = arith.cmpi sge, %17, %18 : vector<1x512xi32>
    %c1_i32_4 = arith.constant 1 : i32
    %20 = vector.broadcast %c1_i32_4 : i32 to vector<1x512xi32>
    %21 = arith.cmpi sge, %17, %20 : vector<1x512xi32>
    %c3_i32 = arith.constant 3 : i32
    %22 = vector.broadcast %c3_i32 : i32 to vector<1x512xi32>
    %23 = arith.cmpi slt, %17, %22 : vector<1x512xi32>
    %c2_i32_5 = arith.constant 2 : i32
    %24 = vector.broadcast %c2_i32_5 : i32 to vector<1x512xi32>
    %25 = arith.cmpi slt, %17, %24 : vector<1x512xi32>
    %26 = vector.extract_strided_slice %0 {offsets = [0, 510], sizes = [16, 2], strides = [1, 1]} : vector<16x512xf32> to vector<16x2xf32>
    %27 = vector.extract_strided_slice %0 {offsets = [0, 0], sizes = [16, 510], strides = [1, 1]} : vector<16x512xf32> to vector<16x510xf32>
    %28 = tpu.concatenate %26, %27 in 1 : vector<16x2xf32>, vector<16x510xf32> -> vector<16x512xf32>
    %cst = arith.constant 0.000000e+00 : f32
    %29 = vector.broadcast %cst : f32 to vector<16x512xf32>
    %30 = vector.shape_cast %19 : vector<1x512xi1> to vector<1x512xi1>
    %31 = vector.broadcast %30 : vector<1x512xi1> to vector<16x512xi1>
    %32 = arith.select %31, %28, %29 : vector<16x512xi1>, vector<16x512xf32>
    %c0_6 = arith.constant 0 : index
    %c0_7 = arith.constant 0 : index
    %33 = vector.load %arg7[%c0_6, %c0_7] : memref<200x512xf32, #tpu.memory_space<vmem>>, vector<16x512xf32>
    tpu.vector_store %arg7[%c0_6, %c0_7], %32 {strides = array<i32>} : memref<200x512xf32, #tpu.memory_space<vmem>>, vector<16x512xf32>,
    %34 = vector.extract_strided_slice %0 {offsets = [0, 511], sizes = [16, 1], strides = [1, 1]} : vector<16x512xf32> to vector<16x1xf32>
    %35 = vector.extract_strided_slice %0 {offsets = [0, 0], sizes = [16, 511], strides = [1, 1]} : vector<16x512xf32> to vector<16x511xf32>
    %36 = tpu.concatenate %34, %35 in 1 : vector<16x1xf32>, vector<16x511xf32> -> vector<16x512xf32>
    %cst_8 = arith.constant 0.000000e+00 : f32
    %37 = vector.broadcast %cst_8 : f32 to vector<16x512xf32>
    %38 = vector.shape_cast %21 : vector<1x512xi1> to vector<1x512xi1>
    %39 = vector.broadcast %38 : vector<1x512xi1> to vector<16x512xi1>
    %40 = arith.select %39, %36, %37 : vector<16x512xi1>, vector<16x512xf32>
    %c16 = arith.constant 16 : index
    %c0_9 = arith.constant 0 : index
    %41 = vector.load %arg7[%c16, %c0_9] : memref<200x512xf32, #tpu.memory_space<vmem>>, vector<16x512xf32>
    tpu.vector_store %arg7[%c16, %c0_9], %40 {strides = array<i32>} : memref<200x512xf32, #tpu.memory_space<vmem>>, vector<16x512xf32>,
    %c32 = arith.constant 32 : index
    %c0_10 = arith.constant 0 : index
    %42 = vector.load %arg7[%c32, %c0_10] : memref<200x512xf32, #tpu.memory_space<vmem>>, vector<16x512xf32>
    tpu.vector_store %arg7[%c32, %c0_10], %0 {strides = array<i32>} : memref<200x512xf32, #tpu.memory_space<vmem>>, vector<16x512xf32>,
    %43 = vector.extract_strided_slice %0 {offsets = [0, 1], sizes = [16, 511], strides = [1, 1]} : vector<16x512xf32> to vector<16x511xf32>
    %44 = vector.extract_strided_slice %0 {offsets = [0, 0], sizes = [16, 1], strides = [1, 1]} : vector<16x512xf32> to vector<16x1xf32>
    %45 = tpu.concatenate %43, %44 in 1 : vector<16x511xf32>, vector<16x1xf32> -> vector<16x512xf32>
    %cst_11 = arith.constant 0.000000e+00 : f32
    %46 = vector.broadcast %cst_11 : f32 to vector<16x512xf32>
    %47 = vector.shape_cast %23 : vector<1x512xi1> to vector<1x512xi1>
    %48 = vector.broadcast %47 : vector<1x512xi1> to vector<16x512xi1>
    %49 = arith.select %48, %45, %46 : vector<16x512xi1>, vector<16x512xf32>
    %c48 = arith.constant 48 : index
    %c0_12 = arith.constant 0 : index
    %50 = vector.load %arg7[%c48, %c0_12] : memref<200x512xf32, #tpu.memory_space<vmem>>, vector<16x512xf32>
    tpu.vector_store %arg7[%c48, %c0_12], %49 {strides = array<i32>} : memref<200x512xf32, #tpu.memory_space<vmem>>, vector<16x512xf32>,
    %51 = vector.extract_strided_slice %0 {offsets = [0, 2], sizes = [16, 510], strides = [1, 1]} : vector<16x512xf32> to vector<16x510xf32>
    %52 = vector.extract_strided_slice %0 {offsets = [0, 0], sizes = [16, 2], strides = [1, 1]} : vector<16x512xf32> to vector<16x2xf32>
    %53 = tpu.concatenate %51, %52 in 1 : vector<16x510xf32>, vector<16x2xf32> -> vector<16x512xf32>
    %cst_13 = arith.constant 0.000000e+00 : f32
    %54 = vector.broadcast %cst_13 : f32 to vector<16x512xf32>
    %55 = vector.shape_cast %25 : vector<1x512xi1> to vector<1x512xi1>
    %56 = vector.broadcast %55 : vector<1x512xi1> to vector<16x512xi1>
    %57 = arith.select %56, %53, %54 : vector<16x512xi1>, vector<16x512xf32>
    %c64 = arith.constant 64 : index
    %c0_14 = arith.constant 0 : index
    %58 = vector.load %arg7[%c64, %c0_14] : memref<200x512xf32, #tpu.memory_space<vmem>>, vector<16x512xf32>
    tpu.vector_store %arg7[%c64, %c0_14], %57 {strides = array<i32>} : memref<200x512xf32, #tpu.memory_space<vmem>>, vector<16x512xf32>,
    %c0_15 = arith.constant 0 : index
    %c0_16 = arith.constant 0 : index
    %59 = vector.load %arg2[%c0_15, %c0_16] : memref<24x512xf32, #tpu.memory_space<vmem>>, vector<24x512xf32>
    %60 = vector.extract_strided_slice %59 {offsets = [0, 510], sizes = [24, 2], strides = [1, 1]} : vector<24x512xf32> to vector<24x2xf32>
    %61 = vector.extract_strided_slice %59 {offsets = [0, 0], sizes = [24, 510], strides = [1, 1]} : vector<24x512xf32> to vector<24x510xf32>
    %62 = tpu.concatenate %60, %61 in 1 : vector<24x2xf32>, vector<24x510xf32> -> vector<24x512xf32>
    %cst_17 = arith.constant 0.000000e+00 : f32
    %63 = vector.broadcast %cst_17 : f32 to vector<24x512xf32>
    %64 = vector.shape_cast %19 : vector<1x512xi1> to vector<1x512xi1>
    %65 = vector.broadcast %64 : vector<1x512xi1> to vector<24x512xi1>
    %66 = arith.select %65, %62, %63 : vector<24x512xi1>, vector<24x512xf32>
    %c80 = arith.constant 80 : index
    %c0_18 = arith.constant 0 : index
    %67 = vector.load %arg7[%c80, %c0_18] : memref<200x512xf32, #tpu.memory_space<vmem>>, vector<24x512xf32>
    tpu.vector_store %arg7[%c80, %c0_18], %66 {strides = array<i32>} : memref<200x512xf32, #tpu.memory_space<vmem>>, vector<24x512xf32>,
    %68 = vector.extract_strided_slice %59 {offsets = [0, 511], sizes = [24, 1], strides = [1, 1]} : vector<24x512xf32> to vector<24x1xf32>
    %69 = vector.extract_strided_slice %59 {offsets = [0, 0], sizes = [24, 511], strides = [1, 1]} : vector<24x512xf32> to vector<24x511xf32>
    %70 = tpu.concatenate %68, %69 in 1 : vector<24x1xf32>, vector<24x511xf32> -> vector<24x512xf32>
    %cst_19 = arith.constant 0.000000e+00 : f32
    %71 = vector.broadcast %cst_19 : f32 to vector<24x512xf32>
    %72 = vector.shape_cast %21 : vector<1x512xi1> to vector<1x512xi1>
    %73 = vector.broadcast %72 : vector<1x512xi1> to vector<24x512xi1>
    %74 = arith.select %73, %70, %71 : vector<24x512xi1>, vector<24x512xf32>
    %c104 = arith.constant 104 : index
    %c0_20 = arith.constant 0 : index
    %75 = vector.load %arg7[%c104, %c0_20] : memref<200x512xf32, #tpu.memory_space<vmem>>, vector<24x512xf32>
    tpu.vector_store %arg7[%c104, %c0_20], %74 {strides = array<i32>} : memref<200x512xf32, #tpu.memory_space<vmem>>, vector<24x512xf32>,
    %c128 = arith.constant 128 : index
    %c0_21 = arith.constant 0 : index
    %76 = vector.load %arg7[%c128, %c0_21] : memref<200x512xf32, #tpu.memory_space<vmem>>, vector<24x512xf32>
    tpu.vector_store %arg7[%c128, %c0_21], %59 {strides = array<i32>} : memref<200x512xf32, #tpu.memory_space<vmem>>, vector<24x512xf32>,
    %77 = vector.extract_strided_slice %59 {offsets = [0, 1], sizes = [24, 511], strides = [1, 1]} : vector<24x512xf32> to vector<24x511xf32>
    %78 = vector.extract_strided_slice %59 {offsets = [0, 0], sizes = [24, 1], strides = [1, 1]} : vector<24x512xf32> to vector<24x1xf32>
    %79 = tpu.concatenate %77, %78 in 1 : vector<24x511xf32>, vector<24x1xf32> -> vector<24x512xf32>
    %cst_22 = arith.constant 0.000000e+00 : f32
    %80 = vector.broadcast %cst_22 : f32 to vector<24x512xf32>
    %81 = vector.shape_cast %23 : vector<1x512xi1> to vector<1x512xi1>
    %82 = vector.broadcast %81 : vector<1x512xi1> to vector<24x512xi1>
    %83 = arith.select %82, %79, %80 : vector<24x512xi1>, vector<24x512xf32>
    %c152 = arith.constant 152 : index
    %c0_23 = arith.constant 0 : index
    %84 = vector.load %arg7[%c152, %c0_23] : memref<200x512xf32, #tpu.memory_space<vmem>>, vector<24x512xf32>
    tpu.vector_store %arg7[%c152, %c0_23], %83 {strides = array<i32>} : memref<200x512xf32, #tpu.memory_space<vmem>>, vector<24x512xf32>,
    %85 = vector.extract_strided_slice %59 {offsets = [0, 2], sizes = [24, 510], strides = [1, 1]} : vector<24x512xf32> to vector<24x510xf32>
    %86 = vector.extract_strided_slice %59 {offsets = [0, 0], sizes = [24, 2], strides = [1, 1]} : vector<24x512xf32> to vector<24x2xf32>
    %87 = tpu.concatenate %85, %86 in 1 : vector<24x510xf32>, vector<24x2xf32> -> vector<24x512xf32>
    %cst_24 = arith.constant 0.000000e+00 : f32
    %88 = vector.broadcast %cst_24 : f32 to vector<24x512xf32>
    %89 = vector.shape_cast %25 : vector<1x512xi1> to vector<1x512xi1>
    %90 = vector.broadcast %89 : vector<1x512xi1> to vector<24x512xi1>
    %91 = arith.select %90, %87, %88 : vector<24x512xi1>, vector<24x512xf32>
    %c176 = arith.constant 176 : index
    %c0_25 = arith.constant 0 : index
    %92 = vector.load %arg7[%c176, %c0_25] : memref<200x512xf32, #tpu.memory_space<vmem>>, vector<24x512xf32>
    tpu.vector_store %arg7[%c176, %c0_25], %91 {strides = array<i32>} : memref<200x512xf32, #tpu.memory_space<vmem>>, vector<24x512xf32>,
    %c0_26 = arith.constant 0 : index
    %c0_27 = arith.constant 0 : index
    %93 = vector.load %arg3[%c0_26, %c0_27] : memref<48x200xf32, #tpu.memory_space<vmem>>, vector<48x200xf32>
    %c0_28 = arith.constant 0 : index
    %c0_29 = arith.constant 0 : index
    %94 = vector.load %arg7[%c0_28, %c0_29] : memref<200x512xf32, #tpu.memory_space<vmem>>, vector<200x512xf32>
    %cst_30 = arith.constant dense<0.000000e+00> : vector<48x512xf32>
    %95 = tpu.matmul %93, %94, %cst_30 {dimension_numbers = #tpu.dot_dimension_numbers<[1], [0], [0], [1], [0, 0, 1, 1], [], []>} : vector<48x200xf32>, vector<200x512xf32>, vector<48x512xf32> -> vector<48x512xf32>
    %c0_31 = arith.constant 0 : index
    %c0_32 = arith.constant 0 : index
    %96 = vector.load %arg5[%c0_31, %c0_32] : memref<48x1xf32, #tpu.memory_space<vmem>>, vector<48x1xf32>
    %97 = vector.broadcast %96 : vector<48x1xf32> to vector<48x512xf32>
    %98 = arith.addf %95, %97 : vector<48x512xf32>
    %99 = vector.extract_strided_slice %98 {offsets = [0, 0], sizes = [16, 512], strides = [1, 1]} : vector<48x512xf32> to vector<16x512xf32>
    %100 = arith.negf %99 : vector<16x512xf32>
    %101 = math.exp %100 : vector<16x512xf32>
    %cst_33 = arith.constant 1.000000e+00 : f32
    %102 = vector.broadcast %cst_33 : f32 to vector<16x512xf32>
    %103 = arith.addf %102, %101 : vector<16x512xf32>
    %104 = arith.divf %102, %103 : vector<16x512xf32>
    %105 = vector.extract_strided_slice %98 {offsets = [16, 0], sizes = [16, 512], strides = [1, 1]} : vector<48x512xf32> to vector<16x512xf32>
    %106 = arith.negf %105 : vector<16x512xf32>
    %107 = math.exp %106 : vector<16x512xf32>
    %cst_34 = arith.constant 1.000000e+00 : f32
    %108 = vector.broadcast %cst_34 : f32 to vector<16x512xf32>
    %109 = arith.addf %108, %107 : vector<16x512xf32>
    %110 = arith.divf %108, %109 : vector<16x512xf32>
    %111 = arith.mulf %110, %0 : vector<16x512xf32>
    %112 = vector.extract_strided_slice %111 {offsets = [0, 510], sizes = [16, 2], strides = [1, 1]} : vector<16x512xf32> to vector<16x2xf32>
    %113 = vector.extract_strided_slice %111 {offsets = [0, 0], sizes = [16, 510], strides = [1, 1]} : vector<16x512xf32> to vector<16x510xf32>
    %114 = tpu.concatenate %112, %113 in 1 : vector<16x2xf32>, vector<16x510xf32> -> vector<16x512xf32>
    %cst_35 = arith.constant 0.000000e+00 : f32
    %115 = vector.broadcast %cst_35 : f32 to vector<16x512xf32>
    %116 = vector.shape_cast %19 : vector<1x512xi1> to vector<1x512xi1>
    %117 = vector.broadcast %116 : vector<1x512xi1> to vector<16x512xi1>
    %118 = arith.select %117, %114, %115 : vector<16x512xi1>, vector<16x512xf32>
    %c0_36 = arith.constant 0 : index
    %c0_37 = arith.constant 0 : index
    %119 = vector.load %arg7[%c0_36, %c0_37] : memref<200x512xf32, #tpu.memory_space<vmem>>, vector<16x512xf32>
    tpu.vector_store %arg7[%c0_36, %c0_37], %118 {strides = array<i32>} : memref<200x512xf32, #tpu.memory_space<vmem>>, vector<16x512xf32>,
    %120 = vector.extract_strided_slice %111 {offsets = [0, 511], sizes = [16, 1], strides = [1, 1]} : vector<16x512xf32> to vector<16x1xf32>
    %121 = vector.extract_strided_slice %111 {offsets = [0, 0], sizes = [16, 511], strides = [1, 1]} : vector<16x512xf32> to vector<16x511xf32>
    %122 = tpu.concatenate %120, %121 in 1 : vector<16x1xf32>, vector<16x511xf32> -> vector<16x512xf32>
    %cst_38 = arith.constant 0.000000e+00 : f32
    %123 = vector.broadcast %cst_38 : f32 to vector<16x512xf32>
    %124 = vector.shape_cast %21 : vector<1x512xi1> to vector<1x512xi1>
    %125 = vector.broadcast %124 : vector<1x512xi1> to vector<16x512xi1>
    %126 = arith.select %125, %122, %123 : vector<16x512xi1>, vector<16x512xf32>
    %c16_39 = arith.constant 16 : index
    %c0_40 = arith.constant 0 : index
    %127 = vector.load %arg7[%c16_39, %c0_40] : memref<200x512xf32, #tpu.memory_space<vmem>>, vector<16x512xf32>
    tpu.vector_store %arg7[%c16_39, %c0_40], %126 {strides = array<i32>} : memref<200x512xf32, #tpu.memory_space<vmem>>, vector<16x512xf32>,
    %c32_41 = arith.constant 32 : index
    %c0_42 = arith.constant 0 : index
    %128 = vector.load %arg7[%c32_41, %c0_42] : memref<200x512xf32, #tpu.memory_space<vmem>>, vector<16x512xf32>
    tpu.vector_store %arg7[%c32_41, %c0_42], %111 {strides = array<i32>} : memref<200x512xf32, #tpu.memory_space<vmem>>, vector<16x512xf32>,
    %129 = vector.extract_strided_slice %111 {offsets = [0, 1], sizes = [16, 511], strides = [1, 1]} : vector<16x512xf32> to vector<16x511xf32>
    %130 = vector.extract_strided_slice %111 {offsets = [0, 0], sizes = [16, 1], strides = [1, 1]} : vector<16x512xf32> to vector<16x1xf32>
    %131 = tpu.concatenate %129, %130 in 1 : vector<16x511xf32>, vector<16x1xf32> -> vector<16x512xf32>
    %cst_43 = arith.constant 0.000000e+00 : f32
    %132 = vector.broadcast %cst_43 : f32 to vector<16x512xf32>
    %133 = vector.shape_cast %23 : vector<1x512xi1> to vector<1x512xi1>
    %134 = vector.broadcast %133 : vector<1x512xi1> to vector<16x512xi1>
    %135 = arith.select %134, %131, %132 : vector<16x512xi1>, vector<16x512xf32>
    %c48_44 = arith.constant 48 : index
    %c0_45 = arith.constant 0 : index
    %136 = vector.load %arg7[%c48_44, %c0_45] : memref<200x512xf32, #tpu.memory_space<vmem>>, vector<16x512xf32>
    tpu.vector_store %arg7[%c48_44, %c0_45], %135 {strides = array<i32>} : memref<200x512xf32, #tpu.memory_space<vmem>>, vector<16x512xf32>,
    %137 = vector.extract_strided_slice %111 {offsets = [0, 2], sizes = [16, 510], strides = [1, 1]} : vector<16x512xf32> to vector<16x510xf32>
    %138 = vector.extract_strided_slice %111 {offsets = [0, 0], sizes = [16, 2], strides = [1, 1]} : vector<16x512xf32> to vector<16x2xf32>
    %139 = tpu.concatenate %137, %138 in 1 : vector<16x510xf32>, vector<16x2xf32> -> vector<16x512xf32>
    %cst_46 = arith.constant 0.000000e+00 : f32
    %140 = vector.broadcast %cst_46 : f32 to vector<16x512xf32>
    %141 = vector.shape_cast %25 : vector<1x512xi1> to vector<1x512xi1>
    %142 = vector.broadcast %141 : vector<1x512xi1> to vector<16x512xi1>
    %143 = arith.select %142, %139, %140 : vector<16x512xi1>, vector<16x512xf32>
    %c64_47 = arith.constant 64 : index
    %c0_48 = arith.constant 0 : index
    %144 = vector.load %arg7[%c64_47, %c0_48] : memref<200x512xf32, #tpu.memory_space<vmem>>, vector<16x512xf32>
    tpu.vector_store %arg7[%c64_47, %c0_48], %143 {strides = array<i32>} : memref<200x512xf32, #tpu.memory_space<vmem>>, vector<16x512xf32>,
    %c0_49 = arith.constant 0 : index
    %c0_50 = arith.constant 0 : index
    %145 = vector.load %arg4[%c0_49, %c0_50] : memref<16x80xf32, #tpu.memory_space<vmem>>, vector<16x80xf32>
    %c0_51 = arith.constant 0 : index
    %c0_52 = arith.constant 0 : index
    %146 = vector.load %arg7[%c0_51, %c0_52] : memref<200x512xf32, #tpu.memory_space<vmem>>, vector<80x512xf32>
    %cst_53 = arith.constant dense<0.000000e+00> : vector<16x512xf32>
    %147 = tpu.matmul %145, %146, %cst_53 {dimension_numbers = #tpu.dot_dimension_numbers<[1], [0], [0], [1], [0, 0, 1, 1], [], []>} : vector<16x80xf32>, vector<80x512xf32>, vector<16x512xf32> -> vector<16x512xf32>
    %148 = vector.extract_strided_slice %98 {offsets = [32, 0], sizes = [16, 512], strides = [1, 1]} : vector<48x512xf32> to vector<16x512xf32>
    %149 = arith.addf %147, %148 : vector<16x512xf32>
    %150 = math.tanh %149 : vector<16x512xf32>
    %cst_54 = arith.constant 1.000000e+00 : f32
    %151 = vector.broadcast %cst_54 : f32 to vector<16x512xf32>
    %152 = arith.subf %151, %104 : vector<16x512xf32>
    %153 = arith.mulf %152, %0 : vector<16x512xf32>
    %154 = arith.mulf %104, %150 : vector<16x512xf32>
    %155 = arith.addf %153, %154 : vector<16x512xf32>
    %c0_55 = arith.constant 0 : index
    %c0_56 = arith.constant 0 : index
    %156 = vector.load %arg6[%c0_55, %c0_56] : memref<16x512xf32, #tpu.memory_space<vmem>>, vector<16x512xf32>
    tpu.vector_store %arg6[%c0_55, %c0_56], %155 {strides = array<i32>} : memref<16x512xf32, #tpu.memory_space<vmem>>, vector<16x512xf32>,
    return
  }
  func.func @transform_0(%arg0: i32) -> (i32, i32) {
    %c0_i32 = arith.constant 0 : i32
    %c0_i32_0 = arith.constant 0 : i32
    return %c0_i32, %arg0 : i32, i32
  }
  func.func @transform_1(%arg0: i32) -> (i32, i32) {
    %c0_i32 = arith.constant 0 : i32
    %c0_i32_0 = arith.constant 0 : i32
    return %c0_i32, %arg0 : i32, i32
  }
  func.func @transform_2(%arg0: i32) -> (i32, i32) {
    %c0_i32 = arith.constant 0 : i32
    %c0_i32_0 = arith.constant 0 : i32
    %c0_i32_1 = arith.constant 0 : i32
    return %c0_i32, %c0_i32_0 : i32, i32
  }
  func.func @transform_3(%arg0: i32) -> (i32, i32) {
    %c0_i32 = arith.constant 0 : i32
    %c0_i32_0 = arith.constant 0 : i32
    %c0_i32_1 = arith.constant 0 : i32
    return %c0_i32, %c0_i32_0 : i32, i32
  }
  func.func @transform_4(%arg0: i32) -> (i32, i32) {
    %c0_i32 = arith.constant 0 : i32
    %c0_i32_0 = arith.constant 0 : i32
    %c0_i32_1 = arith.constant 0 : i32
    return %c0_i32, %c0_i32_0 : i32, i32
  }
  func.func @transform_5(%arg0: i32) -> (i32, i32) {
    %c0_i32 = arith.constant 0 : i32
    %c0_i32_0 = arith.constant 0 : i32
    return %c0_i32, %arg0 : i32, i32
  }
}

</mosaic_0001>

<llo_original>
// kernel: sep_conv_gru3d_forward.3
$region0: #{sep_conv_gru3d_forward.3}
  #allocation0 [shape = 'u32[]', space=smem, size = 0x4, offset = 0x4, fixed_abs, tag = 'smem constant byte address 0x4 - core index']
  #allocation1 [shape = 'u32[144,128]{1,0:T(1,128)}', space=vmem, size = 0x12000, scoped, tag = 'internal scratch']
  #allocation2 [shape = 'f32[200,512]{1,0:T(8,128)}', space=vmem, size = 0x64000, scoped, tag = 'scratch operand']
  %s0 = inlined_call_operand.vmem [shape: f32[16,512], index: 0, kind: input, shape index: {}, may-alias: {0,5}]
  %s1 = inlined_call_operand.vmem [shape: f32[24,512], index: 1, kind: input, shape index: {}]
  %s2 = inlined_call_operand.vmem [shape: f32[48,200], index: 2, kind: input, shape index: {}]
  %s3 = inlined_call_operand.vmem [shape: f32[16,80], index: 3, kind: input, shape index: {}]
  %s4 = inlined_call_operand.vmem [shape: f32[48,1], index: 4, kind: input, shape index: {}]
  %s5 = inlined_call_operand.vmem [shape: f32[16,512], index: 5, kind: output, shape index: {}, may-alias: {0,5}]
  %s6 = sld [smem:[#allocation0]]
  $region30: #{sep_conv_gru3d_forward.3} parent=0
    _
  %s8 = ssub.s32 1, %s6
  %s9 = scalar_select 0, %s8, %s6
  // Predicated region
  $region2: #{sep_conv_gru3d_forward.3} parent=0 // pred_check
    _
  $region3: #{sep_conv_gru3d_forward.3} parent=0 // pred_check_branch
    %11 = sbr.rel (0) target = $region5
  $region4: #{sep_conv_gru3d_forward.3} parent=0 // pred_region
    _
  $region5: #{sep_conv_gru3d_forward.3} parent=0 // pred_fallthru
    _
  // Predicated region
  $region6: #{sep_conv_gru3d_forward.3} parent=0 // pred_check
    _
  $region7: #{sep_conv_gru3d_forward.3} parent=0 // pred_check_branch
    %13 = sbr.rel (0) target = $region9
  $region8: #{sep_conv_gru3d_forward.3} parent=0 // pred_region
    _
  $region9: #{sep_conv_gru3d_forward.3} parent=0 // pred_fallthru
    _
  // Predicated region
  $region10: #{sep_conv_gru3d_forward.3} parent=0 // pred_check
    _
  $region11: #{sep_conv_gru3d_forward.3} parent=0 // pred_check_branch
    %15 = sbr.rel (0) target = $region13
  $region12: #{sep_conv_gru3d_forward.3} parent=0 // pred_region
    _
  $region13: #{sep_conv_gru3d_forward.3} parent=0 // pred_fallthru
    _
  // Predicated region
  $region14: #{sep_conv_gru3d_forward.3} parent=0 // pred_check
    _
  $region15: #{sep_conv_gru3d_forward.3} parent=0 // pred_check_branch
    %17 = sbr.rel (0) target = $region17
  $region16: #{sep_conv_gru3d_forward.3} parent=0 // pred_region
    _
  $region17: #{sep_conv_gru3d_forward.3} parent=0 // pred_fallthru
    _
  // Predicated region
  $region18: #{sep_conv_gru3d_forward.3} parent=0 // pred_check
    _
  $region19: #{sep_conv_gru3d_forward.3} parent=0 // pred_check_branch
    %19 = sbr.rel (0) target = $region21
  $region20: #{sep_conv_gru3d_forward.3} parent=0 // pred_region
    _
  $region21: #{sep_conv_gru3d_forward.3} parent=0 // pred_fallthru
    _
  %v20 = vld [vmem:[%s0] sm:$0xff]
  %v21 = vld [vmem:[%s0 + $0x8] sm:$0xff]
  %v22 = vld [vmem:[%s0 + $0x10] sm:$0xff]
  %v23 = vld [vmem:[%s0 + $0x18] sm:$0xff]
  %v24 = vld [vmem:[%s0 + $0x20] sm:$0xff]
  %v25 = vld [vmem:[%s0 + $0x28] sm:$0xff]
  %v26 = vld [vmem:[%s0 + $0x30] sm:$0xff]
  %v27 = vld [vmem:[%s0 + $0x38] sm:$0xff]
  %v28 = vlaneseq
  %v29 = vand.u32 %v28, 127
  %v30 = vadd.s32 %v29, 128
  %v31 = vadd.s32 %v29, 256
  %v32 = vadd.s32 %v29, 384
  %vm33 = vcmp.lt.s32.totalorder %v29, 0
  %v34 = vsub.s32 0, %v29
  %v35 = vsel %vm33, %v34, %v29
  %v36 = vshrl.u32 %v35, 3
  %v37 = vand.u32 %v35, 7
  %v38 = vsub.s32 0, %v37
  %v39 = vsel %vm33, %v38, %v37
  %vm40 = vcmp.lt.s32.totalorder %v30, 0
  %v41 = vsub.s32 0, %v30
  %v42 = vsel %vm40, %v41, %v30
  %v43 = vshrl.u32 %v42, 3
  %v44 = vand.u32 %v42, 7
  %v45 = vsub.s32 0, %v44
  %v46 = vsel %vm40, %v45, %v44
  %vm47 = vcmp.lt.s32.totalorder %v31, 0
  %v48 = vsub.s32 0, %v31
  %v49 = vsel %vm47, %v48, %v31
  %v50 = vshrl.u32 %v49, 3
  %v51 = vand.u32 %v49, 7
  %v52 = vsub.s32 0, %v51
  %v53 = vsel %vm47, %v52, %v51
  %vm54 = vcmp.lt.s32.totalorder %v32, 0
  %v55 = vsub.s32 0, %v32
  %v56 = vsel %vm54, %v55, %v32
  %v57 = vshrl.u32 %v56, 3
  %v58 = vand.u32 %v56, 7
  %v59 = vsub.s32 0, %v58
  %v60 = vsel %vm54, %v59, %v58
  %vm61 = vcmp.ne.s32.totalorder %v39, 0
  %vm62 = vcmp.ne.s32.totalorder %v46, 0
  %vm63 = vcmp.ne.s32.totalorder %v53, 0
  %vm64 = vcmp.ne.s32.totalorder %v60, 0
  %vm65 = vcmp.lt.s32.totalorder %v39, 0
  %vm66 = vcmp.lt.s32.totalorder %v46, 0
  %vm67 = vcmp.lt.s32.totalorder %v53, 0
  %vm68 = vcmp.lt.s32.totalorder %v60, 0
  %vm69 = vmand %vm65, %vm61
  %vm70 = vmand %vm66, %vm62
  %vm71 = vmand %vm67, %vm63
  %vm72 = vmand %vm68, %vm64
  %v73 = vadd.s32 %v39, 8
  %v74 = vadd.s32 %v46, 8
  %v75 = vadd.s32 %v53, 8
  %v76 = vadd.s32 %v60, 8
  %v77 = vsel %vm69, %v73, %v39
  %v78 = vsel %vm70, %v74, %v46
  %v79 = vsel %vm71, %v75, %v53
  %v80 = vsel %vm72, %v76, %v60
  %vm81 = vcmp.ge.s32.totalorder %v77, 2
  %vm82 = vcmp.ge.s32.totalorder %v78, 2
  %vm83 = vcmp.ge.s32.totalorder %v79, 2
  %vm84 = vcmp.ge.s32.totalorder %v80, 2
  %vm85 = vcmp.ge.s32.totalorder %v77, 1
  %vm86 = vcmp.ge.s32.totalorder %v78, 1
  %vm87 = vcmp.ge.s32.totalorder %v79, 1
  %vm88 = vcmp.ge.s32.totalorder %v80, 1
  %vm89 = vcmp.lt.s32.totalorder %v77, 7
  %vm90 = vcmp.lt.s32.totalorder %v78, 7
  %vm91 = vcmp.lt.s32.totalorder %v79, 7
  %vm92 = vcmp.lt.s32.totalorder %v80, 7
  %vm93 = vcmp.lt.s32.totalorder %v77, 6
  %vm94 = vcmp.lt.s32.totalorder %v78, 6
  %vm95 = vcmp.lt.s32.totalorder %v79, 6
  %vm96 = vcmp.lt.s32.totalorder %v80, 6
  %97 = vrot.lane.b32.xlu0 %v20, 2
  %v98 = vpop.permute.xlu0 %97
  %99 = vrot.lane.b32.xlu0 %v24, 2
  %v100 = vpop.permute.xlu0 %99
  %101 = vrot.lane.b32.xlu0 %v21, 2
  %v102 = vpop.permute.xlu0 %101
  %103 = vrot.lane.b32.xlu0 %v25, 2
  %v104 = vpop.permute.xlu0 %103
  %105 = vrot.lane.b32.xlu0 %v22, 2
  %v106 = vpop.permute.xlu0 %105
  %107 = vrot.lane.b32.xlu0 %v26, 2
  %v108 = vpop.permute.xlu0 %107
  %109 = vrot.lane.b32.xlu0 %v23, 2
  %v110 = vpop.permute.xlu0 %109
  %111 = vrot.lane.b32.xlu0 %v27, 2
  %v112 = vpop.permute.xlu0 %111
  %vm113 = vcmp.lt.s32.totalorder %v29, 2
  %v114 = vsel %vm113, %v106, %v110
  %v115 = vsel %vm113, %v108, %v112
  %v116 = vsel %vm113, %v102, %v106
  %v117 = vsel %vm113, %v104, %v108
  %v118 = vsel %vm113, %v98, %v102
  %v119 = vsel %vm113, %v100, %v104
  %v120 = vsel %vm113, %v110, %v98
  %v121 = vsel %vm113, %v112, %v100
  %v122 = vsel %vm81, 1, 0
  %v123 = vsel %vm82, 1, 0
  %v124 = vsel %vm83, 1, 0
  %v125 = vsel %vm84, 1, 0
  %vm126 = vcmp.eq.s32.totalorder %v122, 1
  %vm127 = vcmp.eq.s32.totalorder %v123, 1
  %vm128 = vcmp.eq.s32.totalorder %v124, 1
  %vm129 = vcmp.eq.s32.totalorder %v125, 1
  %v130 = vsel %vm126, %v120, 0.0
  %v131 = vsel %vm127, %v118, 0.0
  %v132 = vsel %vm128, %v116, 0.0
  %v133 = vsel %vm129, %v114, 0.0
  %v134 = vsel %vm126, %v121, 0.0
  %v135 = vsel %vm127, %v119, 0.0
  %v136 = vsel %vm128, %v117, 0.0
  %v137 = vsel %vm129, %v115, 0.0
  %138 = vst [vmem:[#allocation2] sm:$0xff] %v130
  %139 = vst [vmem:[#allocation2 + $0x8] sm:$0xff] %v131
  %140 = vst [vmem:[#allocation2 + $0x10] sm:$0xff] %v132
  %141 = vst [vmem:[#allocation2 + $0x18] sm:$0xff] %v133
  %142 = vst [vmem:[#allocation2 + $0x20] sm:$0xff] %v134
  %143 = vst [vmem:[#allocation2 + $0x28] sm:$0xff] %v135
  %144 = vst [vmem:[#allocation2 + $0x30] sm:$0xff] %v136
  %145 = vst [vmem:[#allocation2 + $0x38] sm:$0xff] %v137
  %146 = vrot.lane.b32.xlu0 %v20, 1
  %v147 = vpop.permute.xlu0 %146
  %148 = vrot.lane.b32.xlu0 %v24, 1
  %v149 = vpop.permute.xlu0 %148
  %150 = vrot.lane.b32.xlu0 %v21, 1
  %v151 = vpop.permute.xlu0 %150
  %152 = vrot.lane.b32.xlu0 %v25, 1
  %v153 = vpop.permute.xlu0 %152
  %154 = vrot.lane.b32.xlu0 %v22, 1
  %v155 = vpop.permute.xlu0 %154
  %156 = vrot.lane.b32.xlu0 %v26, 1
  %v157 = vpop.permute.xlu0 %156
  %158 = vrot.lane.b32.xlu0 %v23, 1
  %v159 = vpop.permute.xlu0 %158
  %160 = vrot.lane.b32.xlu0 %v27, 1
  %v161 = vpop.permute.xlu0 %160
  %vm162 = vcmp.lt.s32.totalorder %v29, 1
  %v163 = vsel %vm162, %v155, %v159
  %v164 = vsel %vm162, %v157, %v161
  %v165 = vsel %vm162, %v151, %v155
  %v166 = vsel %vm162, %v153, %v157
  %v167 = vsel %vm162, %v147, %v151
  %v168 = vsel %vm162, %v149, %v153
  %v169 = vsel %vm162, %v159, %v147
  %v170 = vsel %vm162, %v161, %v149
  %v171 = vsel %vm85, 1, 0
  %v172 = vsel %vm86, 1, 0
  %v173 = vsel %vm87, 1, 0
  %v174 = vsel %vm88, 1, 0
  %vm175 = vcmp.eq.s32.totalorder %v171, 1
  %vm176 = vcmp.eq.s32.totalorder %v172, 1
  %vm177 = vcmp.eq.s32.totalorder %v173, 1
  %vm178 = vcmp.eq.s32.totalorder %v174, 1
  %v179 = vsel %vm175, %v169, 0.0
  %v180 = vsel %vm176, %v167, 0.0
  %v181 = vsel %vm177, %v165, 0.0
  %v182 = vsel %vm178, %v163, 0.0
  %v183 = vsel %vm175, %v170, 0.0
  %v184 = vsel %vm176, %v168, 0.0
  %v185 = vsel %vm177, %v166, 0.0
  %v186 = vsel %vm178, %v164, 0.0
  %187 = vst [vmem:[#allocation2 + $0x40] sm:$0xff] %v179
  %188 = vst [vmem:[#allocation2 + $0x48] sm:$0xff] %v180
  %189 = vst [vmem:[#allocation2 + $0x50] sm:$0xff] %v181
  %190 = vst [vmem:[#allocation2 + $0x58] sm:$0xff] %v182
  %191 = vst [vmem:[#allocation2 + $0x60] sm:$0xff] %v183
  %192 = vst [vmem:[#allocation2 + $0x68] sm:$0xff] %v184
  %193 = vst [vmem:[#allocation2 + $0x70] sm:$0xff] %v185
  %194 = vst [vmem:[#allocation2 + $0x78] sm:$0xff] %v186
  %195 = vst [vmem:[#allocation2 + $0x80] sm:$0xff] %v20
  %196 = vst [vmem:[#allocation2 + $0x88] sm:$0xff] %v21
  %197 = vst [vmem:[#allocation2 + $0x90] sm:$0xff] %v22
  %198 = vst [vmem:[#allocation2 + $0x98] sm:$0xff] %v23
  %199 = vst [vmem:[#allocation2 + $0xa0] sm:$0xff] %v24
  %200 = vst [vmem:[#allocation2 + $0xa8] sm:$0xff] %v25
  %201 = vst [vmem:[#allocation2 + $0xb0] sm:$0xff] %v26
  %202 = vst [vmem:[#allocation2 + $0xb8] sm:$0xff] %v27
  %203 = vrot.lane.b32.xlu0 %v20, 127
  %v204 = vpop.permute.xlu0 %203
  %205 = vrot.lane.b32.xlu0 %v24, 127
  %v206 = vpop.permute.xlu0 %205
  %207 = vrot.lane.b32.xlu0 %v21, 127
  %v208 = vpop.permute.xlu0 %207
  %209 = vrot.lane.b32.xlu0 %v25, 127
  %v210 = vpop.permute.xlu0 %209
  %211 = vrot.lane.b32.xlu0 %v22, 127
  %v212 = vpop.permute.xlu0 %211
  %213 = vrot.lane.b32.xlu0 %v26, 127
  %v214 = vpop.permute.xlu0 %213
  %215 = vrot.lane.b32.xlu0 %v23, 127
  %v216 = vpop.permute.xlu0 %215
  %217 = vrot.lane.b32.xlu0 %v27, 127
  %v218 = vpop.permute.xlu0 %217
  %vm219 = vcmp.lt.s32.totalorder %v29, 127
  %v220 = vsel %vm219, %v212, %v216
  %v221 = vsel %vm219, %v214, %v218
  %v222 = vsel %vm219, %v208, %v212
  %v223 = vsel %vm219, %v210, %v214
  %v224 = vsel %vm219, %v204, %v208
  %v225 = vsel %vm219, %v206, %v210
  %v226 = vsel %vm219, %v216, %v204
  %v227 = vsel %vm219, %v218, %v206
  %v228 = vsel %vm89, 1, 0
  %v229 = vsel %vm90, 1, 0
  %v230 = vsel %vm91, 1, 0
  %v231 = vsel %vm92, 1, 0
  %vm232 = vcmp.eq.s32.totalorder %v228, 1
  %vm233 = vcmp.eq.s32.totalorder %v229, 1
  %vm234 = vcmp.eq.s32.totalorder %v230, 1
  %vm235 = vcmp.eq.s32.totalorder %v231, 1
  %v236 = vsel %vm232, %v224, 0.0
  %v237 = vsel %vm233, %v222, 0.0
  %v238 = vsel %vm234, %v220, 0.0
  %v239 = vsel %vm235, %v226, 0.0
  %v240 = vsel %vm232, %v225, 0.0
  %v241 = vsel %vm233, %v223, 0.0
  %v242 = vsel %vm234, %v221, 0.0
  %v243 = vsel %vm235, %v227, 0.0
  %244 = vst [vmem:[#allocation2 + $0xc0] sm:$0xff] %v236
  %245 = vst [vmem:[#allocation2 + $0xc8] sm:$0xff] %v237
  %246 = vst [vmem:[#allocation2 + $0xd0] sm:$0xff] %v238
  %247 = vst [vmem:[#allocation2 + $0xd8] sm:$0xff] %v239
  %248 = vst [vmem:[#allocation2 + $0xe0] sm:$0xff] %v240
  %249 = vst [vmem:[#allocation2 + $0xe8] sm:$0xff] %v241
  %250 = vst [vmem:[#allocation2 + $0xf0] sm:$0xff] %v242
  %251 = vst [vmem:[#allocation2 + $0xf8] sm:$0xff] %v243
  %252 = vrot.lane.b32.xlu0 %v20, 126
  %v253 = vpop.permute.xlu0 %252
  %254 = vrot.lane.b32.xlu0 %v24, 126
  %v255 = vpop.permute.xlu0 %254
  %256 = vrot.lane.b32.xlu0 %v21, 126
  %v257 = vpop.permute.xlu0 %256
  %258 = vrot.lane.b32.xlu0 %v25, 126
  %v259 = vpop.permute.xlu0 %258
  %260 = vrot.lane.b32.xlu0 %v22, 126
  %v261 = vpop.permute.xlu0 %260
  %262 = vrot.lane.b32.xlu0 %v26, 126
  %v263 = vpop.permute.xlu0 %262
  %264 = vrot.lane.b32.xlu0 %v23, 126
  %v265 = vpop.permute.xlu0 %264
  %266 = vrot.lane.b32.xlu0 %v27, 126
  %v267 = vpop.permute.xlu0 %266
  %vm268 = vcmp.lt.s32.totalorder %v29, 126
  %v269 = vsel %vm268, %v261, %v265
  %v270 = vsel %vm268, %v263, %v267
  %v271 = vsel %vm268, %v257, %v261
  %v272 = vsel %vm268, %v259, %v263
  %v273 = vsel %vm268, %v253, %v257
  %v274 = vsel %vm268, %v255, %v259
  %v275 = vsel %vm268, %v265, %v253
  %v276 = vsel %vm268, %v267, %v255
  %v277 = vsel %vm93, 1, 0
  %v278 = vsel %vm94, 1, 0
  %v279 = vsel %vm95, 1, 0
  %v280 = vsel %vm96, 1, 0
  %vm281 = vcmp.eq.s32.totalorder %v277, 1
  %vm282 = vcmp.eq.s32.totalorder %v278, 1
  %vm283 = vcmp.eq.s32.totalorder %v279, 1
  %vm284 = vcmp.eq.s32.totalorder %v280, 1
  %v285 = vsel %vm281, %v273, 0.0
  %v286 = vsel %vm282, %v271, 0.0
  %v287 = vsel %vm283, %v269, 0.0
  %v288 = vsel %vm284, %v275, 0.0
  %v289 = vsel %vm281, %v274, 0.0
  %v290 = vsel %vm282, %v272, 0.0
  %v291 = vsel %vm283, %v270, 0.0
  %v292 = vsel %vm284, %v276, 0.0
  %293 = vst [vmem:[#allocation2 + $0x100] sm:$0xff] %v285
  %294 = vst [vmem:[#allocation2 + $0x108] sm:$0xff] %v286
  %295 = vst [vmem:[#allocation2 + $0x110] sm:$0xff] %v287
  %296 = vst [vmem:[#allocation2 + $0x118] sm:$0xff] %v288
  %297 = vst [vmem:[#allocation2 + $0x120] sm:$0xff] %v289
  %298 = vst [vmem:[#allocation2 + $0x128] sm:$0xff] %v290
  %299 = vst [vmem:[#allocation2 + $0x130] sm:$0xff] %v291
  %300 = vst [vmem:[#allocation2 + $0x138] sm:$0xff] %v292
  %v301 = vld [vmem:[%s1] sm:$0xff]
  %v302 = vld [vmem:[%s1 + $0x8] sm:$0xff]
  %v303 = vld [vmem:[%s1 + $0x10] sm:$0xff]
  %v304 = vld [vmem:[%s1 + $0x18] sm:$0xff]
  %v305 = vld [vmem:[%s1 + $0x20] sm:$0xff]
  %v306 = vld [vmem:[%s1 + $0x28] sm:$0xff]
  %v307 = vld [vmem:[%s1 + $0x30] sm:$0xff]
  %v308 = vld [vmem:[%s1 + $0x38] sm:$0xff]
  %v309 = vld [vmem:[%s1 + $0x40] sm:$0xff]
  %v310 = vld [vmem:[%s1 + $0x48] sm:$0xff]
  %v311 = vld [vmem:[%s1 + $0x50] sm:$0xff]
  %v312 = vld [vmem:[%s1 + $0x58] sm:$0xff]
  %313 = vrot.lane.b32.xlu0 %v301, 2
  %v314 = vpop.permute.xlu0 %313
  %315 = vrot.lane.b32.xlu0 %v305, 2
  %v316 = vpop.permute.xlu0 %315
  %317 = vrot.lane.b32.xlu0 %v309, 2
  %v318 = vpop.permute.xlu0 %317
  %319 = vrot.lane.b32.xlu0 %v302, 2
  %v320 = vpop.permute.xlu0 %319
  %321 = vrot.lane.b32.xlu0 %v306, 2
  %v322 = vpop.permute.xlu0 %321
  %323 = vrot.lane.b32.xlu0 %v310, 2
  %v324 = vpop.permute.xlu0 %323
  %325 = vrot.lane.b32.xlu0 %v303, 2
  %v326 = vpop.permute.xlu0 %325
  %327 = vrot.lane.b32.xlu0 %v307, 2
  %v328 = vpop.permute.xlu0 %327
  %329 = vrot.lane.b32.xlu0 %v311, 2
  %v330 = vpop.permute.xlu0 %329
  %331 = vrot.lane.b32.xlu0 %v304, 2
  %v332 = vpop.permute.xlu0 %331
  %333 = vrot.lane.b32.xlu0 %v308, 2
  %v334 = vpop.permute.xlu0 %333
  %335 = vrot.lane.b32.xlu0 %v312, 2
  %v336 = vpop.permute.xlu0 %335
  %v337 = vsel %vm113, %v326, %v332
  %v338 = vsel %vm113, %v328, %v334
  %v339 = vsel %vm113, %v330, %v336
  %v340 = vsel %vm113, %v320, %v326
  %v341 = vsel %vm113, %v322, %v328
  %v342 = vsel %vm113, %v324, %v330
  %v343 = vsel %vm113, %v314, %v320
  %v344 = vsel %vm113, %v316, %v322
  %v345 = vsel %vm113, %v318, %v324
  %v346 = vsel %vm113, %v332, %v314
  %v347 = vsel %vm113, %v334, %v316
  %v348 = vsel %vm113, %v336, %v318
  %v349 = vsel %vm126, %v346, 0.0
  %v350 = vsel %vm127, %v343, 0.0
  %v351 = vsel %vm128, %v340, 0.0
  %v352 = vsel %vm129, %v337, 0.0
  %v353 = vsel %vm126, %v347, 0.0
  %v354 = vsel %vm127, %v344, 0.0
  %v355 = vsel %vm128, %v341, 0.0
  %v356 = vsel %vm129, %v338, 0.0
  %v357 = vsel %vm126, %v348, 0.0
  %v358 = vsel %vm127, %v345, 0.0
  %v359 = vsel %vm128, %v342, 0.0
  %v360 = vsel %vm129, %v339, 0.0
  %361 = vst [vmem:[#allocation2 + $0x140] sm:$0xff] %v349
  %362 = vst [vmem:[#allocation2 + $0x148] sm:$0xff] %v350
  %363 = vst [vmem:[#allocation2 + $0x150] sm:$0xff] %v351
  %364 = vst [vmem:[#allocation2 + $0x158] sm:$0xff] %v352
  %365 = vst [vmem:[#allocation2 + $0x160] sm:$0xff] %v353
  %366 = vst [vmem:[#allocation2 + $0x168] sm:$0xff] %v354
  %367 = vst [vmem:[#allocation2 + $0x170] sm:$0xff] %v355
  %368 = vst [vmem:[#allocation2 + $0x178] sm:$0xff] %v356
  %369 = vst [vmem:[#allocation2 + $0x180] sm:$0xff] %v357
  %370 = vst [vmem:[#allocation2 + $0x188] sm:$0xff] %v358
  %371 = vst [vmem:[#allocation2 + $0x190] sm:$0xff] %v359
  %372 = vst [vmem:[#allocation2 + $0x198] sm:$0xff] %v360
  %373 = vrot.lane.b32.xlu0 %v301, 1
  %v374 = vpop.permute.xlu0 %373
  %375 = vrot.lane.b32.xlu0 %v305, 1
  %v376 = vpop.permute.xlu0 %375
  %377 = vrot.lane.b32.xlu0 %v309, 1
  %v378 = vpop.permute.xlu0 %377
  %379 = vrot.lane.b32.xlu0 %v302, 1
  %v380 = vpop.permute.xlu0 %379
  %381 = vrot.lane.b32.xlu0 %v306, 1
  %v382 = vpop.permute.xlu0 %381
  %383 = vrot.lane.b32.xlu0 %v310, 1
  %v384 = vpop.permute.xlu0 %383
  %385 = vrot.lane.b32.xlu0 %v303, 1
  %v386 = vpop.permute.xlu0 %385
  %387 = vrot.lane.b32.xlu0 %v307, 1
  %v388 = vpop.permute.xlu0 %387
  %389 = vrot.lane.b32.xlu0 %v311, 1
  %v390 = vpop.permute.xlu0 %389
  %391 = vrot.lane.b32.xlu0 %v304, 1
  %v392 = vpop.permute.xlu0 %391
  %393 = vrot.lane.b32.xlu0 %v308, 1
  %v394 = vpop.permute.xlu0 %393
  %395 = vrot.lane.b32.xlu0 %v312, 1
  %v396 = vpop.permute.xlu0 %395
  %v397 = vsel %vm162, %v386, %v392
  %v398 = vsel %vm162, %v388, %v394
  %v399 = vsel %vm162, %v390, %v396
  %v400 = vsel %vm162, %v380, %v386
  %v401 = vsel %vm162, %v382, %v388
  %v402 = vsel %vm162, %v384, %v390
  %v403 = vsel %vm162, %v374, %v380
  %v404 = vsel %vm162, %v376, %v382
  %v405 = vsel %vm162, %v378, %v384
  %v406 = vsel %vm162, %v392, %v374
  %v407 = vsel %vm162, %v394, %v376
  %v408 = vsel %vm162, %v396, %v378
  %v409 = vsel %vm175, %v406, 0.0
  %v410 = vsel %vm176, %v403, 0.0
  %v411 = vsel %vm177, %v400, 0.0
  %v412 = vsel %vm178, %v397, 0.0
  %v413 = vsel %vm175, %v407, 0.0
  %v414 = vsel %vm176, %v404, 0.0
  %v415 = vsel %vm177, %v401, 0.0
  %v416 = vsel %vm178, %v398, 0.0
  %v417 = vsel %vm175, %v408, 0.0
  %v418 = vsel %vm176, %v405, 0.0
  %v419 = vsel %vm177, %v402, 0.0
  %v420 = vsel %vm178, %v399, 0.0
  %421 = vst [vmem:[#allocation2 + $0x1a0] sm:$0xff] %v409
  %422 = vst [vmem:[#allocation2 + $0x1a8] sm:$0xff] %v410
  %423 = vst [vmem:[#allocation2 + $0x1b0] sm:$0xff] %v411
  %424 = vst [vmem:[#allocation2 + $0x1b8] sm:$0xff] %v412
  %425 = vst [vmem:[#allocation2 + $0x1c0] sm:$0xff] %v413
  %426 = vst [vmem:[#allocation2 + $0x1c8] sm:$0xff] %v414
  %427 = vst [vmem:[#allocation2 + $0x1d0] sm:$0xff] %v415
  %428 = vst [vmem:[#allocation2 + $0x1d8] sm:$0xff] %v416
  %429 = vst [vmem:[#allocation2 + $0x1e0] sm:$0xff] %v417
  %430 = vst [vmem:[#allocation2 + $0x1e8] sm:$0xff] %v418
  %431 = vst [vmem:[#allocation2 + $0x1f0] sm:$0xff] %v419
  %432 = vst [vmem:[#allocation2 + $0x1f8] sm:$0xff] %v420
  %433 = vst [vmem:[#allocation2 + $0x200] sm:$0xff] %v301
  %434 = vst [vmem:[#allocation2 + $0x208] sm:$0xff] %v302
  %435 = vst [vmem:[#allocation2 + $0x210] sm:$0xff] %v303
  %436 = vst [vmem:[#allocation2 + $0x218] sm:$0xff] %v304
  %437 = vst [vmem:[#allocation2 + $0x220] sm:$0xff] %v305
  %438 = vst [vmem:[#allocation2 + $0x228] sm:$0xff] %v306
  %439 = vst [vmem:[#allocation2 + $0x230] sm:$0xff] %v307
  %440 = vst [vmem:[#allocation2 + $0x238] sm:$0xff] %v308
  %441 = vst [vmem:[#allocation2 + $0x240] sm:$0xff] %v309
  %442 = vst [vmem:[#allocation2 + $0x248] sm:$0xff] %v310
  %443 = vst [vmem:[#allocation2 + $0x250] sm:$0xff] %v311
  %444 = vst [vmem:[#allocation2 + $0x258] sm:$0xff] %v312
  %445 = vrot.lane.b32.xlu0 %v301, 127
  %v446 = vpop.permute.xlu0 %445
  %447 = vrot.lane.b32.xlu0 %v305, 127
  %v448 = vpop.permute.xlu0 %447
  %449 = vrot.lane.b32.xlu0 %v309, 127
  %v450 = vpop.permute.xlu0 %449
  %451 = vrot.lane.b32.xlu0 %v302, 127
  %v452 = vpop.permute.xlu0 %451
  %453 = vrot.lane.b32.xlu0 %v306, 127
  %v454 = vpop.permute.xlu0 %453
  %455 = vrot.lane.b32.xlu0 %v310, 127
  %v456 = vpop.permute.xlu0 %455
  %457 = vrot.lane.b32.xlu0 %v303, 127
  %v458 = vpop.permute.xlu0 %457
  %459 = vrot.lane.b32.xlu0 %v307, 127
  %v460 = vpop.permute.xlu0 %459
  %461 = vrot.lane.b32.xlu0 %v311, 127
  %v462 = vpop.permute.xlu0 %461
  %463 = vrot.lane.b32.xlu0 %v304, 127
  %v464 = vpop.permute.xlu0 %463
  %465 = vrot.lane.b32.xlu0 %v308, 127
  %v466 = vpop.permute.xlu0 %465
  %467 = vrot.lane.b32.xlu0 %v312, 127
  %v468 = vpop.permute.xlu0 %467
  %v469 = vsel %vm219, %v458, %v464
  %v470 = vsel %vm219, %v460, %v466
  %v471 = vsel %vm219, %v462, %v468
  %v472 = vsel %vm219, %v452, %v458
  %v473 = vsel %vm219, %v454, %v460
  %v474 = vsel %vm219, %v456, %v462
  %v475 = vsel %vm219, %v446, %v452
  %v476 = vsel %vm219, %v448, %v454
  %v477 = vsel %vm219, %v450, %v456
  %v478 = vsel %vm219, %v464, %v446
  %v479 = vsel %vm219, %v466, %v448
  %v480 = vsel %vm219, %v468, %v450
  %v481 = vsel %vm232, %v475, 0.0
  %v482 = vsel %vm233, %v472, 0.0
  %v483 = vsel %vm234, %v469, 0.0
  %v484 = vsel %vm235, %v478, 0.0
  %v485 = vsel %vm232, %v476, 0.0
  %v486 = vsel %vm233, %v473, 0.0
  %v487 = vsel %vm234, %v470, 0.0
  %v488 = vsel %vm235, %v479, 0.0
  %v489 = vsel %vm232, %v477, 0.0
  %v490 = vsel %vm233, %v474, 0.0
  %v491 = vsel %vm234, %v471, 0.0
  %v492 = vsel %vm235, %v480, 0.0
  %493 = vst [vmem:[#allocation2 + $0x260] sm:$0xff] %v481
  %494 = vst [vmem:[#allocation2 + $0x268] sm:$0xff] %v482
  %495 = vst [vmem:[#allocation2 + $0x270] sm:$0xff] %v483
  %496 = vst [vmem:[#allocation2 + $0x278] sm:$0xff] %v484
  %497 = vst [vmem:[#allocation2 + $0x280] sm:$0xff] %v485
  %498 = vst [vmem:[#allocation2 + $0x288] sm:$0xff] %v486
  %499 = vst [vmem:[#allocation2 + $0x290] sm:$0xff] %v487
  %500 = vst [vmem:[#allocation2 + $0x298] sm:$0xff] %v488
  %501 = vst [vmem:[#allocation2 + $0x2a0] sm:$0xff] %v489
  %502 = vst [vmem:[#allocation2 + $0x2a8] sm:$0xff] %v490
  %503 = vst [vmem:[#allocation2 + $0x2b0] sm:$0xff] %v491
  %504 = vst [vmem:[#allocation2 + $0x2b8] sm:$0xff] %v492
  %505 = vrot.lane.b32.xlu0 %v301, 126
  %v506 = vpop.permute.xlu0 %505
  %507 = vrot.lane.b32.xlu0 %v305, 126
  %v508 = vpop.permute.xlu0 %507
  %509 = vrot.lane.b32.xlu0 %v309, 126
  %v510 = vpop.permute.xlu0 %509
  %511 = vrot.lane.b32.xlu0 %v302, 126
  %v512 = vpop.permute.xlu0 %511
  %513 = vrot.lane.b32.xlu0 %v306, 126
  %v514 = vpop.permute.xlu0 %513
  %515 = vrot.lane.b32.xlu0 %v310, 126
  %v516 = vpop.permute.xlu0 %515
  %517 = vrot.lane.b32.xlu0 %v303, 126
  %v518 = vpop.permute.xlu0 %517
  %519 = vrot.lane.b32.xlu0 %v307, 126
  %v520 = vpop.permute.xlu0 %519
  %521 = vrot.lane.b32.xlu0 %v311, 126
  %v522 = vpop.permute.xlu0 %521
  %523 = vrot.lane.b32.xlu0 %v304, 126
  %v524 = vpop.permute.xlu0 %523
  %525 = vrot.lane.b32.xlu0 %v308, 126
  %v526 = vpop.permute.xlu0 %525
  %527 = vrot.lane.b32.xlu0 %v312, 126
  %v528 = vpop.permute.xlu0 %527
  %v529 = vsel %vm268, %v518, %v524
  %v530 = vsel %vm268, %v520, %v526
  %v531 = vsel %vm268, %v522, %v528
  %v532 = vsel %vm268, %v512, %v518
  %v533 = vsel %vm268, %v514, %v520
  %v534 = vsel %vm268, %v516, %v522
  %v535 = vsel %vm268, %v506, %v512
  %v536 = vsel %vm268, %v508, %v514
  %v537 = vsel %vm268, %v510, %v516
  %v538 = vsel %vm268, %v524, %v506
  %v539 = vsel %vm268, %v526, %v508
  %v540 = vsel %vm268, %v528, %v510
  %v541 = vsel %vm281, %v535, 0.0
  %v542 = vsel %vm282, %v532, 0.0
  %v543 = vsel %vm283, %v529, 0.0
  %v544 = vsel %vm284, %v538, 0.0
  %v545 = vsel %vm281, %v536, 0.0
  %v546 = vsel %vm282, %v533, 0.0
  %v547 = vsel %vm283, %v530, 0.0
  %v548 = vsel %vm284, %v539, 0.0
  %v549 = vsel %vm281, %v537, 0.0
  %v550 = vsel %vm282, %v534, 0.0
  %v551 = vsel %vm283, %v531, 0.0
  %v552 = vsel %vm284, %v540, 0.0
  %553 = vst [vmem:[#allocation2 + $0x2c0] sm:$0xff] %v541
  %554 = vst [vmem:[#allocation2 + $0x2c8] sm:$0xff] %v542
  %555 = vst [vmem:[#allocation2 + $0x2d0] sm:$0xff] %v543
  %556 = vst [vmem:[#allocation2 + $0x2d8] sm:$0xff] %v544
  %557 = vst [vmem:[#allocation2 + $0x2e0] sm:$0xff] %v545
  %558 = vst [vmem:[#allocation2 + $0x2e8] sm:$0xff] %v546
  %559 = vst [vmem:[#allocation2 + $0x2f0] sm:$0xff] %v547
  %560 = vst [vmem:[#allocation2 + $0x2f8] sm:$0xff] %v548
  %561 = vst [vmem:[#allocation2 + $0x300] sm:$0xff] %v549
  %562 = vst [vmem:[#allocation2 + $0x308] sm:$0xff] %v550
  %563 = vst [vmem:[#allocation2 + $0x310] sm:$0xff] %v551
  %564 = vst [vmem:[#allocation2 + $0x318] sm:$0xff] %v552
  %v565 = vld [vmem:[%s2] sm:$0xff]
  %v566 = vld [vmem:[%s2 + $0x8] sm:$0xff]
  %v567 = vld [vmem:[%s2 + $0x10] sm:$0xff]
  %v568 = vld [vmem:[%s2 + $0x18] sm:$0xff]
  %v569 = vld [vmem:[%s2 + $0x20] sm:$0xff]
  %v570 = vld [vmem:[%s2 + $0x28] sm:$0xff]
  %v571 = vld [vmem:[%s2 + $0x30] sm:$0xff]
  %v572 = vld [vmem:[%s2 + $0x38] sm:$0xff]
  %v573 = vld [vmem:[%s2 + $0x40] sm:$0xff]
  %v574 = vld [vmem:[%s2 + $0x48] sm:$0xff]
  %v575 = vld [vmem:[%s2 + $0x50] sm:$0xff]
  %v576 = vld [vmem:[%s2 + $0x58] sm:$0xff]
  %v577 = vld [vmem:[#allocation2] sm:$0xff]
  %v578 = vld [vmem:[#allocation2 + $0x8] sm:$0xff]
  %v579 = vld [vmem:[#allocation2 + $0x10] sm:$0xff]
  %v580 = vld [vmem:[#allocation2 + $0x18] sm:$0xff]
  %v581 = vld [vmem:[#allocation2 + $0x20] sm:$0xff]
  %v582 = vld [vmem:[#allocation2 + $0x28] sm:$0xff]
  %v583 = vld [vmem:[#allocation2 + $0x30] sm:$0xff]
  %v584 = vld [vmem:[#allocation2 + $0x38] sm:$0xff]
  %v585 = vld [vmem:[#allocation2 + $0x40] sm:$0xff]
  %v586 = vld [vmem:[#allocation2 + $0x48] sm:$0xff]
  %v587 = vld [vmem:[#allocation2 + $0x50] sm:$0xff]
  %v588 = vld [vmem:[#allocation2 + $0x58] sm:$0xff]
  %v589 = vld [vmem:[#allocation2 + $0x60] sm:$0xff]
  %v590 = vld [vmem:[#allocation2 + $0x68] sm:$0xff]
  %v591 = vld [vmem:[#allocation2 + $0x70] sm:$0xff]
  %v592 = vld [vmem:[#allocation2 + $0x78] sm:$0xff]
  %v593 = vld [vmem:[#allocation2 + $0x80] sm:$0xff]
  %v594 = vld [vmem:[#allocation2 + $0x88] sm:$0xff]
  %v595 = vld [vmem:[#allocation2 + $0x90] sm:$0xff]
  %v596 = vld [vmem:[#allocation2 + $0x98] sm:$0xff]
  %v597 = vld [vmem:[#allocation2 + $0xa0] sm:$0xff]
  %v598 = vld [vmem:[#allocation2 + $0xa8] sm:$0xff]
  %v599 = vld [vmem:[#allocation2 + $0xb0] sm:$0xff]
  %v600 = vld [vmem:[#allocation2 + $0xb8] sm:$0xff]
  %v601 = vld [vmem:[#allocation2 + $0xc0] sm:$0xff]
  %v602 = vld [vmem:[#allocation2 + $0xc8] sm:$0xff]
  %v603 = vld [vmem:[#allocation2 + $0xd0] sm:$0xff]
  %v604 = vld [vmem:[#allocation2 + $0xd8] sm:$0xff]
  %v605 = vld [vmem:[#allocation2 + $0xe0] sm:$0xff]
  %v606 = vld [vmem:[#allocation2 + $0xe8] sm:$0xff]
  %v607 = vld [vmem:[#allocation2 + $0xf0] sm:$0xff]
  %v608 = vld [vmem:[#allocation2 + $0xf8] sm:$0xff]
  %v609 = vld [vmem:[#allocation2 + $0x100] sm:$0xff]
  %v610 = vld [vmem:[#allocation2 + $0x108] sm:$0xff]
  %v611 = vld [vmem:[#allocation2 + $0x110] sm:$0xff]
  %v612 = vld [vmem:[#allocation2 + $0x118] sm:$0xff]
  %v613 = vld [vmem:[#allocation2 + $0x120] sm:$0xff]
  %v614 = vld [vmem:[#allocation2 + $0x128] sm:$0xff]
  %v615 = vld [vmem:[#allocation2 + $0x130] sm:$0xff]
  %v616 = vld [vmem:[#allocation2 + $0x138] sm:$0xff]
  %v617 = vld [vmem:[#allocation2 + $0x140] sm:$0xff]
  %v618 = vld [vmem:[#allocation2 + $0x148] sm:$0xff]
  %v619 = vld [vmem:[#allocation2 + $0x150] sm:$0xff]
  %v620 = vld [vmem:[#allocation2 + $0x158] sm:$0xff]
  %v621 = vld [vmem:[#allocation2 + $0x160] sm:$0xff]
  %v622 = vld [vmem:[#allocation2 + $0x168] sm:$0xff]
  %v623 = vld [vmem:[#allocation2 + $0x170] sm:$0xff]
  %v624 = vld [vmem:[#allocation2 + $0x178] sm:$0xff]
  %v625 = vld [vmem:[#allocation2 + $0x180] sm:$0xff]
  %v626 = vld [vmem:[#allocation2 + $0x188] sm:$0xff]
  %v627 = vld [vmem:[#allocation2 + $0x190] sm:$0xff]
  %v628 = vld [vmem:[#allocation2 + $0x198] sm:$0xff]
  %v629 = vld [vmem:[#allocation2 + $0x1a0] sm:$0xff]
  %v630 = vld [vmem:[#allocation2 + $0x1a8] sm:$0xff]
  %v631 = vld [vmem:[#allocation2 + $0x1b0] sm:$0xff]
  %v632 = vld [vmem:[#allocation2 + $0x1b8] sm:$0xff]
  %v633 = vld [vmem:[#allocation2 + $0x1c0] sm:$0xff]
  %v634 = vld [vmem:[#allocation2 + $0x1c8] sm:$0xff]
  %v635 = vld [vmem:[#allocation2 + $0x1d0] sm:$0xff]
  %v636 = vld [vmem:[#allocation2 + $0x1d8] sm:$0xff]
  %v637 = vld [vmem:[#allocation2 + $0x1e0] sm:$0xff]
  %v638 = vld [vmem:[#allocation2 + $0x1e8] sm:$0xff]
  %v639 = vld [vmem:[#allocation2 + $0x1f0] sm:$0xff]
  %v640 = vld [vmem:[#allocation2 + $0x1f8] sm:$0xff]
  %v641 = vld [vmem:[#allocation2 + $0x200] sm:$0xff]
  %v642 = vld [vmem:[#allocation2 + $0x208] sm:$0xff]
  %v643 = vld [vmem:[#allocation2 + $0x210] sm:$0xff]
  %v644 = vld [vmem:[#allocation2 + $0x218] sm:$0xff]
  %v645 = vld [vmem:[#allocation2 + $0x220] sm:$0xff]
  %v646 = vld [vmem:[#allocation2 + $0x228] sm:$0xff]
  %v647 = vld [vmem:[#allocation2 + $0x230] sm:$0xff]
  %v648 = vld [vmem:[#allocation2 + $0x238] sm:$0xff]
  %v649 = vld [vmem:[#allocation2 + $0x240] sm:$0xff]
  %v650 = vld [vmem:[#allocation2 + $0x248] sm:$0xff]
  %v651 = vld [vmem:[#allocation2 + $0x250] sm:$0xff]
  %v652 = vld [vmem:[#allocation2 + $0x258] sm:$0xff]
  %v653 = vld [vmem:[#allocation2 + $0x260] sm:$0xff]
  %v654 = vld [vmem:[#allocation2 + $0x268] sm:$0xff]
  %v655 = vld [vmem:[#allocation2 + $0x270] sm:$0xff]
  %v656 = vld [vmem:[#allocation2 + $0x278] sm:$0xff]
  %v657 = vld [vmem:[#allocation2 + $0x280] sm:$0xff]
  %v658 = vld [vmem:[#allocation2 + $0x288] sm:$0xff]
  %v659 = vld [vmem:[#allocation2 + $0x290] sm:$0xff]
  %v660 = vld [vmem:[#allocation2 + $0x298] sm:$0xff]
  %v661 = vld [vmem:[#allocation2 + $0x2a0] sm:$0xff]
  %v662 = vld [vmem:[#allocation2 + $0x2a8] sm:$0xff]
  %v663 = vld [vmem:[#allocation2 + $0x2b0] sm:$0xff]
  %v664 = vld [vmem:[#allocation2 + $0x2b8] sm:$0xff]
  %v665 = vld [vmem:[#allocation2 + $0x2c0] sm:$0xff]
  %v666 = vld [vmem:[#allocation2 + $0x2c8] sm:$0xff]
  %v667 = vld [vmem:[#allocation2 + $0x2d0] sm:$0xff]
  %v668 = vld [vmem:[#allocation2 + $0x2d8] sm:$0xff]
  %v669 = vld [vmem:[#allocation2 + $0x2e0] sm:$0xff]
  %v670 = vld [vmem:[#allocation2 + $0x2e8] sm:$0xff]
  %v671 = vld [vmem:[#allocation2 + $0x2f0] sm:$0xff]
  %v672 = vld [vmem:[#allocation2 + $0x2f8] sm:$0xff]
  %v673 = vld [vmem:[#allocation2 + $0x300] sm:$0xff]
  %v674 = vld [vmem:[#allocation2 + $0x308] sm:$0xff]
  %v675 = vld [vmem:[#allocation2 + $0x310] sm:$0xff]
  %v676 = vld [vmem:[#allocation2 + $0x318] sm:$0xff]
  %v677 = vld [vmem:[%s4] sm:$0xff]
  %v678 = vld [vmem:[%s4 + $0x8] sm:$0xff]
  %v679 = vld [vmem:[%s4 + $0x10] sm:$0xff]
  %v680 = vld [vmem:[%s4 + $0x18] sm:$0xff]
  %v681 = vld [vmem:[%s4 + $0x20] sm:$0xff]
  %v682 = vld [vmem:[%s4 + $0x28] sm:$0xff]
  %684 = vset.pattern.permute.xlu0 0
  %685 = vperm.xlu0 %684, %v677
  %v686 = vpop.permute.xlu0 %685
  %689 = vset.pattern.permute.xlu0 0
  %690 = vperm.xlu0 %689, %v678
  %v691 = vpop.permute.xlu0 %690
  %694 = vset.pattern.permute.xlu0 0
  %695 = vperm.xlu0 %694, %v679
  %v696 = vpop.permute.xlu0 %695
  %699 = vset.pattern.permute.xlu0 0
  %700 = vperm.xlu0 %699, %v680
  %v701 = vpop.permute.xlu0 %700
  %704 = vset.pattern.permute.xlu0 0
  %705 = vperm.xlu0 %704, %v681
  %v706 = vpop.permute.xlu0 %705
  %709 = vset.pattern.permute.xlu0 0
  %710 = vperm.xlu0 %709, %v682
  %v711 = vpop.permute.xlu0 %710
  %vm713 = vcmask 588800
  %v715 = vsel %vm713, %v566, 0
  %v718 = vsel %vm713, %v568, 0
  %v721 = vsel %vm713, %v570, 0
  %v724 = vsel %vm713, %v572, 0
  %v727 = vsel %vm713, %v574, 0
  %v730 = vsel %vm713, %v576, 0
  %732 = vmatprep.subr.mxu0 %v578
  %733 = vmatpush1.msra.mxu0 %v577
  %734 = vmatprep.subr.mxu0 %v582
  %735 = vmatpush1.msra.mxu0 %v581
  %736 = vmatprep.subr.mxu0 %v586
  %737 = vmatpush1.msra.mxu0 %v585
  %738 = vmatprep.subr.mxu0 %v590
  %739 = vmatpush1.msra.mxu0 %v589
  %740 = vmatprep.subr.mxu0 %v594
  %741 = vmatpush1.msra.mxu0 %v593
  %742 = vmatprep.subr.mxu0 %v598
  %743 = vmatpush1.msra.mxu0 %v597
  %744 = vmatprep.subr.mxu0 %v602
  %745 = vmatpush1.msra.mxu0 %v601
  %746 = vmatprep.subr.mxu0 %v606
  %747 = vmatpush1.msra.mxu0 %v605
  %748 = vmatprep.subr.mxu0 %v610
  %749 = vmatpush1.msra.mxu0 %v609
  %750 = vmatprep.subr.mxu0 %v614
  %751 = vmatpush1.msra.mxu0 %v613
  %752 = vmatprep.subr.mxu0 %v618
  %753 = vmatpush1.msra.mxu0 %v617
  %754 = vmatprep.subr.mxu0 %v622
  %755 = vmatpush1.msra.mxu0 %v621
  %756 = vmatprep.subr.mxu0 %v626
  %757 = vmatpush1.msra.mxu0 %v625
  %758 = vmatprep.subr.mxu0 %v630
  %759 = vmatpush1.msra.mxu0 %v629
  %760 = vmatprep.subr.mxu0 %v634
  %761 = vmatpush1.msra.mxu0 %v633
  %762 = vmatprep.subr.mxu0 %v638
  %763 = vmatpush1.msra.mxu0 %v637
  %764 = vmatprep.subr.mxu0 %v642
  %765 = vmatpush1.msra.mxu0 %v641
  %766 = vmatprep.subr.mxu0 %v646
  %767 = vmatpush1.msra.mxu0 %v645
  %768 = vmatprep.subr.mxu0 %v650
  %769 = vmatpush1.msra.mxu0 %v649
  %770 = vmatprep.subr.mxu0 %v654
  %771 = vmatpush1.msra.mxu0 %v653
  %772 = vmatprep.subr.mxu0 %v658
  %773 = vmatpush1.msra.mxu0 %v657
  %774 = vmatprep.subr.mxu0 %v662
  %775 = vmatpush1.msra.mxu0 %v661
  %776 = vmatprep.subr.mxu0 %v666
  %777 = vmatpush1.msra.mxu0 %v665
  %778 = vmatprep.subr.mxu0 %v670
  %779 = vmatpush1.msra.mxu0 %v669
  %780 = vmatprep.subr.mxu0 %v674
  %781 = vmatpush1.msra.mxu0 %v673
  %782 = vmatprep.subr.mxu0 0.0
  %783 = vmatpush1.msra.mxu0 0.0
  %784 = vmatprep.subr.mxu0 0.0
  %785 = vmatpush1.msra.mxu0 0.0
  %786 = vmatprep.subr.mxu0 0.0
  %787 = vmatpush1.msra.mxu0 0.0
  %788 = vmatprep.subr.mxu0 0.0
  %789 = vmatpush1.msra.mxu0 0.0
  %790 = vmatprep.subr.mxu0 0.0
  %791 = vmatpush1.msra.mxu0 0.0
  %792 = vmatprep.subr.mxu0 0.0
  %793 = vmatpush1.msra.mxu0 0.0
  %794 = vmatprep.subr.mxu0 0.0
  %795 = vmatpush1.msra.mxu0 0.0
  %796 = vmatprep.mubr.f32.mxu0 %v715
  %797 = vmatmul.mubr.f32.gmra.mrb[0].mxu0 %v565
  %v798 = vpop.f32.mrb[0].mxu0
  %v799 = vadd.f32 %v686, %v798
  %v800 = vpop.f32.mrb[0].mxu0
  %v801 = vadd.f32 %v686, %v800
  %802 = vmatprep.mubr.f32.mxu0 %v718
  %803 = vmatmul.mubr.f32.gmra.mrb[0].mxu0 %v567
  %v804 = vpop.f32.mrb[0].mxu0
  %v805 = vadd.f32 %v691, %v804
  %v806 = vpop.f32.mrb[0].mxu0
  %v807 = vadd.f32 %v691, %v806
  %808 = vmatprep.mubr.f32.mxu0 %v721
  %809 = vmatmul.mubr.f32.gmra.mrb[0].mxu0 %v569
  %v810 = vpop.f32.mrb[0].mxu0
  %v811 = vadd.f32 %v696, %v810
  %v812 = vpop.f32.mrb[0].mxu0
  %v813 = vadd.f32 %v696, %v812
  %814 = vmatprep.mubr.f32.mxu0 %v724
  %815 = vmatmul.mubr.f32.gmra.mrb[0].mxu0 %v571
  %v816 = vpop.f32.mrb[0].mxu0
  %v817 = vadd.f32 %v701, %v816
  %v818 = vpop.f32.mrb[0].mxu0
  %v819 = vadd.f32 %v701, %v818
  %820 = vmatprep.mubr.f32.mxu0 %v727
  %821 = vmatmul.mubr.f32.gmra.mrb[0].mxu0 %v573
  %v822 = vpop.f32.mrb[0].mxu0
  %v823 = vadd.f32 %v706, %v822
  %v824 = vpop.f32.mrb[0].mxu0
  %v825 = vadd.f32 %v706, %v824
  %826 = vmatprep.mubr.f32.mxu0 %v730
  %827 = vmatmul.mubr.f32.gmra.mrb[0].mxu0 %v575
  %v828 = vpop.f32.mrb[0].mxu0
  %v829 = vadd.f32 %v711, %v828
  %v830 = vpop.f32.mrb[0].mxu0
  %v831 = vadd.f32 %v711, %v830
  %832 = vdwg.mxu0
  %833 = vmatprep.subr.mxu0 %v580
  %834 = vmatpush1.msra.mxu0 %v579
  %835 = vmatprep.subr.mxu0 %v584
  %836 = vmatpush1.msra.mxu0 %v583
  %837 = vmatprep.subr.mxu0 %v588
  %838 = vmatpush1.msra.mxu0 %v587
  %839 = vmatprep.subr.mxu0 %v592
  %840 = vmatpush1.msra.mxu0 %v591
  %841 = vmatprep.subr.mxu0 %v596
  %842 = vmatpush1.msra.mxu0 %v595
  %843 = vmatprep.subr.mxu0 %v600
  %844 = vmatpush1.msra.mxu0 %v599
  %845 = vmatprep.subr.mxu0 %v604
  %846 = vmatpush1.msra.mxu0 %v603
  %847 = vmatprep.subr.mxu0 %v608
  %848 = vmatpush1.msra.mxu0 %v607
  %849 = vmatprep.subr.mxu0 %v612
  %850 = vmatpush1.msra.mxu0 %v611
  %851 = vmatprep.subr.mxu0 %v616
  %852 = vmatpush1.msra.mxu0 %v615
  %853 = vmatprep.subr.mxu0 %v620
  %854 = vmatpush1.msra.mxu0 %v619
  %855 = vmatprep.subr.mxu0 %v624
  %856 = vmatpush1.msra.mxu0 %v623
  %857 = vmatprep.subr.mxu0 %v628
  %858 = vmatpush1.msra.mxu0 %v627
  %859 = vmatprep.subr.mxu0 %v632
  %860 = vmatpush1.msra.mxu0 %v631
  %861 = vmatprep.subr.mxu0 %v636
  %862 = vmatpush1.msra.mxu0 %v635
  %863 = vmatprep.subr.mxu0 %v640
  %864 = vmatpush1.msra.mxu0 %v639
  %865 = vmatprep.subr.mxu0 %v644
  %866 = vmatpush1.msra.mxu0 %v643
  %867 = vmatprep.subr.mxu0 %v648
  %868 = vmatpush1.msra.mxu0 %v647
  %869 = vmatprep.subr.mxu0 %v652
  %870 = vmatpush1.msra.mxu0 %v651
  %871 = vmatprep.subr.mxu0 %v656
  %872 = vmatpush1.msra.mxu0 %v655
  %873 = vmatprep.subr.mxu0 %v660
  %874 = vmatpush1.msra.mxu0 %v659
  %875 = vmatprep.subr.mxu0 %v664
  %876 = vmatpush1.msra.mxu0 %v663
  %877 = vmatprep.subr.mxu0 %v668
  %878 = vmatpush1.msra.mxu0 %v667
  %879 = vmatprep.subr.mxu0 %v672
  %880 = vmatpush1.msra.mxu0 %v671
  %881 = vmatprep.subr.mxu0 %v676
  %882 = vmatpush1.msra.mxu0 %v675
  %883 = vmatprep.subr.mxu0 0.0
  %884 = vmatpush1.msra.mxu0 0.0
  %885 = vmatprep.subr.mxu0 0.0
  %886 = vmatpush1.msra.mxu0 0.0
  %887 = vmatprep.subr.mxu0 0.0
  %888 = vmatpush1.msra.mxu0 0.0
  %889 = vmatprep.subr.mxu0 0.0
  %890 = vmatpush1.msra.mxu0 0.0
  %891 = vmatprep.subr.mxu0 0.0
  %892 = vmatpush1.msra.mxu0 0.0
  %893 = vmatprep.subr.mxu0 0.0
  %894 = vmatpush1.msra.mxu0 0.0
  %895 = vmatprep.subr.mxu0 0.0
  %896 = vmatpush1.msra.mxu0 0.0
  %897 = vmatprep.mubr.f32.mxu0 %v715
  %898 = vmatmul.mubr.f32.gmra.mrb[0].mxu0 %v565
  %v899 = vpop.f32.mrb[0].mxu0
  %v900 = vadd.f32 %v686, %v899
  %v901 = vpop.f32.mrb[0].mxu0
  %v902 = vadd.f32 %v686, %v901
  %903 = vmatprep.mubr.f32.mxu0 %v718
  %904 = vmatmul.mubr.f32.gmra.mrb[0].mxu0 %v567
  %v905 = vpop.f32.mrb[0].mxu0
  %v906 = vadd.f32 %v691, %v905
  %v907 = vpop.f32.mrb[0].mxu0
  %v908 = vadd.f32 %v691, %v907
  %909 = vmatprep.mubr.f32.mxu0 %v721
  %910 = vmatmul.mubr.f32.gmra.mrb[0].mxu0 %v569
  %v911 = vpop.f32.mrb[0].mxu0
  %v912 = vadd.f32 %v696, %v911
  %v913 = vpop.f32.mrb[0].mxu0
  %v914 = vadd.f32 %v696, %v913
  %915 = vmatprep.mubr.f32.mxu0 %v724
  %916 = vmatmul.mubr.f32.gmra.mrb[0].mxu0 %v571
  %v917 = vpop.f32.mrb[0].mxu0
  %v918 = vadd.f32 %v701, %v917
  %v919 = vpop.f32.mrb[0].mxu0
  %v920 = vadd.f32 %v701, %v919
  %921 = vmatprep.mubr.f32.mxu0 %v727
  %922 = vmatmul.mubr.f32.gmra.mrb[0].mxu0 %v573
  %v923 = vpop.f32.mrb[0].mxu0
  %v924 = vadd.f32 %v706, %v923
  %v925 = vpop.f32.mrb[0].mxu0
  %v926 = vadd.f32 %v706, %v925
  %927 = vmatprep.mubr.f32.mxu0 %v730
  %928 = vmatmul.mubr.f32.gmra.mrb[0].mxu0 %v575
  %v929 = vpop.f32.mrb[0].mxu0
  %v930 = vadd.f32 %v711, %v929
  %v931 = vpop.f32.mrb[0].mxu0
  %v932 = vadd.f32 %v711, %v931
  %933 = vdwg.mxu0
  %v934 = vxor.u32 %v799, 2147483648
  %v935 = vxor.u32 %v801, 2147483648
  %v936 = vxor.u32 %v900, 2147483648
  %v937 = vxor.u32 %v902, 2147483648
  %v938 = vxor.u32 %v805, 2147483648
  %v939 = vxor.u32 %v807, 2147483648
  %v940 = vxor.u32 %v906, 2147483648
  %v941 = vxor.u32 %v908, 2147483648
  %v942 = vmul.f32 %v934, 1.442695
  %v943 = vpow.pop %v942
  %v944 = vmul.f32 %v935, 1.442695
  %v945 = vpow.pop %v944
  %v946 = vmul.f32 %v936, 1.442695
  %v947 = vpow.pop %v946
  %v948 = vmul.f32 %v937, 1.442695
  %v949 = vpow.pop %v948
  %v950 = vmul.f32 %v938, 1.442695
  %v951 = vpow.pop %v950
  %v952 = vmul.f32 %v939, 1.442695
  %v953 = vpow.pop %v952
  %v954 = vmul.f32 %v940, 1.442695
  %v955 = vpow.pop %v954
  %v956 = vmul.f32 %v941, 1.442695
  %v957 = vpow.pop %v956
  %v958 = vadd.f32 %v943, 1.0
  %v959 = vadd.f32 %v945, 1.0
  %v960 = vadd.f32 %v947, 1.0
  %v961 = vadd.f32 %v949, 1.0
  %v962 = vadd.f32 %v951, 1.0
  %v963 = vadd.f32 %v953, 1.0
  %v964 = vadd.f32 %v955, 1.0
  %v965 = vadd.f32 %v957, 1.0
  %v966 = vrcp.pop %v958
  %v967 = vmul.f32 1.0, %v966
  %v968 = vrcp.pop %v959
  %v969 = vmul.f32 1.0, %v968
  %v970 = vrcp.pop %v960
  %v971 = vmul.f32 1.0, %v970
  %v972 = vrcp.pop %v961
  %v973 = vmul.f32 1.0, %v972
  %v974 = vrcp.pop %v962
  %v975 = vmul.f32 1.0, %v974
  %v976 = vrcp.pop %v963
  %v977 = vmul.f32 1.0, %v976
  %v978 = vrcp.pop %v964
  %v979 = vmul.f32 1.0, %v978
  %v980 = vrcp.pop %v965
  %v981 = vmul.f32 1.0, %v980
  %v982 = vxor.u32 %v811, 2147483648
  %v983 = vxor.u32 %v813, 2147483648
  %v984 = vxor.u32 %v912, 2147483648
  %v985 = vxor.u32 %v914, 2147483648
  %v986 = vxor.u32 %v817, 2147483648
  %v987 = vxor.u32 %v819, 2147483648
  %v988 = vxor.u32 %v918, 2147483648
  %v989 = vxor.u32 %v920, 2147483648
  %v990 = vmul.f32 %v982, 1.442695
  %v991 = vpow.pop %v990
  %v992 = vmul.f32 %v983, 1.442695
  %v993 = vpow.pop %v992
  %v994 = vmul.f32 %v984, 1.442695
  %v995 = vpow.pop %v994
  %v996 = vmul.f32 %v985, 1.442695
  %v997 = vpow.pop %v996
  %v998 = vmul.f32 %v986, 1.442695
  %v999 = vpow.pop %v998
  %v1000 = vmul.f32 %v987, 1.442695
  %v1001 = vpow.pop %v1000
  %v1002 = vmul.f32 %v988, 1.442695
  %v1003 = vpow.pop %v1002
  %v1004 = vmul.f32 %v989, 1.442695
  %v1005 = vpow.pop %v1004
  %v1006 = vadd.f32 %v991, 1.0
  %v1007 = vadd.f32 %v993, 1.0
  %v1008 = vadd.f32 %v995, 1.0
  %v1009 = vadd.f32 %v997, 1.0
  %v1010 = vadd.f32 %v999, 1.0
  %v1011 = vadd.f32 %v1001, 1.0
  %v1012 = vadd.f32 %v1003, 1.0
  %v1013 = vadd.f32 %v1005, 1.0
  %v1014 = vrcp.pop %v1006
  %v1015 = vmul.f32 1.0, %v1014
  %v1016 = vrcp.pop %v1007
  %v1017 = vmul.f32 1.0, %v1016
  %v1018 = vrcp.pop %v1008
  %v1019 = vmul.f32 1.0, %v1018
  %v1020 = vrcp.pop %v1009
  %v1021 = vmul.f32 1.0, %v1020
  %v1022 = vrcp.pop %v1010
  %v1023 = vmul.f32 1.0, %v1022
  %v1024 = vrcp.pop %v1011
  %v1025 = vmul.f32 1.0, %v1024
  %v1026 = vrcp.pop %v1012
  %v1027 = vmul.f32 1.0, %v1026
  %v1028 = vrcp.pop %v1013
  %v1029 = vmul.f32 1.0, %v1028
  %v1030 = vmul.f32 %v1015, %v20
  %v1031 = vmul.f32 %v1017, %v21
  %v1032 = vmul.f32 %v1019, %v22
  %v1033 = vmul.f32 %v1021, %v23
  %v1034 = vmul.f32 %v1023, %v24
  %v1035 = vmul.f32 %v1025, %v25
  %v1036 = vmul.f32 %v1027, %v26
  %v1037 = vmul.f32 %v1029, %v27
  %1038 = vrot.lane.b32.xlu0 %v1030, 2
  %v1039 = vpop.permute.xlu0 %1038
  %1040 = vrot.lane.b32.xlu0 %v1034, 2
  %v1041 = vpop.permute.xlu0 %1040
  %1042 = vrot.lane.b32.xlu0 %v1031, 2
  %v1043 = vpop.permute.xlu0 %1042
  %1044 = vrot.lane.b32.xlu0 %v1035, 2
  %v1045 = vpop.permute.xlu0 %1044
  %1046 = vrot.lane.b32.xlu0 %v1032, 2
  %v1047 = vpop.permute.xlu0 %1046
  %1048 = vrot.lane.b32.xlu0 %v1036, 2
  %v1049 = vpop.permute.xlu0 %1048
  %1050 = vrot.lane.b32.xlu0 %v1033, 2
  %v1051 = vpop.permute.xlu0 %1050
  %1052 = vrot.lane.b32.xlu0 %v1037, 2
  %v1053 = vpop.permute.xlu0 %1052
  %v1054 = vsel %vm113, %v1047, %v1051
  %v1055 = vsel %vm113, %v1049, %v1053
  %v1056 = vsel %vm113, %v1043, %v1047
  %v1057 = vsel %vm113, %v1045, %v1049
  %v1058 = vsel %vm113, %v1039, %v1043
  %v1059 = vsel %vm113, %v1041, %v1045
  %v1060 = vsel %vm113, %v1051, %v1039
  %v1061 = vsel %vm113, %v1053, %v1041
  %v1062 = vsel %vm126, %v1060, 0.0
  %v1063 = vsel %vm127, %v1058, 0.0
  %v1064 = vsel %vm128, %v1056, 0.0
  %v1065 = vsel %vm129, %v1054, 0.0
  %v1066 = vsel %vm126, %v1061, 0.0
  %v1067 = vsel %vm127, %v1059, 0.0
  %v1068 = vsel %vm128, %v1057, 0.0
  %v1069 = vsel %vm129, %v1055, 0.0
  %1070 = vst [vmem:[#allocation2] sm:$0xff] %v1062
  %1071 = vst [vmem:[#allocation2 + $0x8] sm:$0xff] %v1063
  %1072 = vst [vmem:[#allocation2 + $0x10] sm:$0xff] %v1064
  %1073 = vst [vmem:[#allocation2 + $0x18] sm:$0xff] %v1065
  %1074 = vst [vmem:[#allocation2 + $0x20] sm:$0xff] %v1066
  %1075 = vst [vmem:[#allocation2 + $0x28] sm:$0xff] %v1067
  %1076 = vst [vmem:[#allocation2 + $0x30] sm:$0xff] %v1068
  %1077 = vst [vmem:[#allocation2 + $0x38] sm:$0xff] %v1069
  %1078 = vrot.lane.b32.xlu0 %v1030, 1
  %v1079 = vpop.permute.xlu0 %1078
  %1080 = vrot.lane.b32.xlu0 %v1034, 1
  %v1081 = vpop.permute.xlu0 %1080
  %1082 = vrot.lane.b32.xlu0 %v1031, 1
  %v1083 = vpop.permute.xlu0 %1082
  %1084 = vrot.lane.b32.xlu0 %v1035, 1
  %v1085 = vpop.permute.xlu0 %1084
  %1086 = vrot.lane.b32.xlu0 %v1032, 1
  %v1087 = vpop.permute.xlu0 %1086
  %1088 = vrot.lane.b32.xlu0 %v1036, 1
  %v1089 = vpop.permute.xlu0 %1088
  %1090 = vrot.lane.b32.xlu0 %v1033, 1
  %v1091 = vpop.permute.xlu0 %1090
  %1092 = vrot.lane.b32.xlu0 %v1037, 1
  %v1093 = vpop.permute.xlu0 %1092
  %v1094 = vsel %vm162, %v1087, %v1091
  %v1095 = vsel %vm162, %v1089, %v1093
  %v1096 = vsel %vm162, %v1083, %v1087
  %v1097 = vsel %vm162, %v1085, %v1089
  %v1098 = vsel %vm162, %v1079, %v1083
  %v1099 = vsel %vm162, %v1081, %v1085
  %v1100 = vsel %vm162, %v1091, %v1079
  %v1101 = vsel %vm162, %v1093, %v1081
  %v1102 = vsel %vm175, %v1100, 0.0
  %v1103 = vsel %vm176, %v1098, 0.0
  %v1104 = vsel %vm177, %v1096, 0.0
  %v1105 = vsel %vm178, %v1094, 0.0
  %v1106 = vsel %vm175, %v1101, 0.0
  %v1107 = vsel %vm176, %v1099, 0.0
  %v1108 = vsel %vm177, %v1097, 0.0
  %v1109 = vsel %vm178, %v1095, 0.0
  %1110 = vst [vmem:[#allocation2 + $0x40] sm:$0xff] %v1102
  %1111 = vst [vmem:[#allocation2 + $0x48] sm:$0xff] %v1103
  %1112 = vst [vmem:[#allocation2 + $0x50] sm:$0xff] %v1104
  %1113 = vst [vmem:[#allocation2 + $0x58] sm:$0xff] %v1105
  %1114 = vst [vmem:[#allocation2 + $0x60] sm:$0xff] %v1106
  %1115 = vst [vmem:[#allocation2 + $0x68] sm:$0xff] %v1107
  %1116 = vst [vmem:[#allocation2 + $0x70] sm:$0xff] %v1108
  %1117 = vst [vmem:[#allocation2 + $0x78] sm:$0xff] %v1109
  %1118 = vst [vmem:[#allocation2 + $0x80] sm:$0xff] %v1030
  %1119 = vst [vmem:[#allocation2 + $0x88] sm:$0xff] %v1031
  %1120 = vst [vmem:[#allocation2 + $0x90] sm:$0xff] %v1032
  %1121 = vst [vmem:[#allocation2 + $0x98] sm:$0xff] %v1033
  %1122 = vst [vmem:[#allocation2 + $0xa0] sm:$0xff] %v1034
  %1123 = vst [vmem:[#allocation2 + $0xa8] sm:$0xff] %v1035
  %1124 = vst [vmem:[#allocation2 + $0xb0] sm:$0xff] %v1036
  %1125 = vst [vmem:[#allocation2 + $0xb8] sm:$0xff] %v1037
  %1126 = vrot.lane.b32.xlu0 %v1030, 127
  %v1127 = vpop.permute.xlu0 %1126
  %1128 = vrot.lane.b32.xlu0 %v1034, 127
  %v1129 = vpop.permute.xlu0 %1128
  %1130 = vrot.lane.b32.xlu0 %v1031, 127
  %v1131 = vpop.permute.xlu0 %1130
  %1132 = vrot.lane.b32.xlu0 %v1035, 127
  %v1133 = vpop.permute.xlu0 %1132
  %1134 = vrot.lane.b32.xlu0 %v1032, 127
  %v1135 = vpop.permute.xlu0 %1134
  %1136 = vrot.lane.b32.xlu0 %v1036, 127
  %v1137 = vpop.permute.xlu0 %1136
  %1138 = vrot.lane.b32.xlu0 %v1033, 127
  %v1139 = vpop.permute.xlu0 %1138
  %1140 = vrot.lane.b32.xlu0 %v1037, 127
  %v1141 = vpop.permute.xlu0 %1140
  %v1142 = vsel %vm219, %v1135, %v1139
  %v1143 = vsel %vm219, %v1137, %v1141
  %v1144 = vsel %vm219, %v1131, %v1135
  %v1145 = vsel %vm219, %v1133, %v1137
  %v1146 = vsel %vm219, %v1127, %v1131
  %v1147 = vsel %vm219, %v1129, %v1133
  %v1148 = vsel %vm219, %v1139, %v1127
  %v1149 = vsel %vm219, %v1141, %v1129
  %v1150 = vsel %vm232, %v1146, 0.0
  %v1151 = vsel %vm233, %v1144, 0.0
  %v1152 = vsel %vm234, %v1142, 0.0
  %v1153 = vsel %vm235, %v1148, 0.0
  %v1154 = vsel %vm232, %v1147, 0.0
  %v1155 = vsel %vm233, %v1145, 0.0
  %v1156 = vsel %vm234, %v1143, 0.0
  %v1157 = vsel %vm235, %v1149, 0.0
  %1158 = vst [vmem:[#allocation2 + $0xc0] sm:$0xff] %v1150
  %1159 = vst [vmem:[#allocation2 + $0xc8] sm:$0xff] %v1151
  %1160 = vst [vmem:[#allocation2 + $0xd0] sm:$0xff] %v1152
  %1161 = vst [vmem:[#allocation2 + $0xd8] sm:$0xff] %v1153
  %1162 = vst [vmem:[#allocation2 + $0xe0] sm:$0xff] %v1154
  %1163 = vst [vmem:[#allocation2 + $0xe8] sm:$0xff] %v1155
  %1164 = vst [vmem:[#allocation2 + $0xf0] sm:$0xff] %v1156
  %1165 = vst [vmem:[#allocation2 + $0xf8] sm:$0xff] %v1157
  %1166 = vrot.lane.b32.xlu0 %v1030, 126
  %v1167 = vpop.permute.xlu0 %1166
  %1168 = vrot.lane.b32.xlu0 %v1034, 126
  %v1169 = vpop.permute.xlu0 %1168
  %1170 = vrot.lane.b32.xlu0 %v1031, 126
  %v1171 = vpop.permute.xlu0 %1170
  %1172 = vrot.lane.b32.xlu0 %v1035, 126
  %v1173 = vpop.permute.xlu0 %1172
  %1174 = vrot.lane.b32.xlu0 %v1032, 126
  %v1175 = vpop.permute.xlu0 %1174
  %1176 = vrot.lane.b32.xlu0 %v1036, 126
  %v1177 = vpop.permute.xlu0 %1176
  %1178 = vrot.lane.b32.xlu0 %v1033, 126
  %v1179 = vpop.permute.xlu0 %1178
  %1180 = vrot.lane.b32.xlu0 %v1037, 126
  %v1181 = vpop.permute.xlu0 %1180
  %v1182 = vsel %vm268, %v1175, %v1179
  %v1183 = vsel %vm268, %v1177, %v1181
  %v1184 = vsel %vm268, %v1171, %v1175
  %v1185 = vsel %vm268, %v1173, %v1177
  %v1186 = vsel %vm268, %v1167, %v1171
  %v1187 = vsel %vm268, %v1169, %v1173
  %v1188 = vsel %vm268, %v1179, %v1167
  %v1189 = vsel %vm268, %v1181, %v1169
  %v1190 = vsel %vm281, %v1186, 0.0
  %v1191 = vsel %vm282, %v1184, 0.0
  %v1192 = vsel %vm283, %v1182, 0.0
  %v1193 = vsel %vm284, %v1188, 0.0
  %v1194 = vsel %vm281, %v1187, 0.0
  %v1195 = vsel %vm282, %v1185, 0.0
  %v1196 = vsel %vm283, %v1183, 0.0
  %v1197 = vsel %vm284, %v1189, 0.0
  %1198 = vst [vmem:[#allocation2 + $0x100] sm:$0xff] %v1190
  %1199 = vst [vmem:[#allocation2 + $0x108] sm:$0xff] %v1191
  %1200 = vst [vmem:[#allocation2 + $0x110] sm:$0xff] %v1192
  %1201 = vst [vmem:[#allocation2 + $0x118] sm:$0xff] %v1193
  %1202 = vst [vmem:[#allocation2 + $0x120] sm:$0xff] %v1194
  %1203 = vst [vmem:[#allocation2 + $0x128] sm:$0xff] %v1195
  %1204 = vst [vmem:[#allocation2 + $0x130] sm:$0xff] %v1196
  %1205 = vst [vmem:[#allocation2 + $0x138] sm:$0xff] %v1197
  %v1206 = vld [vmem:[%s3] sm:$0xff]
  %v1207 = vld [vmem:[%s3 + $0x8] sm:$0xff]
  %v1208 = vld [vmem:[#allocation2] sm:$0xff]
  %v1209 = vld [vmem:[#allocation2 + $0x8] sm:$0xff]
  %v1210 = vld [vmem:[#allocation2 + $0x10] sm:$0xff]
  %v1211 = vld [vmem:[#allocation2 + $0x18] sm:$0xff]
  %v1212 = vld [vmem:[#allocation2 + $0x20] sm:$0xff]
  %v1213 = vld [vmem:[#allocation2 + $0x28] sm:$0xff]
  %v1214 = vld [vmem:[#allocation2 + $0x30] sm:$0xff]
  %v1215 = vld [vmem:[#allocation2 + $0x38] sm:$0xff]
  %v1216 = vld [vmem:[#allocation2 + $0x40] sm:$0xff]
  %v1217 = vld [vmem:[#allocation2 + $0x48] sm:$0xff]
  %v1218 = vld [vmem:[#allocation2 + $0x50] sm:$0xff]
  %v1219 = vld [vmem:[#allocation2 + $0x58] sm:$0xff]
  %v1220 = vld [vmem:[#allocation2 + $0x60] sm:$0xff]
  %v1221 = vld [vmem:[#allocation2 + $0x68] sm:$0xff]
  %v1222 = vld [vmem:[#allocation2 + $0x70] sm:$0xff]
  %v1223 = vld [vmem:[#allocation2 + $0x78] sm:$0xff]
  %v1224 = vld [vmem:[#allocation2 + $0x80] sm:$0xff]
  %v1225 = vld [vmem:[#allocation2 + $0x88] sm:$0xff]
  %v1226 = vld [vmem:[#allocation2 + $0x90] sm:$0xff]
  %v1227 = vld [vmem:[#allocation2 + $0x98] sm:$0xff]
  %v1228 = vld [vmem:[#allocation2 + $0xa0] sm:$0xff]
  %v1229 = vld [vmem:[#allocation2 + $0xa8] sm:$0xff]
  %v1230 = vld [vmem:[#allocation2 + $0xb0] sm:$0xff]
  %v1231 = vld [vmem:[#allocation2 + $0xb8] sm:$0xff]
  %v1232 = vld [vmem:[#allocation2 + $0xc0] sm:$0xff]
  %v1233 = vld [vmem:[#allocation2 + $0xc8] sm:$0xff]
  %v1234 = vld [vmem:[#allocation2 + $0xd0] sm:$0xff]
  %v1235 = vld [vmem:[#allocation2 + $0xd8] sm:$0xff]
  %v1236 = vld [vmem:[#allocation2 + $0xe0] sm:$0xff]
  %v1237 = vld [vmem:[#allocation2 + $0xe8] sm:$0xff]
  %v1238 = vld [vmem:[#allocation2 + $0xf0] sm:$0xff]
  %v1239 = vld [vmem:[#allocation2 + $0xf8] sm:$0xff]
  %v1240 = vld [vmem:[#allocation2 + $0x100] sm:$0xff]
  %v1241 = vld [vmem:[#allocation2 + $0x108] sm:$0xff]
  %v1242 = vld [vmem:[#allocation2 + $0x110] sm:$0xff]
  %v1243 = vld [vmem:[#allocation2 + $0x118] sm:$0xff]
  %v1244 = vld [vmem:[#allocation2 + $0x120] sm:$0xff]
  %v1245 = vld [vmem:[#allocation2 + $0x128] sm:$0xff]
  %v1246 = vld [vmem:[#allocation2 + $0x130] sm:$0xff]
  %v1247 = vld [vmem:[#allocation2 + $0x138] sm:$0xff]
  %vm1248 = vcmask 654336
  %v1250 = vsel %vm1248, %v1206, 0
  %v1253 = vsel %vm1248, %v1207, 0
  %1255 = vmatprep.subr.mxu0 %v1209
  %1256 = vmatpush1.msra.mxu0 %v1208
  %1257 = vmatprep.subr.mxu0 %v1213
  %1258 = vmatpush1.msra.mxu0 %v1212
  %1259 = vmatprep.subr.mxu0 %v1217
  %1260 = vmatpush1.msra.mxu0 %v1216
  %1261 = vmatprep.subr.mxu0 %v1221
  %1262 = vmatpush1.msra.mxu0 %v1220
  %1263 = vmatprep.subr.mxu0 %v1225
  %1264 = vmatpush1.msra.mxu0 %v1224
  %1265 = vmatprep.subr.mxu0 %v1229
  %1266 = vmatpush1.msra.mxu0 %v1228
  %1267 = vmatprep.subr.mxu0 %v1233
  %1268 = vmatpush1.msra.mxu0 %v1232
  %1269 = vmatprep.subr.mxu0 %v1237
  %1270 = vmatpush1.msra.mxu0 %v1236
  %1271 = vmatprep.subr.mxu0 %v1241
  %1272 = vmatpush1.msra.mxu0 %v1240
  %1273 = vmatprep.subr.mxu0 %v1245
  %1274 = vmatpush1.msra.mxu0 %v1244
  %1275 = vmatprep.subr.mxu0 0.0
  %1276 = vmatpush1.msra.mxu0 0.0
  %1277 = vmatprep.subr.mxu0 0.0
  %1278 = vmatpush1.msra.mxu0 0.0
  %1279 = vmatprep.subr.mxu0 0.0
  %1280 = vmatpush1.msra.mxu0 0.0
  %1281 = vmatprep.subr.mxu0 0.0
  %1282 = vmatpush1.msra.mxu0 0.0
  %1283 = vmatprep.subr.mxu0 0.0
  %1284 = vmatpush1.msra.mxu0 0.0
  %1285 = vmatprep.subr.mxu0 0.0
  %1286 = vmatpush1.msra.mxu0 0.0
  %1287 = vmatprep.subr.mxu0 0.0
  %1288 = vmatpush1.msra.mxu0 0.0
  %1289 = vmatprep.subr.mxu0 0.0
  %1290 = vmatpush1.msra.mxu0 0.0
  %1291 = vmatprep.subr.mxu0 0.0
  %1292 = vmatpush1.msra.mxu0 0.0
  %1293 = vmatprep.subr.mxu0 0.0
  %1294 = vmatpush1.msra.mxu0 0.0
  %1295 = vmatprep.subr.mxu0 0.0
  %1296 = vmatpush1.msra.mxu0 0.0
  %1297 = vmatprep.subr.mxu0 0.0
  %1298 = vmatpush1.msra.mxu0 0.0
  %1299 = vmatprep.subr.mxu0 0.0
  %1300 = vmatpush1.msra.mxu0 0.0
  %1301 = vmatprep.subr.mxu0 0.0
  %1302 = vmatpush1.msra.mxu0 0.0
  %1303 = vmatprep.subr.mxu0 0.0
  %1304 = vmatpush1.msra.mxu0 0.0
  %1305 = vmatprep.subr.mxu0 0.0
  %1306 = vmatpush1.msra.mxu0 0.0
  %1307 = vmatprep.subr.mxu0 0.0
  %1308 = vmatpush1.msra.mxu0 0.0
  %1309 = vmatprep.subr.mxu0 0.0
  %1310 = vmatpush1.msra.mxu0 0.0
  %1311 = vmatprep.subr.mxu0 0.0
  %1312 = vmatpush1.msra.mxu0 0.0
  %1313 = vmatprep.subr.mxu0 0.0
  %1314 = vmatpush1.msra.mxu0 0.0
  %1315 = vmatprep.subr.mxu0 0.0
  %1316 = vmatpush1.msra.mxu0 0.0
  %1317 = vmatprep.subr.mxu0 0.0
  %1318 = vmatpush1.msra.mxu0 0.0
  %1319 = vmatprep.mubr.f32.mxu0 0.0
  %1320 = vmatmul.mubr.f32.gmra.mrb[0].mxu0 %v1250
  %v1321 = vpop.f32.mrb[0].mxu0
  %v1322 = vadd.f32 %v823, %v1321
  %v1323 = vpop.f32.mrb[0].mxu0
  %v1324 = vadd.f32 %v825, %v1323
  %1325 = vmatprep.mubr.f32.mxu0 0.0
  %1326 = vmatmul.mubr.f32.gmra.mrb[0].mxu0 %v1253
  %v1327 = vpop.f32.mrb[0].mxu0
  %v1328 = vadd.f32 %v829, %v1327
  %v1329 = vpop.f32.mrb[0].mxu0
  %v1330 = vadd.f32 %v831, %v1329
  %1331 = vdwg.mxu0
  %1332 = vmatprep.subr.mxu0 %v1211
  %1333 = vmatpush1.msra.mxu0 %v1210
  %1334 = vmatprep.subr.mxu0 %v1215
  %1335 = vmatpush1.msra.mxu0 %v1214
  %1336 = vmatprep.subr.mxu0 %v1219
  %1337 = vmatpush1.msra.mxu0 %v1218
  %1338 = vmatprep.subr.mxu0 %v1223
  %1339 = vmatpush1.msra.mxu0 %v1222
  %1340 = vmatprep.subr.mxu0 %v1227
  %1341 = vmatpush1.msra.mxu0 %v1226
  %1342 = vmatprep.subr.mxu0 %v1231
  %1343 = vmatpush1.msra.mxu0 %v1230
  %1344 = vmatprep.subr.mxu0 %v1235
  %1345 = vmatpush1.msra.mxu0 %v1234
  %1346 = vmatprep.subr.mxu0 %v1239
  %1347 = vmatpush1.msra.mxu0 %v1238
  %1348 = vmatprep.subr.mxu0 %v1243
  %1349 = vmatpush1.msra.mxu0 %v1242
  %1350 = vmatprep.subr.mxu0 %v1247
  %1351 = vmatpush1.msra.mxu0 %v1246
  %1352 = vmatprep.subr.mxu0 0.0
  %1353 = vmatpush1.msra.mxu0 0.0
  %1354 = vmatprep.subr.mxu0 0.0
  %1355 = vmatpush1.msra.mxu0 0.0
  %1356 = vmatprep.subr.mxu0 0.0
  %1357 = vmatpush1.msra.mxu0 0.0
  %1358 = vmatprep.subr.mxu0 0.0
  %1359 = vmatpush1.msra.mxu0 0.0
  %1360 = vmatprep.subr.mxu0 0.0
  %1361 = vmatpush1.msra.mxu0 0.0
  %1362 = vmatprep.subr.mxu0 0.0
  %1363 = vmatpush1.msra.mxu0 0.0
  %1364 = vmatprep.subr.mxu0 0.0
  %1365 = vmatpush1.msra.mxu0 0.0
  %1366 = vmatprep.subr.mxu0 0.0
  %1367 = vmatpush1.msra.mxu0 0.0
  %1368 = vmatprep.subr.mxu0 0.0
  %1369 = vmatpush1.msra.mxu0 0.0
  %1370 = vmatprep.subr.mxu0 0.0
  %1371 = vmatpush1.msra.mxu0 0.0
  %1372 = vmatprep.subr.mxu0 0.0
  %1373 = vmatpush1.msra.mxu0 0.0
  %1374 = vmatprep.subr.mxu0 0.0
  %1375 = vmatpush1.msra.mxu0 0.0
  %1376 = vmatprep.subr.mxu0 0.0
  %1377 = vmatpush1.msra.mxu0 0.0
  %1378 = vmatprep.subr.mxu0 0.0
  %1379 = vmatpush1.msra.mxu0 0.0
  %1380 = vmatprep.subr.mxu0 0.0
  %1381 = vmatpush1.msra.mxu0 0.0
  %1382 = vmatprep.subr.mxu0 0.0
  %1383 = vmatpush1.msra.mxu0 0.0
  %1384 = vmatprep.subr.mxu0 0.0
  %1385 = vmatpush1.msra.mxu0 0.0
  %1386 = vmatprep.subr.mxu0 0.0
  %1387 = vmatpush1.msra.mxu0 0.0
  %1388 = vmatprep.subr.mxu0 0.0
  %1389 = vmatpush1.msra.mxu0 0.0
  %1390 = vmatprep.subr.mxu0 0.0
  %1391 = vmatpush1.msra.mxu0 0.0
  %1392 = vmatprep.subr.mxu0 0.0
  %1393 = vmatpush1.msra.mxu0 0.0
  %1394 = vmatprep.subr.mxu0 0.0
  %1395 = vmatpush1.msra.mxu0 0.0
  %1396 = vmatprep.mubr.f32.mxu0 0.0
  %1397 = vmatmul.mubr.f32.gmra.mrb[0].mxu0 %v1250
  %v1398 = vpop.f32.mrb[0].mxu0
  %v1399 = vadd.f32 %v924, %v1398
  %v1400 = vpop.f32.mrb[0].mxu0
  %v1401 = vadd.f32 %v926, %v1400
  %1402 = vmatprep.mubr.f32.mxu0 0.0
  %1403 = vmatmul.mubr.f32.gmra.mrb[0].mxu0 %v1253
  %v1404 = vpop.f32.mrb[0].mxu0
  %v1405 = vadd.f32 %v930, %v1404
  %v1406 = vpop.f32.mrb[0].mxu0
  %v1407 = vadd.f32 %v932, %v1406
  %1408 = vdwg.mxu0
  %v1409 = vtanh.pop %v1322
  %v1410 = vtanh.pop %v1324
  %v1411 = vtanh.pop %v1399
  %v1412 = vtanh.pop %v1401
  %v1413 = vtanh.pop %v1328
  %v1414 = vtanh.pop %v1330
  %v1415 = vtanh.pop %v1405
  %v1416 = vtanh.pop %v1407
  %v1417 = vsub.f32 1.0, %v967
  %v1418 = vsub.f32 1.0, %v969
  %v1419 = vsub.f32 1.0, %v971
  %v1420 = vsub.f32 1.0, %v973
  %v1421 = vsub.f32 1.0, %v975
  %v1422 = vsub.f32 1.0, %v977
  %v1423 = vsub.f32 1.0, %v979
  %v1424 = vsub.f32 1.0, %v981
  %v1425 = vmul.f32 %v1417, %v20
  %v1426 = vmul.f32 %v1418, %v21
  %v1427 = vmul.f32 %v1419, %v22
  %v1428 = vmul.f32 %v1420, %v23
  %v1429 = vmul.f32 %v1421, %v24
  %v1430 = vmul.f32 %v1422, %v25
  %v1431 = vmul.f32 %v1423, %v26
  %v1432 = vmul.f32 %v1424, %v27
  %v1433 = vmul.f32 %v967, %v1409
  %v1434 = vmul.f32 %v969, %v1410
  %v1435 = vmul.f32 %v971, %v1411
  %v1436 = vmul.f32 %v973, %v1412
  %v1437 = vmul.f32 %v975, %v1413
  %v1438 = vmul.f32 %v977, %v1414
  %v1439 = vmul.f32 %v979, %v1415
  %v1440 = vmul.f32 %v981, %v1416
  %v1441 = vadd.f32 %v1425, %v1433
  %v1442 = vadd.f32 %v1426, %v1434
  %v1443 = vadd.f32 %v1427, %v1435
  %v1444 = vadd.f32 %v1428, %v1436
  %v1445 = vadd.f32 %v1429, %v1437
  %v1446 = vadd.f32 %v1430, %v1438
  %v1447 = vadd.f32 %v1431, %v1439
  %v1448 = vadd.f32 %v1432, %v1440
  %1449 = vst [vmem:[%s5] sm:$0xff] %v1441
  %1450 = vst [vmem:[%s5 + $0x8] sm:$0xff] %v1442
  %1451 = vst [vmem:[%s5 + $0x10] sm:$0xff] %v1443
  %1452 = vst [vmem:[%s5 + $0x18] sm:$0xff] %v1444
  %1453 = vst [vmem:[%s5 + $0x20] sm:$0xff] %v1445
  %1454 = vst [vmem:[%s5 + $0x28] sm:$0xff] %v1446
  %1455 = vst [vmem:[%s5 + $0x30] sm:$0xff] %v1447
  %1456 = vst [vmem:[%s5 + $0x38] sm:$0xff] %v1448
  // Predicated region
  $region22: #{sep_conv_gru3d_forward.3} parent=0 // pred_check
    _
  $region23: #{sep_conv_gru3d_forward.3} parent=0 // pred_check_branch
    %1458 = sbr.rel (0) target = $region25
  $region24: #{sep_conv_gru3d_forward.3} parent=0 // pred_region
    _
  $region25: #{sep_conv_gru3d_forward.3} parent=0 // pred_fallthru
    _
  // Predicated region
  $region26: #{sep_conv_gru3d_forward.3} parent=0 // pred_check
    _
  $region27: #{sep_conv_gru3d_forward.3} parent=0 // pred_check_branch
    %1460 = sbr.rel (0) target = $region29
  $region28: #{sep_conv_gru3d_forward.3} parent=0 // pred_region
    _
  $region29: #{sep_conv_gru3d_forward.3} parent=0 // pred_fallthru
    _

// kernel: sep_conv_gru3d_forward.5
$region0: #{sep_conv_gru3d_forward.5}
  #allocation0 [shape = 'u32[]', space=smem, size = 0x4, offset = 0x4, fixed_abs, tag = 'smem constant byte address 0x4 - core index']
  #allocation1 [shape = 'u32[144,128]{1,0:T(1,128)}', space=vmem, size = 0x12000, scoped, tag = 'internal scratch']
  #allocation2 [shape = 'f32[200,512]{1,0:T(8,128)}', space=vmem, size = 0x64000, scoped, tag = 'scratch operand']
  %s0 = inlined_call_operand.vmem [shape: f32[16,512], index: 0, kind: input, shape index: {}, may-alias: {0,5}]
  %s1 = inlined_call_operand.vmem [shape: f32[24,512], index: 1, kind: input, shape index: {}]
  %s2 = inlined_call_operand.vmem [shape: f32[48,200], index: 2, kind: input, shape index: {}]
  %s3 = inlined_call_operand.vmem [shape: f32[16,80], index: 3, kind: input, shape index: {}]
  %s4 = inlined_call_operand.vmem [shape: f32[48,1], index: 4, kind: input, shape index: {}]
  %s5 = inlined_call_operand.vmem [shape: f32[16,512], index: 5, kind: output, shape index: {}, may-alias: {0,5}]
  %s6 = sld [smem:[#allocation0]]
  $region30: #{sep_conv_gru3d_forward.5} parent=0
    _
  %s8 = ssub.s32 1, %s6
  %s9 = scalar_select 0, %s8, %s6
  // Predicated region
  $region2: #{sep_conv_gru3d_forward.5} parent=0 // pred_check
    _
  $region3: #{sep_conv_gru3d_forward.5} parent=0 // pred_check_branch
    %11 = sbr.rel (0) target = $region5
  $region4: #{sep_conv_gru3d_forward.5} parent=0 // pred_region
    _
  $region5: #{sep_conv_gru3d_forward.5} parent=0 // pred_fallthru
    _
  // Predicated region
  $region6: #{sep_conv_gru3d_forward.5} parent=0 // pred_check
    _
  $region7: #{sep_conv_gru3d_forward.5} parent=0 // pred_check_branch
    %13 = sbr.rel (0) target = $region9
  $region8: #{sep_conv_gru3d_forward.5} parent=0 // pred_region
    _
  $region9: #{sep_conv_gru3d_forward.5} parent=0 // pred_fallthru
    _
  // Predicated region
  $region10: #{sep_conv_gru3d_forward.5} parent=0 // pred_check
    _
  $region11: #{sep_conv_gru3d_forward.5} parent=0 // pred_check_branch
    %15 = sbr.rel (0) target = $region13
  $region12: #{sep_conv_gru3d_forward.5} parent=0 // pred_region
    _
  $region13: #{sep_conv_gru3d_forward.5} parent=0 // pred_fallthru
    _
  // Predicated region
  $region14: #{sep_conv_gru3d_forward.5} parent=0 // pred_check
    _
  $region15: #{sep_conv_gru3d_forward.5} parent=0 // pred_check_branch
    %17 = sbr.rel (0) target = $region17
  $region16: #{sep_conv_gru3d_forward.5} parent=0 // pred_region
    _
  $region17: #{sep_conv_gru3d_forward.5} parent=0 // pred_fallthru
    _
  // Predicated region
  $region18: #{sep_conv_gru3d_forward.5} parent=0 // pred_check
    _
  $region19: #{sep_conv_gru3d_forward.5} parent=0 // pred_check_branch
    %19 = sbr.rel (0) target = $region21
  $region20: #{sep_conv_gru3d_forward.5} parent=0 // pred_region
    _
  $region21: #{sep_conv_gru3d_forward.5} parent=0 // pred_fallthru
    _
  %v20 = vld [vmem:[%s0] sm:$0xff]
  %v21 = vld [vmem:[%s0 + $0x8] sm:$0xff]
  %v22 = vld [vmem:[%s0 + $0x10] sm:$0xff]
  %v23 = vld [vmem:[%s0 + $0x18] sm:$0xff]
  %v24 = vld [vmem:[%s0 + $0x20] sm:$0xff]
  %v25 = vld [vmem:[%s0 + $0x28] sm:$0xff]
  %v26 = vld [vmem:[%s0 + $0x30] sm:$0xff]
  %v27 = vld [vmem:[%s0 + $0x38] sm:$0xff]
  %v28 = vlaneseq
  %v29 = vand.u32 %v28, 127
  %v30 = vadd.s32 %v29, 128
  %v31 = vadd.s32 %v29, 256
  %v32 = vadd.s32 %v29, 384
  %vm33 = vcmp.lt.s32.totalorder %v29, 0
  %v34 = vsub.s32 0, %v29
  %v35 = vsel %vm33, %v34, %v29
  %v36 = vshrl.u32 %v35, 2
  %v37 = vand.u32 %v35, 3
  %v38 = vsub.s32 0, %v37
  %v39 = vsel %vm33, %v38, %v37
  %vm40 = vcmp.lt.s32.totalorder %v30, 0
  %v41 = vsub.s32 0, %v30
  %v42 = vsel %vm40, %v41, %v30
  %v43 = vshrl.u32 %v42, 2
  %v44 = vand.u32 %v42, 3
  %v45 = vsub.s32 0, %v44
  %v46 = vsel %vm40, %v45, %v44
  %vm47 = vcmp.lt.s32.totalorder %v31, 0
  %v48 = vsub.s32 0, %v31
  %v49 = vsel %vm47, %v48, %v31
  %v50 = vshrl.u32 %v49, 2
  %v51 = vand.u32 %v49, 3
  %v52 = vsub.s32 0, %v51
  %v53 = vsel %vm47, %v52, %v51
  %vm54 = vcmp.lt.s32.totalorder %v32, 0
  %v55 = vsub.s32 0, %v32
  %v56 = vsel %vm54, %v55, %v32
  %v57 = vshrl.u32 %v56, 2
  %v58 = vand.u32 %v56, 3
  %v59 = vsub.s32 0, %v58
  %v60 = vsel %vm54, %v59, %v58
  %vm61 = vcmp.ne.s32.totalorder %v39, 0
  %vm62 = vcmp.ne.s32.totalorder %v46, 0
  %vm63 = vcmp.ne.s32.totalorder %v53, 0
  %vm64 = vcmp.ne.s32.totalorder %v60, 0
  %vm65 = vcmp.lt.s32.totalorder %v39, 0
  %vm66 = vcmp.lt.s32.totalorder %v46, 0
  %vm67 = vcmp.lt.s32.totalorder %v53, 0
  %vm68 = vcmp.lt.s32.totalorder %v60, 0
  %vm69 = vmand %vm65, %vm61
  %vm70 = vmand %vm66, %vm62
  %vm71 = vmand %vm67, %vm63
  %vm72 = vmand %vm68, %vm64
  %v73 = vadd.s32 %v39, 4
  %v74 = vadd.s32 %v46, 4
  %v75 = vadd.s32 %v53, 4
  %v76 = vadd.s32 %v60, 4
  %v77 = vsel %vm69, %v73, %v39
  %v78 = vsel %vm70, %v74, %v46
  %v79 = vsel %vm71, %v75, %v53
  %v80 = vsel %vm72, %v76, %v60
  %vm81 = vcmp.ge.s32.totalorder %v77, 2
  %vm82 = vcmp.ge.s32.totalorder %v78, 2
  %vm83 = vcmp.ge.s32.totalorder %v79, 2
  %vm84 = vcmp.ge.s32.totalorder %v80, 2
  %vm85 = vcmp.ge.s32.totalorder %v77, 1
  %vm86 = vcmp.ge.s32.totalorder %v78, 1
  %vm87 = vcmp.ge.s32.totalorder %v79, 1
  %vm88 = vcmp.ge.s32.totalorder %v80, 1
  %vm89 = vcmp.lt.s32.totalorder %v77, 3
  %vm90 = vcmp.lt.s32.totalorder %v78, 3
  %vm91 = vcmp.lt.s32.totalorder %v79, 3
  %vm92 = vcmp.lt.s32.totalorder %v80, 3
  %vm93 = vcmp.lt.s32.totalorder %v77, 2
  %vm94 = vcmp.lt.s32.totalorder %v78, 2
  %vm95 = vcmp.lt.s32.totalorder %v79, 2
  %vm96 = vcmp.lt.s32.totalorder %v80, 2
  %97 = vrot.lane.b32.xlu0 %v20, 2
  %v98 = vpop.permute.xlu0 %97
  %99 = vrot.lane.b32.xlu0 %v24, 2
  %v100 = vpop.permute.xlu0 %99
  %101 = vrot.lane.b32.xlu0 %v21, 2
  %v102 = vpop.permute.xlu0 %101
  %103 = vrot.lane.b32.xlu0 %v25, 2
  %v104 = vpop.permute.xlu0 %103
  %105 = vrot.lane.b32.xlu0 %v22, 2
  %v106 = vpop.permute.xlu0 %105
  %107 = vrot.lane.b32.xlu0 %v26, 2
  %v108 = vpop.permute.xlu0 %107
  %109 = vrot.lane.b32.xlu0 %v23, 2
  %v110 = vpop.permute.xlu0 %109
  %111 = vrot.lane.b32.xlu0 %v27, 2
  %v112 = vpop.permute.xlu0 %111
  %vm113 = vcmp.lt.s32.totalorder %v29, 2
  %v114 = vsel %vm113, %v106, %v110
  %v115 = vsel %vm113, %v108, %v112
  %v116 = vsel %vm113, %v102, %v106
  %v117 = vsel %vm113, %v104, %v108
  %v118 = vsel %vm113, %v98, %v102
  %v119 = vsel %vm113, %v100, %v104
  %v120 = vsel %vm113, %v110, %v98
  %v121 = vsel %vm113, %v112, %v100
  %v122 = vsel %vm81, 1, 0
  %v123 = vsel %vm82, 1, 0
  %v124 = vsel %vm83, 1, 0
  %v125 = vsel %vm84, 1, 0
  %vm126 = vcmp.eq.s32.totalorder %v122, 1
  %vm127 = vcmp.eq.s32.totalorder %v123, 1
  %vm128 = vcmp.eq.s32.totalorder %v124, 1
  %vm129 = vcmp.eq.s32.totalorder %v125, 1
  %v130 = vsel %vm126, %v120, 0.0
  %v131 = vsel %vm127, %v118, 0.0
  %v132 = vsel %vm128, %v116, 0.0
  %v133 = vsel %vm129, %v114, 0.0
  %v134 = vsel %vm126, %v121, 0.0
  %v135 = vsel %vm127, %v119, 0.0
  %v136 = vsel %vm128, %v117, 0.0
  %v137 = vsel %vm129, %v115, 0.0
  %138 = vst [vmem:[#allocation2] sm:$0xff] %v130
  %139 = vst [vmem:[#allocation2 + $0x8] sm:$0xff] %v131
  %140 = vst [vmem:[#allocation2 + $0x10] sm:$0xff] %v132
  %141 = vst [vmem:[#allocation2 + $0x18] sm:$0xff] %v133
  %142 = vst [vmem:[#allocation2 + $0x20] sm:$0xff] %v134
  %143 = vst [vmem:[#allocation2 + $0x28] sm:$0xff] %v135
  %144 = vst [vmem:[#allocation2 + $0x30] sm:$0xff] %v136
  %145 = vst [vmem:[#allocation2 + $0x38] sm:$0xff] %v137
  %146 = vrot.lane.b32.xlu0 %v20, 1
  %v147 = vpop.permute.xlu0 %146
  %148 = vrot.lane.b32.xlu0 %v24, 1
  %v149 = vpop.permute.xlu0 %148
  %150 = vrot.lane.b32.xlu0 %v21, 1
  %v151 = vpop.permute.xlu0 %150
  %152 = vrot.lane.b32.xlu0 %v25, 1
  %v153 = vpop.permute.xlu0 %152
  %154 = vrot.lane.b32.xlu0 %v22, 1
  %v155 = vpop.permute.xlu0 %154
  %156 = vrot.lane.b32.xlu0 %v26, 1
  %v157 = vpop.permute.xlu0 %156
  %158 = vrot.lane.b32.xlu0 %v23, 1
  %v159 = vpop.permute.xlu0 %158
  %160 = vrot.lane.b32.xlu0 %v27, 1
  %v161 = vpop.permute.xlu0 %160
  %vm162 = vcmp.lt.s32.totalorder %v29, 1
  %v163 = vsel %vm162, %v155, %v159
  %v164 = vsel %vm162, %v157, %v161
  %v165 = vsel %vm162, %v151, %v155
  %v166 = vsel %vm162, %v153, %v157
  %v167 = vsel %vm162, %v147, %v151
  %v168 = vsel %vm162, %v149, %v153
  %v169 = vsel %vm162, %v159, %v147
  %v170 = vsel %vm162, %v161, %v149
  %v171 = vsel %vm85, 1, 0
  %v172 = vsel %vm86, 1, 0
  %v173 = vsel %vm87, 1, 0
  %v174 = vsel %vm88, 1, 0
  %vm175 = vcmp.eq.s32.totalorder %v171, 1
  %vm176 = vcmp.eq.s32.totalorder %v172, 1
  %vm177 = vcmp.eq.s32.totalorder %v173, 1
  %vm178 = vcmp.eq.s32.totalorder %v174, 1
  %v179 = vsel %vm175, %v169, 0.0
  %v180 = vsel %vm176, %v167, 0.0
  %v181 = vsel %vm177, %v165, 0.0
  %v182 = vsel %vm178, %v163, 0.0
  %v183 = vsel %vm175, %v170, 0.0
  %v184 = vsel %vm176, %v168, 0.0
  %v185 = vsel %vm177, %v166, 0.0
  %v186 = vsel %vm178, %v164, 0.0
  %187 = vst [vmem:[#allocation2 + $0x40] sm:$0xff] %v179
  %188 = vst [vmem:[#allocation2 + $0x48] sm:$0xff] %v180
  %189 = vst [vmem:[#allocation2 + $0x50] sm:$0xff] %v181
  %190 = vst [vmem:[#allocation2 + $0x58] sm:$0xff] %v182
  %191 = vst [vmem:[#allocation2 + $0x60] sm:$0xff] %v183
  %192 = vst [vmem:[#allocation2 + $0x68] sm:$0xff] %v184
  %193 = vst [vmem:[#allocation2 + $0x70] sm:$0xff] %v185
  %194 = vst [vmem:[#allocation2 + $0x78] sm:$0xff] %v186
  %195 = vst [vmem:[#allocation2 + $0x80] sm:$0xff] %v20
  %196 = vst [vmem:[#allocation2 + $0x88] sm:$0xff] %v21
  %197 = vst [vmem:[#allocation2 + $0x90] sm:$0xff] %v22
  %198 = vst [vmem:[#allocation2 + $0x98] sm:$0xff] %v23
  %199 = vst [vmem:[#allocation2 + $0xa0] sm:$0xff] %v24
  %200 = vst [vmem:[#allocation2 + $0xa8] sm:$0xff] %v25
  %201 = vst [vmem:[#allocation2 + $0xb0] sm:$0xff] %v26
  %202 = vst [vmem:[#allocation2 + $0xb8] sm:$0xff] %v27
  %203 = vrot.lane.b32.xlu0 %v20, 127
  %v204 = vpop.permute.xlu0 %203
  %205 = vrot.lane.b32.xlu0 %v24, 127
  %v206 = vpop.permute.xlu0 %205
  %207 = vrot.lane.b32.xlu0 %v21, 127
  %v208 = vpop.permute.xlu0 %207
  %209 = vrot.lane.b32.xlu0 %v25, 127
  %v210 = vpop.permute.xlu0 %209
  %211 = vrot.lane.b32.xlu0 %v22, 127
  %v212 = vpop.permute.xlu0 %211
  %213 = vrot.lane.b32.xlu0 %v26, 127
  %v214 = vpop.permute.xlu0 %213
  %215 = vrot.lane.b32.xlu0 %v23, 127
  %v216 = vpop.permute.xlu0 %215
  %217 = vrot.lane.b32.xlu0 %v27, 127
  %v218 = vpop.permute.xlu0 %217
  %vm219 = vcmp.lt.s32.totalorder %v29, 127
  %v220 = vsel %vm219, %v212, %v216
  %v221 = vsel %vm219, %v214, %v218
  %v222 = vsel %vm219, %v208, %v212
  %v223 = vsel %vm219, %v210, %v214
  %v224 = vsel %vm219, %v204, %v208
  %v225 = vsel %vm219, %v206, %v210
  %v226 = vsel %vm219, %v216, %v204
  %v227 = vsel %vm219, %v218, %v206
  %v228 = vsel %vm89, 1, 0
  %v229 = vsel %vm90, 1, 0
  %v230 = vsel %vm91, 1, 0
  %v231 = vsel %vm92, 1, 0
  %vm232 = vcmp.eq.s32.totalorder %v228, 1
  %vm233 = vcmp.eq.s32.totalorder %v229, 1
  %vm234 = vcmp.eq.s32.totalorder %v230, 1
  %vm235 = vcmp.eq.s32.totalorder %v231, 1
  %v236 = vsel %vm232, %v224, 0.0
  %v237 = vsel %vm233, %v222, 0.0
  %v238 = vsel %vm234, %v220, 0.0
  %v239 = vsel %vm235, %v226, 0.0
  %v240 = vsel %vm232, %v225, 0.0
  %v241 = vsel %vm233, %v223, 0.0
  %v242 = vsel %vm234, %v221, 0.0
  %v243 = vsel %vm235, %v227, 0.0
  %244 = vst [vmem:[#allocation2 + $0xc0] sm:$0xff] %v236
  %245 = vst [vmem:[#allocation2 + $0xc8] sm:$0xff] %v237
  %246 = vst [vmem:[#allocation2 + $0xd0] sm:$0xff] %v238
  %247 = vst [vmem:[#allocation2 + $0xd8] sm:$0xff] %v239
  %248 = vst [vmem:[#allocation2 + $0xe0] sm:$0xff] %v240
  %249 = vst [vmem:[#allocation2 + $0xe8] sm:$0xff] %v241
  %250 = vst [vmem:[#allocation2 + $0xf0] sm:$0xff] %v242
  %251 = vst [vmem:[#allocation2 + $0xf8] sm:$0xff] %v243
  %252 = vrot.lane.b32.xlu0 %v20, 126
  %v253 = vpop.permute.xlu0 %252
  %254 = vrot.lane.b32.xlu0 %v24, 126
  %v255 = vpop.permute.xlu0 %254
  %256 = vrot.lane.b32.xlu0 %v21, 126
  %v257 = vpop.permute.xlu0 %256
  %258 = vrot.lane.b32.xlu0 %v25, 126
  %v259 = vpop.permute.xlu0 %258
  %260 = vrot.lane.b32.xlu0 %v22, 126
  %v261 = vpop.permute.xlu0 %260
  %262 = vrot.lane.b32.xlu0 %v26, 126
  %v263 = vpop.permute.xlu0 %262
  %264 = vrot.lane.b32.xlu0 %v23, 126
  %v265 = vpop.permute.xlu0 %264
  %266 = vrot.lane.b32.xlu0 %v27, 126
  %v267 = vpop.permute.xlu0 %266
  %vm268 = vcmp.lt.s32.totalorder %v29, 126
  %v269 = vsel %vm268, %v261, %v265
  %v270 = vsel %vm268, %v263, %v267
  %v271 = vsel %vm268, %v257, %v261
  %v272 = vsel %vm268, %v259, %v263
  %v273 = vsel %vm268, %v253, %v257
  %v274 = vsel %vm268, %v255, %v259
  %v275 = vsel %vm268, %v265, %v253
  %v276 = vsel %vm268, %v267, %v255
  %v277 = vsel %vm93, 1, 0
  %v278 = vsel %vm94, 1, 0
  %v279 = vsel %vm95, 1, 0
  %v280 = vsel %vm96, 1, 0
  %vm281 = vcmp.eq.s32.totalorder %v277, 1
  %vm282 = vcmp.eq.s32.totalorder %v278, 1
  %vm283 = vcmp.eq.s32.totalorder %v279, 1
  %vm284 = vcmp.eq.s32.totalorder %v280, 1
  %v285 = vsel %vm281, %v273, 0.0
  %v286 = vsel %vm282, %v271, 0.0
  %v287 = vsel %vm283, %v269, 0.0
  %v288 = vsel %vm284, %v275, 0.0
  %v289 = vsel %vm281, %v274, 0.0
  %v290 = vsel %vm282, %v272, 0.0
  %v291 = vsel %vm283, %v270, 0.0
  %v292 = vsel %vm284, %v276, 0.0
  %293 = vst [vmem:[#allocation2 + $0x100] sm:$0xff] %v285
  %294 = vst [vmem:[#allocation2 + $0x108] sm:$0xff] %v286
  %295 = vst [vmem:[#allocation2 + $0x110] sm:$0xff] %v287
  %296 = vst [vmem:[#allocation2 + $0x118] sm:$0xff] %v288
  %297 = vst [vmem:[#allocation2 + $0x120] sm:$0xff] %v289
  %298 = vst [vmem:[#allocation2 + $0x128] sm:$0xff] %v290
  %299 = vst [vmem:[#allocation2 + $0x130] sm:$0xff] %v291
  %300 = vst [vmem:[#allocation2 + $0x138] sm:$0xff] %v292
  %v301 = vld [vmem:[%s1] sm:$0xff]
  %v302 = vld [vmem:[%s1 + $0x8] sm:$0xff]
  %v303 = vld [vmem:[%s1 + $0x10] sm:$0xff]
  %v304 = vld [vmem:[%s1 + $0x18] sm:$0xff]
  %v305 = vld [vmem:[%s1 + $0x20] sm:$0xff]
  %v306 = vld [vmem:[%s1 + $0x28] sm:$0xff]
  %v307 = vld [vmem:[%s1 + $0x30] sm:$0xff]
  %v308 = vld [vmem:[%s1 + $0x38] sm:$0xff]
  %v309 = vld [vmem:[%s1 + $0x40] sm:$0xff]
  %v310 = vld [vmem:[%s1 + $0x48] sm:$0xff]
  %v311 = vld [vmem:[%s1 + $0x50] sm:$0xff]
  %v312 = vld [vmem:[%s1 + $0x58] sm:$0xff]
  %313 = vrot.lane.b32.xlu0 %v301, 2
  %v314 = vpop.permute.xlu0 %313
  %315 = vrot.lane.b32.xlu0 %v305, 2
  %v316 = vpop.permute.xlu0 %315
  %317 = vrot.lane.b32.xlu0 %v309, 2
  %v318 = vpop.permute.xlu0 %317
  %319 = vrot.lane.b32.xlu0 %v302, 2
  %v320 = vpop.permute.xlu0 %319
  %321 = vrot.lane.b32.xlu0 %v306, 2
  %v322 = vpop.permute.xlu0 %321
  %323 = vrot.lane.b32.xlu0 %v310, 2
  %v324 = vpop.permute.xlu0 %323
  %325 = vrot.lane.b32.xlu0 %v303, 2
  %v326 = vpop.permute.xlu0 %325
  %327 = vrot.lane.b32.xlu0 %v307, 2
  %v328 = vpop.permute.xlu0 %327
  %329 = vrot.lane.b32.xlu0 %v311, 2
  %v330 = vpop.permute.xlu0 %329
  %331 = vrot.lane.b32.xlu0 %v304, 2
  %v332 = vpop.permute.xlu0 %331
  %333 = vrot.lane.b32.xlu0 %v308, 2
  %v334 = vpop.permute.xlu0 %333
  %335 = vrot.lane.b32.xlu0 %v312, 2
  %v336 = vpop.permute.xlu0 %335
  %v337 = vsel %vm113, %v326, %v332
  %v338 = vsel %vm113, %v328, %v334
  %v339 = vsel %vm113, %v330, %v336
  %v340 = vsel %vm113, %v320, %v326
  %v341 = vsel %vm113, %v322, %v328
  %v342 = vsel %vm113, %v324, %v330
  %v343 = vsel %vm113, %v314, %v320
  %v344 = vsel %vm113, %v316, %v322
  %v345 = vsel %vm113, %v318, %v324
  %v346 = vsel %vm113, %v332, %v314
  %v347 = vsel %vm113, %v334, %v316
  %v348 = vsel %vm113, %v336, %v318
  %v349 = vsel %vm126, %v346, 0.0
  %v350 = vsel %vm127, %v343, 0.0
  %v351 = vsel %vm128, %v340, 0.0
  %v352 = vsel %vm129, %v337, 0.0
  %v353 = vsel %vm126, %v347, 0.0
  %v354 = vsel %vm127, %v344, 0.0
  %v355 = vsel %vm128, %v341, 0.0
  %v356 = vsel %vm129, %v338, 0.0
  %v357 = vsel %vm126, %v348, 0.0
  %v358 = vsel %vm127, %v345, 0.0
  %v359 = vsel %vm128, %v342, 0.0
  %v360 = vsel %vm129, %v339, 0.0
  %361 = vst [vmem:[#allocation2 + $0x140] sm:$0xff] %v349
  %362 = vst [vmem:[#allocation2 + $0x148] sm:$0xff] %v350
  %363 = vst [vmem:[#allocation2 + $0x150] sm:$0xff] %v351
  %364 = vst [vmem:[#allocation2 + $0x158] sm:$0xff] %v352
  %365 = vst [vmem:[#allocation2 + $0x160] sm:$0xff] %v353
  %366 = vst [vmem:[#allocation2 + $0x168] sm:$0xff] %v354
  %367 = vst [vmem:[#allocation2 + $0x170] sm:$0xff] %v355
  %368 = vst [vmem:[#allocation2 + $0x178] sm:$0xff] %v356
  %369 = vst [vmem:[#allocation2 + $0x180] sm:$0xff] %v357
  %370 = vst [vmem:[#allocation2 + $0x188] sm:$0xff] %v358
  %371 = vst [vmem:[#allocation2 + $0x190] sm:$0xff] %v359
  %372 = vst [vmem:[#allocation2 + $0x198] sm:$0xff] %v360
  %373 = vrot.lane.b32.xlu0 %v301, 1
  %v374 = vpop.permute.xlu0 %373
  %375 = vrot.lane.b32.xlu0 %v305, 1
  %v376 = vpop.permute.xlu0 %375
  %377 = vrot.lane.b32.xlu0 %v309, 1
  %v378 = vpop.permute.xlu0 %377
  %379 = vrot.lane.b32.xlu0 %v302, 1
  %v380 = vpop.permute.xlu0 %379
  %381 = vrot.lane.b32.xlu0 %v306, 1
  %v382 = vpop.permute.xlu0 %381
  %383 = vrot.lane.b32.xlu0 %v310, 1
  %v384 = vpop.permute.xlu0 %383
  %385 = vrot.lane.b32.xlu0 %v303, 1
  %v386 = vpop.permute.xlu0 %385
  %387 = vrot.lane.b32.xlu0 %v307, 1
  %v388 = vpop.permute.xlu0 %387
  %389 = vrot.lane.b32.xlu0 %v311, 1
  %v390 = vpop.permute.xlu0 %389
  %391 = vrot.lane.b32.xlu0 %v304, 1
  %v392 = vpop.permute.xlu0 %391
  %393 = vrot.lane.b32.xlu0 %v308, 1
  %v394 = vpop.permute.xlu0 %393
  %395 = vrot.lane.b32.xlu0 %v312, 1
  %v396 = vpop.permute.xlu0 %395
  %v397 = vsel %vm162, %v386, %v392
  %v398 = vsel %vm162, %v388, %v394
  %v399 = vsel %vm162, %v390, %v396
  %v400 = vsel %vm162, %v380, %v386
  %v401 = vsel %vm162, %v382, %v388
  %v402 = vsel %vm162, %v384, %v390
  %v403 = vsel %vm162, %v374, %v380
  %v404 = vsel %vm162, %v376, %v382
  %v405 = vsel %vm162, %v378, %v384
  %v406 = vsel %vm162, %v392, %v374
  %v407 = vsel %vm162, %v394, %v376
  %v408 = vsel %vm162, %v396, %v378
  %v409 = vsel %vm175, %v406, 0.0
  %v410 = vsel %vm176, %v403, 0.0
  %v411 = vsel %vm177, %v400, 0.0
  %v412 = vsel %vm178, %v397, 0.0
  %v413 = vsel %vm175, %v407, 0.0
  %v414 = vsel %vm176, %v404, 0.0
  %v415 = vsel %vm177, %v401, 0.0
  %v416 = vsel %vm178, %v398, 0.0
  %v417 = vsel %vm175, %v408, 0.0
  %v418 = vsel %vm176, %v405, 0.0
  %v419 = vsel %vm177, %v402, 0.0
  %v420 = vsel %vm178, %v399, 0.0
  %421 = vst [vmem:[#allocation2 + $0x1a0] sm:$0xff] %v409
  %422 = vst [vmem:[#allocation2 + $0x1a8] sm:$0xff] %v410
  %423 = vst [vmem:[#allocation2 + $0x1b0] sm:$0xff] %v411
  %424 = vst [vmem:[#allocation2 + $0x1b8] sm:$0xff] %v412
  %425 = vst [vmem:[#allocation2 + $0x1c0] sm:$0xff] %v413
  %426 = vst [vmem:[#allocation2 + $0x1c8] sm:$0xff] %v414
  %427 = vst [vmem:[#allocation2 + $0x1d0] sm:$0xff] %v415
  %428 = vst [vmem:[#allocation2 + $0x1d8] sm:$0xff] %v416
  %429 = vst [vmem:[#allocation2 + $0x1e0] sm:$0xff] %v417
  %430 = vst [vmem:[#allocation2 + $0x1e8] sm:$0xff] %v418
  %431 = vst [vmem:[#allocation2 + $0x1f0] sm:$0xff] %v419
  %432 = vst [vmem:[#allocation2 + $0x1f8] sm:$0xff] %v420
  %433 = vst [vmem:[#allocation2 + $0x200] sm:$0xff] %v301
  %434 = vst [vmem:[#allocation2 + $0x208] sm:$0xff] %v302
  %435 = vst [vmem:[#allocation2 + $0x210] sm:$0xff] %v303
  %436 = vst [vmem:[#allocation2 + $0x218] sm:$0xff] %v304
  %437 = vst [vmem:[#allocation2 + $0x220] sm:$0xff] %v305
  %438 = vst [vmem:[#allocation2 + $0x228] sm:$0xff] %v306
  %439 = vst [vmem:[#allocation2 + $0x230] sm:$0xff] %v307
  %440 = vst [vmem:[#allocation2 + $0x238] sm:$0xff] %v308
  %441 = vst [vmem:[#allocation2 + $0x240] sm:$0xff] %v309
  %442 = vst [vmem:[#allocation2 + $0x248] sm:$0xff] %v310
  %443 = vst [vmem:[#allocation2 + $0x250] sm:$0xff] %v311
  %444 = vst [vmem:[#allocation2 + $0x258] sm:$0xff] %v312
  %445 = vrot.lane.b32.xlu0 %v301, 127
  %v446 = vpop.permute.xlu0 %445
  %447 = vrot.lane.b32.xlu0 %v305, 127
  %v448 = vpop.permute.xlu0 %447
  %449 = vrot.lane.b32.xlu0 %v309, 127
  %v450 = vpop.permute.xlu0 %449
  %451 = vrot.lane.b32.xlu0 %v302, 127
  %v452 = vpop.permute.xlu0 %451
  %453 = vrot.lane.b32.xlu0 %v306, 127
  %v454 = vpop.permute.xlu0 %453
  %455 = vrot.lane.b32.xlu0 %v310, 127
  %v456 = vpop.permute.xlu0 %455
  %457 = vrot.lane.b32.xlu0 %v303, 127
  %v458 = vpop.permute.xlu0 %457
  %459 = vrot.lane.b32.xlu0 %v307, 127
  %v460 = vpop.permute.xlu0 %459
  %461 = vrot.lane.b32.xlu0 %v311, 127
  %v462 = vpop.permute.xlu0 %461
  %463 = vrot.lane.b32.xlu0 %v304, 127
  %v464 = vpop.permute.xlu0 %463
  %465 = vrot.lane.b32.xlu0 %v308, 127
  %v466 = vpop.permute.xlu0 %465
  %467 = vrot.lane.b32.xlu0 %v312, 127
  %v468 = vpop.permute.xlu0 %467
  %v469 = vsel %vm219, %v458, %v464
  %v470 = vsel %vm219, %v460, %v466
  %v471 = vsel %vm219, %v462, %v468
  %v472 = vsel %vm219, %v452, %v458
  %v473 = vsel %vm219, %v454, %v460
  %v474 = vsel %vm219, %v456, %v462
  %v475 = vsel %vm219, %v446, %v452
  %v476 = vsel %vm219, %v448, %v454
  %v477 = vsel %vm219, %v450, %v456
  %v478 = vsel %vm219, %v464, %v446
  %v479 = vsel %vm219, %v466, %v448
  %v480 = vsel %vm219, %v468, %v450
  %v481 = vsel %vm232, %v475, 0.0
  %v482 = vsel %vm233, %v472, 0.0
  %v483 = vsel %vm234, %v469, 0.0
  %v484 = vsel %vm235, %v478, 0.0
  %v485 = vsel %vm232, %v476, 0.0
  %v486 = vsel %vm233, %v473, 0.0
  %v487 = vsel %vm234, %v470, 0.0
  %v488 = vsel %vm235, %v479, 0.0
  %v489 = vsel %vm232, %v477, 0.0
  %v490 = vsel %vm233, %v474, 0.0
  %v491 = vsel %vm234, %v471, 0.0
  %v492 = vsel %vm235, %v480, 0.0
  %493 = vst [vmem:[#allocation2 + $0x260] sm:$0xff] %v481
  %494 = vst [vmem:[#allocation2 + $0x268] sm:$0xff] %v482
  %495 = vst [vmem:[#allocation2 + $0x270] sm:$0xff] %v483
  %496 = vst [vmem:[#allocation2 + $0x278] sm:$0xff] %v484
  %497 = vst [vmem:[#allocation2 + $0x280] sm:$0xff] %v485
  %498 = vst [vmem:[#allocation2 + $0x288] sm:$0xff] %v486
  %499 = vst [vmem:[#allocation2 + $0x290] sm:$0xff] %v487
  %500 = vst [vmem:[#allocation2 + $0x298] sm:$0xff] %v488
  %501 = vst [vmem:[#allocation2 + $0x2a0] sm:$0xff] %v489
  %502 = vst [vmem:[#allocation2 + $0x2a8] sm:$0xff] %v490
  %503 = vst [vmem:[#allocation2 + $0x2b0] sm:$0xff] %v491
  %504 = vst [vmem:[#allocation2 + $0x2b8] sm:$0xff] %v492
  %505 = vrot.lane.b32.xlu0 %v301, 126
  %v506 = vpop.permute.xlu0 %505
  %507 = vrot.lane.b32.xlu0 %v305, 126
  %v508 = vpop.permute.xlu0 %507
  %509 = vrot.lane.b32.xlu0 %v309, 126
  %v510 = vpop.permute.xlu0 %509
  %511 = vrot.lane.b32.xlu0 %v302, 126
  %v512 = vpop.permute.xlu0 %511
  %513 = vrot.lane.b32.xlu0 %v306, 126
  %v514 = vpop.permute.xlu0 %513
  %515 = vrot.lane.b32.xlu0 %v310, 126
  %v516 = vpop.permute.xlu0 %515
  %517 = vrot.lane.b32.xlu0 %v303, 126
  %v518 = vpop.permute.xlu0 %517
  %519 = vrot.lane.b32.xlu0 %v307, 126
  %v520 = vpop.permute.xlu0 %519
  %521 = vrot.lane.b32.xlu0 %v311, 126
  %v522 = vpop.permute.xlu0 %521
  %523 = vrot.lane.b32.xlu0 %v304, 126
  %v524 = vpop.permute.xlu0 %523
  %525 = vrot.lane.b32.xlu0 %v308, 126
  %v526 = vpop.permute.xlu0 %525
  %527 = vrot.lane.b32.xlu0 %v312, 126
  %v528 = vpop.permute.xlu0 %527
  %v529 = vsel %vm268, %v518, %v524
  %v530 = vsel %vm268, %v520, %v526
  %v531 = vsel %vm268, %v522, %v528
  %v532 = vsel %vm268, %v512, %v518
  %v533 = vsel %vm268, %v514, %v520
  %v534 = vsel %vm268, %v516, %v522
  %v535 = vsel %vm268, %v506, %v512
  %v536 = vsel %vm268, %v508, %v514
  %v537 = vsel %vm268, %v510, %v516
  %v538 = vsel %vm268, %v524, %v506
  %v539 = vsel %vm268, %v526, %v508
  %v540 = vsel %vm268, %v528, %v510
  %v541 = vsel %vm281, %v535, 0.0
  %v542 = vsel %vm282, %v532, 0.0
  %v543 = vsel %vm283, %v529, 0.0
  %v544 = vsel %vm284, %v538, 0.0
  %v545 = vsel %vm281, %v536, 0.0
  %v546 = vsel %vm282, %v533, 0.0
  %v547 = vsel %vm283, %v530, 0.0
  %v548 = vsel %vm284, %v539, 0.0
  %v549 = vsel %vm281, %v537, 0.0
  %v550 = vsel %vm282, %v534, 0.0
  %v551 = vsel %vm283, %v531, 0.0
  %v552 = vsel %vm284, %v540, 0.0
  %553 = vst [vmem:[#allocation2 + $0x2c0] sm:$0xff] %v541
  %554 = vst [vmem:[#allocation2 + $0x2c8] sm:$0xff] %v542
  %555 = vst [vmem:[#allocation2 + $0x2d0] sm:$0xff] %v543
  %556 = vst [vmem:[#allocation2 + $0x2d8] sm:$0xff] %v544
  %557 = vst [vmem:[#allocation2 + $0x2e0] sm:$0xff] %v545
  %558 = vst [vmem:[#allocation2 + $0x2e8] sm:$0xff] %v546
  %559 = vst [vmem:[#allocation2 + $0x2f0] sm:$0xff] %v547
  %560 = vst [vmem:[#allocation2 + $0x2f8] sm:$0xff] %v548
  %561 = vst [vmem:[#allocation2 + $0x300] sm:$0xff] %v549
  %562 = vst [vmem:[#allocation2 + $0x308] sm:$0xff] %v550
  %563 = vst [vmem:[#allocation2 + $0x310] sm:$0xff] %v551
  %564 = vst [vmem:[#allocation2 + $0x318] sm:$0xff] %v552
  %v565 = vld [vmem:[%s2] sm:$0xff]
  %v566 = vld [vmem:[%s2 + $0x8] sm:$0xff]
  %v567 = vld [vmem:[%s2 + $0x10] sm:$0xff]
  %v568 = vld [vmem:[%s2 + $0x18] sm:$0xff]
  %v569 = vld [vmem:[%s2 + $0x20] sm:$0xff]
  %v570 = vld [vmem:[%s2 + $0x28] sm:$0xff]
  %v571 = vld [vmem:[%s2 + $0x30] sm:$0xff]
  %v572 = vld [vmem:[%s2 + $0x38] sm:$0xff]
  %v573 = vld [vmem:[%s2 + $0x40] sm:$0xff]
  %v574 = vld [vmem:[%s2 + $0x48] sm:$0xff]
  %v575 = vld [vmem:[%s2 + $0x50] sm:$0xff]
  %v576 = vld [vmem:[%s2 + $0x58] sm:$0xff]
  %v577 = vld [vmem:[#allocation2] sm:$0xff]
  %v578 = vld [vmem:[#allocation2 + $0x8] sm:$0xff]
  %v579 = vld [vmem:[#allocation2 + $0x10] sm:$0xff]
  %v580 = vld [vmem:[#allocation2 + $0x18] sm:$0xff]
  %v581 = vld [vmem:[#allocation2 + $0x20] sm:$0xff]
  %v582 = vld [vmem:[#allocation2 + $0x28] sm:$0xff]
  %v583 = vld [vmem:[#allocation2 + $0x30] sm:$0xff]
  %v584 = vld [vmem:[#allocation2 + $0x38] sm:$0xff]
  %v585 = vld [vmem:[#allocation2 + $0x40] sm:$0xff]
  %v586 = vld [vmem:[#allocation2 + $0x48] sm:$0xff]
  %v587 = vld [vmem:[#allocation2 + $0x50] sm:$0xff]
  %v588 = vld [vmem:[#allocation2 + $0x58] sm:$0xff]
  %v589 = vld [vmem:[#allocation2 + $0x60] sm:$0xff]
  %v590 = vld [vmem:[#allocation2 + $0x68] sm:$0xff]
  %v591 = vld [vmem:[#allocation2 + $0x70] sm:$0xff]
  %v592 = vld [vmem:[#allocation2 + $0x78] sm:$0xff]
  %v593 = vld [vmem:[#allocation2 + $0x80] sm:$0xff]
  %v594 = vld [vmem:[#allocation2 + $0x88] sm:$0xff]
  %v595 = vld [vmem:[#allocation2 + $0x90] sm:$0xff]
  %v596 = vld [vmem:[#allocation2 + $0x98] sm:$0xff]
  %v597 = vld [vmem:[#allocation2 + $0xa0] sm:$0xff]
  %v598 = vld [vmem:[#allocation2 + $0xa8] sm:$0xff]
  %v599 = vld [vmem:[#allocation2 + $0xb0] sm:$0xff]
  %v600 = vld [vmem:[#allocation2 + $0xb8] sm:$0xff]
  %v601 = vld [vmem:[#allocation2 + $0xc0] sm:$0xff]
  %v602 = vld [vmem:[#allocation2 + $0xc8] sm:$0xff]
  %v603 = vld [vmem:[#allocation2 + $0xd0] sm:$0xff]
  %v604 = vld [vmem:[#allocation2 + $0xd8] sm:$0xff]
  %v605 = vld [vmem:[#allocation2 + $0xe0] sm:$0xff]
  %v606 = vld [vmem:[#allocation2 + $0xe8] sm:$0xff]
  %v607 = vld [vmem:[#allocation2 + $0xf0] sm:$0xff]
  %v608 = vld [vmem:[#allocation2 + $0xf8] sm:$0xff]
  %v609 = vld [vmem:[#allocation2 + $0x100] sm:$0xff]
  %v610 = vld [vmem:[#allocation2 + $0x108] sm:$0xff]
  %v611 = vld [vmem:[#allocation2 + $0x110] sm:$0xff]
  %v612 = vld [vmem:[#allocation2 + $0x118] sm:$0xff]
  %v613 = vld [vmem:[#allocation2 + $0x120] sm:$0xff]
  %v614 = vld [vmem:[#allocation2 + $0x128] sm:$0xff]
  %v615 = vld [vmem:[#allocation2 + $0x130] sm:$0xff]
  %v616 = vld [vmem:[#allocation2 + $0x138] sm:$0xff]
  %v617 = vld [vmem:[#allocation2 + $0x140] sm:$0xff]
  %v618 = vld [vmem:[#allocation2 + $0x148] sm:$0xff]
  %v619 = vld [vmem:[#allocation2 + $0x150] sm:$0xff]
  %v620 = vld [vmem:[#allocation2 + $0x158] sm:$0xff]
  %v621 = vld [vmem:[#allocation2 + $0x160] sm:$0xff]
  %v622 = vld [vmem:[#allocation2 + $0x168] sm:$0xff]
  %v623 = vld [vmem:[#allocation2 + $0x170] sm:$0xff]
  %v624 = vld [vmem:[#allocation2 + $0x178] sm:$0xff]
  %v625 = vld [vmem:[#allocation2 + $0x180] sm:$0xff]
  %v626 = vld [vmem:[#allocation2 + $0x188] sm:$0xff]
  %v627 = vld [vmem:[#allocation2 + $0x190] sm:$0xff]
  %v628 = vld [vmem:[#allocation2 + $0x198] sm:$0xff]
  %v629 = vld [vmem:[#allocation2 + $0x1a0] sm:$0xff]
  %v630 = vld [vmem:[#allocation2 + $0x1a8] sm:$0xff]
  %v631 = vld [vmem:[#allocation2 + $0x1b0] sm:$0xff]
  %v632 = vld [vmem:[#allocation2 + $0x1b8] sm:$0xff]
  %v633 = vld [vmem:[#allocation2 + $0x1c0] sm:$0xff]
  %v634 = vld [vmem:[#allocation2 + $0x1c8] sm:$0xff]
  %v635 = vld [vmem:[#allocation2 + $0x1d0] sm:$0xff]
  %v636 = vld [vmem:[#allocation2 + $0x1d8] sm:$0xff]
  %v637 = vld [vmem:[#allocation2 + $0x1e0] sm:$0xff]
  %v638 = vld [vmem:[#allocation2 + $0x1e8] sm:$0xff]
  %v639 = vld [vmem:[#allocation2 + $0x1f0] sm:$0xff]
  %v640 = vld [vmem:[#allocation2 + $0x1f8] sm:$0xff]
  %v641 = vld [vmem:[#allocation2 + $0x200] sm:$0xff]
  %v642 = vld [vmem:[#allocation2 + $0x208] sm:$0xff]
  %v643 = vld [vmem:[#allocation2 + $0x210] sm:$0xff]
  %v644 = vld [vmem:[#allocation2 + $0x218] sm:$0xff]
  %v645 = vld [vmem:[#allocation2 + $0x220] sm:$0xff]
  %v646 = vld [vmem:[#allocation2 + $0x228] sm:$0xff]
  %v647 = vld [vmem:[#allocation2 + $0x230] sm:$0xff]
  %v648 = vld [vmem:[#allocation2 + $0x238] sm:$0xff]
  %v649 = vld [vmem:[#allocation2 + $0x240] sm:$0xff]
  %v650 = vld [vmem:[#allocation2 + $0x248] sm:$0xff]
  %v651 = vld [vmem:[#allocation2 + $0x250] sm:$0xff]
  %v652 = vld [vmem:[#allocation2 + $0x258] sm:$0xff]
  %v653 = vld [vmem:[#allocation2 + $0x260] sm:$0xff]
  %v654 = vld [vmem:[#allocation2 + $0x268] sm:$0xff]
  %v655 = vld [vmem:[#allocation2 + $0x270] sm:$0xff]
  %v656 = vld [vmem:[#allocation2 + $0x278] sm:$0xff]
  %v657 = vld [vmem:[#allocation2 + $0x280] sm:$0xff]
  %v658 = vld [vmem:[#allocation2 + $0x288] sm:$0xff]
  %v659 = vld [vmem:[#allocation2 + $0x290] sm:$0xff]
  %v660 = vld [vmem:[#allocation2 + $0x298] sm:$0xff]
  %v661 = vld [vmem:[#allocation2 + $0x2a0] sm:$0xff]
  %v662 = vld [vmem:[#allocation2 + $0x2a8] sm:$0xff]
  %v663 = vld [vmem:[#allocation2 + $0x2b0] sm:$0xff]
  %v664 = vld [vmem:[#allocation2 + $0x2b8] sm:$0xff]
  %v665 = vld [vmem:[#allocation2 + $0x2c0] sm:$0xff]
  %v666 = vld [vmem:[#allocation2 + $0x2c8] sm:$0xff]
  %v667 = vld [vmem:[#allocation2 + $0x2d0] sm:$0xff]
  %v668 = vld [vmem:[#allocation2 + $0x2d8] sm:$0xff]
  %v669 = vld [vmem:[#allocation2 + $0x2e0] sm:$0xff]
  %v670 = vld [vmem:[#allocation2 + $0x2e8] sm:$0xff]
  %v671 = vld [vmem:[#allocation2 + $0x2f0] sm:$0xff]
  %v672 = vld [vmem:[#allocation2 + $0x2f8] sm:$0xff]
  %v673 = vld [vmem:[#allocation2 + $0x300] sm:$0xff]
  %v674 = vld [vmem:[#allocation2 + $0x308] sm:$0xff]
  %v675 = vld [vmem:[#allocation2 + $0x310] sm:$0xff]
  %v676 = vld [vmem:[#allocation2 + $0x318] sm:$0xff]
  %v677 = vld [vmem:[%s4] sm:$0xff]
  %v678 = vld [vmem:[%s4 + $0x8] sm:$0xff]
  %v679 = vld [vmem:[%s4 + $0x10] sm:$0xff]
  %v680 = vld [vmem:[%s4 + $0x18] sm:$0xff]
  %v681 = vld [vmem:[%s4 + $0x20] sm:$0xff]
  %v682 = vld [vmem:[%s4 + $0x28] sm:$0xff]
  %684 = vset.pattern.permute.xlu0 0
  %685 = vperm.xlu0 %684, %v677
  %v686 = vpop.permute.xlu0 %685
  %689 = vset.pattern.permute.xlu0 0
  %690 = vperm.xlu0 %689, %v678
  %v691 = vpop.permute.xlu0 %690
  %694 = vset.pattern.permute.xlu0 0
  %695 = vperm.xlu0 %694, %v679
  %v696 = vpop.permute.xlu0 %695
  %699 = vset.pattern.permute.xlu0 0
  %700 = vperm.xlu0 %699, %v680
  %v701 = vpop.permute.xlu0 %700
  %704 = vset.pattern.permute.xlu0 0
  %705 = vperm.xlu0 %704, %v681
  %v706 = vpop.permute.xlu0 %705
  %709 = vset.pattern.permute.xlu0 0
  %710 = vperm.xlu0 %709, %v682
  %v711 = vpop.permute.xlu0 %710
  %vm713 = vcmask 588800
  %v715 = vsel %vm713, %v566, 0
  %v718 = vsel %vm713, %v568, 0
  %v721 = vsel %vm713, %v570, 0
  %v724 = vsel %vm713, %v572, 0
  %v727 = vsel %vm713, %v574, 0
  %v730 = vsel %vm713, %v576, 0
  %732 = vmatprep.subr.mxu0 %v578
  %733 = vmatpush1.msra.mxu0 %v577
  %734 = vmatprep.subr.mxu0 %v582
  %735 = vmatpush1.msra.mxu0 %v581
  %736 = vmatprep.subr.mxu0 %v586
  %737 = vmatpush1.msra.mxu0 %v585
  %738 = vmatprep.subr.mxu0 %v590
  %739 = vmatpush1.msra.mxu0 %v589
  %740 = vmatprep.subr.mxu0 %v594
  %741 = vmatpush1.msra.mxu0 %v593
  %742 = vmatprep.subr.mxu0 %v598
  %743 = vmatpush1.msra.mxu0 %v597
  %744 = vmatprep.subr.mxu0 %v602
  %745 = vmatpush1.msra.mxu0 %v601
  %746 = vmatprep.subr.mxu0 %v606
  %747 = vmatpush1.msra.mxu0 %v605
  %748 = vmatprep.subr.mxu0 %v610
  %749 = vmatpush1.msra.mxu0 %v609
  %750 = vmatprep.subr.mxu0 %v614
  %751 = vmatpush1.msra.mxu0 %v613
  %752 = vmatprep.subr.mxu0 %v618
  %753 = vmatpush1.msra.mxu0 %v617
  %754 = vmatprep.subr.mxu0 %v622
  %755 = vmatpush1.msra.mxu0 %v621
  %756 = vmatprep.subr.mxu0 %v626
  %757 = vmatpush1.msra.mxu0 %v625
  %758 = vmatprep.subr.mxu0 %v630
  %759 = vmatpush1.msra.mxu0 %v629
  %760 = vmatprep.subr.mxu0 %v634
  %761 = vmatpush1.msra.mxu0 %v633
  %762 = vmatprep.subr.mxu0 %v638
  %763 = vmatpush1.msra.mxu0 %v637
  %764 = vmatprep.subr.mxu0 %v642
  %765 = vmatpush1.msra.mxu0 %v641
  %766 = vmatprep.subr.mxu0 %v646
  %767 = vmatpush1.msra.mxu0 %v645
  %768 = vmatprep.subr.mxu0 %v650
  %769 = vmatpush1.msra.mxu0 %v649
  %770 = vmatprep.subr.mxu0 %v654
  %771 = vmatpush1.msra.mxu0 %v653
  %772 = vmatprep.subr.mxu0 %v658
  %773 = vmatpush1.msra.mxu0 %v657
  %774 = vmatprep.subr.mxu0 %v662
  %775 = vmatpush1.msra.mxu0 %v661
  %776 = vmatprep.subr.mxu0 %v666
  %777 = vmatpush1.msra.mxu0 %v665
  %778 = vmatprep.subr.mxu0 %v670
  %779 = vmatpush1.msra.mxu0 %v669
  %780 = vmatprep.subr.mxu0 %v674
  %781 = vmatpush1.msra.mxu0 %v673
  %782 = vmatprep.subr.mxu0 0.0
  %783 = vmatpush1.msra.mxu0 0.0
  %784 = vmatprep.subr.mxu0 0.0
  %785 = vmatpush1.msra.mxu0 0.0
  %786 = vmatprep.subr.mxu0 0.0
  %787 = vmatpush1.msra.mxu0 0.0
  %788 = vmatprep.subr.mxu0 0.0
  %789 = vmatpush1.msra.mxu0 0.0
  %790 = vmatprep.subr.mxu0 0.0
  %791 = vmatpush1.msra.mxu0 0.0
  %792 = vmatprep.subr.mxu0 0.0
  %793 = vmatpush1.msra.mxu0 0.0
  %794 = vmatprep.subr.mxu0 0.0
  %795 = vmatpush1.msra.mxu0 0.0
  %796 = vmatprep.mubr.f32.mxu0 %v715
  %797 = vmatmul.mubr.f32.gmra.mrb[0].mxu0 %v565
  %v798 = vpop.f32.mrb[0].mxu0
  %v799 = vadd.f32 %v686, %v798
  %v800 = vpop.f32.mrb[0].mxu0
  %v801 = vadd.f32 %v686, %v800
  %802 = vmatprep.mubr.f32.mxu0 %v718
  %803 = vmatmul.mubr.f32.gmra.mrb[0].mxu0 %v567
  %v804 = vpop.f32.mrb[0].mxu0
  %v805 = vadd.f32 %v691, %v804
  %v806 = vpop.f32.mrb[0].mxu0
  %v807 = vadd.f32 %v691, %v806
  %808 = vmatprep.mubr.f32.mxu0 %v721
  %809 = vmatmul.mubr.f32.gmra.mrb[0].mxu0 %v569
  %v810 = vpop.f32.mrb[0].mxu0
  %v811 = vadd.f32 %v696, %v810
  %v812 = vpop.f32.mrb[0].mxu0
  %v813 = vadd.f32 %v696, %v812
  %814 = vmatprep.mubr.f32.mxu0 %v724
  %815 = vmatmul.mubr.f32.gmra.mrb[0].mxu0 %v571
  %v816 = vpop.f32.mrb[0].mxu0
  %v817 = vadd.f32 %v701, %v816
  %v818 = vpop.f32.mrb[0].mxu0
  %v819 = vadd.f32 %v701, %v818
  %820 = vmatprep.mubr.f32.mxu0 %v727
  %821 = vmatmul.mubr.f32.gmra.mrb[0].mxu0 %v573
  %v822 = vpop.f32.mrb[0].mxu0
  %v823 = vadd.f32 %v706, %v822
  %v824 = vpop.f32.mrb[0].mxu0
  %v825 = vadd.f32 %v706, %v824
  %826 = vmatprep.mubr.f32.mxu0 %v730
  %827 = vmatmul.mubr.f32.gmra.mrb[0].mxu0 %v575
  %v828 = vpop.f32.mrb[0].mxu0
  %v829 = vadd.f32 %v711, %v828
  %v830 = vpop.f32.mrb[0].mxu0
  %v831 = vadd.f32 %v711, %v830
  %832 = vdwg.mxu0
  %833 = vmatprep.subr.mxu0 %v580
  %834 = vmatpush1.msra.mxu0 %v579
  %835 = vmatprep.subr.mxu0 %v584
  %836 = vmatpush1.msra.mxu0 %v583
  %837 = vmatprep.subr.mxu0 %v588
  %838 = vmatpush1.msra.mxu0 %v587
  %839 = vmatprep.subr.mxu0 %v592
  %840 = vmatpush1.msra.mxu0 %v591
  %841 = vmatprep.subr.mxu0 %v596
  %842 = vmatpush1.msra.mxu0 %v595
  %843 = vmatprep.subr.mxu0 %v600
  %844 = vmatpush1.msra.mxu0 %v599
  %845 = vmatprep.subr.mxu0 %v604
  %846 = vmatpush1.msra.mxu0 %v603
  %847 = vmatprep.subr.mxu0 %v608
  %848 = vmatpush1.msra.mxu0 %v607
  %849 = vmatprep.subr.mxu0 %v612
  %850 = vmatpush1.msra.mxu0 %v611
  %851 = vmatprep.subr.mxu0 %v616
  %852 = vmatpush1.msra.mxu0 %v615
  %853 = vmatprep.subr.mxu0 %v620
  %854 = vmatpush1.msra.mxu0 %v619
  %855 = vmatprep.subr.mxu0 %v624
  %856 = vmatpush1.msra.mxu0 %v623
  %857 = vmatprep.subr.mxu0 %v628
  %858 = vmatpush1.msra.mxu0 %v627
  %859 = vmatprep.subr.mxu0 %v632
  %860 = vmatpush1.msra.mxu0 %v631
  %861 = vmatprep.subr.mxu0 %v636
  %862 = vmatpush1.msra.mxu0 %v635
  %863 = vmatprep.subr.mxu0 %v640
  %864 = vmatpush1.msra.mxu0 %v639
  %865 = vmatprep.subr.mxu0 %v644
  %866 = vmatpush1.msra.mxu0 %v643
  %867 = vmatprep.subr.mxu0 %v648
  %868 = vmatpush1.msra.mxu0 %v647
  %869 = vmatprep.subr.mxu0 %v652
  %870 = vmatpush1.msra.mxu0 %v651
  %871 = vmatprep.subr.mxu0 %v656
  %872 = vmatpush1.msra.mxu0 %v655
  %873 = vmatprep.subr.mxu0 %v660
  %874 = vmatpush1.msra.mxu0 %v659
  %875 = vmatprep.subr.mxu0 %v664
  %876 = vmatpush1.msra.mxu0 %v663
  %877 = vmatprep.subr.mxu0 %v668
  %878 = vmatpush1.msra.mxu0 %v667
  %879 = vmatprep.subr.mxu0 %v672
  %880 = vmatpush1.msra.mxu0 %v671
  %881 = vmatprep.subr.mxu0 %v676
  %882 = vmatpush1.msra.mxu0 %v675
  %883 = vmatprep.subr.mxu0 0.0
  %884 = vmatpush1.msra.mxu0 0.0
  %885 = vmatprep.subr.mxu0 0.0
  %886 = vmatpush1.msra.mxu0 0.0
  %887 = vmatprep.subr.mxu0 0.0
  %888 = vmatpush1.msra.mxu0 0.0
  %889 = vmatprep.subr.mxu0 0.0
  %890 = vmatpush1.msra.mxu0 0.0
  %891 = vmatprep.subr.mxu0 0.0
  %892 = vmatpush1.msra.mxu0 0.0
  %893 = vmatprep.subr.mxu0 0.0
  %894 = vmatpush1.msra.mxu0 0.0
  %895 = vmatprep.subr.mxu0 0.0
  %896 = vmatpush1.msra.mxu0 0.0
  %897 = vmatprep.mubr.f32.mxu0 %v715
  %898 = vmatmul.mubr.f32.gmra.mrb[0].mxu0 %v565
  %v899 = vpop.f32.mrb[0].mxu0
  %v900 = vadd.f32 %v686, %v899
  %v901 = vpop.f32.mrb[0].mxu0
  %v902 = vadd.f32 %v686, %v901
  %903 = vmatprep.mubr.f32.mxu0 %v718
  %904 = vmatmul.mubr.f32.gmra.mrb[0].mxu0 %v567
  %v905 = vpop.f32.mrb[0].mxu0
  %v906 = vadd.f32 %v691, %v905
  %v907 = vpop.f32.mrb[0].mxu0
  %v908 = vadd.f32 %v691, %v907
  %909 = vmatprep.mubr.f32.mxu0 %v721
  %910 = vmatmul.mubr.f32.gmra.mrb[0].mxu0 %v569
  %v911 = vpop.f32.mrb[0].mxu0
  %v912 = vadd.f32 %v696, %v911
  %v913 = vpop.f32.mrb[0].mxu0
  %v914 = vadd.f32 %v696, %v913
  %915 = vmatprep.mubr.f32.mxu0 %v724
  %916 = vmatmul.mubr.f32.gmra.mrb[0].mxu0 %v571
  %v917 = vpop.f32.mrb[0].mxu0
  %v918 = vadd.f32 %v701, %v917
  %v919 = vpop.f32.mrb[0].mxu0
  %v920 = vadd.f32 %v701, %v919
  %921 = vmatprep.mubr.f32.mxu0 %v727
  %922 = vmatmul.mubr.f32.gmra.mrb[0].mxu0 %v573
  %v923 = vpop.f32.mrb[0].mxu0
  %v924 = vadd.f32 %v706, %v923
  %v925 = vpop.f32.mrb[0].mxu0
  %v926 = vadd.f32 %v706, %v925
  %927 = vmatprep.mubr.f32.mxu0 %v730
  %928 = vmatmul.mubr.f32.gmra.mrb[0].mxu0 %v575
  %v929 = vpop.f32.mrb[0].mxu0
  %v930 = vadd.f32 %v711, %v929
  %v931 = vpop.f32.mrb[0].mxu0
  %v932 = vadd.f32 %v711, %v931
  %933 = vdwg.mxu0
  %v934 = vxor.u32 %v799, 2147483648
  %v935 = vxor.u32 %v801, 2147483648
  %v936 = vxor.u32 %v900, 2147483648
  %v937 = vxor.u32 %v902, 2147483648
  %v938 = vxor.u32 %v805, 2147483648
  %v939 = vxor.u32 %v807, 2147483648
  %v940 = vxor.u32 %v906, 2147483648
  %v941 = vxor.u32 %v908, 2147483648
  %v942 = vmul.f32 %v934, 1.442695
  %v943 = vpow.pop %v942
  %v944 = vmul.f32 %v935, 1.442695
  %v945 = vpow.pop %v944
  %v946 = vmul.f32 %v936, 1.442695
  %v947 = vpow.pop %v946
  %v948 = vmul.f32 %v937, 1.442695
  %v949 = vpow.pop %v948
  %v950 = vmul.f32 %v938, 1.442695
  %v951 = vpow.pop %v950
  %v952 = vmul.f32 %v939, 1.442695
  %v953 = vpow.pop %v952
  %v954 = vmul.f32 %v940, 1.442695
  %v955 = vpow.pop %v954
  %v956 = vmul.f32 %v941, 1.442695
  %v957 = vpow.pop %v956
  %v958 = vadd.f32 %v943, 1.0
  %v959 = vadd.f32 %v945, 1.0
  %v960 = vadd.f32 %v947, 1.0
  %v961 = vadd.f32 %v949, 1.0
  %v962 = vadd.f32 %v951, 1.0
  %v963 = vadd.f32 %v953, 1.0
  %v964 = vadd.f32 %v955, 1.0
  %v965 = vadd.f32 %v957, 1.0
  %v966 = vrcp.pop %v958
  %v967 = vmul.f32 1.0, %v966
  %v968 = vrcp.pop %v959
  %v969 = vmul.f32 1.0, %v968
  %v970 = vrcp.pop %v960
  %v971 = vmul.f32 1.0, %v970
  %v972 = vrcp.pop %v961
  %v973 = vmul.f32 1.0, %v972
  %v974 = vrcp.pop %v962
  %v975 = vmul.f32 1.0, %v974
  %v976 = vrcp.pop %v963
  %v977 = vmul.f32 1.0, %v976
  %v978 = vrcp.pop %v964
  %v979 = vmul.f32 1.0, %v978
  %v980 = vrcp.pop %v965
  %v981 = vmul.f32 1.0, %v980
  %v982 = vxor.u32 %v811, 2147483648
  %v983 = vxor.u32 %v813, 2147483648
  %v984 = vxor.u32 %v912, 2147483648
  %v985 = vxor.u32 %v914, 2147483648
  %v986 = vxor.u32 %v817, 2147483648
  %v987 = vxor.u32 %v819, 2147483648
  %v988 = vxor.u32 %v918, 2147483648
  %v989 = vxor.u32 %v920, 2147483648
  %v990 = vmul.f32 %v982, 1.442695
  %v991 = vpow.pop %v990
  %v992 = vmul.f32 %v983, 1.442695
  %v993 = vpow.pop %v992
  %v994 = vmul.f32 %v984, 1.442695
  %v995 = vpow.pop %v994
  %v996 = vmul.f32 %v985, 1.442695
  %v997 = vpow.pop %v996
  %v998 = vmul.f32 %v986, 1.442695
  %v999 = vpow.pop %v998
  %v1000 = vmul.f32 %v987, 1.442695
  %v1001 = vpow.pop %v1000
  %v1002 = vmul.f32 %v988, 1.442695
  %v1003 = vpow.pop %v1002
  %v1004 = vmul.f32 %v989, 1.442695
  %v1005 = vpow.pop %v1004
  %v1006 = vadd.f32 %v991, 1.0
  %v1007 = vadd.f32 %v993, 1.0
  %v1008 = vadd.f32 %v995, 1.0
  %v1009 = vadd.f32 %v997, 1.0
  %v1010 = vadd.f32 %v999, 1.0
  %v1011 = vadd.f32 %v1001, 1.0
  %v1012 = vadd.f32 %v1003, 1.0
  %v1013 = vadd.f32 %v1005, 1.0
  %v1014 = vrcp.pop %v1006
  %v1015 = vmul.f32 1.0, %v1014
  %v1016 = vrcp.pop %v1007
  %v1017 = vmul.f32 1.0, %v1016
  %v1018 = vrcp.pop %v1008
  %v1019 = vmul.f32 1.0, %v1018
  %v1020 = vrcp.pop %v1009
  %v1021 = vmul.f32 1.0, %v1020
  %v1022 = vrcp.pop %v1010
  %v1023 = vmul.f32 1.0, %v1022
  %v1024 = vrcp.pop %v1011
  %v1025 = vmul.f32 1.0, %v1024
  %v1026 = vrcp.pop %v1012
  %v1027 = vmul.f32 1.0, %v1026
  %v1028 = vrcp.pop %v1013
  %v1029 = vmul.f32 1.0, %v1028
  %v1030 = vmul.f32 %v1015, %v20
  %v1031 = vmul.f32 %v1017, %v21
  %v1032 = vmul.f32 %v1019, %v22
  %v1033 = vmul.f32 %v1021, %v23
  %v1034 = vmul.f32 %v1023, %v24
  %v1035 = vmul.f32 %v1025, %v25
  %v1036 = vmul.f32 %v1027, %v26
  %v1037 = vmul.f32 %v1029, %v27
  %1038 = vrot.lane.b32.xlu0 %v1030, 2
  %v1039 = vpop.permute.xlu0 %1038
  %1040 = vrot.lane.b32.xlu0 %v1034, 2
  %v1041 = vpop.permute.xlu0 %1040
  %1042 = vrot.lane.b32.xlu0 %v1031, 2
  %v1043 = vpop.permute.xlu0 %1042
  %1044 = vrot.lane.b32.xlu0 %v1035, 2
  %v1045 = vpop.permute.xlu0 %1044
  %1046 = vrot.lane.b32.xlu0 %v1032, 2
  %v1047 = vpop.permute.xlu0 %1046
  %1048 = vrot.lane.b32.xlu0 %v1036, 2
  %v1049 = vpop.permute.xlu0 %1048
  %1050 = vrot.lane.b32.xlu0 %v1033, 2
  %v1051 = vpop.permute.xlu0 %1050
  %1052 = vrot.lane.b32.xlu0 %v1037, 2
  %v1053 = vpop.permute.xlu0 %1052
  %v1054 = vsel %vm113, %v1047, %v1051
  %v1055 = vsel %vm113, %v1049, %v1053
  %v1056 = vsel %vm113, %v1043, %v1047
  %v1057 = vsel %vm113, %v1045, %v1049
  %v1058 = vsel %vm113, %v1039, %v1043
  %v1059 = vsel %vm113, %v1041, %v1045
  %v1060 = vsel %vm113, %v1051, %v1039
  %v1061 = vsel %vm113, %v1053, %v1041
  %v1062 = vsel %vm126, %v1060, 0.0
  %v1063 = vsel %vm127, %v1058, 0.0
  %v1064 = vsel %vm128, %v1056, 0.0
  %v1065 = vsel %vm129, %v1054, 0.0
  %v1066 = vsel %vm126, %v1061, 0.0
  %v1067 = vsel %vm127, %v1059, 0.0
  %v1068 = vsel %vm128, %v1057, 0.0
  %v1069 = vsel %vm129, %v1055, 0.0
  %1070 = vst [vmem:[#allocation2] sm:$0xff] %v1062
  %1071 = vst [vmem:[#allocation2 + $0x8] sm:$0xff] %v1063
  %1072 = vst [vmem:[#allocation2 + $0x10] sm:$0xff] %v1064
  %1073 = vst [vmem:[#allocation2 + $0x18] sm:$0xff] %v1065
  %1074 = vst [vmem:[#allocation2 + $0x20] sm:$0xff] %v1066
  %1075 = vst [vmem:[#allocation2 + $0x28] sm:$0xff] %v1067
  %1076 = vst [vmem:[#allocation2 + $0x30] sm:$0xff] %v1068
  %1077 = vst [vmem:[#allocation2 + $0x38] sm:$0xff] %v1069
  %1078 = vrot.lane.b32.xlu0 %v1030, 1
  %v1079 = vpop.permute.xlu0 %1078
  %1080 = vrot.lane.b32.xlu0 %v1034, 1
  %v1081 = vpop.permute.xlu0 %1080
  %1082 = vrot.lane.b32.xlu0 %v1031, 1
  %v1083 = vpop.permute.xlu0 %1082
  %1084 = vrot.lane.b32.xlu0 %v1035, 1
  %v1085 = vpop.permute.xlu0 %1084
  %1086 = vrot.lane.b32.xlu0 %v1032, 1
  %v1087 = vpop.permute.xlu0 %1086
  %1088 = vrot.lane.b32.xlu0 %v1036, 1
  %v1089 = vpop.permute.xlu0 %1088
  %1090 = vrot.lane.b32.xlu0 %v1033, 1
  %v1091 = vpop.permute.xlu0 %1090
  %1092 = vrot.lane.b32.xlu0 %v1037, 1
  %v1093 = vpop.permute.xlu0 %1092
  %v1094 = vsel %vm162, %v1087, %v1091
  %v1095 = vsel %vm162, %v1089, %v1093
  %v1096 = vsel %vm162, %v1083, %v1087
  %v1097 = vsel %vm162, %v1085, %v1089
  %v1098 = vsel %vm162, %v1079, %v1083
  %v1099 = vsel %vm162, %v1081, %v1085
  %v1100 = vsel %vm162, %v1091, %v1079
  %v1101 = vsel %vm162, %v1093, %v1081
  %v1102 = vsel %vm175, %v1100, 0.0
  %v1103 = vsel %vm176, %v1098, 0.0
  %v1104 = vsel %vm177, %v1096, 0.0
  %v1105 = vsel %vm178, %v1094, 0.0
  %v1106 = vsel %vm175, %v1101, 0.0
  %v1107 = vsel %vm176, %v1099, 0.0
  %v1108 = vsel %vm177, %v1097, 0.0
  %v1109 = vsel %vm178, %v1095, 0.0
  %1110 = vst [vmem:[#allocation2 + $0x40] sm:$0xff] %v1102
  %1111 = vst [vmem:[#allocation2 + $0x48] sm:$0xff] %v1103
  %1112 = vst [vmem:[#allocation2 + $0x50] sm:$0xff] %v1104
  %1113 = vst [vmem:[#allocation2 + $0x58] sm:$0xff] %v1105
  %1114 = vst [vmem:[#allocation2 + $0x60] sm:$0xff] %v1106
  %1115 = vst [vmem:[#allocation2 + $0x68] sm:$0xff] %v1107
  %1116 = vst [vmem:[#allocation2 + $0x70] sm:$0xff] %v1108
  %1117 = vst [vmem:[#allocation2 + $0x78] sm:$0xff] %v1109
  %1118 = vst [vmem:[#allocation2 + $0x80] sm:$0xff] %v1030
  %1119 = vst [vmem:[#allocation2 + $0x88] sm:$0xff] %v1031
  %1120 = vst [vmem:[#allocation2 + $0x90] sm:$0xff] %v1032
  %1121 = vst [vmem:[#allocation2 + $0x98] sm:$0xff] %v1033
  %1122 = vst [vmem:[#allocation2 + $0xa0] sm:$0xff] %v1034
  %1123 = vst [vmem:[#allocation2 + $0xa8] sm:$0xff] %v1035
  %1124 = vst [vmem:[#allocation2 + $0xb0] sm:$0xff] %v1036
  %1125 = vst [vmem:[#allocation2 + $0xb8] sm:$0xff] %v1037
  %1126 = vrot.lane.b32.xlu0 %v1030, 127
  %v1127 = vpop.permute.xlu0 %1126
  %1128 = vrot.lane.b32.xlu0 %v1034, 127
  %v1129 = vpop.permute.xlu0 %1128
  %1130 = vrot.lane.b32.xlu0 %v1031, 127
  %v1131 = vpop.permute.xlu0 %1130
  %1132 = vrot.lane.b32.xlu0 %v1035, 127
  %v1133 = vpop.permute.xlu0 %1132
  %1134 = vrot.lane.b32.xlu0 %v1032, 127
  %v1135 = vpop.permute.xlu0 %1134
  %1136 = vrot.lane.b32.xlu0 %v1036, 127
  %v1137 = vpop.permute.xlu0 %1136
  %1138 = vrot.lane.b32.xlu0 %v1033, 127
  %v1139 = vpop.permute.xlu0 %1138
  %1140 = vrot.lane.b32.xlu0 %v1037, 127
  %v1141 = vpop.permute.xlu0 %1140
  %v1142 = vsel %vm219, %v1135, %v1139
  %v1143 = vsel %vm219, %v1137, %v1141
  %v1144 = vsel %vm219, %v1131, %v1135
  %v1145 = vsel %vm219, %v1133, %v1137
  %v1146 = vsel %vm219, %v1127, %v1131
  %v1147 = vsel %vm219, %v1129, %v1133
  %v1148 = vsel %vm219, %v1139, %v1127
  %v1149 = vsel %vm219, %v1141, %v1129
  %v1150 = vsel %vm232, %v1146, 0.0
  %v1151 = vsel %vm233, %v1144, 0.0
  %v1152 = vsel %vm234, %v1142, 0.0
  %v1153 = vsel %vm235, %v1148, 0.0
  %v1154 = vsel %vm232, %v1147, 0.0
  %v1155 = vsel %vm233, %v1145, 0.0
  %v1156 = vsel %vm234, %v1143, 0.0
  %v1157 = vsel %vm235, %v1149, 0.0
  %1158 = vst [vmem:[#allocation2 + $0xc0] sm:$0xff] %v1150
  %1159 = vst [vmem:[#allocation2 + $0xc8] sm:$0xff] %v1151
  %1160 = vst [vmem:[#allocation2 + $0xd0] sm:$0xff] %v1152
  %1161 = vst [vmem:[#allocation2 + $0xd8] sm:$0xff] %v1153
  %1162 = vst [vmem:[#allocation2 + $0xe0] sm:$0xff] %v1154
  %1163 = vst [vmem:[#allocation2 + $0xe8] sm:$0xff] %v1155
  %1164 = vst [vmem:[#allocation2 + $0xf0] sm:$0xff] %v1156
  %1165 = vst [vmem:[#allocation2 + $0xf8] sm:$0xff] %v1157
  %1166 = vrot.lane.b32.xlu0 %v1030, 126
  %v1167 = vpop.permute.xlu0 %1166
  %1168 = vrot.lane.b32.xlu0 %v1034, 126
  %v1169 = vpop.permute.xlu0 %1168
  %1170 = vrot.lane.b32.xlu0 %v1031, 126
  %v1171 = vpop.permute.xlu0 %1170
  %1172 = vrot.lane.b32.xlu0 %v1035, 126
  %v1173 = vpop.permute.xlu0 %1172
  %1174 = vrot.lane.b32.xlu0 %v1032, 126
  %v1175 = vpop.permute.xlu0 %1174
  %1176 = vrot.lane.b32.xlu0 %v1036, 126
  %v1177 = vpop.permute.xlu0 %1176
  %1178 = vrot.lane.b32.xlu0 %v1033, 126
  %v1179 = vpop.permute.xlu0 %1178
  %1180 = vrot.lane.b32.xlu0 %v1037, 126
  %v1181 = vpop.permute.xlu0 %1180
  %v1182 = vsel %vm268, %v1175, %v1179
  %v1183 = vsel %vm268, %v1177, %v1181
  %v1184 = vsel %vm268, %v1171, %v1175
  %v1185 = vsel %vm268, %v1173, %v1177
  %v1186 = vsel %vm268, %v1167, %v1171
  %v1187 = vsel %vm268, %v1169, %v1173
  %v1188 = vsel %vm268, %v1179, %v1167
  %v1189 = vsel %vm268, %v1181, %v1169
  %v1190 = vsel %vm281, %v1186, 0.0
  %v1191 = vsel %vm282, %v1184, 0.0
  %v1192 = vsel %vm283, %v1182, 0.0
  %v1193 = vsel %vm284, %v1188, 0.0
  %v1194 = vsel %vm281, %v1187, 0.0
  %v1195 = vsel %vm282, %v1185, 0.0
  %v1196 = vsel %vm283, %v1183, 0.0
  %v1197 = vsel %vm284, %v1189, 0.0
  %1198 = vst [vmem:[#allocation2 + $0x100] sm:$0xff] %v1190
  %1199 = vst [vmem:[#allocation2 + $0x108] sm:$0xff] %v1191
  %1200 = vst [vmem:[#allocation2 + $0x110] sm:$0xff] %v1192
  %1201 = vst [vmem:[#allocation2 + $0x118] sm:$0xff] %v1193
  %1202 = vst [vmem:[#allocation2 + $0x120] sm:$0xff] %v1194
  %1203 = vst [vmem:[#allocation2 + $0x128] sm:$0xff] %v1195
  %1204 = vst [vmem:[#allocation2 + $0x130] sm:$0xff] %v1196
  %1205 = vst [vmem:[#allocation2 + $0x138] sm:$0xff] %v1197
  %v1206 = vld [vmem:[%s3] sm:$0xff]
  %v1207 = vld [vmem:[%s3 + $0x8] sm:$0xff]
  %v1208 = vld [vmem:[#allocation2] sm:$0xff]
  %v1209 = vld [vmem:[#allocation2 + $0x8] sm:$0xff]
  %v1210 = vld [vmem:[#allocation2 + $0x10] sm:$0xff]
  %v1211 = vld [vmem:[#allocation2 + $0x18] sm:$0xff]
  %v1212 = vld [vmem:[#allocation2 + $0x20] sm:$0xff]
  %v1213 = vld [vmem:[#allocation2 + $0x28] sm:$0xff]
  %v1214 = vld [vmem:[#allocation2 + $0x30] sm:$0xff]
  %v1215 = vld [vmem:[#allocation2 + $0x38] sm:$0xff]
  %v1216 = vld [vmem:[#allocation2 + $0x40] sm:$0xff]
  %v1217 = vld [vmem:[#allocation2 + $0x48] sm:$0xff]
  %v1218 = vld [vmem:[#allocation2 + $0x50] sm:$0xff]
  %v1219 = vld [vmem:[#allocation2 + $0x58] sm:$0xff]
  %v1220 = vld [vmem:[#allocation2 + $0x60] sm:$0xff]
  %v1221 = vld [vmem:[#allocation2 + $0x68] sm:$0xff]
  %v1222 = vld [vmem:[#allocation2 + $0x70] sm:$0xff]
  %v1223 = vld [vmem:[#allocation2 + $0x78] sm:$0xff]
  %v1224 = vld [vmem:[#allocation2 + $0x80] sm:$0xff]
  %v1225 = vld [vmem:[#allocation2 + $0x88] sm:$0xff]
  %v1226 = vld [vmem:[#allocation2 + $0x90] sm:$0xff]
  %v1227 = vld [vmem:[#allocation2 + $0x98] sm:$0xff]
  %v1228 = vld [vmem:[#allocation2 + $0xa0] sm:$0xff]
  %v1229 = vld [vmem:[#allocation2 + $0xa8] sm:$0xff]
  %v1230 = vld [vmem:[#allocation2 + $0xb0] sm:$0xff]
  %v1231 = vld [vmem:[#allocation2 + $0xb8] sm:$0xff]
  %v1232 = vld [vmem:[#allocation2 + $0xc0] sm:$0xff]
  %v1233 = vld [vmem:[#allocation2 + $0xc8] sm:$0xff]
  %v1234 = vld [vmem:[#allocation2 + $0xd0] sm:$0xff]
  %v1235 = vld [vmem:[#allocation2 + $0xd8] sm:$0xff]
  %v1236 = vld [vmem:[#allocation2 + $0xe0] sm:$0xff]
  %v1237 = vld [vmem:[#allocation2 + $0xe8] sm:$0xff]
  %v1238 = vld [vmem:[#allocation2 + $0xf0] sm:$0xff]
  %v1239 = vld [vmem:[#allocation2 + $0xf8] sm:$0xff]
  %v1240 = vld [vmem:[#allocation2 + $0x100] sm:$0xff]
  %v1241 = vld [vmem:[#allocation2 + $0x108] sm:$0xff]
  %v1242 = vld [vmem:[#allocation2 + $0x110] sm:$0xff]
  %v1243 = vld [vmem:[#allocation2 + $0x118] sm:$0xff]
  %v1244 = vld [vmem:[#allocation2 + $0x120] sm:$0xff]
  %v1245 = vld [vmem:[#allocation2 + $0x128] sm:$0xff]
  %v1246 = vld [vmem:[#allocation2 + $0x130] sm:$0xff]
  %v1247 = vld [vmem:[#allocation2 + $0x138] sm:$0xff]
  %vm1248 = vcmask 654336
  %v1250 = vsel %vm1248, %v1206, 0
  %v1253 = vsel %vm1248, %v1207, 0
  %1255 = vmatprep.subr.mxu0 %v1209
  %1256 = vmatpush1.msra.mxu0 %v1208
  %1257 = vmatprep.subr.mxu0 %v1213
  %1258 = vmatpush1.msra.mxu0 %v1212
  %1259 = vmatprep.subr.mxu0 %v1217
  %1260 = vmatpush1.msra.mxu0 %v1216
  %1261 = vmatprep.subr.mxu0 %v1221
  %1262 = vmatpush1.msra.mxu0 %v1220
  %1263 = vmatprep.subr.mxu0 %v1225
  %1264 = vmatpush1.msra.mxu0 %v1224
  %1265 = vmatprep.subr.mxu0 %v1229
  %1266 = vmatpush1.msra.mxu0 %v1228
  %1267 = vmatprep.subr.mxu0 %v1233
  %1268 = vmatpush1.msra.mxu0 %v1232
  %1269 = vmatprep.subr.mxu0 %v1237
  %1270 = vmatpush1.msra.mxu0 %v1236
  %1271 = vmatprep.subr.mxu0 %v1241
  %1272 = vmatpush1.msra.mxu0 %v1240
  %1273 = vmatprep.subr.mxu0 %v1245
  %1274 = vmatpush1.msra.mxu0 %v1244
  %1275 = vmatprep.subr.mxu0 0.0
  %1276 = vmatpush1.msra.mxu0 0.0
  %1277 = vmatprep.subr.mxu0 0.0
  %1278 = vmatpush1.msra.mxu0 0.0
  %1279 = vmatprep.subr.mxu0 0.0
  %1280 = vmatpush1.msra.mxu0 0.0
  %1281 = vmatprep.subr.mxu0 0.0
  %1282 = vmatpush1.msra.mxu0 0.0
  %1283 = vmatprep.subr.mxu0 0.0
  %1284 = vmatpush1.msra.mxu0 0.0
  %1285 = vmatprep.subr.mxu0 0.0
  %1286 = vmatpush1.msra.mxu0 0.0
  %1287 = vmatprep.subr.mxu0 0.0
  %1288 = vmatpush1.msra.mxu0 0.0
  %1289 = vmatprep.subr.mxu0 0.0
  %1290 = vmatpush1.msra.mxu0 0.0
  %1291 = vmatprep.subr.mxu0 0.0
  %1292 = vmatpush1.msra.mxu0 0.0
  %1293 = vmatprep.subr.mxu0 0.0
  %1294 = vmatpush1.msra.mxu0 0.0
  %1295 = vmatprep.subr.mxu0 0.0
  %1296 = vmatpush1.msra.mxu0 0.0
  %1297 = vmatprep.subr.mxu0 0.0
  %1298 = vmatpush1.msra.mxu0 0.0
  %1299 = vmatprep.subr.mxu0 0.0
  %1300 = vmatpush1.msra.mxu0 0.0
  %1301 = vmatprep.subr.mxu0 0.0
  %1302 = vmatpush1.msra.mxu0 0.0
  %1303 = vmatprep.subr.mxu0 0.0
  %1304 = vmatpush1.msra.mxu0 0.0
  %1305 = vmatprep.subr.mxu0 0.0
  %1306 = vmatpush1.msra.mxu0 0.0
  %1307 = vmatprep.subr.mxu0 0.0
  %1308 = vmatpush1.msra.mxu0 0.0
  %1309 = vmatprep.subr.mxu0 0.0
  %1310 = vmatpush1.msra.mxu0 0.0
  %1311 = vmatprep.subr.mxu0 0.0
  %1312 = vmatpush1.msra.mxu0 0.0
  %1313 = vmatprep.subr.mxu0 0.0
  %1314 = vmatpush1.msra.mxu0 0.0
  %1315 = vmatprep.subr.mxu0 0.0
  %1316 = vmatpush1.msra.mxu0 0.0
  %1317 = vmatprep.subr.mxu0 0.0
  %1318 = vmatpush1.msra.mxu0 0.0
  %1319 = vmatprep.mubr.f32.mxu0 0.0
  %1320 = vmatmul.mubr.f32.gmra.mrb[0].mxu0 %v1250
  %v1321 = vpop.f32.mrb[0].mxu0
  %v1322 = vadd.f32 %v823, %v1321
  %v1323 = vpop.f32.mrb[0].mxu0
  %v1324 = vadd.f32 %v825, %v1323
  %1325 = vmatprep.mubr.f32.mxu0 0.0
  %1326 = vmatmul.mubr.f32.gmra.mrb[0].mxu0 %v1253
  %v1327 = vpop.f32.mrb[0].mxu0
  %v1328 = vadd.f32 %v829, %v1327
  %v1329 = vpop.f32.mrb[0].mxu0
  %v1330 = vadd.f32 %v831, %v1329
  %1331 = vdwg.mxu0
  %1332 = vmatprep.subr.mxu0 %v1211
  %1333 = vmatpush1.msra.mxu0 %v1210
  %1334 = vmatprep.subr.mxu0 %v1215
  %1335 = vmatpush1.msra.mxu0 %v1214
  %1336 = vmatprep.subr.mxu0 %v1219
  %1337 = vmatpush1.msra.mxu0 %v1218
  %1338 = vmatprep.subr.mxu0 %v1223
  %1339 = vmatpush1.msra.mxu0 %v1222
  %1340 = vmatprep.subr.mxu0 %v1227
  %1341 = vmatpush1.msra.mxu0 %v1226
  %1342 = vmatprep.subr.mxu0 %v1231
  %1343 = vmatpush1.msra.mxu0 %v1230
  %1344 = vmatprep.subr.mxu0 %v1235
  %1345 = vmatpush1.msra.mxu0 %v1234
  %1346 = vmatprep.subr.mxu0 %v1239
  %1347 = vmatpush1.msra.mxu0 %v1238
  %1348 = vmatprep.subr.mxu0 %v1243
  %1349 = vmatpush1.msra.mxu0 %v1242
  %1350 = vmatprep.subr.mxu0 %v1247
  %1351 = vmatpush1.msra.mxu0 %v1246
  %1352 = vmatprep.subr.mxu0 0.0
  %1353 = vmatpush1.msra.mxu0 0.0
  %1354 = vmatprep.subr.mxu0 0.0
  %1355 = vmatpush1.msra.mxu0 0.0
  %1356 = vmatprep.subr.mxu0 0.0
  %1357 = vmatpush1.msra.mxu0 0.0
  %1358 = vmatprep.subr.mxu0 0.0
  %1359 = vmatpush1.msra.mxu0 0.0
  %1360 = vmatprep.subr.mxu0 0.0
  %1361 = vmatpush1.msra.mxu0 0.0
  %1362 = vmatprep.subr.mxu0 0.0
  %1363 = vmatpush1.msra.mxu0 0.0
  %1364 = vmatprep.subr.mxu0 0.0
  %1365 = vmatpush1.msra.mxu0 0.0
  %1366 = vmatprep.subr.mxu0 0.0
  %1367 = vmatpush1.msra.mxu0 0.0
  %1368 = vmatprep.subr.mxu0 0.0
  %1369 = vmatpush1.msra.mxu0 0.0
  %1370 = vmatprep.subr.mxu0 0.0
  %1371 = vmatpush1.msra.mxu0 0.0
  %1372 = vmatprep.subr.mxu0 0.0
  %1373 = vmatpush1.msra.mxu0 0.0
  %1374 = vmatprep.subr.mxu0 0.0
  %1375 = vmatpush1.msra.mxu0 0.0
  %1376 = vmatprep.subr.mxu0 0.0
  %1377 = vmatpush1.msra.mxu0 0.0
  %1378 = vmatprep.subr.mxu0 0.0
  %1379 = vmatpush1.msra.mxu0 0.0
  %1380 = vmatprep.subr.mxu0 0.0
  %1381 = vmatpush1.msra.mxu0 0.0
  %1382 = vmatprep.subr.mxu0 0.0
  %1383 = vmatpush1.msra.mxu0 0.0
  %1384 = vmatprep.subr.mxu0 0.0
  %1385 = vmatpush1.msra.mxu0 0.0
  %1386 = vmatprep.subr.mxu0 0.0
  %1387 = vmatpush1.msra.mxu0 0.0
  %1388 = vmatprep.subr.mxu0 0.0
  %1389 = vmatpush1.msra.mxu0 0.0
  %1390 = vmatprep.subr.mxu0 0.0
  %1391 = vmatpush1.msra.mxu0 0.0
  %1392 = vmatprep.subr.mxu0 0.0
  %1393 = vmatpush1.msra.mxu0 0.0
  %1394 = vmatprep.subr.mxu0 0.0
  %1395 = vmatpush1.msra.mxu0 0.0
  %1396 = vmatprep.mubr.f32.mxu0 0.0
  %1397 = vmatmul.mubr.f32.gmra.mrb[0].mxu0 %v1250
  %v1398 = vpop.f32.mrb[0].mxu0
  %v1399 = vadd.f32 %v924, %v1398
  %v1400 = vpop.f32.mrb[0].mxu0
  %v1401 = vadd.f32 %v926, %v1400
  %1402 = vmatprep.mubr.f32.mxu0 0.0
  %1403 = vmatmul.mubr.f32.gmra.mrb[0].mxu0 %v1253
  %v1404 = vpop.f32.mrb[0].mxu0
  %v1405 = vadd.f32 %v930, %v1404
  %v1406 = vpop.f32.mrb[0].mxu0
  %v1407 = vadd.f32 %v932, %v1406
  %1408 = vdwg.mxu0
  %v1409 = vtanh.pop %v1322
  %v1410 = vtanh.pop %v1324
  %v1411 = vtanh.pop %v1399
  %v1412 = vtanh.pop %v1401
  %v1413 = vtanh.pop %v1328
  %v1414 = vtanh.pop %v1330
  %v1415 = vtanh.pop %v1405
  %v1416 = vtanh.pop %v1407
  %v1417 = vsub.f32 1.0, %v967
  %v1418 = vsub.f32 1.0, %v969
  %v1419 = vsub.f32 1.0, %v971
  %v1420 = vsub.f32 1.0, %v973
  %v1421 = vsub.f32 1.0, %v975
  %v1422 = vsub.f32 1.0, %v977
  %v1423 = vsub.f32 1.0, %v979
  %v1424 = vsub.f32 1.0, %v981
  %v1425 = vmul.f32 %v1417, %v20
  %v1426 = vmul.f32 %v1418, %v21
  %v1427 = vmul.f32 %v1419, %v22
  %v1428 = vmul.f32 %v1420, %v23
  %v1429 = vmul.f32 %v1421, %v24
  %v1430 = vmul.f32 %v1422, %v25
  %v1431 = vmul.f32 %v1423, %v26
  %v1432 = vmul.f32 %v1424, %v27
  %v1433 = vmul.f32 %v967, %v1409
  %v1434 = vmul.f32 %v969, %v1410
  %v1435 = vmul.f32 %v971, %v1411
  %v1436 = vmul.f32 %v973, %v1412
  %v1437 = vmul.f32 %v975, %v1413
  %v1438 = vmul.f32 %v977, %v1414
  %v1439 = vmul.f32 %v979, %v1415
  %v1440 = vmul.f32 %v981, %v1416
  %v1441 = vadd.f32 %v1425, %v1433
  %v1442 = vadd.f32 %v1426, %v1434
  %v1443 = vadd.f32 %v1427, %v1435
  %v1444 = vadd.f32 %v1428, %v1436
  %v1445 = vadd.f32 %v1429, %v1437
  %v1446 = vadd.f32 %v1430, %v1438
  %v1447 = vadd.f32 %v1431, %v1439
  %v1448 = vadd.f32 %v1432, %v1440
  %1449 = vst [vmem:[%s5] sm:$0xff] %v1441
  %1450 = vst [vmem:[%s5 + $0x8] sm:$0xff] %v1442
  %1451 = vst [vmem:[%s5 + $0x10] sm:$0xff] %v1443
  %1452 = vst [vmem:[%s5 + $0x18] sm:$0xff] %v1444
  %1453 = vst [vmem:[%s5 + $0x20] sm:$0xff] %v1445
  %1454 = vst [vmem:[%s5 + $0x28] sm:$0xff] %v1446
  %1455 = vst [vmem:[%s5 + $0x30] sm:$0xff] %v1447
  %1456 = vst [vmem:[%s5 + $0x38] sm:$0xff] %v1448
  // Predicated region
  $region22: #{sep_conv_gru3d_forward.5} parent=0 // pred_check
    _
  $region23: #{sep_conv_gru3d_forward.5} parent=0 // pred_check_branch
    %1458 = sbr.rel (0) target = $region25
  $region24: #{sep_conv_gru3d_forward.5} parent=0 // pred_region
    _
  $region25: #{sep_conv_gru3d_forward.5} parent=0 // pred_fallthru
    _
  // Predicated region
  $region26: #{sep_conv_gru3d_forward.5} parent=0 // pred_check
    _
  $region27: #{sep_conv_gru3d_forward.5} parent=0 // pred_check_branch
    %1460 = sbr.rel (0) target = $region29
  $region28: #{sep_conv_gru3d_forward.5} parent=0 // pred_region
    _
  $region29: #{sep_conv_gru3d_forward.5} parent=0 // pred_fallthru
    _

// kernel: sep_conv_gru3d_forward.3
$region0: #{sep_conv_gru3d_forward.3}
  #allocation0 [shape = 'u32[]', space=smem, size = 0x4, offset = 0x4, fixed_abs, tag = 'smem constant byte address 0x4 - core index']
  #allocation1 [shape = 'u32[144,128]{1,0:T(1,128)}', space=vmem, size = 0x12000, scoped, tag = 'internal scratch']
  #allocation2 [shape = 'f32[200,512]{1,0:T(8,128)}', space=vmem, size = 0x64000, scoped, tag = 'scratch operand']
  %s0 = inlined_call_operand.vmem [shape: f32[16,512], index: 0, kind: input, shape index: {}, may-alias: {0,5}]
  %s1 = inlined_call_operand.vmem [shape: f32[24,512], index: 1, kind: input, shape index: {}]
  %s2 = inlined_call_operand.vmem [shape: f32[48,200], index: 2, kind: input, shape index: {}]
  %s3 = inlined_call_operand.vmem [shape: f32[16,80], index: 3, kind: input, shape index: {}]
  %s4 = inlined_call_operand.vmem [shape: f32[48,1], index: 4, kind: input, shape index: {}]
  %s5 = inlined_call_operand.vmem [shape: f32[16,512], index: 5, kind: output, shape index: {}, may-alias: {0,5}]
  %s6 = sld [smem:[#allocation0]]
  $region30: #{sep_conv_gru3d_forward.3} parent=0
    _
  %s8 = ssub.s32 1, %s6
  %s9 = scalar_select 0, %s8, %s6
  // Predicated region
  $region2: #{sep_conv_gru3d_forward.3} parent=0 // pred_check
    _
  $region3: #{sep_conv_gru3d_forward.3} parent=0 // pred_check_branch
    %11 = sbr.rel (0) target = $region5
  $region4: #{sep_conv_gru3d_forward.3} parent=0 // pred_region
    _
  $region5: #{sep_conv_gru3d_forward.3} parent=0 // pred_fallthru
    _
  // Predicated region
  $region6: #{sep_conv_gru3d_forward.3} parent=0 // pred_check
    _
  $region7: #{sep_conv_gru3d_forward.3} parent=0 // pred_check_branch
    %13 = sbr.rel (0) target = $region9
  $region8: #{sep_conv_gru3d_forward.3} parent=0 // pred_region
    _
  $region9: #{sep_conv_gru3d_forward.3} parent=0 // pred_fallthru
    _
  // Predicated region
  $region10: #{sep_conv_gru3d_forward.3} parent=0 // pred_check
    _
  $region11: #{sep_conv_gru3d_forward.3} parent=0 // pred_check_branch
    %15 = sbr.rel (0) target = $region13
  $region12: #{sep_conv_gru3d_forward.3} parent=0 // pred_region
    _
  $region13: #{sep_conv_gru3d_forward.3} parent=0 // pred_fallthru
    _
  // Predicated region
  $region14: #{sep_conv_gru3d_forward.3} parent=0 // pred_check
    _
  $region15: #{sep_conv_gru3d_forward.3} parent=0 // pred_check_branch
    %17 = sbr.rel (0) target = $region17
  $region16: #{sep_conv_gru3d_forward.3} parent=0 // pred_region
    _
  $region17: #{sep_conv_gru3d_forward.3} parent=0 // pred_fallthru
    _
  // Predicated region
  $region18: #{sep_conv_gru3d_forward.3} parent=0 // pred_check
    _
  $region19: #{sep_conv_gru3d_forward.3} parent=0 // pred_check_branch
    %19 = sbr.rel (0) target = $region21
  $region20: #{sep_conv_gru3d_forward.3} parent=0 // pred_region
    _
  $region21: #{sep_conv_gru3d_forward.3} parent=0 // pred_fallthru
    _
  %v20 = vld [vmem:[%s0] sm:$0xff]
  %v21 = vld [vmem:[%s0 + $0x8] sm:$0xff]
  %v22 = vld [vmem:[%s0 + $0x10] sm:$0xff]
  %v23 = vld [vmem:[%s0 + $0x18] sm:$0xff]
  %v24 = vld [vmem:[%s0 + $0x20] sm:$0xff]
  %v25 = vld [vmem:[%s0 + $0x28] sm:$0xff]
  %v26 = vld [vmem:[%s0 + $0x30] sm:$0xff]
  %v27 = vld [vmem:[%s0 + $0x38] sm:$0xff]
  %v28 = vlaneseq
  %v29 = vand.u32 %v28, 127
  %v30 = vadd.s32 %v29, 128
  %v31 = vadd.s32 %v29, 256
  %v32 = vadd.s32 %v29, 384
  %vm33 = vcmp.lt.s32.totalorder %v29, 0
  %v34 = vsub.s32 0, %v29
  %v35 = vsel %vm33, %v34, %v29
  %v36 = vshrl.u32 %v35, 3
  %v37 = vand.u32 %v35, 7
  %v38 = vsub.s32 0, %v37
  %v39 = vsel %vm33, %v38, %v37
  %vm40 = vcmp.lt.s32.totalorder %v30, 0
  %v41 = vsub.s32 0, %v30
  %v42 = vsel %vm40, %v41, %v30
  %v43 = vshrl.u32 %v42, 3
  %v44 = vand.u32 %v42, 7
  %v45 = vsub.s32 0, %v44
  %v46 = vsel %vm40, %v45, %v44
  %vm47 = vcmp.lt.s32.totalorder %v31, 0
  %v48 = vsub.s32 0, %v31
  %v49 = vsel %vm47, %v48, %v31
  %v50 = vshrl.u32 %v49, 3
  %v51 = vand.u32 %v49, 7
  %v52 = vsub.s32 0, %v51
  %v53 = vsel %vm47, %v52, %v51
  %vm54 = vcmp.lt.s32.totalorder %v32, 0
  %v55 = vsub.s32 0, %v32
  %v56 = vsel %vm54, %v55, %v32
  %v57 = vshrl.u32 %v56, 3
  %v58 = vand.u32 %v56, 7
  %v59 = vsub.s32 0, %v58
  %v60 = vsel %vm54, %v59, %v58
  %vm61 = vcmp.ne.s32.totalorder %v39, 0
  %vm62 = vcmp.ne.s32.totalorder %v46, 0
  %vm63 = vcmp.ne.s32.totalorder %v53, 0
  %vm64 = vcmp.ne.s32.totalorder %v60, 0
  %vm65 = vcmp.lt.s32.totalorder %v39, 0
  %vm66 = vcmp.lt.s32.totalorder %v46, 0
  %vm67 = vcmp.lt.s32.totalorder %v53, 0
  %vm68 = vcmp.lt.s32.totalorder %v60, 0
  %vm69 = vmand %vm65, %vm61
  %vm70 = vmand %vm66, %vm62
  %vm71 = vmand %vm67, %vm63
  %vm72 = vmand %vm68, %vm64
  %v73 = vadd.s32 %v39, 8
  %v74 = vadd.s32 %v46, 8
  %v75 = vadd.s32 %v53, 8
  %v76 = vadd.s32 %v60, 8
  %v77 = vsel %vm69, %v73, %v39
  %v78 = vsel %vm70, %v74, %v46
  %v79 = vsel %vm71, %v75, %v53
  %v80 = vsel %vm72, %v76, %v60
  %vm81 = vcmp.ge.s32.totalorder %v77, 2
  %vm82 = vcmp.ge.s32.totalorder %v78, 2
  %vm83 = vcmp.ge.s32.totalorder %v79, 2
  %vm84 = vcmp.ge.s32.totalorder %v80, 2
  %vm85 = vcmp.ge.s32.totalorder %v77, 1
  %vm86 = vcmp.ge.s32.totalorder %v78, 1
  %vm87 = vcmp.ge.s32.totalorder %v79, 1
  %vm88 = vcmp.ge.s32.totalorder %v80, 1
  %vm89 = vcmp.lt.s32.totalorder %v77, 7
  %vm90 = vcmp.lt.s32.totalorder %v78, 7
  %vm91 = vcmp.lt.s32.totalorder %v79, 7
  %vm92 = vcmp.lt.s32.totalorder %v80, 7
  %vm93 = vcmp.lt.s32.totalorder %v77, 6
  %vm94 = vcmp.lt.s32.totalorder %v78, 6
  %vm95 = vcmp.lt.s32.totalorder %v79, 6
  %vm96 = vcmp.lt.s32.totalorder %v80, 6
  %99 = vrot.lane.b32.xlu0 %v23, 2
  %v100 = vpop.permute.xlu0 %99
  %101 = vrot.lane.b32.xlu0 %v27, 2
  %v102 = vpop.permute.xlu0 %101
  %111 = vrot.lane.b32.xlu0 %v20, 2
  %v112 = vpop.permute.xlu0 %111
  %113 = vrot.lane.b32.xlu0 %v21, 2
  %v114 = vpop.permute.xlu0 %113
  %115 = vrot.lane.b32.xlu0 %v22, 2
  %v116 = vpop.permute.xlu0 %115
  %117 = vrot.lane.b32.xlu0 %v24, 2
  %v118 = vpop.permute.xlu0 %117
  %119 = vrot.lane.b32.xlu0 %v25, 2
  %v120 = vpop.permute.xlu0 %119
  %121 = vrot.lane.b32.xlu0 %v26, 2
  %v122 = vpop.permute.xlu0 %121
  %vm123 = vcmask 15360
  %v124 = vsel %vm123, %v112, %v114
  %v125 = vsel %vm123, %v114, %v116
  %v126 = vsel %vm123, %v116, %v100
  %v127 = vsel %vm123, %v118, %v120
  %v128 = vsel %vm123, %v120, %v122
  %v129 = vsel %vm123, %v122, %v102
  %v138 = vsel %vm123, %v100, %v112
  %v139 = vsel %vm123, %v102, %v118
  %v140 = vsel %vm81, 1, 0
  %v141 = vsel %vm82, 1, 0
  %v142 = vsel %vm83, 1, 0
  %v143 = vsel %vm84, 1, 0
  %vm144 = vcmp.eq.s32.totalorder %v140, 1
  %vm145 = vcmp.eq.s32.totalorder %v141, 1
  %vm146 = vcmp.eq.s32.totalorder %v142, 1
  %vm147 = vcmp.eq.s32.totalorder %v143, 1
  %v148 = vsel %vm144, %v138, 0.0
  %v149 = vsel %vm145, %v124, 0.0
  %v150 = vsel %vm146, %v125, 0.0
  %v151 = vsel %vm147, %v126, 0.0
  %v152 = vsel %vm144, %v139, 0.0
  %v153 = vsel %vm145, %v127, 0.0
  %v154 = vsel %vm146, %v128, 0.0
  %v155 = vsel %vm147, %v129, 0.0
  %156 = vst [vmem:[#allocation2] sm:$0xff] %v148
  %157 = vst [vmem:[#allocation2 + $0x8] sm:$0xff] %v149
  %158 = vst [vmem:[#allocation2 + $0x10] sm:$0xff] %v150
  %159 = vst [vmem:[#allocation2 + $0x18] sm:$0xff] %v151
  %160 = vst [vmem:[#allocation2 + $0x20] sm:$0xff] %v152
  %161 = vst [vmem:[#allocation2 + $0x28] sm:$0xff] %v153
  %162 = vst [vmem:[#allocation2 + $0x30] sm:$0xff] %v154
  %163 = vst [vmem:[#allocation2 + $0x38] sm:$0xff] %v155
  %164 = vrot.lane.b32.xlu0 %v23, 1
  %v165 = vpop.permute.xlu0 %164
  %166 = vrot.lane.b32.xlu0 %v27, 1
  %v167 = vpop.permute.xlu0 %166
  %170 = vrot.lane.b32.xlu0 %v20, 1
  %v171 = vpop.permute.xlu0 %170
  %172 = vrot.lane.b32.xlu0 %v21, 1
  %v173 = vpop.permute.xlu0 %172
  %174 = vrot.lane.b32.xlu0 %v22, 1
  %v175 = vpop.permute.xlu0 %174
  %176 = vrot.lane.b32.xlu0 %v24, 1
  %v177 = vpop.permute.xlu0 %176
  %178 = vrot.lane.b32.xlu0 %v25, 1
  %v179 = vpop.permute.xlu0 %178
  %180 = vrot.lane.b32.xlu0 %v26, 1
  %v181 = vpop.permute.xlu0 %180
  %vm182 = vcmask 7168
  %v183 = vsel %vm182, %v171, %v173
  %v184 = vsel %vm182, %v173, %v175
  %v185 = vsel %vm182, %v175, %v165
  %v186 = vsel %vm182, %v177, %v179
  %v187 = vsel %vm182, %v179, %v181
  %v188 = vsel %vm182, %v181, %v167
  %v197 = vsel %vm182, %v165, %v171
  %v198 = vsel %vm182, %v167, %v177
  %v199 = vsel %vm85, 1, 0
  %v200 = vsel %vm86, 1, 0
  %v201 = vsel %vm87, 1, 0
  %v202 = vsel %vm88, 1, 0
  %vm203 = vcmp.eq.s32.totalorder %v199, 1
  %vm204 = vcmp.eq.s32.totalorder %v200, 1
  %vm205 = vcmp.eq.s32.totalorder %v201, 1
  %vm206 = vcmp.eq.s32.totalorder %v202, 1
  %v207 = vsel %vm203, %v197, 0.0
  %v208 = vsel %vm204, %v183, 0.0
  %v209 = vsel %vm205, %v184, 0.0
  %v210 = vsel %vm206, %v185, 0.0
  %v211 = vsel %vm203, %v198, 0.0
  %v212 = vsel %vm204, %v186, 0.0
  %v213 = vsel %vm205, %v187, 0.0
  %v214 = vsel %vm206, %v188, 0.0
  %215 = vst [vmem:[#allocation2 + $0x40] sm:$0xff] %v207
  %216 = vst [vmem:[#allocation2 + $0x48] sm:$0xff] %v208
  %217 = vst [vmem:[#allocation2 + $0x50] sm:$0xff] %v209
  %218 = vst [vmem:[#allocation2 + $0x58] sm:$0xff] %v210
  %219 = vst [vmem:[#allocation2 + $0x60] sm:$0xff] %v211
  %220 = vst [vmem:[#allocation2 + $0x68] sm:$0xff] %v212
  %221 = vst [vmem:[#allocation2 + $0x70] sm:$0xff] %v213
  %222 = vst [vmem:[#allocation2 + $0x78] sm:$0xff] %v214
  %223 = vst [vmem:[#allocation2 + $0x80] sm:$0xff] %v20
  %224 = vst [vmem:[#allocation2 + $0x88] sm:$0xff] %v21
  %225 = vst [vmem:[#allocation2 + $0x90] sm:$0xff] %v22
  %226 = vst [vmem:[#allocation2 + $0x98] sm:$0xff] %v23
  %227 = vst [vmem:[#allocation2 + $0xa0] sm:$0xff] %v24
  %228 = vst [vmem:[#allocation2 + $0xa8] sm:$0xff] %v25
  %229 = vst [vmem:[#allocation2 + $0xb0] sm:$0xff] %v26
  %230 = vst [vmem:[#allocation2 + $0xb8] sm:$0xff] %v27
  %231 = vrot.lane.b32.xlu0 %v20, 127
  %v232 = vpop.permute.xlu0 %231
  %233 = vrot.lane.b32.xlu0 %v21, 127
  %v234 = vpop.permute.xlu0 %233
  %235 = vrot.lane.b32.xlu0 %v22, 127
  %v236 = vpop.permute.xlu0 %235
  %237 = vrot.lane.b32.xlu0 %v23, 127
  %v238 = vpop.permute.xlu0 %237
  %239 = vrot.lane.b32.xlu0 %v24, 127
  %v240 = vpop.permute.xlu0 %239
  %241 = vrot.lane.b32.xlu0 %v25, 127
  %v242 = vpop.permute.xlu0 %241
  %243 = vrot.lane.b32.xlu0 %v26, 127
  %v244 = vpop.permute.xlu0 %243
  %245 = vrot.lane.b32.xlu0 %v27, 127
  %v246 = vpop.permute.xlu0 %245
  %vm247 = vcmask 1039360
  %v248 = vsel %vm247, %v232, %v234
  %v249 = vsel %vm247, %v234, %v236
  %v250 = vsel %vm247, %v236, %v238
  %v251 = vsel %vm247, %v240, %v242
  %v252 = vsel %vm247, %v242, %v244
  %v253 = vsel %vm247, %v244, %v246
  %v264 = vsel %vm247, %v238, %v232
  %v265 = vsel %vm247, %v246, %v240
  %v266 = vsel %vm89, 1, 0
  %v267 = vsel %vm90, 1, 0
  %v268 = vsel %vm91, 1, 0
  %v269 = vsel %vm92, 1, 0
  %vm270 = vcmp.eq.s32.totalorder %v266, 1
  %vm271 = vcmp.eq.s32.totalorder %v267, 1
  %vm272 = vcmp.eq.s32.totalorder %v268, 1
  %vm273 = vcmp.eq.s32.totalorder %v269, 1
  %v274 = vsel %vm270, %v248, 0.0
  %v275 = vsel %vm271, %v249, 0.0
  %v276 = vsel %vm272, %v250, 0.0
  %v277 = vsel %vm273, %v264, 0.0
  %v278 = vsel %vm270, %v251, 0.0
  %v279 = vsel %vm271, %v252, 0.0
  %v280 = vsel %vm272, %v253, 0.0
  %v281 = vsel %vm273, %v265, 0.0
  %282 = vst [vmem:[#allocation2 + $0xc0] sm:$0xff] %v274
  %283 = vst [vmem:[#allocation2 + $0xc8] sm:$0xff] %v275
  %284 = vst [vmem:[#allocation2 + $0xd0] sm:$0xff] %v276
  %285 = vst [vmem:[#allocation2 + $0xd8] sm:$0xff] %v277
  %286 = vst [vmem:[#allocation2 + $0xe0] sm:$0xff] %v278
  %287 = vst [vmem:[#allocation2 + $0xe8] sm:$0xff] %v279
  %288 = vst [vmem:[#allocation2 + $0xf0] sm:$0xff] %v280
  %289 = vst [vmem:[#allocation2 + $0xf8] sm:$0xff] %v281
  %290 = vrot.lane.b32.xlu0 %v20, 126
  %v291 = vpop.permute.xlu0 %290
  %292 = vrot.lane.b32.xlu0 %v21, 126
  %v293 = vpop.permute.xlu0 %292
  %294 = vrot.lane.b32.xlu0 %v22, 126
  %v295 = vpop.permute.xlu0 %294
  %296 = vrot.lane.b32.xlu0 %v23, 126
  %v297 = vpop.permute.xlu0 %296
  %298 = vrot.lane.b32.xlu0 %v24, 126
  %v299 = vpop.permute.xlu0 %298
  %300 = vrot.lane.b32.xlu0 %v25, 126
  %v301 = vpop.permute.xlu0 %300
  %302 = vrot.lane.b32.xlu0 %v26, 126
  %v303 = vpop.permute.xlu0 %302
  %304 = vrot.lane.b32.xlu0 %v27, 126
  %v305 = vpop.permute.xlu0 %304
  %vm306 = vcmask 1031168
  %v307 = vsel %vm306, %v291, %v293
  %v308 = vsel %vm306, %v293, %v295
  %v309 = vsel %vm306, %v295, %v297
  %v310 = vsel %vm306, %v299, %v301
  %v311 = vsel %vm306, %v301, %v303
  %v312 = vsel %vm306, %v303, %v305
  %v323 = vsel %vm306, %v297, %v291
  %v324 = vsel %vm306, %v305, %v299
  %v325 = vsel %vm93, 1, 0
  %v326 = vsel %vm94, 1, 0
  %v327 = vsel %vm95, 1, 0
  %v328 = vsel %vm96, 1, 0
  %vm329 = vcmp.eq.s32.totalorder %v325, 1
  %vm330 = vcmp.eq.s32.totalorder %v326, 1
  %vm331 = vcmp.eq.s32.totalorder %v327, 1
  %vm332 = vcmp.eq.s32.totalorder %v328, 1
  %v333 = vsel %vm329, %v307, 0.0
  %v334 = vsel %vm330, %v308, 0.0
  %v335 = vsel %vm331, %v309, 0.0
  %v336 = vsel %vm332, %v323, 0.0
  %v337 = vsel %vm329, %v310, 0.0
  %v338 = vsel %vm330, %v311, 0.0
  %v339 = vsel %vm331, %v312, 0.0
  %v340 = vsel %vm332, %v324, 0.0
  %341 = vst [vmem:[#allocation2 + $0x100] sm:$0xff] %v333
  %342 = vst [vmem:[#allocation2 + $0x108] sm:$0xff] %v334
  %343 = vst [vmem:[#allocation2 + $0x110] sm:$0xff] %v335
  %344 = vst [vmem:[#allocation2 + $0x118] sm:$0xff] %v336
  %345 = vst [vmem:[#allocation2 + $0x120] sm:$0xff] %v337
  %346 = vst [vmem:[#allocation2 + $0x128] sm:$0xff] %v338
  %347 = vst [vmem:[#allocation2 + $0x130] sm:$0xff] %v339
  %348 = vst [vmem:[#allocation2 + $0x138] sm:$0xff] %v340
  %v349 = vld [vmem:[%s1] sm:$0xff]
  %v350 = vld [vmem:[%s1 + $0x8] sm:$0xff]
  %v351 = vld [vmem:[%s1 + $0x10] sm:$0xff]
  %v352 = vld [vmem:[%s1 + $0x18] sm:$0xff]
  %v353 = vld [vmem:[%s1 + $0x20] sm:$0xff]
  %v354 = vld [vmem:[%s1 + $0x28] sm:$0xff]
  %v355 = vld [vmem:[%s1 + $0x30] sm:$0xff]
  %v356 = vld [vmem:[%s1 + $0x38] sm:$0xff]
  %v357 = vld [vmem:[%s1 + $0x40] sm:$0xff]
  %v358 = vld [vmem:[%s1 + $0x48] sm:$0xff]
  %v359 = vld [vmem:[%s1 + $0x50] sm:$0xff]
  %v360 = vld [vmem:[%s1 + $0x58] sm:$0xff]
  %364 = vrot.lane.b32.xlu0 %v352, 2
  %v365 = vpop.permute.xlu0 %364
  %366 = vrot.lane.b32.xlu0 %v356, 2
  %v367 = vpop.permute.xlu0 %366
  %368 = vrot.lane.b32.xlu0 %v360, 2
  %v369 = vpop.permute.xlu0 %368
  %382 = vrot.lane.b32.xlu0 %v349, 2
  %v383 = vpop.permute.xlu0 %382
  %384 = vrot.lane.b32.xlu0 %v350, 2
  %v385 = vpop.permute.xlu0 %384
  %386 = vrot.lane.b32.xlu0 %v351, 2
  %v387 = vpop.permute.xlu0 %386
  %388 = vrot.lane.b32.xlu0 %v353, 2
  %v389 = vpop.permute.xlu0 %388
  %390 = vrot.lane.b32.xlu0 %v354, 2
  %v391 = vpop.permute.xlu0 %390
  %392 = vrot.lane.b32.xlu0 %v355, 2
  %v393 = vpop.permute.xlu0 %392
  %394 = vrot.lane.b32.xlu0 %v357, 2
  %v395 = vpop.permute.xlu0 %394
  %396 = vrot.lane.b32.xlu0 %v358, 2
  %v397 = vpop.permute.xlu0 %396
  %398 = vrot.lane.b32.xlu0 %v359, 2
  %v399 = vpop.permute.xlu0 %398
  %v400 = vsel %vm123, %v383, %v385
  %v401 = vsel %vm123, %v385, %v387
  %v402 = vsel %vm123, %v387, %v365
  %v403 = vsel %vm123, %v389, %v391
  %v404 = vsel %vm123, %v391, %v393
  %v405 = vsel %vm123, %v393, %v367
  %v406 = vsel %vm123, %v395, %v397
  %v407 = vsel %vm123, %v397, %v399
  %v408 = vsel %vm123, %v399, %v369
  %v421 = vsel %vm123, %v365, %v383
  %v422 = vsel %vm123, %v367, %v389
  %v423 = vsel %vm123, %v369, %v395
  %v424 = vsel %vm144, %v421, 0.0
  %v425 = vsel %vm145, %v400, 0.0
  %v426 = vsel %vm146, %v401, 0.0
  %v427 = vsel %vm147, %v402, 0.0
  %v428 = vsel %vm144, %v422, 0.0
  %v429 = vsel %vm145, %v403, 0.0
  %v430 = vsel %vm146, %v404, 0.0
  %v431 = vsel %vm147, %v405, 0.0
  %v432 = vsel %vm144, %v423, 0.0
  %v433 = vsel %vm145, %v406, 0.0
  %v434 = vsel %vm146, %v407, 0.0
  %v435 = vsel %vm147, %v408, 0.0
  %436 = vst [vmem:[#allocation2 + $0x140] sm:$0xff] %v424
  %437 = vst [vmem:[#allocation2 + $0x148] sm:$0xff] %v425
  %438 = vst [vmem:[#allocation2 + $0x150] sm:$0xff] %v426
  %439 = vst [vmem:[#allocation2 + $0x158] sm:$0xff] %v427
  %440 = vst [vmem:[#allocation2 + $0x160] sm:$0xff] %v428
  %441 = vst [vmem:[#allocation2 + $0x168] sm:$0xff] %v429
  %442 = vst [vmem:[#allocation2 + $0x170] sm:$0xff] %v430
  %443 = vst [vmem:[#allocation2 + $0x178] sm:$0xff] %v431
  %444 = vst [vmem:[#allocation2 + $0x180] sm:$0xff] %v432
  %445 = vst [vmem:[#allocation2 + $0x188] sm:$0xff] %v433
  %446 = vst [vmem:[#allocation2 + $0x190] sm:$0xff] %v434
  %447 = vst [vmem:[#allocation2 + $0x198] sm:$0xff] %v435
  %448 = vrot.lane.b32.xlu0 %v352, 1
  %v449 = vpop.permute.xlu0 %448
  %450 = vrot.lane.b32.xlu0 %v356, 1
  %v451 = vpop.permute.xlu0 %450
  %452 = vrot.lane.b32.xlu0 %v360, 1
  %v453 = vpop.permute.xlu0 %452
  %457 = vrot.lane.b32.xlu0 %v349, 1
  %v458 = vpop.permute.xlu0 %457
  %459 = vrot.lane.b32.xlu0 %v350, 1
  %v460 = vpop.permute.xlu0 %459
  %461 = vrot.lane.b32.xlu0 %v351, 1
  %v462 = vpop.permute.xlu0 %461
  %463 = vrot.lane.b32.xlu0 %v353, 1
  %v464 = vpop.permute.xlu0 %463
  %465 = vrot.lane.b32.xlu0 %v354, 1
  %v466 = vpop.permute.xlu0 %465
  %467 = vrot.lane.b32.xlu0 %v355, 1
  %v468 = vpop.permute.xlu0 %467
  %469 = vrot.lane.b32.xlu0 %v357, 1
  %v470 = vpop.permute.xlu0 %469
  %471 = vrot.lane.b32.xlu0 %v358, 1
  %v472 = vpop.permute.xlu0 %471
  %473 = vrot.lane.b32.xlu0 %v359, 1
  %v474 = vpop.permute.xlu0 %473
  %v475 = vsel %vm182, %v458, %v460
  %v476 = vsel %vm182, %v460, %v462
  %v477 = vsel %vm182, %v462, %v449
  %v478 = vsel %vm182, %v464, %v466
  %v479 = vsel %vm182, %v466, %v468
  %v480 = vsel %vm182, %v468, %v451
  %v481 = vsel %vm182, %v470, %v472
  %v482 = vsel %vm182, %v472, %v474
  %v483 = vsel %vm182, %v474, %v453
  %v496 = vsel %vm182, %v449, %v458
  %v497 = vsel %vm182, %v451, %v464
  %v498 = vsel %vm182, %v453, %v470
  %v499 = vsel %vm203, %v496, 0.0
  %v500 = vsel %vm204, %v475, 0.0
  %v501 = vsel %vm205, %v476, 0.0
  %v502 = vsel %vm206, %v477, 0.0
  %v503 = vsel %vm203, %v497, 0.0
  %v504 = vsel %vm204, %v478, 0.0
  %v505 = vsel %vm205, %v479, 0.0
  %v506 = vsel %vm206, %v480, 0.0
  %v507 = vsel %vm203, %v498, 0.0
  %v508 = vsel %vm204, %v481, 0.0
  %v509 = vsel %vm205, %v482, 0.0
  %v510 = vsel %vm206, %v483, 0.0
  %511 = vst [vmem:[#allocation2 + $0x1a0] sm:$0xff] %v499
  %512 = vst [vmem:[#allocation2 + $0x1a8] sm:$0xff] %v500
  %513 = vst [vmem:[#allocation2 + $0x1b0] sm:$0xff] %v501
  %514 = vst [vmem:[#allocation2 + $0x1b8] sm:$0xff] %v502
  %515 = vst [vmem:[#allocation2 + $0x1c0] sm:$0xff] %v503
  %516 = vst [vmem:[#allocation2 + $0x1c8] sm:$0xff] %v504
  %517 = vst [vmem:[#allocation2 + $0x1d0] sm:$0xff] %v505
  %518 = vst [vmem:[#allocation2 + $0x1d8] sm:$0xff] %v506
  %519 = vst [vmem:[#allocation2 + $0x1e0] sm:$0xff] %v507
  %520 = vst [vmem:[#allocation2 + $0x1e8] sm:$0xff] %v508
  %521 = vst [vmem:[#allocation2 + $0x1f0] sm:$0xff] %v509
  %522 = vst [vmem:[#allocation2 + $0x1f8] sm:$0xff] %v510
  %523 = vst [vmem:[#allocation2 + $0x200] sm:$0xff] %v349
  %524 = vst [vmem:[#allocation2 + $0x208] sm:$0xff] %v350
  %525 = vst [vmem:[#allocation2 + $0x210] sm:$0xff] %v351
  %526 = vst [vmem:[#allocation2 + $0x218] sm:$0xff] %v352
  %527 = vst [vmem:[#allocation2 + $0x220] sm:$0xff] %v353
  %528 = vst [vmem:[#allocation2 + $0x228] sm:$0xff] %v354
  %529 = vst [vmem:[#allocation2 + $0x230] sm:$0xff] %v355
  %530 = vst [vmem:[#allocation2 + $0x238] sm:$0xff] %v356
  %531 = vst [vmem:[#allocation2 + $0x240] sm:$0xff] %v357
  %532 = vst [vmem:[#allocation2 + $0x248] sm:$0xff] %v358
  %533 = vst [vmem:[#allocation2 + $0x250] sm:$0xff] %v359
  %534 = vst [vmem:[#allocation2 + $0x258] sm:$0xff] %v360
  %535 = vrot.lane.b32.xlu0 %v349, 127
  %v536 = vpop.permute.xlu0 %535
  %537 = vrot.lane.b32.xlu0 %v350, 127
  %v538 = vpop.permute.xlu0 %537
  %539 = vrot.lane.b32.xlu0 %v351, 127
  %v540 = vpop.permute.xlu0 %539
  %541 = vrot.lane.b32.xlu0 %v352, 127
  %v542 = vpop.permute.xlu0 %541
  %543 = vrot.lane.b32.xlu0 %v353, 127
  %v544 = vpop.permute.xlu0 %543
  %545 = vrot.lane.b32.xlu0 %v354, 127
  %v546 = vpop.permute.xlu0 %545
  %547 = vrot.lane.b32.xlu0 %v355, 127
  %v548 = vpop.permute.xlu0 %547
  %549 = vrot.lane.b32.xlu0 %v356, 127
  %v550 = vpop.permute.xlu0 %549
  %551 = vrot.lane.b32.xlu0 %v357, 127
  %v552 = vpop.permute.xlu0 %551
  %553 = vrot.lane.b32.xlu0 %v358, 127
  %v554 = vpop.permute.xlu0 %553
  %555 = vrot.lane.b32.xlu0 %v359, 127
  %v556 = vpop.permute.xlu0 %555
  %557 = vrot.lane.b32.xlu0 %v360, 127
  %v558 = vpop.permute.xlu0 %557
  %v559 = vsel %vm247, %v536, %v538
  %v560 = vsel %vm247, %v538, %v540
  %v561 = vsel %vm247, %v540, %v542
  %v562 = vsel %vm247, %v544, %v546
  %v563 = vsel %vm247, %v546, %v548
  %v564 = vsel %vm247, %v548, %v550
  %v565 = vsel %vm247, %v552, %v554
  %v566 = vsel %vm247, %v554, %v556
  %v567 = vsel %vm247, %v556, %v558
  %v583 = vsel %vm247, %v542, %v536
  %v584 = vsel %vm247, %v550, %v544
  %v585 = vsel %vm247, %v558, %v552
  %v586 = vsel %vm270, %v559, 0.0
  %v587 = vsel %vm271, %v560, 0.0
  %v588 = vsel %vm272, %v561, 0.0
  %v589 = vsel %vm273, %v583, 0.0
  %v590 = vsel %vm270, %v562, 0.0
  %v591 = vsel %vm271, %v563, 0.0
  %v592 = vsel %vm272, %v564, 0.0
  %v593 = vsel %vm273, %v584, 0.0
  %v594 = vsel %vm270, %v565, 0.0
  %v595 = vsel %vm271, %v566, 0.0
  %v596 = vsel %vm272, %v567, 0.0
  %v597 = vsel %vm273, %v585, 0.0
  %598 = vst [vmem:[#allocation2 + $0x260] sm:$0xff] %v586
  %599 = vst [vmem:[#allocation2 + $0x268] sm:$0xff] %v587
  %600 = vst [vmem:[#allocation2 + $0x270] sm:$0xff] %v588
  %601 = vst [vmem:[#allocation2 + $0x278] sm:$0xff] %v589
  %602 = vst [vmem:[#allocation2 + $0x280] sm:$0xff] %v590
  %603 = vst [vmem:[#allocation2 + $0x288] sm:$0xff] %v591
  %604 = vst [vmem:[#allocation2 + $0x290] sm:$0xff] %v592
  %605 = vst [vmem:[#allocation2 + $0x298] sm:$0xff] %v593
  %606 = vst [vmem:[#allocation2 + $0x2a0] sm:$0xff] %v594
  %607 = vst [vmem:[#allocation2 + $0x2a8] sm:$0xff] %v595
  %608 = vst [vmem:[#allocation2 + $0x2b0] sm:$0xff] %v596
  %609 = vst [vmem:[#allocation2 + $0x2b8] sm:$0xff] %v597
  %610 = vrot.lane.b32.xlu0 %v349, 126
  %v611 = vpop.permute.xlu0 %610
  %612 = vrot.lane.b32.xlu0 %v350, 126
  %v613 = vpop.permute.xlu0 %612
  %614 = vrot.lane.b32.xlu0 %v351, 126
  %v615 = vpop.permute.xlu0 %614
  %616 = vrot.lane.b32.xlu0 %v352, 126
  %v617 = vpop.permute.xlu0 %616
  %618 = vrot.lane.b32.xlu0 %v353, 126
  %v619 = vpop.permute.xlu0 %618
  %620 = vrot.lane.b32.xlu0 %v354, 126
  %v621 = vpop.permute.xlu0 %620
  %622 = vrot.lane.b32.xlu0 %v355, 126
  %v623 = vpop.permute.xlu0 %622
  %624 = vrot.lane.b32.xlu0 %v356, 126
  %v625 = vpop.permute.xlu0 %624
  %626 = vrot.lane.b32.xlu0 %v357, 126
  %v627 = vpop.permute.xlu0 %626
  %628 = vrot.lane.b32.xlu0 %v358, 126
  %v629 = vpop.permute.xlu0 %628
  %630 = vrot.lane.b32.xlu0 %v359, 126
  %v631 = vpop.permute.xlu0 %630
  %632 = vrot.lane.b32.xlu0 %v360, 126
  %v633 = vpop.permute.xlu0 %632
  %v634 = vsel %vm306, %v611, %v613
  %v635 = vsel %vm306, %v613, %v615
  %v636 = vsel %vm306, %v615, %v617
  %v637 = vsel %vm306, %v619, %v621
  %v638 = vsel %vm306, %v621, %v623
  %v639 = vsel %vm306, %v623, %v625
  %v640 = vsel %vm306, %v627, %v629
  %v641 = vsel %vm306, %v629, %v631
  %v642 = vsel %vm306, %v631, %v633
  %v658 = vsel %vm306, %v617, %v611
  %v659 = vsel %vm306, %v625, %v619
  %v660 = vsel %vm306, %v633, %v627
  %v661 = vsel %vm329, %v634, 0.0
  %v662 = vsel %vm330, %v635, 0.0
  %v663 = vsel %vm331, %v636, 0.0
  %v664 = vsel %vm332, %v658, 0.0
  %v665 = vsel %vm329, %v637, 0.0
  %v666 = vsel %vm330, %v638, 0.0
  %v667 = vsel %vm331, %v639, 0.0
  %v668 = vsel %vm332, %v659, 0.0
  %v669 = vsel %vm329, %v640, 0.0
  %v670 = vsel %vm330, %v641, 0.0
  %v671 = vsel %vm331, %v642, 0.0
  %v672 = vsel %vm332, %v660, 0.0
  %673 = vst [vmem:[#allocation2 + $0x2c0] sm:$0xff] %v661
  %674 = vst [vmem:[#allocation2 + $0x2c8] sm:$0xff] %v662
  %675 = vst [vmem:[#allocation2 + $0x2d0] sm:$0xff] %v663
  %676 = vst [vmem:[#allocation2 + $0x2d8] sm:$0xff] %v664
  %677 = vst [vmem:[#allocation2 + $0x2e0] sm:$0xff] %v665
  %678 = vst [vmem:[#allocation2 + $0x2e8] sm:$0xff] %v666
  %679 = vst [vmem:[#allocation2 + $0x2f0] sm:$0xff] %v667
  %680 = vst [vmem:[#allocation2 + $0x2f8] sm:$0xff] %v668
  %681 = vst [vmem:[#allocation2 + $0x300] sm:$0xff] %v669
  %682 = vst [vmem:[#allocation2 + $0x308] sm:$0xff] %v670
  %683 = vst [vmem:[#allocation2 + $0x310] sm:$0xff] %v671
  %684 = vst [vmem:[#allocation2 + $0x318] sm:$0xff] %v672
  %v685 = vld [vmem:[%s2] sm:$0xff]
  %v686 = vld [vmem:[%s2 + $0x8] sm:$0xff]
  %v687 = vld [vmem:[%s2 + $0x10] sm:$0xff]
  %v688 = vld [vmem:[%s2 + $0x18] sm:$0xff]
  %v689 = vld [vmem:[%s2 + $0x20] sm:$0xff]
  %v690 = vld [vmem:[%s2 + $0x28] sm:$0xff]
  %v691 = vld [vmem:[%s2 + $0x30] sm:$0xff]
  %v692 = vld [vmem:[%s2 + $0x38] sm:$0xff]
  %v693 = vld [vmem:[%s2 + $0x40] sm:$0xff]
  %v694 = vld [vmem:[%s2 + $0x48] sm:$0xff]
  %v695 = vld [vmem:[%s2 + $0x50] sm:$0xff]
  %v696 = vld [vmem:[%s2 + $0x58] sm:$0xff]
  %v697 = vld [vmem:[#allocation2] sm:$0xff]
  %v698 = vld [vmem:[#allocation2 + $0x8] sm:$0xff]
  %v699 = vld [vmem:[#allocation2 + $0x10] sm:$0xff]
  %v700 = vld [vmem:[#allocation2 + $0x18] sm:$0xff]
  %v701 = vld [vmem:[#allocation2 + $0x20] sm:$0xff]
  %v702 = vld [vmem:[#allocation2 + $0x28] sm:$0xff]
  %v703 = vld [vmem:[#allocation2 + $0x30] sm:$0xff]
  %v704 = vld [vmem:[#allocation2 + $0x38] sm:$0xff]
  %v705 = vld [vmem:[#allocation2 + $0x40] sm:$0xff]
  %v706 = vld [vmem:[#allocation2 + $0x48] sm:$0xff]
  %v707 = vld [vmem:[#allocation2 + $0x50] sm:$0xff]
  %v708 = vld [vmem:[#allocation2 + $0x58] sm:$0xff]
  %v709 = vld [vmem:[#allocation2 + $0x60] sm:$0xff]
  %v710 = vld [vmem:[#allocation2 + $0x68] sm:$0xff]
  %v711 = vld [vmem:[#allocation2 + $0x70] sm:$0xff]
  %v712 = vld [vmem:[#allocation2 + $0x78] sm:$0xff]
  %v713 = vld [vmem:[#allocation2 + $0x80] sm:$0xff]
  %v714 = vld [vmem:[#allocation2 + $0x88] sm:$0xff]
  %v715 = vld [vmem:[#allocation2 + $0x90] sm:$0xff]
  %v716 = vld [vmem:[#allocation2 + $0x98] sm:$0xff]
  %v717 = vld [vmem:[#allocation2 + $0xa0] sm:$0xff]
  %v718 = vld [vmem:[#allocation2 + $0xa8] sm:$0xff]
  %v719 = vld [vmem:[#allocation2 + $0xb0] sm:$0xff]
  %v720 = vld [vmem:[#allocation2 + $0xb8] sm:$0xff]
  %v721 = vld [vmem:[#allocation2 + $0xc0] sm:$0xff]
  %v722 = vld [vmem:[#allocation2 + $0xc8] sm:$0xff]
  %v723 = vld [vmem:[#allocation2 + $0xd0] sm:$0xff]
  %v724 = vld [vmem:[#allocation2 + $0xd8] sm:$0xff]
  %v725 = vld [vmem:[#allocation2 + $0xe0] sm:$0xff]
  %v726 = vld [vmem:[#allocation2 + $0xe8] sm:$0xff]
  %v727 = vld [vmem:[#allocation2 + $0xf0] sm:$0xff]
  %v728 = vld [vmem:[#allocation2 + $0xf8] sm:$0xff]
  %v729 = vld [vmem:[#allocation2 + $0x100] sm:$0xff]
  %v730 = vld [vmem:[#allocation2 + $0x108] sm:$0xff]
  %v731 = vld [vmem:[#allocation2 + $0x110] sm:$0xff]
  %v732 = vld [vmem:[#allocation2 + $0x118] sm:$0xff]
  %v733 = vld [vmem:[#allocation2 + $0x120] sm:$0xff]
  %v734 = vld [vmem:[#allocation2 + $0x128] sm:$0xff]
  %v735 = vld [vmem:[#allocation2 + $0x130] sm:$0xff]
  %v736 = vld [vmem:[#allocation2 + $0x138] sm:$0xff]
  %v737 = vld [vmem:[#allocation2 + $0x140] sm:$0xff]
  %v738 = vld [vmem:[#allocation2 + $0x148] sm:$0xff]
  %v739 = vld [vmem:[#allocation2 + $0x150] sm:$0xff]
  %v740 = vld [vmem:[#allocation2 + $0x158] sm:$0xff]
  %v741 = vld [vmem:[#allocation2 + $0x160] sm:$0xff]
  %v742 = vld [vmem:[#allocation2 + $0x168] sm:$0xff]
  %v743 = vld [vmem:[#allocation2 + $0x170] sm:$0xff]
  %v744 = vld [vmem:[#allocation2 + $0x178] sm:$0xff]
  %v745 = vld [vmem:[#allocation2 + $0x180] sm:$0xff]
  %v746 = vld [vmem:[#allocation2 + $0x188] sm:$0xff]
  %v747 = vld [vmem:[#allocation2 + $0x190] sm:$0xff]
  %v748 = vld [vmem:[#allocation2 + $0x198] sm:$0xff]
  %v749 = vld [vmem:[#allocation2 + $0x1a0] sm:$0xff]
  %v750 = vld [vmem:[#allocation2 + $0x1a8] sm:$0xff]
  %v751 = vld [vmem:[#allocation2 + $0x1b0] sm:$0xff]
  %v752 = vld [vmem:[#allocation2 + $0x1b8] sm:$0xff]
  %v753 = vld [vmem:[#allocation2 + $0x1c0] sm:$0xff]
  %v754 = vld [vmem:[#allocation2 + $0x1c8] sm:$0xff]
  %v755 = vld [vmem:[#allocation2 + $0x1d0] sm:$0xff]
  %v756 = vld [vmem:[#allocation2 + $0x1d8] sm:$0xff]
  %v757 = vld [vmem:[#allocation2 + $0x1e0] sm:$0xff]
  %v758 = vld [vmem:[#allocation2 + $0x1e8] sm:$0xff]
  %v759 = vld [vmem:[#allocation2 + $0x1f0] sm:$0xff]
  %v760 = vld [vmem:[#allocation2 + $0x1f8] sm:$0xff]
  %v761 = vld [vmem:[#allocation2 + $0x200] sm:$0xff]
  %v762 = vld [vmem:[#allocation2 + $0x208] sm:$0xff]
  %v763 = vld [vmem:[#allocation2 + $0x210] sm:$0xff]
  %v764 = vld [vmem:[#allocation2 + $0x218] sm:$0xff]
  %v765 = vld [vmem:[#allocation2 + $0x220] sm:$0xff]
  %v766 = vld [vmem:[#allocation2 + $0x228] sm:$0xff]
  %v767 = vld [vmem:[#allocation2 + $0x230] sm:$0xff]
  %v768 = vld [vmem:[#allocation2 + $0x238] sm:$0xff]
  %v769 = vld [vmem:[#allocation2 + $0x240] sm:$0xff]
  %v770 = vld [vmem:[#allocation2 + $0x248] sm:$0xff]
  %v771 = vld [vmem:[#allocation2 + $0x250] sm:$0xff]
  %v772 = vld [vmem:[#allocation2 + $0x258] sm:$0xff]
  %v773 = vld [vmem:[#allocation2 + $0x260] sm:$0xff]
  %v774 = vld [vmem:[#allocation2 + $0x268] sm:$0xff]
  %v775 = vld [vmem:[#allocation2 + $0x270] sm:$0xff]
  %v776 = vld [vmem:[#allocation2 + $0x278] sm:$0xff]
  %v777 = vld [vmem:[#allocation2 + $0x280] sm:$0xff]
  %v778 = vld [vmem:[#allocation2 + $0x288] sm:$0xff]
  %v779 = vld [vmem:[#allocation2 + $0x290] sm:$0xff]
  %v780 = vld [vmem:[#allocation2 + $0x298] sm:$0xff]
  %v781 = vld [vmem:[#allocation2 + $0x2a0] sm:$0xff]
  %v782 = vld [vmem:[#allocation2 + $0x2a8] sm:$0xff]
  %v783 = vld [vmem:[#allocation2 + $0x2b0] sm:$0xff]
  %v784 = vld [vmem:[#allocation2 + $0x2b8] sm:$0xff]
  %v785 = vld [vmem:[#allocation2 + $0x2c0] sm:$0xff]
  %v786 = vld [vmem:[#allocation2 + $0x2c8] sm:$0xff]
  %v787 = vld [vmem:[#allocation2 + $0x2d0] sm:$0xff]
  %v788 = vld [vmem:[#allocation2 + $0x2d8] sm:$0xff]
  %v789 = vld [vmem:[#allocation2 + $0x2e0] sm:$0xff]
  %v790 = vld [vmem:[#allocation2 + $0x2e8] sm:$0xff]
  %v791 = vld [vmem:[#allocation2 + $0x2f0] sm:$0xff]
  %v792 = vld [vmem:[#allocation2 + $0x2f8] sm:$0xff]
  %v793 = vld [vmem:[#allocation2 + $0x300] sm:$0xff]
  %v794 = vld [vmem:[#allocation2 + $0x308] sm:$0xff]
  %v795 = vld [vmem:[#allocation2 + $0x310] sm:$0xff]
  %v796 = vld [vmem:[#allocation2 + $0x318] sm:$0xff]
  %v797 = vld [vmem:[%s4] sm:$0xff]
  %v798 = vld [vmem:[%s4 + $0x8] sm:$0xff]
  %v799 = vld [vmem:[%s4 + $0x10] sm:$0xff]
  %v800 = vld [vmem:[%s4 + $0x18] sm:$0xff]
  %v801 = vld [vmem:[%s4 + $0x20] sm:$0xff]
  %v802 = vld [vmem:[%s4 + $0x28] sm:$0xff]
  %804 = vset.pattern.permute.xlu0 0
  %805 = vperm.xlu0 %804, %v797
  %v806 = vpop.permute.xlu0 %805
  %809 = vset.pattern.permute.xlu0 0
  %810 = vperm.xlu0 %809, %v798
  %v811 = vpop.permute.xlu0 %810
  %814 = vset.pattern.permute.xlu0 0
  %815 = vperm.xlu0 %814, %v799
  %v816 = vpop.permute.xlu0 %815
  %819 = vset.pattern.permute.xlu0 0
  %820 = vperm.xlu0 %819, %v800
  %v821 = vpop.permute.xlu0 %820
  %824 = vset.pattern.permute.xlu0 0
  %825 = vperm.xlu0 %824, %v801
  %v826 = vpop.permute.xlu0 %825
  %829 = vset.pattern.permute.xlu0 0
  %830 = vperm.xlu0 %829, %v802
  %v831 = vpop.permute.xlu0 %830
  %vm833 = vcmask 588800
  %v835 = vsel %vm833, %v686, 0
  %v838 = vsel %vm833, %v688, 0
  %v841 = vsel %vm833, %v690, 0
  %v844 = vsel %vm833, %v692, 0
  %v847 = vsel %vm833, %v694, 0
  %v850 = vsel %vm833, %v696, 0
  %852 = vmatprep.subr.mxu0 %v698
  %853 = vmatpush1.msra.mxu0 %v697
  %854 = vmatprep.subr.mxu0 %v702
  %855 = vmatpush1.msra.mxu0 %v701
  %856 = vmatprep.subr.mxu0 %v706
  %857 = vmatpush1.msra.mxu0 %v705
  %858 = vmatprep.subr.mxu0 %v710
  %859 = vmatpush1.msra.mxu0 %v709
  %860 = vmatprep.subr.mxu0 %v714
  %861 = vmatpush1.msra.mxu0 %v713
  %862 = vmatprep.subr.mxu0 %v718
  %863 = vmatpush1.msra.mxu0 %v717
  %864 = vmatprep.subr.mxu0 %v722
  %865 = vmatpush1.msra.mxu0 %v721
  %866 = vmatprep.subr.mxu0 %v726
  %867 = vmatpush1.msra.mxu0 %v725
  %868 = vmatprep.subr.mxu0 %v730
  %869 = vmatpush1.msra.mxu0 %v729
  %870 = vmatprep.subr.mxu0 %v734
  %871 = vmatpush1.msra.mxu0 %v733
  %872 = vmatprep.subr.mxu0 %v738
  %873 = vmatpush1.msra.mxu0 %v737
  %874 = vmatprep.subr.mxu0 %v742
  %875 = vmatpush1.msra.mxu0 %v741
  %876 = vmatprep.subr.mxu0 %v746
  %877 = vmatpush1.msra.mxu0 %v745
  %878 = vmatprep.subr.mxu0 %v750
  %879 = vmatpush1.msra.mxu0 %v749
  %880 = vmatprep.subr.mxu0 %v754
  %881 = vmatpush1.msra.mxu0 %v753
  %882 = vmatprep.subr.mxu0 %v758
  %883 = vmatpush1.msra.mxu0 %v757
  %884 = vmatprep.subr.mxu0 %v762
  %885 = vmatpush1.msra.mxu0 %v761
  %886 = vmatprep.subr.mxu0 %v766
  %887 = vmatpush1.msra.mxu0 %v765
  %888 = vmatprep.subr.mxu0 %v770
  %889 = vmatpush1.msra.mxu0 %v769
  %890 = vmatprep.subr.mxu0 %v774
  %891 = vmatpush1.msra.mxu0 %v773
  %892 = vmatprep.subr.mxu0 %v778
  %893 = vmatpush1.msra.mxu0 %v777
  %894 = vmatprep.subr.mxu0 %v782
  %895 = vmatpush1.msra.mxu0 %v781
  %896 = vmatprep.subr.mxu0 %v786
  %897 = vmatpush1.msra.mxu0 %v785
  %898 = vmatprep.subr.mxu0 %v790
  %899 = vmatpush1.msra.mxu0 %v789
  %900 = vmatprep.subr.mxu0 %v794
  %901 = vmatpush1.msra.mxu0 %v793
  %902 = vmatprep.subr.mxu0 0.0
  %903 = vmatpush1.msra.mxu0 0.0
  %904 = vmatprep.subr.mxu0 0.0
  %905 = vmatpush1.msra.mxu0 0.0
  %906 = vmatprep.subr.mxu0 0.0
  %907 = vmatpush1.msra.mxu0 0.0
  %908 = vmatprep.subr.mxu0 0.0
  %909 = vmatpush1.msra.mxu0 0.0
  %910 = vmatprep.subr.mxu0 0.0
  %911 = vmatpush1.msra.mxu0 0.0
  %912 = vmatprep.subr.mxu0 0.0
  %913 = vmatpush1.msra.mxu0 0.0
  %914 = vmatprep.subr.mxu0 0.0
  %915 = vmatpush1.msra.mxu0 0.0
  %916 = vmatprep.mubr.f32.mxu0 %v835
  %917 = vmatmul.mubr.f32.gmra.mrb[0].mxu0 %v685
  %v918 = vpop.f32.mrb[0].mxu0
  %v919 = vadd.f32 %v806, %v918
  %v920 = vpop.f32.mrb[0].mxu0
  %v921 = vadd.f32 %v806, %v920
  %922 = vmatprep.mubr.f32.mxu0 %v838
  %923 = vmatmul.mubr.f32.gmra.mrb[0].mxu0 %v687
  %v924 = vpop.f32.mrb[0].mxu0
  %v925 = vadd.f32 %v811, %v924
  %v926 = vpop.f32.mrb[0].mxu0
  %v927 = vadd.f32 %v811, %v926
  %928 = vmatprep.mubr.f32.mxu0 %v841
  %929 = vmatmul.mubr.f32.gmra.mrb[0].mxu0 %v689
  %v930 = vpop.f32.mrb[0].mxu0
  %v931 = vadd.f32 %v816, %v930
  %v932 = vpop.f32.mrb[0].mxu0
  %v933 = vadd.f32 %v816, %v932
  %934 = vmatprep.mubr.f32.mxu0 %v844
  %935 = vmatmul.mubr.f32.gmra.mrb[0].mxu0 %v691
  %v936 = vpop.f32.mrb[0].mxu0
  %v937 = vadd.f32 %v821, %v936
  %v938 = vpop.f32.mrb[0].mxu0
  %v939 = vadd.f32 %v821, %v938
  %940 = vmatprep.mubr.f32.mxu0 %v847
  %941 = vmatmul.mubr.f32.gmra.mrb[0].mxu0 %v693
  %v942 = vpop.f32.mrb[0].mxu0
  %v943 = vadd.f32 %v826, %v942
  %v944 = vpop.f32.mrb[0].mxu0
  %v945 = vadd.f32 %v826, %v944
  %946 = vmatprep.mubr.f32.mxu0 %v850
  %947 = vmatmul.mubr.f32.gmra.mrb[0].mxu0 %v695
  %v948 = vpop.f32.mrb[0].mxu0
  %v949 = vadd.f32 %v831, %v948
  %v950 = vpop.f32.mrb[0].mxu0
  %v951 = vadd.f32 %v831, %v950
  %952 = vdwg.mxu0
  %953 = vmatprep.subr.mxu0 %v700
  %954 = vmatpush1.msra.mxu0 %v699
  %955 = vmatprep.subr.mxu0 %v704
  %956 = vmatpush1.msra.mxu0 %v703
  %957 = vmatprep.subr.mxu0 %v708
  %958 = vmatpush1.msra.mxu0 %v707
  %959 = vmatprep.subr.mxu0 %v712
  %960 = vmatpush1.msra.mxu0 %v711
  %961 = vmatprep.subr.mxu0 %v716
  %962 = vmatpush1.msra.mxu0 %v715
  %963 = vmatprep.subr.mxu0 %v720
  %964 = vmatpush1.msra.mxu0 %v719
  %965 = vmatprep.subr.mxu0 %v724
  %966 = vmatpush1.msra.mxu0 %v723
  %967 = vmatprep.subr.mxu0 %v728
  %968 = vmatpush1.msra.mxu0 %v727
  %969 = vmatprep.subr.mxu0 %v732
  %970 = vmatpush1.msra.mxu0 %v731
  %971 = vmatprep.subr.mxu0 %v736
  %972 = vmatpush1.msra.mxu0 %v735
  %973 = vmatprep.subr.mxu0 %v740
  %974 = vmatpush1.msra.mxu0 %v739
  %975 = vmatprep.subr.mxu0 %v744
  %976 = vmatpush1.msra.mxu0 %v743
  %977 = vmatprep.subr.mxu0 %v748
  %978 = vmatpush1.msra.mxu0 %v747
  %979 = vmatprep.subr.mxu0 %v752
  %980 = vmatpush1.msra.mxu0 %v751
  %981 = vmatprep.subr.mxu0 %v756
  %982 = vmatpush1.msra.mxu0 %v755
  %983 = vmatprep.subr.mxu0 %v760
  %984 = vmatpush1.msra.mxu0 %v759
  %985 = vmatprep.subr.mxu0 %v764
  %986 = vmatpush1.msra.mxu0 %v763
  %987 = vmatprep.subr.mxu0 %v768
  %988 = vmatpush1.msra.mxu0 %v767
  %989 = vmatprep.subr.mxu0 %v772
  %990 = vmatpush1.msra.mxu0 %v771
  %991 = vmatprep.subr.mxu0 %v776
  %992 = vmatpush1.msra.mxu0 %v775
  %993 = vmatprep.subr.mxu0 %v780
  %994 = vmatpush1.msra.mxu0 %v779
  %995 = vmatprep.subr.mxu0 %v784
  %996 = vmatpush1.msra.mxu0 %v783
  %997 = vmatprep.subr.mxu0 %v788
  %998 = vmatpush1.msra.mxu0 %v787
  %999 = vmatprep.subr.mxu0 %v792
  %1000 = vmatpush1.msra.mxu0 %v791
  %1001 = vmatprep.subr.mxu0 %v796
  %1002 = vmatpush1.msra.mxu0 %v795
  %1003 = vmatprep.subr.mxu0 0.0
  %1004 = vmatpush1.msra.mxu0 0.0
  %1005 = vmatprep.subr.mxu0 0.0
  %1006 = vmatpush1.msra.mxu0 0.0
  %1007 = vmatprep.subr.mxu0 0.0
  %1008 = vmatpush1.msra.mxu0 0.0
  %1009 = vmatprep.subr.mxu0 0.0
  %1010 = vmatpush1.msra.mxu0 0.0
  %1011 = vmatprep.subr.mxu0 0.0
  %1012 = vmatpush1.msra.mxu0 0.0
  %1013 = vmatprep.subr.mxu0 0.0
  %1014 = vmatpush1.msra.mxu0 0.0
  %1015 = vmatprep.subr.mxu0 0.0
  %1016 = vmatpush1.msra.mxu0 0.0
  %1017 = vmatprep.mubr.f32.mxu0 %v835
  %1018 = vmatmul.mubr.f32.gmra.mrb[0].mxu0 %v685
  %v1019 = vpop.f32.mrb[0].mxu0
  %v1020 = vadd.f32 %v806, %v1019
  %v1021 = vpop.f32.mrb[0].mxu0
  %v1022 = vadd.f32 %v806, %v1021
  %1023 = vmatprep.mubr.f32.mxu0 %v838
  %1024 = vmatmul.mubr.f32.gmra.mrb[0].mxu0 %v687
  %v1025 = vpop.f32.mrb[0].mxu0
  %v1026 = vadd.f32 %v811, %v1025
  %v1027 = vpop.f32.mrb[0].mxu0
  %v1028 = vadd.f32 %v811, %v1027
  %1029 = vmatprep.mubr.f32.mxu0 %v841
  %1030 = vmatmul.mubr.f32.gmra.mrb[0].mxu0 %v689
  %v1031 = vpop.f32.mrb[0].mxu0
  %v1032 = vadd.f32 %v816, %v1031
  %v1033 = vpop.f32.mrb[0].mxu0
  %v1034 = vadd.f32 %v816, %v1033
  %1035 = vmatprep.mubr.f32.mxu0 %v844
  %1036 = vmatmul.mubr.f32.gmra.mrb[0].mxu0 %v691
  %v1037 = vpop.f32.mrb[0].mxu0
  %v1038 = vadd.f32 %v821, %v1037
  %v1039 = vpop.f32.mrb[0].mxu0
  %v1040 = vadd.f32 %v821, %v1039
  %1041 = vmatprep.mubr.f32.mxu0 %v847
  %1042 = vmatmul.mubr.f32.gmra.mrb[0].mxu0 %v693
  %v1043 = vpop.f32.mrb[0].mxu0
  %v1044 = vadd.f32 %v826, %v1043
  %v1045 = vpop.f32.mrb[0].mxu0
  %v1046 = vadd.f32 %v826, %v1045
  %1047 = vmatprep.mubr.f32.mxu0 %v850
  %1048 = vmatmul.mubr.f32.gmra.mrb[0].mxu0 %v695
  %v1049 = vpop.f32.mrb[0].mxu0
  %v1050 = vadd.f32 %v831, %v1049
  %v1051 = vpop.f32.mrb[0].mxu0
  %v1052 = vadd.f32 %v831, %v1051
  %1053 = vdwg.mxu0
  %v1054 = vxor.u32 %v919, 2147483648
  %v1055 = vxor.u32 %v921, 2147483648
  %v1056 = vxor.u32 %v1020, 2147483648
  %v1057 = vxor.u32 %v1022, 2147483648
  %v1058 = vxor.u32 %v925, 2147483648
  %v1059 = vxor.u32 %v927, 2147483648
  %v1060 = vxor.u32 %v1026, 2147483648
  %v1061 = vxor.u32 %v1028, 2147483648
  %v1062 = vmul.f32 %v1054, 1.442695
  %v1063 = vpow.pop %v1062
  %v1064 = vmul.f32 %v1055, 1.442695
  %v1065 = vpow.pop %v1064
  %v1066 = vmul.f32 %v1056, 1.442695
  %v1067 = vpow.pop %v1066
  %v1068 = vmul.f32 %v1057, 1.442695
  %v1069 = vpow.pop %v1068
  %v1070 = vmul.f32 %v1058, 1.442695
  %v1071 = vpow.pop %v1070
  %v1072 = vmul.f32 %v1059, 1.442695
  %v1073 = vpow.pop %v1072
  %v1074 = vmul.f32 %v1060, 1.442695
  %v1075 = vpow.pop %v1074
  %v1076 = vmul.f32 %v1061, 1.442695
  %v1077 = vpow.pop %v1076
  %v1078 = vadd.f32 %v1063, 1.0
  %v1079 = vadd.f32 %v1065, 1.0
  %v1080 = vadd.f32 %v1067, 1.0
  %v1081 = vadd.f32 %v1069, 1.0
  %v1082 = vadd.f32 %v1071, 1.0
  %v1083 = vadd.f32 %v1073, 1.0
  %v1084 = vadd.f32 %v1075, 1.0
  %v1085 = vadd.f32 %v1077, 1.0
  %v1086 = vrcp.pop %v1078
  %v1087 = vmul.f32 1.0, %v1086
  %v1088 = vrcp.pop %v1079
  %v1089 = vmul.f32 1.0, %v1088
  %v1090 = vrcp.pop %v1080
  %v1091 = vmul.f32 1.0, %v1090
  %v1092 = vrcp.pop %v1081
  %v1093 = vmul.f32 1.0, %v1092
  %v1094 = vrcp.pop %v1082
  %v1095 = vmul.f32 1.0, %v1094
  %v1096 = vrcp.pop %v1083
  %v1097 = vmul.f32 1.0, %v1096
  %v1098 = vrcp.pop %v1084
  %v1099 = vmul.f32 1.0, %v1098
  %v1100 = vrcp.pop %v1085
  %v1101 = vmul.f32 1.0, %v1100
  %v1102 = vxor.u32 %v931, 2147483648
  %v1103 = vxor.u32 %v933, 2147483648
  %v1104 = vxor.u32 %v1032, 2147483648
  %v1105 = vxor.u32 %v1034, 2147483648
  %v1106 = vxor.u32 %v937, 2147483648
  %v1107 = vxor.u32 %v939, 2147483648
  %v1108 = vxor.u32 %v1038, 2147483648
  %v1109 = vxor.u32 %v1040, 2147483648
  %v1110 = vmul.f32 %v1102, 1.442695
  %v1111 = vpow.pop %v1110
  %v1112 = vmul.f32 %v1103, 1.442695
  %v1113 = vpow.pop %v1112
  %v1114 = vmul.f32 %v1104, 1.442695
  %v1115 = vpow.pop %v1114
  %v1116 = vmul.f32 %v1105, 1.442695
  %v1117 = vpow.pop %v1116
  %v1118 = vmul.f32 %v1106, 1.442695
  %v1119 = vpow.pop %v1118
  %v1120 = vmul.f32 %v1107, 1.442695
  %v1121 = vpow.pop %v1120
  %v1122 = vmul.f32 %v1108, 1.442695
  %v1123 = vpow.pop %v1122
  %v1124 = vmul.f32 %v1109, 1.442695
  %v1125 = vpow.pop %v1124
  %v1126 = vadd.f32 %v1111, 1.0
  %v1127 = vadd.f32 %v1113, 1.0
  %v1128 = vadd.f32 %v1115, 1.0
  %v1129 = vadd.f32 %v1117, 1.0
  %v1130 = vadd.f32 %v1119, 1.0
  %v1131 = vadd.f32 %v1121, 1.0
  %v1132 = vadd.f32 %v1123, 1.0
  %v1133 = vadd.f32 %v1125, 1.0
  %v1134 = vrcp.pop %v1126
  %v1135 = vmul.f32 1.0, %v1134
  %v1136 = vrcp.pop %v1127
  %v1137 = vmul.f32 1.0, %v1136
  %v1138 = vrcp.pop %v1128
  %v1139 = vmul.f32 1.0, %v1138
  %v1140 = vrcp.pop %v1129
  %v1141 = vmul.f32 1.0, %v1140
  %v1142 = vrcp.pop %v1130
  %v1143 = vmul.f32 1.0, %v1142
  %v1144 = vrcp.pop %v1131
  %v1145 = vmul.f32 1.0, %v1144
  %v1146 = vrcp.pop %v1132
  %v1147 = vmul.f32 1.0, %v1146
  %v1148 = vrcp.pop %v1133
  %v1149 = vmul.f32 1.0, %v1148
  %v1150 = vmul.f32 %v1135, %v20
  %v1151 = vmul.f32 %v1137, %v21
  %v1152 = vmul.f32 %v1139, %v22
  %v1153 = vmul.f32 %v1141, %v23
  %v1154 = vmul.f32 %v1143, %v24
  %v1155 = vmul.f32 %v1145, %v25
  %v1156 = vmul.f32 %v1147, %v26
  %v1157 = vmul.f32 %v1149, %v27
  %1160 = vrot.lane.b32.xlu0 %v1153, 2
  %v1161 = vpop.permute.xlu0 %1160
  %1162 = vrot.lane.b32.xlu0 %v1157, 2
  %v1163 = vpop.permute.xlu0 %1162
  %1172 = vrot.lane.b32.xlu0 %v1150, 2
  %v1173 = vpop.permute.xlu0 %1172
  %1174 = vrot.lane.b32.xlu0 %v1151, 2
  %v1175 = vpop.permute.xlu0 %1174
  %1176 = vrot.lane.b32.xlu0 %v1152, 2
  %v1177 = vpop.permute.xlu0 %1176
  %1178 = vrot.lane.b32.xlu0 %v1154, 2
  %v1179 = vpop.permute.xlu0 %1178
  %1180 = vrot.lane.b32.xlu0 %v1155, 2
  %v1181 = vpop.permute.xlu0 %1180
  %1182 = vrot.lane.b32.xlu0 %v1156, 2
  %v1183 = vpop.permute.xlu0 %1182
  %v1184 = vsel %vm123, %v1173, %v1175
  %v1185 = vsel %vm123, %v1175, %v1177
  %v1186 = vsel %vm123, %v1177, %v1161
  %v1187 = vsel %vm123, %v1179, %v1181
  %v1188 = vsel %vm123, %v1181, %v1183
  %v1189 = vsel %vm123, %v1183, %v1163
  %v1198 = vsel %vm123, %v1161, %v1173
  %v1199 = vsel %vm123, %v1163, %v1179
  %v1200 = vsel %vm144, %v1198, 0.0
  %v1201 = vsel %vm145, %v1184, 0.0
  %v1202 = vsel %vm146, %v1185, 0.0
  %v1203 = vsel %vm147, %v1186, 0.0
  %v1204 = vsel %vm144, %v1199, 0.0
  %v1205 = vsel %vm145, %v1187, 0.0
  %v1206 = vsel %vm146, %v1188, 0.0
  %v1207 = vsel %vm147, %v1189, 0.0
  %1208 = vst [vmem:[#allocation2] sm:$0xff] %v1200
  %1209 = vst [vmem:[#allocation2 + $0x8] sm:$0xff] %v1201
  %1210 = vst [vmem:[#allocation2 + $0x10] sm:$0xff] %v1202
  %1211 = vst [vmem:[#allocation2 + $0x18] sm:$0xff] %v1203
  %1212 = vst [vmem:[#allocation2 + $0x20] sm:$0xff] %v1204
  %1213 = vst [vmem:[#allocation2 + $0x28] sm:$0xff] %v1205
  %1214 = vst [vmem:[#allocation2 + $0x30] sm:$0xff] %v1206
  %1215 = vst [vmem:[#allocation2 + $0x38] sm:$0xff] %v1207
  %1216 = vrot.lane.b32.xlu0 %v1153, 1
  %v1217 = vpop.permute.xlu0 %1216
  %1218 = vrot.lane.b32.xlu0 %v1157, 1
  %v1219 = vpop.permute.xlu0 %1218
  %1222 = vrot.lane.b32.xlu0 %v1150, 1
  %v1223 = vpop.permute.xlu0 %1222
  %1224 = vrot.lane.b32.xlu0 %v1151, 1
  %v1225 = vpop.permute.xlu0 %1224
  %1226 = vrot.lane.b32.xlu0 %v1152, 1
  %v1227 = vpop.permute.xlu0 %1226
  %1228 = vrot.lane.b32.xlu0 %v1154, 1
  %v1229 = vpop.permute.xlu0 %1228
  %1230 = vrot.lane.b32.xlu0 %v1155, 1
  %v1231 = vpop.permute.xlu0 %1230
  %1232 = vrot.lane.b32.xlu0 %v1156, 1
  %v1233 = vpop.permute.xlu0 %1232
  %v1234 = vsel %vm182, %v1223, %v1225
  %v1235 = vsel %vm182, %v1225, %v1227
  %v1236 = vsel %vm182, %v1227, %v1217
  %v1237 = vsel %vm182, %v1229, %v1231
  %v1238 = vsel %vm182, %v1231, %v1233
  %v1239 = vsel %vm182, %v1233, %v1219
  %v1248 = vsel %vm182, %v1217, %v1223
  %v1249 = vsel %vm182, %v1219, %v1229
  %v1250 = vsel %vm203, %v1248, 0.0
  %v1251 = vsel %vm204, %v1234, 0.0
  %v1252 = vsel %vm205, %v1235, 0.0
  %v1253 = vsel %vm206, %v1236, 0.0
  %v1254 = vsel %vm203, %v1249, 0.0
  %v1255 = vsel %vm204, %v1237, 0.0
  %v1256 = vsel %vm205, %v1238, 0.0
  %v1257 = vsel %vm206, %v1239, 0.0
  %1258 = vst [vmem:[#allocation2 + $0x40] sm:$0xff] %v1250
  %1259 = vst [vmem:[#allocation2 + $0x48] sm:$0xff] %v1251
  %1260 = vst [vmem:[#allocation2 + $0x50] sm:$0xff] %v1252
  %1261 = vst [vmem:[#allocation2 + $0x58] sm:$0xff] %v1253
  %1262 = vst [vmem:[#allocation2 + $0x60] sm:$0xff] %v1254
  %1263 = vst [vmem:[#allocation2 + $0x68] sm:$0xff] %v1255
  %1264 = vst [vmem:[#allocation2 + $0x70] sm:$0xff] %v1256
  %1265 = vst [vmem:[#allocation2 + $0x78] sm:$0xff] %v1257
  %1266 = vst [vmem:[#allocation2 + $0x80] sm:$0xff] %v1150
  %1267 = vst [vmem:[#allocation2 + $0x88] sm:$0xff] %v1151
  %1268 = vst [vmem:[#allocation2 + $0x90] sm:$0xff] %v1152
  %1269 = vst [vmem:[#allocation2 + $0x98] sm:$0xff] %v1153
  %1270 = vst [vmem:[#allocation2 + $0xa0] sm:$0xff] %v1154
  %1271 = vst [vmem:[#allocation2 + $0xa8] sm:$0xff] %v1155
  %1272 = vst [vmem:[#allocation2 + $0xb0] sm:$0xff] %v1156
  %1273 = vst [vmem:[#allocation2 + $0xb8] sm:$0xff] %v1157
  %1274 = vrot.lane.b32.xlu0 %v1150, 127
  %v1275 = vpop.permute.xlu0 %1274
  %1276 = vrot.lane.b32.xlu0 %v1151, 127
  %v1277 = vpop.permute.xlu0 %1276
  %1278 = vrot.lane.b32.xlu0 %v1152, 127
  %v1279 = vpop.permute.xlu0 %1278
  %1280 = vrot.lane.b32.xlu0 %v1153, 127
  %v1281 = vpop.permute.xlu0 %1280
  %1282 = vrot.lane.b32.xlu0 %v1154, 127
  %v1283 = vpop.permute.xlu0 %1282
  %1284 = vrot.lane.b32.xlu0 %v1155, 127
  %v1285 = vpop.permute.xlu0 %1284
  %1286 = vrot.lane.b32.xlu0 %v1156, 127
  %v1287 = vpop.permute.xlu0 %1286
  %1288 = vrot.lane.b32.xlu0 %v1157, 127
  %v1289 = vpop.permute.xlu0 %1288
  %v1290 = vsel %vm247, %v1275, %v1277
  %v1291 = vsel %vm247, %v1277, %v1279
  %v1292 = vsel %vm247, %v1279, %v1281
  %v1293 = vsel %vm247, %v1283, %v1285
  %v1294 = vsel %vm247, %v1285, %v1287
  %v1295 = vsel %vm247, %v1287, %v1289
  %v1306 = vsel %vm247, %v1281, %v1275
  %v1307 = vsel %vm247, %v1289, %v1283
  %v1308 = vsel %vm270, %v1290, 0.0
  %v1309 = vsel %vm271, %v1291, 0.0
  %v1310 = vsel %vm272, %v1292, 0.0
  %v1311 = vsel %vm273, %v1306, 0.0
  %v1312 = vsel %vm270, %v1293, 0.0
  %v1313 = vsel %vm271, %v1294, 0.0
  %v1314 = vsel %vm272, %v1295, 0.0
  %v1315 = vsel %vm273, %v1307, 0.0
  %1316 = vst [vmem:[#allocation2 + $0xc0] sm:$0xff] %v1308
  %1317 = vst [vmem:[#allocation2 + $0xc8] sm:$0xff] %v1309
  %1318 = vst [vmem:[#allocation2 + $0xd0] sm:$0xff] %v1310
  %1319 = vst [vmem:[#allocation2 + $0xd8] sm:$0xff] %v1311
  %1320 = vst [vmem:[#allocation2 + $0xe0] sm:$0xff] %v1312
  %1321 = vst [vmem:[#allocation2 + $0xe8] sm:$0xff] %v1313
  %1322 = vst [vmem:[#allocation2 + $0xf0] sm:$0xff] %v1314
  %1323 = vst [vmem:[#allocation2 + $0xf8] sm:$0xff] %v1315
  %1324 = vrot.lane.b32.xlu0 %v1150, 126
  %v1325 = vpop.permute.xlu0 %1324
  %1326 = vrot.lane.b32.xlu0 %v1151, 126
  %v1327 = vpop.permute.xlu0 %1326
  %1328 = vrot.lane.b32.xlu0 %v1152, 126
  %v1329 = vpop.permute.xlu0 %1328
  %1330 = vrot.lane.b32.xlu0 %v1153, 126
  %v1331 = vpop.permute.xlu0 %1330
  %1332 = vrot.lane.b32.xlu0 %v1154, 126
  %v1333 = vpop.permute.xlu0 %1332
  %1334 = vrot.lane.b32.xlu0 %v1155, 126
  %v1335 = vpop.permute.xlu0 %1334
  %1336 = vrot.lane.b32.xlu0 %v1156, 126
  %v1337 = vpop.permute.xlu0 %1336
  %1338 = vrot.lane.b32.xlu0 %v1157, 126
  %v1339 = vpop.permute.xlu0 %1338
  %v1340 = vsel %vm306, %v1325, %v1327
  %v1341 = vsel %vm306, %v1327, %v1329
  %v1342 = vsel %vm306, %v1329, %v1331
  %v1343 = vsel %vm306, %v1333, %v1335
  %v1344 = vsel %vm306, %v1335, %v1337
  %v1345 = vsel %vm306, %v1337, %v1339
  %v1356 = vsel %vm306, %v1331, %v1325
  %v1357 = vsel %vm306, %v1339, %v1333
  %v1358 = vsel %vm329, %v1340, 0.0
  %v1359 = vsel %vm330, %v1341, 0.0
  %v1360 = vsel %vm331, %v1342, 0.0
  %v1361 = vsel %vm332, %v1356, 0.0
  %v1362 = vsel %vm329, %v1343, 0.0
  %v1363 = vsel %vm330, %v1344, 0.0
  %v1364 = vsel %vm331, %v1345, 0.0
  %v1365 = vsel %vm332, %v1357, 0.0
  %1366 = vst [vmem:[#allocation2 + $0x100] sm:$0xff] %v1358
  %1367 = vst [vmem:[#allocation2 + $0x108] sm:$0xff] %v1359
  %1368 = vst [vmem:[#allocation2 + $0x110] sm:$0xff] %v1360
  %1369 = vst [vmem:[#allocation2 + $0x118] sm:$0xff] %v1361
  %1370 = vst [vmem:[#allocation2 + $0x120] sm:$0xff] %v1362
  %1371 = vst [vmem:[#allocation2 + $0x128] sm:$0xff] %v1363
  %1372 = vst [vmem:[#allocation2 + $0x130] sm:$0xff] %v1364
  %1373 = vst [vmem:[#allocation2 + $0x138] sm:$0xff] %v1365
  %v1374 = vld [vmem:[%s3] sm:$0xff]
  %v1375 = vld [vmem:[%s3 + $0x8] sm:$0xff]
  %v1376 = vld [vmem:[#allocation2] sm:$0xff]
  %v1377 = vld [vmem:[#allocation2 + $0x8] sm:$0xff]
  %v1378 = vld [vmem:[#allocation2 + $0x10] sm:$0xff]
  %v1379 = vld [vmem:[#allocation2 + $0x18] sm:$0xff]
  %v1380 = vld [vmem:[#allocation2 + $0x20] sm:$0xff]
  %v1381 = vld [vmem:[#allocation2 + $0x28] sm:$0xff]
  %v1382 = vld [vmem:[#allocation2 + $0x30] sm:$0xff]
  %v1383 = vld [vmem:[#allocation2 + $0x38] sm:$0xff]
  %v1384 = vld [vmem:[#allocation2 + $0x40] sm:$0xff]
  %v1385 = vld [vmem:[#allocation2 + $0x48] sm:$0xff]
  %v1386 = vld [vmem:[#allocation2 + $0x50] sm:$0xff]
  %v1387 = vld [vmem:[#allocation2 + $0x58] sm:$0xff]
  %v1388 = vld [vmem:[#allocation2 + $0x60] sm:$0xff]
  %v1389 = vld [vmem:[#allocation2 + $0x68] sm:$0xff]
  %v1390 = vld [vmem:[#allocation2 + $0x70] sm:$0xff]
  %v1391 = vld [vmem:[#allocation2 + $0x78] sm:$0xff]
  %v1392 = vld [vmem:[#allocation2 + $0x80] sm:$0xff]
  %v1393 = vld [vmem:[#allocation2 + $0x88] sm:$0xff]
  %v1394 = vld [vmem:[#allocation2 + $0x90] sm:$0xff]
  %v1395 = vld [vmem:[#allocation2 + $0x98] sm:$0xff]
  %v1396 = vld [vmem:[#allocation2 + $0xa0] sm:$0xff]
  %v1397 = vld [vmem:[#allocation2 + $0xa8] sm:$0xff]
  %v1398 = vld [vmem:[#allocation2 + $0xb0] sm:$0xff]
  %v1399 = vld [vmem:[#allocation2 + $0xb8] sm:$0xff]
  %v1400 = vld [vmem:[#allocation2 + $0xc0] sm:$0xff]
  %v1401 = vld [vmem:[#allocation2 + $0xc8] sm:$0xff]
  %v1402 = vld [vmem:[#allocation2 + $0xd0] sm:$0xff]
  %v1403 = vld [vmem:[#allocation2 + $0xd8] sm:$0xff]
  %v1404 = vld [vmem:[#allocation2 + $0xe0] sm:$0xff]
  %v1405 = vld [vmem:[#allocation2 + $0xe8] sm:$0xff]
  %v1406 = vld [vmem:[#allocation2 + $0xf0] sm:$0xff]
  %v1407 = vld [vmem:[#allocation2 + $0xf8] sm:$0xff]
  %v1408 = vld [vmem:[#allocation2 + $0x100] sm:$0xff]
  %v1409 = vld [vmem:[#allocation2 + $0x108] sm:$0xff]
  %v1410 = vld [vmem:[#allocation2 + $0x110] sm:$0xff]
  %v1411 = vld [vmem:[#allocation2 + $0x118] sm:$0xff]
  %v1412 = vld [vmem:[#allocation2 + $0x120] sm:$0xff]
  %v1413 = vld [vmem:[#allocation2 + $0x128] sm:$0xff]
  %v1414 = vld [vmem:[#allocation2 + $0x130] sm:$0xff]
  %v1415 = vld [vmem:[#allocation2 + $0x138] sm:$0xff]
  %vm1416 = vcmask 654336
  %v1418 = vsel %vm1416, %v1374, 0
  %v1421 = vsel %vm1416, %v1375, 0
  %1423 = vmatprep.subr.mxu0 %v1377
  %1424 = vmatpush1.msra.mxu0 %v1376
  %1425 = vmatprep.subr.mxu0 %v1381
  %1426 = vmatpush1.msra.mxu0 %v1380
  %1427 = vmatprep.subr.mxu0 %v1385
  %1428 = vmatpush1.msra.mxu0 %v1384
  %1429 = vmatprep.subr.mxu0 %v1389
  %1430 = vmatpush1.msra.mxu0 %v1388
  %1431 = vmatprep.subr.mxu0 %v1393
  %1432 = vmatpush1.msra.mxu0 %v1392
  %1433 = vmatprep.subr.mxu0 %v1397
  %1434 = vmatpush1.msra.mxu0 %v1396
  %1435 = vmatprep.subr.mxu0 %v1401
  %1436 = vmatpush1.msra.mxu0 %v1400
  %1437 = vmatprep.subr.mxu0 %v1405
  %1438 = vmatpush1.msra.mxu0 %v1404
  %1439 = vmatprep.subr.mxu0 %v1409
  %1440 = vmatpush1.msra.mxu0 %v1408
  %1441 = vmatprep.subr.mxu0 %v1413
  %1442 = vmatpush1.msra.mxu0 %v1412
  %1443 = vmatprep.subr.mxu0 0.0
  %1444 = vmatpush1.msra.mxu0 0.0
  %1445 = vmatprep.subr.mxu0 0.0
  %1446 = vmatpush1.msra.mxu0 0.0
  %1447 = vmatprep.subr.mxu0 0.0
  %1448 = vmatpush1.msra.mxu0 0.0
  %1449 = vmatprep.subr.mxu0 0.0
  %1450 = vmatpush1.msra.mxu0 0.0
  %1451 = vmatprep.subr.mxu0 0.0
  %1452 = vmatpush1.msra.mxu0 0.0
  %1453 = vmatprep.subr.mxu0 0.0
  %1454 = vmatpush1.msra.mxu0 0.0
  %1455 = vmatprep.subr.mxu0 0.0
  %1456 = vmatpush1.msra.mxu0 0.0
  %1457 = vmatprep.subr.mxu0 0.0
  %1458 = vmatpush1.msra.mxu0 0.0
  %1459 = vmatprep.subr.mxu0 0.0
  %1460 = vmatpush1.msra.mxu0 0.0
  %1461 = vmatprep.subr.mxu0 0.0
  %1462 = vmatpush1.msra.mxu0 0.0
  %1463 = vmatprep.subr.mxu0 0.0
  %1464 = vmatpush1.msra.mxu0 0.0
  %1465 = vmatprep.subr.mxu0 0.0
  %1466 = vmatpush1.msra.mxu0 0.0
  %1467 = vmatprep.subr.mxu0 0.0
  %1468 = vmatpush1.msra.mxu0 0.0
  %1469 = vmatprep.subr.mxu0 0.0
  %1470 = vmatpush1.msra.mxu0 0.0
  %1471 = vmatprep.subr.mxu0 0.0
  %1472 = vmatpush1.msra.mxu0 0.0
  %1473 = vmatprep.subr.mxu0 0.0
  %1474 = vmatpush1.msra.mxu0 0.0
  %1475 = vmatprep.subr.mxu0 0.0
  %1476 = vmatpush1.msra.mxu0 0.0
  %1477 = vmatprep.subr.mxu0 0.0
  %1478 = vmatpush1.msra.mxu0 0.0
  %1479 = vmatprep.subr.mxu0 0.0
  %1480 = vmatpush1.msra.mxu0 0.0
  %1481 = vmatprep.subr.mxu0 0.0
  %1482 = vmatpush1.msra.mxu0 0.0
  %1483 = vmatprep.subr.mxu0 0.0
  %1484 = vmatpush1.msra.mxu0 0.0
  %1485 = vmatprep.subr.mxu0 0.0
  %1486 = vmatpush1.msra.mxu0 0.0
  %1487 = vmatprep.mubr.f32.mxu0 0.0
  %1488 = vmatmul.mubr.f32.gmra.mrb[0].mxu0 %v1418
  %v1489 = vpop.f32.mrb[0].mxu0
  %v1490 = vadd.f32 %v943, %v1489
  %v1491 = vpop.f32.mrb[0].mxu0
  %v1492 = vadd.f32 %v945, %v1491
  %1493 = vmatprep.mubr.f32.mxu0 0.0
  %1494 = vmatmul.mubr.f32.gmra.mrb[0].mxu0 %v1421
  %v1495 = vpop.f32.mrb[0].mxu0
  %v1496 = vadd.f32 %v949, %v1495
  %v1497 = vpop.f32.mrb[0].mxu0
  %v1498 = vadd.f32 %v951, %v1497
  %1499 = vdwg.mxu0
  %1500 = vmatprep.subr.mxu0 %v1379
  %1501 = vmatpush1.msra.mxu0 %v1378
  %1502 = vmatprep.subr.mxu0 %v1383
  %1503 = vmatpush1.msra.mxu0 %v1382
  %1504 = vmatprep.subr.mxu0 %v1387
  %1505 = vmatpush1.msra.mxu0 %v1386
  %1506 = vmatprep.subr.mxu0 %v1391
  %1507 = vmatpush1.msra.mxu0 %v1390
  %1508 = vmatprep.subr.mxu0 %v1395
  %1509 = vmatpush1.msra.mxu0 %v1394
  %1510 = vmatprep.subr.mxu0 %v1399
  %1511 = vmatpush1.msra.mxu0 %v1398
  %1512 = vmatprep.subr.mxu0 %v1403
  %1513 = vmatpush1.msra.mxu0 %v1402
  %1514 = vmatprep.subr.mxu0 %v1407
  %1515 = vmatpush1.msra.mxu0 %v1406
  %1516 = vmatprep.subr.mxu0 %v1411
  %1517 = vmatpush1.msra.mxu0 %v1410
  %1518 = vmatprep.subr.mxu0 %v1415
  %1519 = vmatpush1.msra.mxu0 %v1414
  %1520 = vmatprep.subr.mxu0 0.0
  %1521 = vmatpush1.msra.mxu0 0.0
  %1522 = vmatprep.subr.mxu0 0.0
  %1523 = vmatpush1.msra.mxu0 0.0
  %1524 = vmatprep.subr.mxu0 0.0
  %1525 = vmatpush1.msra.mxu0 0.0
  %1526 = vmatprep.subr.mxu0 0.0
  %1527 = vmatpush1.msra.mxu0 0.0
  %1528 = vmatprep.subr.mxu0 0.0
  %1529 = vmatpush1.msra.mxu0 0.0
  %1530 = vmatprep.subr.mxu0 0.0
  %1531 = vmatpush1.msra.mxu0 0.0
  %1532 = vmatprep.subr.mxu0 0.0
  %1533 = vmatpush1.msra.mxu0 0.0
  %1534 = vmatprep.subr.mxu0 0.0
  %1535 = vmatpush1.msra.mxu0 0.0
  %1536 = vmatprep.subr.mxu0 0.0
  %1537 = vmatpush1.msra.mxu0 0.0
  %1538 = vmatprep.subr.mxu0 0.0
  %1539 = vmatpush1.msra.mxu0 0.0
  %1540 = vmatprep.subr.mxu0 0.0
  %1541 = vmatpush1.msra.mxu0 0.0
  %1542 = vmatprep.subr.mxu0 0.0
  %1543 = vmatpush1.msra.mxu0 0.0
  %1544 = vmatprep.subr.mxu0 0.0
  %1545 = vmatpush1.msra.mxu0 0.0
  %1546 = vmatprep.subr.mxu0 0.0
  %1547 = vmatpush1.msra.mxu0 0.0
  %1548 = vmatprep.subr.mxu0 0.0
  %1549 = vmatpush1.msra.mxu0 0.0
  %1550 = vmatprep.subr.mxu0 0.0
  %1551 = vmatpush1.msra.mxu0 0.0
  %1552 = vmatprep.subr.mxu0 0.0
  %1553 = vmatpush1.msra.mxu0 0.0
  %1554 = vmatprep.subr.mxu0 0.0
  %1555 = vmatpush1.msra.mxu0 0.0
  %1556 = vmatprep.subr.mxu0 0.0
  %1557 = vmatpush1.msra.mxu0 0.0
  %1558 = vmatprep.subr.mxu0 0.0
  %1559 = vmatpush1.msra.mxu0 0.0
  %1560 = vmatprep.subr.mxu0 0.0
  %1561 = vmatpush1.msra.mxu0 0.0
  %1562 = vmatprep.subr.mxu0 0.0
  %1563 = vmatpush1.msra.mxu0 0.0
  %1564 = vmatprep.mubr.f32.mxu0 0.0
  %1565 = vmatmul.mubr.f32.gmra.mrb[0].mxu0 %v1418
  %v1566 = vpop.f32.mrb[0].mxu0
  %v1567 = vadd.f32 %v1044, %v1566
  %v1568 = vpop.f32.mrb[0].mxu0
  %v1569 = vadd.f32 %v1046, %v1568
  %1570 = vmatprep.mubr.f32.mxu0 0.0
  %1571 = vmatmul.mubr.f32.gmra.mrb[0].mxu0 %v1421
  %v1572 = vpop.f32.mrb[0].mxu0
  %v1573 = vadd.f32 %v1050, %v1572
  %v1574 = vpop.f32.mrb[0].mxu0
  %v1575 = vadd.f32 %v1052, %v1574
  %1576 = vdwg.mxu0
  %v1577 = vtanh.pop %v1490
  %v1578 = vtanh.pop %v1492
  %v1579 = vtanh.pop %v1567
  %v1580 = vtanh.pop %v1569
  %v1581 = vtanh.pop %v1496
  %v1582 = vtanh.pop %v1498
  %v1583 = vtanh.pop %v1573
  %v1584 = vtanh.pop %v1575
  %v1585 = vsub.f32 1.0, %v1087
  %v1586 = vsub.f32 1.0, %v1089
  %v1587 = vsub.f32 1.0, %v1091
  %v1588 = vsub.f32 1.0, %v1093
  %v1589 = vsub.f32 1.0, %v1095
  %v1590 = vsub.f32 1.0, %v1097
  %v1591 = vsub.f32 1.0, %v1099
  %v1592 = vsub.f32 1.0, %v1101
  %v1593 = vmul.f32 %v1585, %v20
  %v1594 = vmul.f32 %v1586, %v21
  %v1595 = vmul.f32 %v1587, %v22
  %v1596 = vmul.f32 %v1588, %v23
  %v1597 = vmul.f32 %v1589, %v24
  %v1598 = vmul.f32 %v1590, %v25
  %v1599 = vmul.f32 %v1591, %v26
  %v1600 = vmul.f32 %v1592, %v27
  %v1601 = vmul.f32 %v1087, %v1577
  %v1602 = vmul.f32 %v1089, %v1578
  %v1603 = vmul.f32 %v1091, %v1579
  %v1604 = vmul.f32 %v1093, %v1580
  %v1605 = vmul.f32 %v1095, %v1581
  %v1606 = vmul.f32 %v1097, %v1582
  %v1607 = vmul.f32 %v1099, %v1583
  %v1608 = vmul.f32 %v1101, %v1584
  %v1609 = vadd.f32 %v1593, %v1601
  %v1610 = vadd.f32 %v1594, %v1602
  %v1611 = vadd.f32 %v1595, %v1603
  %v1612 = vadd.f32 %v1596, %v1604
  %v1613 = vadd.f32 %v1597, %v1605
  %v1614 = vadd.f32 %v1598, %v1606
  %v1615 = vadd.f32 %v1599, %v1607
  %v1616 = vadd.f32 %v1600, %v1608
  %1617 = vst [vmem:[%s5] sm:$0xff] %v1609
  %1618 = vst [vmem:[%s5 + $0x8] sm:$0xff] %v1610
  %1619 = vst [vmem:[%s5 + $0x10] sm:$0xff] %v1611
  %1620 = vst [vmem:[%s5 + $0x18] sm:$0xff] %v1612
  %1621 = vst [vmem:[%s5 + $0x20] sm:$0xff] %v1613
  %1622 = vst [vmem:[%s5 + $0x28] sm:$0xff] %v1614
  %1623 = vst [vmem:[%s5 + $0x30] sm:$0xff] %v1615
  %1624 = vst [vmem:[%s5 + $0x38] sm:$0xff] %v1616
  // Predicated region
  $region22: #{sep_conv_gru3d_forward.3} parent=0 // pred_check
    _
  $region23: #{sep_conv_gru3d_forward.3} parent=0 // pred_check_branch
    %1626 = sbr.rel (0) target = $region25
  $region24: #{sep_conv_gru3d_forward.3} parent=0 // pred_region
    _
  $region25: #{sep_conv_gru3d_forward.3} parent=0 // pred_fallthru
    _
  // Predicated region
  $region26: #{sep_conv_gru3d_forward.3} parent=0 // pred_check
    _
  $region27: #{sep_conv_gru3d_forward.3} parent=0 // pred_check_branch
    %1628 = sbr.rel (0) target = $region29
  $region28: #{sep_conv_gru3d_forward.3} parent=0 // pred_region
    _
  $region29: #{sep_conv_gru3d_forward.3} parent=0 // pred_fallthru
    _

// kernel: sep_conv_gru3d_forward.5
$region0: #{sep_conv_gru3d_forward.5}
  #allocation0 [shape = 'u32[]', space=smem, size = 0x4, offset = 0x4, fixed_abs, tag = 'smem constant byte address 0x4 - core index']
  #allocation1 [shape = 'u32[144,128]{1,0:T(1,128)}', space=vmem, size = 0x12000, scoped, tag = 'internal scratch']
  #allocation2 [shape = 'f32[200,512]{1,0:T(8,128)}', space=vmem, size = 0x64000, scoped, tag = 'scratch operand']
  %s0 = inlined_call_operand.vmem [shape: f32[16,512], index: 0, kind: input, shape index: {}, may-alias: {0,5}]
  %s1 = inlined_call_operand.vmem [shape: f32[24,512], index: 1, kind: input, shape index: {}]
  %s2 = inlined_call_operand.vmem [shape: f32[48,200], index: 2, kind: input, shape index: {}]
  %s3 = inlined_call_operand.vmem [shape: f32[16,80], index: 3, kind: input, shape index: {}]
  %s4 = inlined_call_operand.vmem [shape: f32[48,1], index: 4, kind: input, shape index: {}]
  %s5 = inlined_call_operand.vmem [shape: f32[16,512], index: 5, kind: output, shape index: {}, may-alias: {0,5}]
  %s6 = sld [smem:[#allocation0]]
  $region30: #{sep_conv_gru3d_forward.5} parent=0
    _
  %s8 = ssub.s32 1, %s6
  %s9 = scalar_select 0, %s8, %s6
  // Predicated region
  $region2: #{sep_conv_gru3d_forward.5} parent=0 // pred_check
    _
  $region3: #{sep_conv_gru3d_forward.5} parent=0 // pred_check_branch
    %11 = sbr.rel (0) target = $region5
  $region4: #{sep_conv_gru3d_forward.5} parent=0 // pred_region
    _
  $region5: #{sep_conv_gru3d_forward.5} parent=0 // pred_fallthru
    _
  // Predicated region
  $region6: #{sep_conv_gru3d_forward.5} parent=0 // pred_check
    _
  $region7: #{sep_conv_gru3d_forward.5} parent=0 // pred_check_branch
    %13 = sbr.rel (0) target = $region9
  $region8: #{sep_conv_gru3d_forward.5} parent=0 // pred_region
    _
  $region9: #{sep_conv_gru3d_forward.5} parent=0 // pred_fallthru
    _
  // Predicated region
  $region10: #{sep_conv_gru3d_forward.5} parent=0 // pred_check
    _
  $region11: #{sep_conv_gru3d_forward.5} parent=0 // pred_check_branch
    %15 = sbr.rel (0) target = $region13
  $region12: #{sep_conv_gru3d_forward.5} parent=0 // pred_region
    _
  $region13: #{sep_conv_gru3d_forward.5} parent=0 // pred_fallthru
    _
  // Predicated region
  $region14: #{sep_conv_gru3d_forward.5} parent=0 // pred_check
    _
  $region15: #{sep_conv_gru3d_forward.5} parent=0 // pred_check_branch
    %17 = sbr.rel (0) target = $region17
  $region16: #{sep_conv_gru3d_forward.5} parent=0 // pred_region
    _
  $region17: #{sep_conv_gru3d_forward.5} parent=0 // pred_fallthru
    _
  // Predicated region
  $region18: #{sep_conv_gru3d_forward.5} parent=0 // pred_check
    _
  $region19: #{sep_conv_gru3d_forward.5} parent=0 // pred_check_branch
    %19 = sbr.rel (0) target = $region21
  $region20: #{sep_conv_gru3d_forward.5} parent=0 // pred_region
    _
  $region21: #{sep_conv_gru3d_forward.5} parent=0 // pred_fallthru
    _
  %v20 = vld [vmem:[%s0] sm:$0xff]
  %v21 = vld [vmem:[%s0 + $0x8] sm:$0xff]
  %v22 = vld [vmem:[%s0 + $0x10] sm:$0xff]
  %v23 = vld [vmem:[%s0 + $0x18] sm:$0xff]
  %v24 = vld [vmem:[%s0 + $0x20] sm:$0xff]
  %v25 = vld [vmem:[%s0 + $0x28] sm:$0xff]
  %v26 = vld [vmem:[%s0 + $0x30] sm:$0xff]
  %v27 = vld [vmem:[%s0 + $0x38] sm:$0xff]
  %v28 = vlaneseq
  %v29 = vand.u32 %v28, 127
  %v30 = vadd.s32 %v29, 128
  %v31 = vadd.s32 %v29, 256
  %v32 = vadd.s32 %v29, 384
  %vm33 = vcmp.lt.s32.totalorder %v29, 0
  %v34 = vsub.s32 0, %v29
  %v35 = vsel %vm33, %v34, %v29
  %v36 = vshrl.u32 %v35, 2
  %v37 = vand.u32 %v35, 3
  %v38 = vsub.s32 0, %v37
  %v39 = vsel %vm33, %v38, %v37
  %vm40 = vcmp.lt.s32.totalorder %v30, 0
  %v41 = vsub.s32 0, %v30
  %v42 = vsel %vm40, %v41, %v30
  %v43 = vshrl.u32 %v42, 2
  %v44 = vand.u32 %v42, 3
  %v45 = vsub.s32 0, %v44
  %v46 = vsel %vm40, %v45, %v44
  %vm47 = vcmp.lt.s32.totalorder %v31, 0
  %v48 = vsub.s32 0, %v31
  %v49 = vsel %vm47, %v48, %v31
  %v50 = vshrl.u32 %v49, 2
  %v51 = vand.u32 %v49, 3
  %v52 = vsub.s32 0, %v51
  %v53 = vsel %vm47, %v52, %v51
  %vm54 = vcmp.lt.s32.totalorder %v32, 0
  %v55 = vsub.s32 0, %v32
  %v56 = vsel %vm54, %v55, %v32
  %v57 = vshrl.u32 %v56, 2
  %v58 = vand.u32 %v56, 3
  %v59 = vsub.s32 0, %v58
  %v60 = vsel %vm54, %v59, %v58
  %vm61 = vcmp.ne.s32.totalorder %v39, 0
  %vm62 = vcmp.ne.s32.totalorder %v46, 0
  %vm63 = vcmp.ne.s32.totalorder %v53, 0
  %vm64 = vcmp.ne.s32.totalorder %v60, 0
  %vm65 = vcmp.lt.s32.totalorder %v39, 0
  %vm66 = vcmp.lt.s32.totalorder %v46, 0
  %vm67 = vcmp.lt.s32.totalorder %v53, 0
  %vm68 = vcmp.lt.s32.totalorder %v60, 0
  %vm69 = vmand %vm65, %vm61
  %vm70 = vmand %vm66, %vm62
  %vm71 = vmand %vm67, %vm63
  %vm72 = vmand %vm68, %vm64
  %v73 = vadd.s32 %v39, 4
  %v74 = vadd.s32 %v46, 4
  %v75 = vadd.s32 %v53, 4
  %v76 = vadd.s32 %v60, 4
  %v77 = vsel %vm69, %v73, %v39
  %v78 = vsel %vm70, %v74, %v46
  %v79 = vsel %vm71, %v75, %v53
  %v80 = vsel %vm72, %v76, %v60
  %vm81 = vcmp.ge.s32.totalorder %v77, 2
  %vm82 = vcmp.ge.s32.totalorder %v78, 2
  %vm83 = vcmp.ge.s32.totalorder %v79, 2
  %vm84 = vcmp.ge.s32.totalorder %v80, 2
  %vm85 = vcmp.ge.s32.totalorder %v77, 1
  %vm86 = vcmp.ge.s32.totalorder %v78, 1
  %vm87 = vcmp.ge.s32.totalorder %v79, 1
  %vm88 = vcmp.ge.s32.totalorder %v80, 1
  %vm89 = vcmp.lt.s32.totalorder %v77, 3
  %vm90 = vcmp.lt.s32.totalorder %v78, 3
  %vm91 = vcmp.lt.s32.totalorder %v79, 3
  %vm92 = vcmp.lt.s32.totalorder %v80, 3
  %vm93 = vcmp.lt.s32.totalorder %v77, 2
  %vm94 = vcmp.lt.s32.totalorder %v78, 2
  %vm95 = vcmp.lt.s32.totalorder %v79, 2
  %vm96 = vcmp.lt.s32.totalorder %v80, 2
  %99 = vrot.lane.b32.xlu0 %v23, 2
  %v100 = vpop.permute.xlu0 %99
  %101 = vrot.lane.b32.xlu0 %v27, 2
  %v102 = vpop.permute.xlu0 %101
  %111 = vrot.lane.b32.xlu0 %v20, 2
  %v112 = vpop.permute.xlu0 %111
  %113 = vrot.lane.b32.xlu0 %v21, 2
  %v114 = vpop.permute.xlu0 %113
  %115 = vrot.lane.b32.xlu0 %v22, 2
  %v116 = vpop.permute.xlu0 %115
  %117 = vrot.lane.b32.xlu0 %v24, 2
  %v118 = vpop.permute.xlu0 %117
  %119 = vrot.lane.b32.xlu0 %v25, 2
  %v120 = vpop.permute.xlu0 %119
  %121 = vrot.lane.b32.xlu0 %v26, 2
  %v122 = vpop.permute.xlu0 %121
  %vm123 = vcmask 15360
  %v124 = vsel %vm123, %v112, %v114
  %v125 = vsel %vm123, %v114, %v116
  %v126 = vsel %vm123, %v116, %v100
  %v127 = vsel %vm123, %v118, %v120
  %v128 = vsel %vm123, %v120, %v122
  %v129 = vsel %vm123, %v122, %v102
  %v138 = vsel %vm123, %v100, %v112
  %v139 = vsel %vm123, %v102, %v118
  %v140 = vsel %vm81, 1, 0
  %v141 = vsel %vm82, 1, 0
  %v142 = vsel %vm83, 1, 0
  %v143 = vsel %vm84, 1, 0
  %vm144 = vcmp.eq.s32.totalorder %v140, 1
  %vm145 = vcmp.eq.s32.totalorder %v141, 1
  %vm146 = vcmp.eq.s32.totalorder %v142, 1
  %vm147 = vcmp.eq.s32.totalorder %v143, 1
  %v148 = vsel %vm144, %v138, 0.0
  %v149 = vsel %vm145, %v124, 0.0
  %v150 = vsel %vm146, %v125, 0.0
  %v151 = vsel %vm147, %v126, 0.0
  %v152 = vsel %vm144, %v139, 0.0
  %v153 = vsel %vm145, %v127, 0.0
  %v154 = vsel %vm146, %v128, 0.0
  %v155 = vsel %vm147, %v129, 0.0
  %156 = vst [vmem:[#allocation2] sm:$0xff] %v148
  %157 = vst [vmem:[#allocation2 + $0x8] sm:$0xff] %v149
  %158 = vst [vmem:[#allocation2 + $0x10] sm:$0xff] %v150
  %159 = vst [vmem:[#allocation2 + $0x18] sm:$0xff] %v151
  %160 = vst [vmem:[#allocation2 + $0x20] sm:$0xff] %v152
  %161 = vst [vmem:[#allocation2 + $0x28] sm:$0xff] %v153
  %162 = vst [vmem:[#allocation2 + $0x30] sm:$0xff] %v154
  %163 = vst [vmem:[#allocation2 + $0x38] sm:$0xff] %v155
  %164 = vrot.lane.b32.xlu0 %v23, 1
  %v165 = vpop.permute.xlu0 %164
  %166 = vrot.lane.b32.xlu0 %v27, 1
  %v167 = vpop.permute.xlu0 %166
  %170 = vrot.lane.b32.xlu0 %v20, 1
  %v171 = vpop.permute.xlu0 %170
  %172 = vrot.lane.b32.xlu0 %v21, 1
  %v173 = vpop.permute.xlu0 %172
  %174 = vrot.lane.b32.xlu0 %v22, 1
  %v175 = vpop.permute.xlu0 %174
  %176 = vrot.lane.b32.xlu0 %v24, 1
  %v177 = vpop.permute.xlu0 %176
  %178 = vrot.lane.b32.xlu0 %v25, 1
  %v179 = vpop.permute.xlu0 %178
  %180 = vrot.lane.b32.xlu0 %v26, 1
  %v181 = vpop.permute.xlu0 %180
  %vm182 = vcmask 7168
  %v183 = vsel %vm182, %v171, %v173
  %v184 = vsel %vm182, %v173, %v175
  %v185 = vsel %vm182, %v175, %v165
  %v186 = vsel %vm182, %v177, %v179
  %v187 = vsel %vm182, %v179, %v181
  %v188 = vsel %vm182, %v181, %v167
  %v197 = vsel %vm182, %v165, %v171
  %v198 = vsel %vm182, %v167, %v177
  %v199 = vsel %vm85, 1, 0
  %v200 = vsel %vm86, 1, 0
  %v201 = vsel %vm87, 1, 0
  %v202 = vsel %vm88, 1, 0
  %vm203 = vcmp.eq.s32.totalorder %v199, 1
  %vm204 = vcmp.eq.s32.totalorder %v200, 1
  %vm205 = vcmp.eq.s32.totalorder %v201, 1
  %vm206 = vcmp.eq.s32.totalorder %v202, 1
  %v207 = vsel %vm203, %v197, 0.0
  %v208 = vsel %vm204, %v183, 0.0
  %v209 = vsel %vm205, %v184, 0.0
  %v210 = vsel %vm206, %v185, 0.0
  %v211 = vsel %vm203, %v198, 0.0
  %v212 = vsel %vm204, %v186, 0.0
  %v213 = vsel %vm205, %v187, 0.0
  %v214 = vsel %vm206, %v188, 0.0
  %215 = vst [vmem:[#allocation2 + $0x40] sm:$0xff] %v207
  %216 = vst [vmem:[#allocation2 + $0x48] sm:$0xff] %v208
  %217 = vst [vmem:[#allocation2 + $0x50] sm:$0xff] %v209
  %218 = vst [vmem:[#allocation2 + $0x58] sm:$0xff] %v210
  %219 = vst [vmem:[#allocation2 + $0x60] sm:$0xff] %v211
  %220 = vst [vmem:[#allocation2 + $0x68] sm:$0xff] %v212
  %221 = vst [vmem:[#allocation2 + $0x70] sm:$0xff] %v213
  %222 = vst [vmem:[#allocation2 + $0x78] sm:$0xff] %v214
  %223 = vst [vmem:[#allocation2 + $0x80] sm:$0xff] %v20
  %224 = vst [vmem:[#allocation2 + $0x88] sm:$0xff] %v21
  %225 = vst [vmem:[#allocation2 + $0x90] sm:$0xff] %v22
  %226 = vst [vmem:[#allocation2 + $0x98] sm:$0xff] %v23
  %227 = vst [vmem:[#allocation2 + $0xa0] sm:$0xff] %v24
  %228 = vst [vmem:[#allocation2 + $0xa8] sm:$0xff] %v25
  %229 = vst [vmem:[#allocation2 + $0xb0] sm:$0xff] %v26
  %230 = vst [vmem:[#allocation2 + $0xb8] sm:$0xff] %v27
  %231 = vrot.lane.b32.xlu0 %v20, 127
  %v232 = vpop.permute.xlu0 %231
  %233 = vrot.lane.b32.xlu0 %v21, 127
  %v234 = vpop.permute.xlu0 %233
  %235 = vrot.lane.b32.xlu0 %v22, 127
  %v236 = vpop.permute.xlu0 %235
  %237 = vrot.lane.b32.xlu0 %v23, 127
  %v238 = vpop.permute.xlu0 %237
  %239 = vrot.lane.b32.xlu0 %v24, 127
  %v240 = vpop.permute.xlu0 %239
  %241 = vrot.lane.b32.xlu0 %v25, 127
  %v242 = vpop.permute.xlu0 %241
  %243 = vrot.lane.b32.xlu0 %v26, 127
  %v244 = vpop.permute.xlu0 %243
  %245 = vrot.lane.b32.xlu0 %v27, 127
  %v246 = vpop.permute.xlu0 %245
  %vm247 = vcmask 1039360
  %v248 = vsel %vm247, %v232, %v234
  %v249 = vsel %vm247, %v234, %v236
  %v250 = vsel %vm247, %v236, %v238
  %v251 = vsel %vm247, %v240, %v242
  %v252 = vsel %vm247, %v242, %v244
  %v253 = vsel %vm247, %v244, %v246
  %v264 = vsel %vm247, %v238, %v232
  %v265 = vsel %vm247, %v246, %v240
  %v266 = vsel %vm89, 1, 0
  %v267 = vsel %vm90, 1, 0
  %v268 = vsel %vm91, 1, 0
  %v269 = vsel %vm92, 1, 0
  %vm270 = vcmp.eq.s32.totalorder %v266, 1
  %vm271 = vcmp.eq.s32.totalorder %v267, 1
  %vm272 = vcmp.eq.s32.totalorder %v268, 1
  %vm273 = vcmp.eq.s32.totalorder %v269, 1
  %v274 = vsel %vm270, %v248, 0.0
  %v275 = vsel %vm271, %v249, 0.0
  %v276 = vsel %vm272, %v250, 0.0
  %v277 = vsel %vm273, %v264, 0.0
  %v278 = vsel %vm270, %v251, 0.0
  %v279 = vsel %vm271, %v252, 0.0
  %v280 = vsel %vm272, %v253, 0.0
  %v281 = vsel %vm273, %v265, 0.0
  %282 = vst [vmem:[#allocation2 + $0xc0] sm:$0xff] %v274
  %283 = vst [vmem:[#allocation2 + $0xc8] sm:$0xff] %v275
  %284 = vst [vmem:[#allocation2 + $0xd0] sm:$0xff] %v276
  %285 = vst [vmem:[#allocation2 + $0xd8] sm:$0xff] %v277
  %286 = vst [vmem:[#allocation2 + $0xe0] sm:$0xff] %v278
  %287 = vst [vmem:[#allocation2 + $0xe8] sm:$0xff] %v279
  %288 = vst [vmem:[#allocation2 + $0xf0] sm:$0xff] %v280
  %289 = vst [vmem:[#allocation2 + $0xf8] sm:$0xff] %v281
  %290 = vrot.lane.b32.xlu0 %v20, 126
  %v291 = vpop.permute.xlu0 %290
  %292 = vrot.lane.b32.xlu0 %v21, 126
  %v293 = vpop.permute.xlu0 %292
  %294 = vrot.lane.b32.xlu0 %v22, 126
  %v295 = vpop.permute.xlu0 %294
  %296 = vrot.lane.b32.xlu0 %v23, 126
  %v297 = vpop.permute.xlu0 %296
  %298 = vrot.lane.b32.xlu0 %v24, 126
  %v299 = vpop.permute.xlu0 %298
  %300 = vrot.lane.b32.xlu0 %v25, 126
  %v301 = vpop.permute.xlu0 %300
  %302 = vrot.lane.b32.xlu0 %v26, 126
  %v303 = vpop.permute.xlu0 %302
  %304 = vrot.lane.b32.xlu0 %v27, 126
  %v305 = vpop.permute.xlu0 %304
  %vm306 = vcmask 1031168
  %v307 = vsel %vm306, %v291, %v293
  %v308 = vsel %vm306, %v293, %v295
  %v309 = vsel %vm306, %v295, %v297
  %v310 = vsel %vm306, %v299, %v301
  %v311 = vsel %vm306, %v301, %v303
  %v312 = vsel %vm306, %v303, %v305
  %v323 = vsel %vm306, %v297, %v291
  %v324 = vsel %vm306, %v305, %v299
  %v325 = vsel %vm93, 1, 0
  %v326 = vsel %vm94, 1, 0
  %v327 = vsel %vm95, 1, 0
  %v328 = vsel %vm96, 1, 0
  %vm329 = vcmp.eq.s32.totalorder %v325, 1
  %vm330 = vcmp.eq.s32.totalorder %v326, 1
  %vm331 = vcmp.eq.s32.totalorder %v327, 1
  %vm332 = vcmp.eq.s32.totalorder %v328, 1
  %v333 = vsel %vm329, %v307, 0.0
  %v334 = vsel %vm330, %v308, 0.0
  %v335 = vsel %vm331, %v309, 0.0
  %v336 = vsel %vm332, %v323, 0.0
  %v337 = vsel %vm329, %v310, 0.0
  %v338 = vsel %vm330, %v311, 0.0
  %v339 = vsel %vm331, %v312, 0.0
  %v340 = vsel %vm332, %v324, 0.0
  %341 = vst [vmem:[#allocation2 + $0x100] sm:$0xff] %v333
  %342 = vst [vmem:[#allocation2 + $0x108] sm:$0xff] %v334
  %343 = vst [vmem:[#allocation2 + $0x110] sm:$0xff] %v335
  %344 = vst [vmem:[#allocation2 + $0x118] sm:$0xff] %v336
  %345 = vst [vmem:[#allocation2 + $0x120] sm:$0xff] %v337
  %346 = vst [vmem:[#allocation2 + $0x128] sm:$0xff] %v338
  %347 = vst [vmem:[#allocation2 + $0x130] sm:$0xff] %v339
  %348 = vst [vmem:[#allocation2 + $0x138] sm:$0xff] %v340
  %v349 = vld [vmem:[%s1] sm:$0xff]
  %v350 = vld [vmem:[%s1 + $0x8] sm:$0xff]
  %v351 = vld [vmem:[%s1 + $0x10] sm:$0xff]
  %v352 = vld [vmem:[%s1 + $0x18] sm:$0xff]
  %v353 = vld [vmem:[%s1 + $0x20] sm:$0xff]
  %v354 = vld [vmem:[%s1 + $0x28] sm:$0xff]
  %v355 = vld [vmem:[%s1 + $0x30] sm:$0xff]
  %v356 = vld [vmem:[%s1 + $0x38] sm:$0xff]
  %v357 = vld [vmem:[%s1 + $0x40] sm:$0xff]
  %v358 = vld [vmem:[%s1 + $0x48] sm:$0xff]
  %v359 = vld [vmem:[%s1 + $0x50] sm:$0xff]
  %v360 = vld [vmem:[%s1 + $0x58] sm:$0xff]
  %364 = vrot.lane.b32.xlu0 %v352, 2
  %v365 = vpop.permute.xlu0 %364
  %366 = vrot.lane.b32.xlu0 %v356, 2
  %v367 = vpop.permute.xlu0 %366
  %368 = vrot.lane.b32.xlu0 %v360, 2
  %v369 = vpop.permute.xlu0 %368
  %382 = vrot.lane.b32.xlu0 %v349, 2
  %v383 = vpop.permute.xlu0 %382
  %384 = vrot.lane.b32.xlu0 %v350, 2
  %v385 = vpop.permute.xlu0 %384
  %386 = vrot.lane.b32.xlu0 %v351, 2
  %v387 = vpop.permute.xlu0 %386
  %388 = vrot.lane.b32.xlu0 %v353, 2
  %v389 = vpop.permute.xlu0 %388
  %390 = vrot.lane.b32.xlu0 %v354, 2
  %v391 = vpop.permute.xlu0 %390
  %392 = vrot.lane.b32.xlu0 %v355, 2
  %v393 = vpop.permute.xlu0 %392
  %394 = vrot.lane.b32.xlu0 %v357, 2
  %v395 = vpop.permute.xlu0 %394
  %396 = vrot.lane.b32.xlu0 %v358, 2
  %v397 = vpop.permute.xlu0 %396
  %398 = vrot.lane.b32.xlu0 %v359, 2
  %v399 = vpop.permute.xlu0 %398
  %v400 = vsel %vm123, %v383, %v385
  %v401 = vsel %vm123, %v385, %v387
  %v402 = vsel %vm123, %v387, %v365
  %v403 = vsel %vm123, %v389, %v391
  %v404 = vsel %vm123, %v391, %v393
  %v405 = vsel %vm123, %v393, %v367
  %v406 = vsel %vm123, %v395, %v397
  %v407 = vsel %vm123, %v397, %v399
  %v408 = vsel %vm123, %v399, %v369
  %v421 = vsel %vm123, %v365, %v383
  %v422 = vsel %vm123, %v367, %v389
  %v423 = vsel %vm123, %v369, %v395
  %v424 = vsel %vm144, %v421, 0.0
  %v425 = vsel %vm145, %v400, 0.0
  %v426 = vsel %vm146, %v401, 0.0
  %v427 = vsel %vm147, %v402, 0.0
  %v428 = vsel %vm144, %v422, 0.0
  %v429 = vsel %vm145, %v403, 0.0
  %v430 = vsel %vm146, %v404, 0.0
  %v431 = vsel %vm147, %v405, 0.0
  %v432 = vsel %vm144, %v423, 0.0
  %v433 = vsel %vm145, %v406, 0.0
  %v434 = vsel %vm146, %v407, 0.0
  %v435 = vsel %vm147, %v408, 0.0
  %436 = vst [vmem:[#allocation2 + $0x140] sm:$0xff] %v424
  %437 = vst [vmem:[#allocation2 + $0x148] sm:$0xff] %v425
  %438 = vst [vmem:[#allocation2 + $0x150] sm:$0xff] %v426
  %439 = vst [vmem:[#allocation2 + $0x158] sm:$0xff] %v427
  %440 = vst [vmem:[#allocation2 + $0x160] sm:$0xff] %v428
  %441 = vst [vmem:[#allocation2 + $0x168] sm:$0xff] %v429
  %442 = vst [vmem:[#allocation2 + $0x170] sm:$0xff] %v430
  %443 = vst [vmem:[#allocation2 + $0x178] sm:$0xff] %v431
  %444 = vst [vmem:[#allocation2 + $0x180] sm:$0xff] %v432
  %445 = vst [vmem:[#allocation2 + $0x188] sm:$0xff] %v433
  %446 = vst [vmem:[#allocation2 + $0x190] sm:$0xff] %v434
  %447 = vst [vmem:[#allocation2 + $0x198] sm:$0xff] %v435
  %448 = vrot.lane.b32.xlu0 %v352, 1
  %v449 = vpop.permute.xlu0 %448
  %450 = vrot.lane.b32.xlu0 %v356, 1
  %v451 = vpop.permute.xlu0 %450
  %452 = vrot.lane.b32.xlu0 %v360, 1
  %v453 = vpop.permute.xlu0 %452
  %457 = vrot.lane.b32.xlu0 %v349, 1
  %v458 = vpop.permute.xlu0 %457
  %459 = vrot.lane.b32.xlu0 %v350, 1
  %v460 = vpop.permute.xlu0 %459
  %461 = vrot.lane.b32.xlu0 %v351, 1
  %v462 = vpop.permute.xlu0 %461
  %463 = vrot.lane.b32.xlu0 %v353, 1
  %v464 = vpop.permute.xlu0 %463
  %465 = vrot.lane.b32.xlu0 %v354, 1
  %v466 = vpop.permute.xlu0 %465
  %467 = vrot.lane.b32.xlu0 %v355, 1
  %v468 = vpop.permute.xlu0 %467
  %469 = vrot.lane.b32.xlu0 %v357, 1
  %v470 = vpop.permute.xlu0 %469
  %471 = vrot.lane.b32.xlu0 %v358, 1
  %v472 = vpop.permute.xlu0 %471
  %473 = vrot.lane.b32.xlu0 %v359, 1
  %v474 = vpop.permute.xlu0 %473
  %v475 = vsel %vm182, %v458, %v460
  %v476 = vsel %vm182, %v460, %v462
  %v477 = vsel %vm182, %v462, %v449
  %v478 = vsel %vm182, %v464, %v466
  %v479 = vsel %vm182, %v466, %v468
  %v480 = vsel %vm182, %v468, %v451
  %v481 = vsel %vm182, %v470, %v472
  %v482 = vsel %vm182, %v472, %v474
  %v483 = vsel %vm182, %v474, %v453
  %v496 = vsel %vm182, %v449, %v458
  %v497 = vsel %vm182, %v451, %v464
  %v498 = vsel %vm182, %v453, %v470
  %v499 = vsel %vm203, %v496, 0.0
  %v500 = vsel %vm204, %v475, 0.0
  %v501 = vsel %vm205, %v476, 0.0
  %v502 = vsel %vm206, %v477, 0.0
  %v503 = vsel %vm203, %v497, 0.0
  %v504 = vsel %vm204, %v478, 0.0
  %v505 = vsel %vm205, %v479, 0.0
  %v506 = vsel %vm206, %v480, 0.0
  %v507 = vsel %vm203, %v498, 0.0
  %v508 = vsel %vm204, %v481, 0.0
  %v509 = vsel %vm205, %v482, 0.0
  %v510 = vsel %vm206, %v483, 0.0
  %511 = vst [vmem:[#allocation2 + $0x1a0] sm:$0xff] %v499
  %512 = vst [vmem:[#allocation2 + $0x1a8] sm:$0xff] %v500
  %513 = vst [vmem:[#allocation2 + $0x1b0] sm:$0xff] %v501
  %514 = vst [vmem:[#allocation2 + $0x1b8] sm:$0xff] %v502
  %515 = vst [vmem:[#allocation2 + $0x1c0] sm:$0xff] %v503
  %516 = vst [vmem:[#allocation2 + $0x1c8] sm:$0xff] %v504
  %517 = vst [vmem:[#allocation2 + $0x1d0] sm:$0xff] %v505
  %518 = vst [vmem:[#allocation2 + $0x1d8] sm:$0xff] %v506
  %519 = vst [vmem:[#allocation2 + $0x1e0] sm:$0xff] %v507
  %520 = vst [vmem:[#allocation2 + $0x1e8] sm:$0xff] %v508
  %521 = vst [vmem:[#allocation2 + $0x1f0] sm:$0xff] %v509
  %522 = vst [vmem:[#allocation2 + $0x1f8] sm:$0xff] %v510
  %523 = vst [vmem:[#allocation2 + $0x200] sm:$0xff] %v349
  %524 = vst [vmem:[#allocation2 + $0x208] sm:$0xff] %v350
  %525 = vst [vmem:[#allocation2 + $0x210] sm:$0xff] %v351
  %526 = vst [vmem:[#allocation2 + $0x218] sm:$0xff] %v352
  %527 = vst [vmem:[#allocation2 + $0x220] sm:$0xff] %v353
  %528 = vst [vmem:[#allocation2 + $0x228] sm:$0xff] %v354
  %529 = vst [vmem:[#allocation2 + $0x230] sm:$0xff] %v355
  %530 = vst [vmem:[#allocation2 + $0x238] sm:$0xff] %v356
  %531 = vst [vmem:[#allocation2 + $0x240] sm:$0xff] %v357
  %532 = vst [vmem:[#allocation2 + $0x248] sm:$0xff] %v358
  %533 = vst [vmem:[#allocation2 + $0x250] sm:$0xff] %v359
  %534 = vst [vmem:[#allocation2 + $0x258] sm:$0xff] %v360
  %535 = vrot.lane.b32.xlu0 %v349, 127
  %v536 = vpop.permute.xlu0 %535
  %537 = vrot.lane.b32.xlu0 %v350, 127
  %v538 = vpop.permute.xlu0 %537
  %539 = vrot.lane.b32.xlu0 %v351, 127
  %v540 = vpop.permute.xlu0 %539
  %541 = vrot.lane.b32.xlu0 %v352, 127
  %v542 = vpop.permute.xlu0 %541
  %543 = vrot.lane.b32.xlu0 %v353, 127
  %v544 = vpop.permute.xlu0 %543
  %545 = vrot.lane.b32.xlu0 %v354, 127
  %v546 = vpop.permute.xlu0 %545
  %547 = vrot.lane.b32.xlu0 %v355, 127
  %v548 = vpop.permute.xlu0 %547
  %549 = vrot.lane.b32.xlu0 %v356, 127
  %v550 = vpop.permute.xlu0 %549
  %551 = vrot.lane.b32.xlu0 %v357, 127
  %v552 = vpop.permute.xlu0 %551
  %553 = vrot.lane.b32.xlu0 %v358, 127
  %v554 = vpop.permute.xlu0 %553
  %555 = vrot.lane.b32.xlu0 %v359, 127
  %v556 = vpop.permute.xlu0 %555
  %557 = vrot.lane.b32.xlu0 %v360, 127
  %v558 = vpop.permute.xlu0 %557
  %v559 = vsel %vm247, %v536, %v538
  %v560 = vsel %vm247, %v538, %v540
  %v561 = vsel %vm247, %v540, %v542
  %v562 = vsel %vm247, %v544, %v546
  %v563 = vsel %vm247, %v546, %v548
  %v564 = vsel %vm247, %v548, %v550
  %v565 = vsel %vm247, %v552, %v554
  %v566 = vsel %vm247, %v554, %v556
  %v567 = vsel %vm247, %v556, %v558
  %v583 = vsel %vm247, %v542, %v536
  %v584 = vsel %vm247, %v550, %v544
  %v585 = vsel %vm247, %v558, %v552
  %v586 = vsel %vm270, %v559, 0.0
  %v587 = vsel %vm271, %v560, 0.0
  %v588 = vsel %vm272, %v561, 0.0
  %v589 = vsel %vm273, %v583, 0.0
  %v590 = vsel %vm270, %v562, 0.0
  %v591 = vsel %vm271, %v563, 0.0
  %v592 = vsel %vm272, %v564, 0.0
  %v593 = vsel %vm273, %v584, 0.0
  %v594 = vsel %vm270, %v565, 0.0
  %v595 = vsel %vm271, %v566, 0.0
  %v596 = vsel %vm272, %v567, 0.0
  %v597 = vsel %vm273, %v585, 0.0
  %598 = vst [vmem:[#allocation2 + $0x260] sm:$0xff] %v586
  %599 = vst [vmem:[#allocation2 + $0x268] sm:$0xff] %v587
  %600 = vst [vmem:[#allocation2 + $0x270] sm:$0xff] %v588
  %601 = vst [vmem:[#allocation2 + $0x278] sm:$0xff] %v589
  %602 = vst [vmem:[#allocation2 + $0x280] sm:$0xff] %v590
  %603 = vst [vmem:[#allocation2 + $0x288] sm:$0xff] %v591
  %604 = vst [vmem:[#allocation2 + $0x290] sm:$0xff] %v592
  %605 = vst [vmem:[#allocation2 + $0x298] sm:$0xff] %v593
  %606 = vst [vmem:[#allocation2 + $0x2a0] sm:$0xff] %v594
  %607 = vst [vmem:[#allocation2 + $0x2a8] sm:$0xff] %v595
  %608 = vst [vmem:[#allocation2 + $0x2b0] sm:$0xff] %v596
  %609 = vst [vmem:[#allocation2 + $0x2b8] sm:$0xff] %v597
  %610 = vrot.lane.b32.xlu0 %v349, 126
  %v611 = vpop.permute.xlu0 %610
  %612 = vrot.lane.b32.xlu0 %v350, 126
  %v613 = vpop.permute.xlu0 %612
  %614 = vrot.lane.b32.xlu0 %v351, 126
  %v615 = vpop.permute.xlu0 %614
  %616 = vrot.lane.b32.xlu0 %v352, 126
  %v617 = vpop.permute.xlu0 %616
  %618 = vrot.lane.b32.xlu0 %v353, 126
  %v619 = vpop.permute.xlu0 %618
  %620 = vrot.lane.b32.xlu0 %v354, 126
  %v621 = vpop.permute.xlu0 %620
  %622 = vrot.lane.b32.xlu0 %v355, 126
  %v623 = vpop.permute.xlu0 %622
  %624 = vrot.lane.b32.xlu0 %v356, 126
  %v625 = vpop.permute.xlu0 %624
  %626 = vrot.lane.b32.xlu0 %v357, 126
  %v627 = vpop.permute.xlu0 %626
  %628 = vrot.lane.b32.xlu0 %v358, 126
  %v629 = vpop.permute.xlu0 %628
  %630 = vrot.lane.b32.xlu0 %v359, 126
  %v631 = vpop.permute.xlu0 %630
  %632 = vrot.lane.b32.xlu0 %v360, 126
  %v633 = vpop.permute.xlu0 %632
  %v634 = vsel %vm306, %v611, %v613
  %v635 = vsel %vm306, %v613, %v615
  %v636 = vsel %vm306, %v615, %v617
  %v637 = vsel %vm306, %v619, %v621
  %v638 = vsel %vm306, %v621, %v623
  %v639 = vsel %vm306, %v623, %v625
  %v640 = vsel %vm306, %v627, %v629
  %v641 = vsel %vm306, %v629, %v631
  %v642 = vsel %vm306, %v631, %v633
  %v658 = vsel %vm306, %v617, %v611
  %v659 = vsel %vm306, %v625, %v619
  %v660 = vsel %vm306, %v633, %v627
  %v661 = vsel %vm329, %v634, 0.0
  %v662 = vsel %vm330, %v635, 0.0
  %v663 = vsel %vm331, %v636, 0.0
  %v664 = vsel %vm332, %v658, 0.0
  %v665 = vsel %vm329, %v637, 0.0
  %v666 = vsel %vm330, %v638, 0.0
  %v667 = vsel %vm331, %v639, 0.0
  %v668 = vsel %vm332, %v659, 0.0
  %v669 = vsel %vm329, %v640, 0.0
  %v670 = vsel %vm330, %v641, 0.0
  %v671 = vsel %vm331, %v642, 0.0
  %v672 = vsel %vm332, %v660, 0.0
  %673 = vst [vmem:[#allocation2 + $0x2c0] sm:$0xff] %v661
  %674 = vst [vmem:[#allocation2 + $0x2c8] sm:$0xff] %v662
  %675 = vst [vmem:[#allocation2 + $0x2d0] sm:$0xff] %v663
  %676 = vst [vmem:[#allocation2 + $0x2d8] sm:$0xff] %v664
  %677 = vst [vmem:[#allocation2 + $0x2e0] sm:$0xff] %v665
  %678 = vst [vmem:[#allocation2 + $0x2e8] sm:$0xff] %v666
  %679 = vst [vmem:[#allocation2 + $0x2f0] sm:$0xff] %v667
  %680 = vst [vmem:[#allocation2 + $0x2f8] sm:$0xff] %v668
  %681 = vst [vmem:[#allocation2 + $0x300] sm:$0xff] %v669
  %682 = vst [vmem:[#allocation2 + $0x308] sm:$0xff] %v670
  %683 = vst [vmem:[#allocation2 + $0x310] sm:$0xff] %v671
  %684 = vst [vmem:[#allocation2 + $0x318] sm:$0xff] %v672
  %v685 = vld [vmem:[%s2] sm:$0xff]
  %v686 = vld [vmem:[%s2 + $0x8] sm:$0xff]
  %v687 = vld [vmem:[%s2 + $0x10] sm:$0xff]
  %v688 = vld [vmem:[%s2 + $0x18] sm:$0xff]
  %v689 = vld [vmem:[%s2 + $0x20] sm:$0xff]
  %v690 = vld [vmem:[%s2 + $0x28] sm:$0xff]
  %v691 = vld [vmem:[%s2 + $0x30] sm:$0xff]
  %v692 = vld [vmem:[%s2 + $0x38] sm:$0xff]
  %v693 = vld [vmem:[%s2 + $0x40] sm:$0xff]
  %v694 = vld [vmem:[%s2 + $0x48] sm:$0xff]
  %v695 = vld [vmem:[%s2 + $0x50] sm:$0xff]
  %v696 = vld [vmem:[%s2 + $0x58] sm:$0xff]
  %v697 = vld [vmem:[#allocation2] sm:$0xff]
  %v698 = vld [vmem:[#allocation2 + $0x8] sm:$0xff]
  %v699 = vld [vmem:[#allocation2 + $0x10] sm:$0xff]
  %v700 = vld [vmem:[#allocation2 + $0x18] sm:$0xff]
  %v701 = vld [vmem:[#allocation2 + $0x20] sm:$0xff]
  %v702 = vld [vmem:[#allocation2 + $0x28] sm:$0xff]
  %v703 = vld [vmem:[#allocation2 + $0x30] sm:$0xff]
  %v704 = vld [vmem:[#allocation2 + $0x38] sm:$0xff]
  %v705 = vld [vmem:[#allocation2 + $0x40] sm:$0xff]
  %v706 = vld [vmem:[#allocation2 + $0x48] sm:$0xff]
  %v707 = vld [vmem:[#allocation2 + $0x50] sm:$0xff]
  %v708 = vld [vmem:[#allocation2 + $0x58] sm:$0xff]
  %v709 = vld [vmem:[#allocation2 + $0x60] sm:$0xff]
  %v710 = vld [vmem:[#allocation2 + $0x68] sm:$0xff]
  %v711 = vld [vmem:[#allocation2 + $0x70] sm:$0xff]
  %v712 = vld [vmem:[#allocation2 + $0x78] sm:$0xff]
  %v713 = vld [vmem:[#allocation2 + $0x80] sm:$0xff]
  %v714 = vld [vmem:[#allocation2 + $0x88] sm:$0xff]
  %v715 = vld [vmem:[#allocation2 + $0x90] sm:$0xff]
  %v716 = vld [vmem:[#allocation2 + $0x98] sm:$0xff]
  %v717 = vld [vmem:[#allocation2 + $0xa0] sm:$0xff]
  %v718 = vld [vmem:[#allocation2 + $0xa8] sm:$0xff]
  %v719 = vld [vmem:[#allocation2 + $0xb0] sm:$0xff]
  %v720 = vld [vmem:[#allocation2 + $0xb8] sm:$0xff]
  %v721 = vld [vmem:[#allocation2 + $0xc0] sm:$0xff]
  %v722 = vld [vmem:[#allocation2 + $0xc8] sm:$0xff]
  %v723 = vld [vmem:[#allocation2 + $0xd0] sm:$0xff]
  %v724 = vld [vmem:[#allocation2 + $0xd8] sm:$0xff]
  %v725 = vld [vmem:[#allocation2 + $0xe0] sm:$0xff]
  %v726 = vld [vmem:[#allocation2 + $0xe8] sm:$0xff]
  %v727 = vld [vmem:[#allocation2 + $0xf0] sm:$0xff]
  %v728 = vld [vmem:[#allocation2 + $0xf8] sm:$0xff]
  %v729 = vld [vmem:[#allocation2 + $0x100] sm:$0xff]
  %v730 = vld [vmem:[#allocation2 + $0x108] sm:$0xff]
  %v731 = vld [vmem:[#allocation2 + $0x110] sm:$0xff]
  %v732 = vld [vmem:[#allocation2 + $0x118] sm:$0xff]
  %v733 = vld [vmem:[#allocation2 + $0x120] sm:$0xff]
  %v734 = vld [vmem:[#allocation2 + $0x128] sm:$0xff]
  %v735 = vld [vmem:[#allocation2 + $0x130] sm:$0xff]
  %v736 = vld [vmem:[#allocation2 + $0x138] sm:$0xff]
  %v737 = vld [vmem:[#allocation2 + $0x140] sm:$0xff]
  %v738 = vld [vmem:[#allocation2 + $0x148] sm:$0xff]
  %v739 = vld [vmem:[#allocation2 + $0x150] sm:$0xff]
  %v740 = vld [vmem:[#allocation2 + $0x158] sm:$0xff]
  %v741 = vld [vmem:[#allocation2 + $0x160] sm:$0xff]
  %v742 = vld [vmem:[#allocation2 + $0x168] sm:$0xff]
  %v743 = vld [vmem:[#allocation2 + $0x170] sm:$0xff]
  %v744 = vld [vmem:[#allocation2 + $0x178] sm:$0xff]
  %v745 = vld [vmem:[#allocation2 + $0x180] sm:$0xff]
  %v746 = vld [vmem:[#allocation2 + $0x188] sm:$0xff]
  %v747 = vld [vmem:[#allocation2 + $0x190] sm:$0xff]
  %v748 = vld [vmem:[#allocation2 + $0x198] sm:$0xff]
  %v749 = vld [vmem:[#allocation2 + $0x1a0] sm:$0xff]
  %v750 = vld [vmem:[#allocation2 + $0x1a8] sm:$0xff]
  %v751 = vld [vmem:[#allocation2 + $0x1b0] sm:$0xff]
  %v752 = vld [vmem:[#allocation2 + $0x1b8] sm:$0xff]
  %v753 = vld [vmem:[#allocation2 + $0x1c0] sm:$0xff]
  %v754 = vld [vmem:[#allocation2 + $0x1c8] sm:$0xff]
  %v755 = vld [vmem:[#allocation2 + $0x1d0] sm:$0xff]
  %v756 = vld [vmem:[#allocation2 + $0x1d8] sm:$0xff]
  %v757 = vld [vmem:[#allocation2 + $0x1e0] sm:$0xff]
  %v758 = vld [vmem:[#allocation2 + $0x1e8] sm:$0xff]
  %v759 = vld [vmem:[#allocation2 + $0x1f0] sm:$0xff]
  %v760 = vld [vmem:[#allocation2 + $0x1f8] sm:$0xff]
  %v761 = vld [vmem:[#allocation2 + $0x200] sm:$0xff]
  %v762 = vld [vmem:[#allocation2 + $0x208] sm:$0xff]
  %v763 = vld [vmem:[#allocation2 + $0x210] sm:$0xff]
  %v764 = vld [vmem:[#allocation2 + $0x218] sm:$0xff]
  %v765 = vld [vmem:[#allocation2 + $0x220] sm:$0xff]
  %v766 = vld [vmem:[#allocation2 + $0x228] sm:$0xff]
  %v767 = vld [vmem:[#allocation2 + $0x230] sm:$0xff]
  %v768 = vld [vmem:[#allocation2 + $0x238] sm:$0xff]
  %v769 = vld [vmem:[#allocation2 + $0x240] sm:$0xff]
  %v770 = vld [vmem:[#allocation2 + $0x248] sm:$0xff]
  %v771 = vld [vmem:[#allocation2 + $0x250] sm:$0xff]
  %v772 = vld [vmem:[#allocation2 + $0x258] sm:$0xff]
  %v773 = vld [vmem:[#allocation2 + $0x260] sm:$0xff]
  %v774 = vld [vmem:[#allocation2 + $0x268] sm:$0xff]
  %v775 = vld [vmem:[#allocation2 + $0x270] sm:$0xff]
  %v776 = vld [vmem:[#allocation2 + $0x278] sm:$0xff]
  %v777 = vld [vmem:[#allocation2 + $0x280] sm:$0xff]
  %v778 = vld [vmem:[#allocation2 + $0x288] sm:$0xff]
  %v779 = vld [vmem:[#allocation2 + $0x290] sm:$0xff]
  %v780 = vld [vmem:[#allocation2 + $0x298] sm:$0xff]
  %v781 = vld [vmem:[#allocation2 + $0x2a0] sm:$0xff]
  %v782 = vld [vmem:[#allocation2 + $0x2a8] sm:$0xff]
  %v783 = vld [vmem:[#allocation2 + $0x2b0] sm:$0xff]
  %v784 = vld [vmem:[#allocation2 + $0x2b8] sm:$0xff]
  %v785 = vld [vmem:[#allocation2 + $0x2c0] sm:$0xff]
  %v786 = vld [vmem:[#allocation2 + $0x2c8] sm:$0xff]
  %v787 = vld [vmem:[#allocation2 + $0x2d0] sm:$0xff]
  %v788 = vld [vmem:[#allocation2 + $0x2d8] sm:$0xff]
  %v789 = vld [vmem:[#allocation2 + $0x2e0] sm:$0xff]
  %v790 = vld [vmem:[#allocation2 + $0x2e8] sm:$0xff]
  %v791 = vld [vmem:[#allocation2 + $0x2f0] sm:$0xff]
  %v792 = vld [vmem:[#allocation2 + $0x2f8] sm:$0xff]
  %v793 = vld [vmem:[#allocation2 + $0x300] sm:$0xff]
  %v794 = vld [vmem:[#allocation2 + $0x308] sm:$0xff]
  %v795 = vld [vmem:[#allocation2 + $0x310] sm:$0xff]
  %v796 = vld [vmem:[#allocation2 + $0x318] sm:$0xff]
  %v797 = vld [vmem:[%s4] sm:$0xff]
  %v798 = vld [vmem:[%s4 + $0x8] sm:$0xff]
  %v799 = vld [vmem:[%s4 + $0x10] sm:$0xff]
  %v800 = vld [vmem:[%s4 + $0x18] sm:$0xff]
  %v801 = vld [vmem:[%s4 + $0x20] sm:$0xff]
  %v802 = vld [vmem:[%s4 + $0x28] sm:$0xff]
  %804 = vset.pattern.permute.xlu0 0
  %805 = vperm.xlu0 %804, %v797
  %v806 = vpop.permute.xlu0 %805
  %809 = vset.pattern.permute.xlu0 0
  %810 = vperm.xlu0 %809, %v798
  %v811 = vpop.permute.xlu0 %810
  %814 = vset.pattern.permute.xlu0 0
  %815 = vperm.xlu0 %814, %v799
  %v816 = vpop.permute.xlu0 %815
  %819 = vset.pattern.permute.xlu0 0
  %820 = vperm.xlu0 %819, %v800
  %v821 = vpop.permute.xlu0 %820
  %824 = vset.pattern.permute.xlu0 0
  %825 = vperm.xlu0 %824, %v801
  %v826 = vpop.permute.xlu0 %825
  %829 = vset.pattern.permute.xlu0 0
  %830 = vperm.xlu0 %829, %v802
  %v831 = vpop.permute.xlu0 %830
  %vm833 = vcmask 588800
  %v835 = vsel %vm833, %v686, 0
  %v838 = vsel %vm833, %v688, 0
  %v841 = vsel %vm833, %v690, 0
  %v844 = vsel %vm833, %v692, 0
  %v847 = vsel %vm833, %v694, 0
  %v850 = vsel %vm833, %v696, 0
  %852 = vmatprep.subr.mxu0 %v698
  %853 = vmatpush1.msra.mxu0 %v697
  %854 = vmatprep.subr.mxu0 %v702
  %855 = vmatpush1.msra.mxu0 %v701
  %856 = vmatprep.subr.mxu0 %v706
  %857 = vmatpush1.msra.mxu0 %v705
  %858 = vmatprep.subr.mxu0 %v710
  %859 = vmatpush1.msra.mxu0 %v709
  %860 = vmatprep.subr.mxu0 %v714
  %861 = vmatpush1.msra.mxu0 %v713
  %862 = vmatprep.subr.mxu0 %v718
  %863 = vmatpush1.msra.mxu0 %v717
  %864 = vmatprep.subr.mxu0 %v722
  %865 = vmatpush1.msra.mxu0 %v721
  %866 = vmatprep.subr.mxu0 %v726
  %867 = vmatpush1.msra.mxu0 %v725
  %868 = vmatprep.subr.mxu0 %v730
  %869 = vmatpush1.msra.mxu0 %v729
  %870 = vmatprep.subr.mxu0 %v734
  %871 = vmatpush1.msra.mxu0 %v733
  %872 = vmatprep.subr.mxu0 %v738
  %873 = vmatpush1.msra.mxu0 %v737
  %874 = vmatprep.subr.mxu0 %v742
  %875 = vmatpush1.msra.mxu0 %v741
  %876 = vmatprep.subr.mxu0 %v746
  %877 = vmatpush1.msra.mxu0 %v745
  %878 = vmatprep.subr.mxu0 %v750
  %879 = vmatpush1.msra.mxu0 %v749
  %880 = vmatprep.subr.mxu0 %v754
  %881 = vmatpush1.msra.mxu0 %v753
  %882 = vmatprep.subr.mxu0 %v758
  %883 = vmatpush1.msra.mxu0 %v757
  %884 = vmatprep.subr.mxu0 %v762
  %885 = vmatpush1.msra.mxu0 %v761
  %886 = vmatprep.subr.mxu0 %v766
  %887 = vmatpush1.msra.mxu0 %v765
  %888 = vmatprep.subr.mxu0 %v770
  %889 = vmatpush1.msra.mxu0 %v769
  %890 = vmatprep.subr.mxu0 %v774
  %891 = vmatpush1.msra.mxu0 %v773
  %892 = vmatprep.subr.mxu0 %v778
  %893 = vmatpush1.msra.mxu0 %v777
  %894 = vmatprep.subr.mxu0 %v782
  %895 = vmatpush1.msra.mxu0 %v781
  %896 = vmatprep.subr.mxu0 %v786
  %897 = vmatpush1.msra.mxu0 %v785
  %898 = vmatprep.subr.mxu0 %v790
  %899 = vmatpush1.msra.mxu0 %v789
  %900 = vmatprep.subr.mxu0 %v794
  %901 = vmatpush1.msra.mxu0 %v793
  %902 = vmatprep.subr.mxu0 0.0
  %903 = vmatpush1.msra.mxu0 0.0
  %904 = vmatprep.subr.mxu0 0.0
  %905 = vmatpush1.msra.mxu0 0.0
  %906 = vmatprep.subr.mxu0 0.0
  %907 = vmatpush1.msra.mxu0 0.0
  %908 = vmatprep.subr.mxu0 0.0
  %909 = vmatpush1.msra.mxu0 0.0
  %910 = vmatprep.subr.mxu0 0.0
  %911 = vmatpush1.msra.mxu0 0.0
  %912 = vmatprep.subr.mxu0 0.0
  %913 = vmatpush1.msra.mxu0 0.0
  %914 = vmatprep.subr.mxu0 0.0
  %915 = vmatpush1.msra.mxu0 0.0
  %916 = vmatprep.mubr.f32.mxu0 %v835
  %917 = vmatmul.mubr.f32.gmra.mrb[0].mxu0 %v685
  %v918 = vpop.f32.mrb[0].mxu0
  %v919 = vadd.f32 %v806, %v918
  %v920 = vpop.f32.mrb[0].mxu0
  %v921 = vadd.f32 %v806, %v920
  %922 = vmatprep.mubr.f32.mxu0 %v838
  %923 = vmatmul.mubr.f32.gmra.mrb[0].mxu0 %v687
  %v924 = vpop.f32.mrb[0].mxu0
  %v925 = vadd.f32 %v811, %v924
  %v926 = vpop.f32.mrb[0].mxu0
  %v927 = vadd.f32 %v811, %v926
  %928 = vmatprep.mubr.f32.mxu0 %v841
  %929 = vmatmul.mubr.f32.gmra.mrb[0].mxu0 %v689
  %v930 = vpop.f32.mrb[0].mxu0
  %v931 = vadd.f32 %v816, %v930
  %v932 = vpop.f32.mrb[0].mxu0
  %v933 = vadd.f32 %v816, %v932
  %934 = vmatprep.mubr.f32.mxu0 %v844
  %935 = vmatmul.mubr.f32.gmra.mrb[0].mxu0 %v691
  %v936 = vpop.f32.mrb[0].mxu0
  %v937 = vadd.f32 %v821, %v936
  %v938 = vpop.f32.mrb[0].mxu0
  %v939 = vadd.f32 %v821, %v938
  %940 = vmatprep.mubr.f32.mxu0 %v847
  %941 = vmatmul.mubr.f32.gmra.mrb[0].mxu0 %v693
  %v942 = vpop.f32.mrb[0].mxu0
  %v943 = vadd.f32 %v826, %v942
  %v944 = vpop.f32.mrb[0].mxu0
  %v945 = vadd.f32 %v826, %v944
  %946 = vmatprep.mubr.f32.mxu0 %v850
  %947 = vmatmul.mubr.f32.gmra.mrb[0].mxu0 %v695
  %v948 = vpop.f32.mrb[0].mxu0
  %v949 = vadd.f32 %v831, %v948
  %v950 = vpop.f32.mrb[0].mxu0
  %v951 = vadd.f32 %v831, %v950
  %952 = vdwg.mxu0
  %953 = vmatprep.subr.mxu0 %v700
  %954 = vmatpush1.msra.mxu0 %v699
  %955 = vmatprep.subr.mxu0 %v704
  %956 = vmatpush1.msra.mxu0 %v703
  %957 = vmatprep.subr.mxu0 %v708
  %958 = vmatpush1.msra.mxu0 %v707
  %959 = vmatprep.subr.mxu0 %v712
  %960 = vmatpush1.msra.mxu0 %v711
  %961 = vmatprep.subr.mxu0 %v716
  %962 = vmatpush1.msra.mxu0 %v715
  %963 = vmatprep.subr.mxu0 %v720
  %964 = vmatpush1.msra.mxu0 %v719
  %965 = vmatprep.subr.mxu0 %v724
  %966 = vmatpush1.msra.mxu0 %v723
  %967 = vmatprep.subr.mxu0 %v728
  %968 = vmatpush1.msra.mxu0 %v727
  %969 = vmatprep.subr.mxu0 %v732
  %970 = vmatpush1.msra.mxu0 %v731
  %971 = vmatprep.subr.mxu0 %v736
  %972 = vmatpush1.msra.mxu0 %v735
  %973 = vmatprep.subr.mxu0 %v740
  %974 = vmatpush1.msra.mxu0 %v739
  %975 = vmatprep.subr.mxu0 %v744
  %976 = vmatpush1.msra.mxu0 %v743
  %977 = vmatprep.subr.mxu0 %v748
  %978 = vmatpush1.msra.mxu0 %v747
  %979 = vmatprep.subr.mxu0 %v752
  %980 = vmatpush1.msra.mxu0 %v751
  %981 = vmatprep.subr.mxu0 %v756
  %982 = vmatpush1.msra.mxu0 %v755
  %983 = vmatprep.subr.mxu0 %v760
  %984 = vmatpush1.msra.mxu0 %v759
  %985 = vmatprep.subr.mxu0 %v764
  %986 = vmatpush1.msra.mxu0 %v763
  %987 = vmatprep.subr.mxu0 %v768
  %988 = vmatpush1.msra.mxu0 %v767
  %989 = vmatprep.subr.mxu0 %v772
  %990 = vmatpush1.msra.mxu0 %v771
  %991 = vmatprep.subr.mxu0 %v776
  %992 = vmatpush1.msra.mxu0 %v775
  %993 = vmatprep.subr.mxu0 %v780
  %994 = vmatpush1.msra.mxu0 %v779
  %995 = vmatprep.subr.mxu0 %v784
  %996 = vmatpush1.msra.mxu0 %v783
  %997 = vmatprep.subr.mxu0 %v788
  %998 = vmatpush1.msra.mxu0 %v787
  %999 = vmatprep.subr.mxu0 %v792
  %1000 = vmatpush1.msra.mxu0 %v791
  %1001 = vmatprep.subr.mxu0 %v796
  %1002 = vmatpush1.msra.mxu0 %v795
  %1003 = vmatprep.subr.mxu0 0.0
  %1004 = vmatpush1.msra.mxu0 0.0
  %1005 = vmatprep.subr.mxu0 0.0
  %1006 = vmatpush1.msra.mxu0 0.0
  %1007 = vmatprep.subr.mxu0 0.0
  %1008 = vmatpush1.msra.mxu0 0.0
  %1009 = vmatprep.subr.mxu0 0.0
  %1010 = vmatpush1.msra.mxu0 0.0
  %1011 = vmatprep.subr.mxu0 0.0
  %1012 = vmatpush1.msra.mxu0 0.0
  %1013 = vmatprep.subr.mxu0 0.0
  %1014 = vmatpush1.msra.mxu0 0.0
  %1015 = vmatprep.subr.mxu0 0.0
  %1016 = vmatpush1.msra.mxu0 0.0
  %1017 = vmatprep.mubr.f32.mxu0 %v835
  %1018 = vmatmul.mubr.f32.gmra.mrb[0].mxu0 %v685
  %v1019 = vpop.f32.mrb[0].mxu0
  %v1020 = vadd.f32 %v806, %v1019
  %v1021 = vpop.f32.mrb[0].mxu0
  %v1022 = vadd.f32 %v806, %v1021
  %1023 = vmatprep.mubr.f32.mxu0 %v838
  %1024 = vmatmul.mubr.f32.gmra.mrb[0].mxu0 %v687
  %v1025 = vpop.f32.mrb[0].mxu0
  %v1026 = vadd.f32 %v811, %v1025
  %v1027 = vpop.f32.mrb[0].mxu0
  %v1028 = vadd.f32 %v811, %v1027
  %1029 = vmatprep.mubr.f32.mxu0 %v841
  %1030 = vmatmul.mubr.f32.gmra.mrb[0].mxu0 %v689
  %v1031 = vpop.f32.mrb[0].mxu0
  %v1032 = vadd.f32 %v816, %v1031
  %v1033 = vpop.f32.mrb[0].mxu0
  %v1034 = vadd.f32 %v816, %v1033
  %1035 = vmatprep.mubr.f32.mxu0 %v844
  %1036 = vmatmul.mubr.f32.gmra.mrb[0].mxu0 %v691
  %v1037 = vpop.f32.mrb[0].mxu0
  %v1038 = vadd.f32 %v821, %v1037
  %v1039 = vpop.f32.mrb[0].mxu0
  %v1040 = vadd.f32 %v821, %v1039
  %1041 = vmatprep.mubr.f32.mxu0 %v847
  %1042 = vmatmul.mubr.f32.gmra.mrb[0].mxu0 %v693
  %v1043 = vpop.f32.mrb[0].mxu0
  %v1044 = vadd.f32 %v826, %v1043
  %v1045 = vpop.f32.mrb[0].mxu0
  %v1046 = vadd.f32 %v826, %v1045
  %1047 = vmatprep.mubr.f32.mxu0 %v850
  %1048 = vmatmul.mubr.f32.gmra.mrb[0].mxu0 %v695
  %v1049 = vpop.f32.mrb[0].mxu0
  %v1050 = vadd.f32 %v831, %v1049
  %v1051 = vpop.f32.mrb[0].mxu0
  %v1052 = vadd.f32 %v831, %v1051
  %1053 = vdwg.mxu0
  %v1054 = vxor.u32 %v919, 2147483648
  %v1055 = vxor.u32 %v921, 2147483648
  %v1056 = vxor.u32 %v1020, 2147483648
  %v1057 = vxor.u32 %v1022, 2147483648
  %v1058 = vxor.u32 %v925, 2147483648
  %v1059 = vxor.u32 %v927, 2147483648
  %v1060 = vxor.u32 %v1026, 2147483648
  %v1061 = vxor.u32 %v1028, 2147483648
  %v1062 = vmul.f32 %v1054, 1.442695
  %v1063 = vpow.pop %v1062
  %v1064 = vmul.f32 %v1055, 1.442695
  %v1065 = vpow.pop %v1064
  %v1066 = vmul.f32 %v1056, 1.442695
  %v1067 = vpow.pop %v1066
  %v1068 = vmul.f32 %v1057, 1.442695
  %v1069 = vpow.pop %v1068
  %v1070 = vmul.f32 %v1058, 1.442695
  %v1071 = vpow.pop %v1070
  %v1072 = vmul.f32 %v1059, 1.442695
  %v1073 = vpow.pop %v1072
  %v1074 = vmul.f32 %v1060, 1.442695
  %v1075 = vpow.pop %v1074
  %v1076 = vmul.f32 %v1061, 1.442695
  %v1077 = vpow.pop %v1076
  %v1078 = vadd.f32 %v1063, 1.0
  %v1079 = vadd.f32 %v1065, 1.0
  %v1080 = vadd.f32 %v1067, 1.0
  %v1081 = vadd.f32 %v1069, 1.0
  %v1082 = vadd.f32 %v1071, 1.0
  %v1083 = vadd.f32 %v1073, 1.0
  %v1084 = vadd.f32 %v1075, 1.0
  %v1085 = vadd.f32 %v1077, 1.0
  %v1086 = vrcp.pop %v1078
  %v1087 = vmul.f32 1.0, %v1086
  %v1088 = vrcp.pop %v1079
  %v1089 = vmul.f32 1.0, %v1088
  %v1090 = vrcp.pop %v1080
  %v1091 = vmul.f32 1.0, %v1090
  %v1092 = vrcp.pop %v1081
  %v1093 = vmul.f32 1.0, %v1092
  %v1094 = vrcp.pop %v1082
  %v1095 = vmul.f32 1.0, %v1094
  %v1096 = vrcp.pop %v1083
  %v1097 = vmul.f32 1.0, %v1096
  %v1098 = vrcp.pop %v1084
  %v1099 = vmul.f32 1.0, %v1098
  %v1100 = vrcp.pop %v1085
  %v1101 = vmul.f32 1.0, %v1100
  %v1102 = vxor.u32 %v931, 2147483648
  %v1103 = vxor.u32 %v933, 2147483648
  %v1104 = vxor.u32 %v1032, 2147483648
  %v1105 = vxor.u32 %v1034, 2147483648
  %v1106 = vxor.u32 %v937, 2147483648
  %v1107 = vxor.u32 %v939, 2147483648
  %v1108 = vxor.u32 %v1038, 2147483648
  %v1109 = vxor.u32 %v1040, 2147483648
  %v1110 = vmul.f32 %v1102, 1.442695
  %v1111 = vpow.pop %v1110
  %v1112 = vmul.f32 %v1103, 1.442695
  %v1113 = vpow.pop %v1112
  %v1114 = vmul.f32 %v1104, 1.442695
  %v1115 = vpow.pop %v1114
  %v1116 = vmul.f32 %v1105, 1.442695
  %v1117 = vpow.pop %v1116
  %v1118 = vmul.f32 %v1106, 1.442695
  %v1119 = vpow.pop %v1118
  %v1120 = vmul.f32 %v1107, 1.442695
  %v1121 = vpow.pop %v1120
  %v1122 = vmul.f32 %v1108, 1.442695
  %v1123 = vpow.pop %v1122
  %v1124 = vmul.f32 %v1109, 1.442695
  %v1125 = vpow.pop %v1124
  %v1126 = vadd.f32 %v1111, 1.0
  %v1127 = vadd.f32 %v1113, 1.0
  %v1128 = vadd.f32 %v1115, 1.0
  %v1129 = vadd.f32 %v1117, 1.0
  %v1130 = vadd.f32 %v1119, 1.0
  %v1131 = vadd.f32 %v1121, 1.0
  %v1132 = vadd.f32 %v1123, 1.0
  %v1133 = vadd.f32 %v1125, 1.0
  %v1134 = vrcp.pop %v1126
  %v1135 = vmul.f32 1.0, %v1134
  %v1136 = vrcp.pop %v1127
  %v1137 = vmul.f32 1.0, %v1136
  %v1138 = vrcp.pop %v1128
  %v1139 = vmul.f32 1.0, %v1138
  %v1140 = vrcp.pop %v1129
  %v1141 = vmul.f32 1.0, %v1140
  %v1142 = vrcp.pop %v1130
  %v1143 = vmul.f32 1.0, %v1142
  %v1144 = vrcp.pop %v1131
  %v1145 = vmul.f32 1.0, %v1144
  %v1146 = vrcp.pop %v1132
  %v1147 = vmul.f32 1.0, %v1146
  %v1148 = vrcp.pop %v1133
  %v1149 = vmul.f32 1.0, %v1148
  %v1150 = vmul.f32 %v1135, %v20
  %v1151 = vmul.f32 %v1137, %v21
  %v1152 = vmul.f32 %v1139, %v22
  %v1153 = vmul.f32 %v1141, %v23
  %v1154 = vmul.f32 %v1143, %v24
  %v1155 = vmul.f32 %v1145, %v25
  %v1156 = vmul.f32 %v1147, %v26
  %v1157 = vmul.f32 %v1149, %v27
  %1160 = vrot.lane.b32.xlu0 %v1153, 2
  %v1161 = vpop.permute.xlu0 %1160
  %1162 = vrot.lane.b32.xlu0 %v1157, 2
  %v1163 = vpop.permute.xlu0 %1162
  %1172 = vrot.lane.b32.xlu0 %v1150, 2
  %v1173 = vpop.permute.xlu0 %1172
  %1174 = vrot.lane.b32.xlu0 %v1151, 2
  %v1175 = vpop.permute.xlu0 %1174
  %1176 = vrot.lane.b32.xlu0 %v1152, 2
  %v1177 = vpop.permute.xlu0 %1176
  %1178 = vrot.lane.b32.xlu0 %v1154, 2
  %v1179 = vpop.permute.xlu0 %1178
  %1180 = vrot.lane.b32.xlu0 %v1155, 2
  %v1181 = vpop.permute.xlu0 %1180
  %1182 = vrot.lane.b32.xlu0 %v1156, 2
  %v1183 = vpop.permute.xlu0 %1182
  %v1184 = vsel %vm123, %v1173, %v1175
  %v1185 = vsel %vm123, %v1175, %v1177
  %v1186 = vsel %vm123, %v1177, %v1161
  %v1187 = vsel %vm123, %v1179, %v1181
  %v1188 = vsel %vm123, %v1181, %v1183
  %v1189 = vsel %vm123, %v1183, %v1163
  %v1198 = vsel %vm123, %v1161, %v1173
  %v1199 = vsel %vm123, %v1163, %v1179
  %v1200 = vsel %vm144, %v1198, 0.0
  %v1201 = vsel %vm145, %v1184, 0.0
  %v1202 = vsel %vm146, %v1185, 0.0
  %v1203 = vsel %vm147, %v1186, 0.0
  %v1204 = vsel %vm144, %v1199, 0.0
  %v1205 = vsel %vm145, %v1187, 0.0
  %v1206 = vsel %vm146, %v1188, 0.0
  %v1207 = vsel %vm147, %v1189, 0.0
  %1208 = vst [vmem:[#allocation2] sm:$0xff] %v1200
  %1209 = vst [vmem:[#allocation2 + $0x8] sm:$0xff] %v1201
  %1210 = vst [vmem:[#allocation2 + $0x10] sm:$0xff] %v1202
  %1211 = vst [vmem:[#allocation2 + $0x18] sm:$0xff] %v1203
  %1212 = vst [vmem:[#allocation2 + $0x20] sm:$0xff] %v1204
  %1213 = vst [vmem:[#allocation2 + $0x28] sm:$0xff] %v1205
  %1214 = vst [vmem:[#allocation2 + $0x30] sm:$0xff] %v1206
  %1215 = vst [vmem:[#allocation2 + $0x38] sm:$0xff] %v1207
  %1216 = vrot.lane.b32.xlu0 %v1153, 1
  %v1217 = vpop.permute.xlu0 %1216
  %1218 = vrot.lane.b32.xlu0 %v1157, 1
  %v1219 = vpop.permute.xlu0 %1218
  %1222 = vrot.lane.b32.xlu0 %v1150, 1
  %v1223 = vpop.permute.xlu0 %1222
  %1224 = vrot.lane.b32.xlu0 %v1151, 1
  %v1225 = vpop.permute.xlu0 %1224
  %1226 = vrot.lane.b32.xlu0 %v1152, 1
  %v1227 = vpop.permute.xlu0 %1226
  %1228 = vrot.lane.b32.xlu0 %v1154, 1
  %v1229 = vpop.permute.xlu0 %1228
  %1230 = vrot.lane.b32.xlu0 %v1155, 1
  %v1231 = vpop.permute.xlu0 %1230
  %1232 = vrot.lane.b32.xlu0 %v1156, 1
  %v1233 = vpop.permute.xlu0 %1232
  %v1234 = vsel %vm182, %v1223, %v1225
  %v1235 = vsel %vm182, %v1225, %v1227
  %v1236 = vsel %vm182, %v1227, %v1217
  %v1237 = vsel %vm182, %v1229, %v1231
  %v1238 = vsel %vm182, %v1231, %v1233
  %v1239 = vsel %vm182, %v1233, %v1219
  %v1248 = vsel %vm182, %v1217, %v1223
  %v1249 = vsel %vm182, %v1219, %v1229
  %v1250 = vsel %vm203, %v1248, 0.0
  %v1251 = vsel %vm204, %v1234, 0.0
  %v1252 = vsel %vm205, %v1235, 0.0
  %v1253 = vsel %vm206, %v1236, 0.0
  %v1254 = vsel %vm203, %v1249, 0.0
  %v1255 = vsel %vm204, %v1237, 0.0
  %v1256 = vsel %vm205, %v1238, 0.0
  %v1257 = vsel %vm206, %v1239, 0.0
  %1258 = vst [vmem:[#allocation2 + $0x40] sm:$0xff] %v1250
  %1259 = vst [vmem:[#allocation2 + $0x48] sm:$0xff] %v1251
  %1260 = vst [vmem:[#allocation2 + $0x50] sm:$0xff] %v1252
  %1261 = vst [vmem:[#allocation2 + $0x58] sm:$0xff] %v1253
  %1262 = vst [vmem:[#allocation2 + $0x60] sm:$0xff] %v1254
  %1263 = vst [vmem:[#allocation2 + $0x68] sm:$0xff] %v1255
  %1264 = vst [vmem:[#allocation2 + $0x70] sm:$0xff] %v1256
  %1265 = vst [vmem:[#allocation2 + $0x78] sm:$0xff] %v1257
  %1266 = vst [vmem:[#allocation2 + $0x80] sm:$0xff] %v1150
  %1267 = vst [vmem:[#allocation2 + $0x88] sm:$0xff] %v1151
  %1268 = vst [vmem:[#allocation2 + $0x90] sm:$0xff] %v1152
  %1269 = vst [vmem:[#allocation2 + $0x98] sm:$0xff] %v1153
  %1270 = vst [vmem:[#allocation2 + $0xa0] sm:$0xff] %v1154
  %1271 = vst [vmem:[#allocation2 + $0xa8] sm:$0xff] %v1155
  %1272 = vst [vmem:[#allocation2 + $0xb0] sm:$0xff] %v1156
  %1273 = vst [vmem:[#allocation2 + $0xb8] sm:$0xff] %v1157
  %1274 = vrot.lane.b32.xlu0 %v1150, 127
  %v1275 = vpop.permute.xlu0 %1274
  %1276 = vrot.lane.b32.xlu0 %v1151, 127
  %v1277 = vpop.permute.xlu0 %1276
  %1278 = vrot.lane.b32.xlu0 %v1152, 127
  %v1279 = vpop.permute.xlu0 %1278
  %1280 = vrot.lane.b32.xlu0 %v1153, 127
  %v1281 = vpop.permute.xlu0 %1280
  %1282 = vrot.lane.b32.xlu0 %v1154, 127
  %v1283 = vpop.permute.xlu0 %1282
  %1284 = vrot.lane.b32.xlu0 %v1155, 127
  %v1285 = vpop.permute.xlu0 %1284
  %1286 = vrot.lane.b32.xlu0 %v1156, 127
  %v1287 = vpop.permute.xlu0 %1286
  %1288 = vrot.lane.b32.xlu0 %v1157, 127
  %v1289 = vpop.permute.xlu0 %1288
  %v1290 = vsel %vm247, %v1275, %v1277
  %v1291 = vsel %vm247, %v1277, %v1279
  %v1292 = vsel %vm247, %v1279, %v1281
  %v1293 = vsel %vm247, %v1283, %v1285
  %v1294 = vsel %vm247, %v1285, %v1287
  %v1295 = vsel %vm247, %v1287, %v1289
  %v1306 = vsel %vm247, %v1281, %v1275
  %v1307 = vsel %vm247, %v1289, %v1283
  %v1308 = vsel %vm270, %v1290, 0.0
  %v1309 = vsel %vm271, %v1291, 0.0
  %v1310 = vsel %vm272, %v1292, 0.0
  %v1311 = vsel %vm273, %v1306, 0.0
  %v1312 = vsel %vm270, %v1293, 0.0
  %v1313 = vsel %vm271, %v1294, 0.0
  %v1314 = vsel %vm272, %v1295, 0.0
  %v1315 = vsel %vm273, %v1307, 0.0
  %1316 = vst [vmem:[#allocation2 + $0xc0] sm:$0xff] %v1308
  %1317 = vst [vmem:[#allocation2 + $0xc8] sm:$0xff] %v1309
  %1318 = vst [vmem:[#allocation2 + $0xd0] sm:$0xff] %v1310
  %1319 = vst [vmem:[#allocation2 + $0xd8] sm:$0xff] %v1311
  %1320 = vst [vmem:[#allocation2 + $0xe0] sm:$0xff] %v1312
  %1321 = vst [vmem:[#allocation2 + $0xe8] sm:$0xff] %v1313
  %1322 = vst [vmem:[#allocation2 + $0xf0] sm:$0xff] %v1314
  %1323 = vst [vmem:[#allocation2 + $0xf8] sm:$0xff] %v1315
  %1324 = vrot.lane.b32.xlu0 %v1150, 126
  %v1325 = vpop.permute.xlu0 %1324
  %1326 = vrot.lane.b32.xlu0 %v1151, 126
  %v1327 = vpop.permute.xlu0 %1326
  %1328 = vrot.lane.b32.xlu0 %v1152, 126
  %v1329 = vpop.permute.xlu0 %1328
  %1330 = vrot.lane.b32.xlu0 %v1153, 126
  %v1331 = vpop.permute.xlu0 %1330
  %1332 = vrot.lane.b32.xlu0 %v1154, 126
  %v1333 = vpop.permute.xlu0 %1332
  %1334 = vrot.lane.b32.xlu0 %v1155, 126
  %v1335 = vpop.permute.xlu0 %1334
  %1336 = vrot.lane.b32.xlu0 %v1156, 126
  %v1337 = vpop.permute.xlu0 %1336
  %1338 = vrot.lane.b32.xlu0 %v1157, 126
  %v1339 = vpop.permute.xlu0 %1338
  %v1340 = vsel %vm306, %v1325, %v1327
  %v1341 = vsel %vm306, %v1327, %v1329
  %v1342 = vsel %vm306, %v1329, %v1331
  %v1343 = vsel %vm306, %v1333, %v1335
  %v1344 = vsel %vm306, %v1335, %v1337
  %v1345 = vsel %vm306, %v1337, %v1339
  %v1356 = vsel %vm306, %v1331, %v1325
  %v1357 = vsel %vm306, %v1339, %v1333
  %v1358 = vsel %vm329, %v1340, 0.0
  %v1359 = vsel %vm330, %v1341, 0.0
  %v1360 = vsel %vm331, %v1342, 0.0
  %v1361 = vsel %vm332, %v1356, 0.0
  %v1362 = vsel %vm329, %v1343, 0.0
  %v1363 = vsel %vm330, %v1344, 0.0
  %v1364 = vsel %vm331, %v1345, 0.0
  %v1365 = vsel %vm332, %v1357, 0.0
  %1366 = vst [vmem:[#allocation2 + $0x100] sm:$0xff] %v1358
  %1367 = vst [vmem:[#allocation2 + $0x108] sm:$0xff] %v1359
  %1368 = vst [vmem:[#allocation2 + $0x110] sm:$0xff] %v1360
  %1369 = vst [vmem:[#allocation2 + $0x118] sm:$0xff] %v1361
  %1370 = vst [vmem:[#allocation2 + $0x120] sm:$0xff] %v1362
  %1371 = vst [vmem:[#allocation2 + $0x128] sm:$0xff] %v1363
  %1372 = vst [vmem:[#allocation2 + $0x130] sm:$0xff] %v1364
  %1373 = vst [vmem:[#allocation2 + $0x138] sm:$0xff] %v1365
  %v1374 = vld [vmem:[%s3] sm:$0xff]
  %v1375 = vld [vmem:[%s3 + $0x8] sm:$0xff]
  %v1376 = vld [vmem:[#allocation2] sm:$0xff]
  %v1377 = vld [vmem:[#allocation2 + $0x8] sm:$0xff]
  %v1378 = vld [vmem:[#allocation2 + $0x10] sm:$0xff]
  %v1379 = vld [vmem:[#allocation2 + $0x18] sm:$0xff]
  %v1380 = vld [vmem:[#allocation2 + $0x20] sm:$0xff]
  %v1381 = vld [vmem:[#allocation2 + $0x28] sm:$0xff]
  %v1382 = vld [vmem:[#allocation2 + $0x30] sm:$0xff]
  %v1383 = vld [vmem:[#allocation2 + $0x38] sm:$0xff]
  %v1384 = vld [vmem:[#allocation2 + $0x40] sm:$0xff]
  %v1385 = vld [vmem:[#allocation2 + $0x48] sm:$0xff]
  %v1386 = vld [vmem:[#allocation2 + $0x50] sm:$0xff]
  %v1387 = vld [vmem:[#allocation2 + $0x58] sm:$0xff]
  %v1388 = vld [vmem:[#allocation2 + $0x60] sm:$0xff]
  %v1389 = vld [vmem:[#allocation2 + $0x68] sm:$0xff]
  %v1390 = vld [vmem:[#allocation2 + $0x70] sm:$0xff]
  %v1391 = vld [vmem:[#allocation2 + $0x78] sm:$0xff]
  %v1392 = vld [vmem:[#allocation2 + $0x80] sm:$0xff]
  %v1393 = vld [vmem:[#allocation2 + $0x88] sm:$0xff]
  %v1394 = vld [vmem:[#allocation2 + $0x90] sm:$0xff]
  %v1395 = vld [vmem:[#allocation2 + $0x98] sm:$0xff]
  %v1396 = vld [vmem:[#allocation2 + $0xa0] sm:$0xff]
  %v1397 = vld [vmem:[#allocation2 + $0xa8] sm:$0xff]
  %v1398 = vld [vmem:[#allocation2 + $0xb0] sm:$0xff]
  %v1399 = vld [vmem:[#allocation2 + $0xb8] sm:$0xff]
  %v1400 = vld [vmem:[#allocation2 + $0xc0] sm:$0xff]
  %v1401 = vld [vmem:[#allocation2 + $0xc8] sm:$0xff]
  %v1402 = vld [vmem:[#allocation2 + $0xd0] sm:$0xff]
  %v1403 = vld [vmem:[#allocation2 + $0xd8] sm:$0xff]
  %v1404 = vld [vmem:[#allocation2 + $0xe0] sm:$0xff]
  %v1405 = vld [vmem:[#allocation2 + $0xe8] sm:$0xff]
  %v1406 = vld [vmem:[#allocation2 + $0xf0] sm:$0xff]
  %v1407 = vld [vmem:[#allocation2 + $0xf8] sm:$0xff]
  %v1408 = vld [vmem:[#allocation2 + $0x100] sm:$0xff]
  %v1409 = vld [vmem:[#allocation2 + $0x108] sm:$0xff]
  %v1410 = vld [vmem:[#allocation2 + $0x110] sm:$0xff]
  %v1411 = vld [vmem:[#allocation2 + $0x118] sm:$0xff]
  %v1412 = vld [vmem:[#allocation2 + $0x120] sm:$0xff]
  %v1413 = vld [vmem:[#allocation2 + $0x128] sm:$0xff]
  %v1414 = vld [vmem:[#allocation2 + $0x130] sm:$0xff]
  %v1415 = vld [vmem:[#allocation2 + $0x138] sm:$0xff]
  %vm1416 = vcmask 654336
  %v1418 = vsel %vm1416, %v1374, 0
  %v1421 = vsel %vm1416, %v1375, 0
  %1423 = vmatprep.subr.mxu0 %v1377
  %1424 = vmatpush1.msra.mxu0 %v1376
  %1425 = vmatprep.subr.mxu0 %v1381
  %1426 = vmatpush1.msra.mxu0 %v1380
  %1427 = vmatprep.subr.mxu0 %v1385
  %1428 = vmatpush1.msra.mxu0 %v1384
  %1429 = vmatprep.subr.mxu0 %v1389
  %1430 = vmatpush1.msra.mxu0 %v1388
  %1431 = vmatprep.subr.mxu0 %v1393
  %1432 = vmatpush1.msra.mxu0 %v1392
  %1433 = vmatprep.subr.mxu0 %v1397
  %1434 = vmatpush1.msra.mxu0 %v1396
  %1435 = vmatprep.subr.mxu0 %v1401
  %1436 = vmatpush1.msra.mxu0 %v1400
  %1437 = vmatprep.subr.mxu0 %v1405
  %1438 = vmatpush1.msra.mxu0 %v1404
  %1439 = vmatprep.subr.mxu0 %v1409
  %1440 = vmatpush1.msra.mxu0 %v1408
  %1441 = vmatprep.subr.mxu0 %v1413
  %1442 = vmatpush1.msra.mxu0 %v1412
  %1443 = vmatprep.subr.mxu0 0.0
  %1444 = vmatpush1.msra.mxu0 0.0
  %1445 = vmatprep.subr.mxu0 0.0
  %1446 = vmatpush1.msra.mxu0 0.0
  %1447 = vmatprep.subr.mxu0 0.0
  %1448 = vmatpush1.msra.mxu0 0.0
  %1449 = vmatprep.subr.mxu0 0.0
  %1450 = vmatpush1.msra.mxu0 0.0
  %1451 = vmatprep.subr.mxu0 0.0
  %1452 = vmatpush1.msra.mxu0 0.0
  %1453 = vmatprep.subr.mxu0 0.0
  %1454 = vmatpush1.msra.mxu0 0.0
  %1455 = vmatprep.subr.mxu0 0.0
  %1456 = vmatpush1.msra.mxu0 0.0
  %1457 = vmatprep.subr.mxu0 0.0
  %1458 = vmatpush1.msra.mxu0 0.0
  %1459 = vmatprep.subr.mxu0 0.0
  %1460 = vmatpush1.msra.mxu0 0.0
  %1461 = vmatprep.subr.mxu0 0.0
  %1462 = vmatpush1.msra.mxu0 0.0
  %1463 = vmatprep.subr.mxu0 0.0
  %1464 = vmatpush1.msra.mxu0 0.0
  %1465 = vmatprep.subr.mxu0 0.0
  %1466 = vmatpush1.msra.mxu0 0.0
  %1467 = vmatprep.subr.mxu0 0.0
  %1468 = vmatpush1.msra.mxu0 0.0
  %1469 = vmatprep.subr.mxu0 0.0
  %1470 = vmatpush1.msra.mxu0 0.0
  %1471 = vmatprep.subr.mxu0 0.0
  %1472 = vmatpush1.msra.mxu0 0.0
  %1473 = vmatprep.subr.mxu0 0.0
  %1474 = vmatpush1.msra.mxu0 0.0
  %1475 = vmatprep.subr.mxu0 0.0
  %1476 = vmatpush1.msra.mxu0 0.0
  %1477 = vmatprep.subr.mxu0 0.0
  %1478 = vmatpush1.msra.mxu0 0.0
  %1479 = vmatprep.subr.mxu0 0.0
  %1480 = vmatpush1.msra.mxu0 0.0
  %1481 = vmatprep.subr.mxu0 0.0
  %1482 = vmatpush1.msra.mxu0 0.0
  %1483 = vmatprep.subr.mxu0 0.0
  %1484 = vmatpush1.msra.mxu0 0.0
  %1485 = vmatprep.subr.mxu0 0.0
  %1486 = vmatpush1.msra.mxu0 0.0
  %1487 = vmatprep.mubr.f32.mxu0 0.0
  %1488 = vmatmul.mubr.f32.gmra.mrb[0].mxu0 %v1418
  %v1489 = vpop.f32.mrb[0].mxu0
  %v1490 = vadd.f32 %v943, %v1489
  %v1491 = vpop.f32.mrb[0].mxu0
  %v1492 = vadd.f32 %v945, %v1491
  %1493 = vmatprep.mubr.f32.mxu0 0.0
  %1494 = vmatmul.mubr.f32.gmra.mrb[0].mxu0 %v1421
  %v1495 = vpop.f32.mrb[0].mxu0
  %v1496 = vadd.f32 %v949, %v1495
  %v1497 = vpop.f32.mrb[0].mxu0
  %v1498 = vadd.f32 %v951, %v1497
  %1499 = vdwg.mxu0
  %1500 = vmatprep.subr.mxu0 %v1379
  %1501 = vmatpush1.msra.mxu0 %v1378
  %1502 = vmatprep.subr.mxu0 %v1383
  %1503 = vmatpush1.msra.mxu0 %v1382
  %1504 = vmatprep.subr.mxu0 %v1387
  %1505 = vmatpush1.msra.mxu0 %v1386
  %1506 = vmatprep.subr.mxu0 %v1391
  %1507 = vmatpush1.msra.mxu0 %v1390
  %1508 = vmatprep.subr.mxu0 %v1395
  %1509 = vmatpush1.msra.mxu0 %v1394
  %1510 = vmatprep.subr.mxu0 %v1399
  %1511 = vmatpush1.msra.mxu0 %v1398
  %1512 = vmatprep.subr.mxu0 %v1403
  %1513 = vmatpush1.msra.mxu0 %v1402
  %1514 = vmatprep.subr.mxu0 %v1407
  %1515 = vmatpush1.msra.mxu0 %v1406
  %1516 = vmatprep.subr.mxu0 %v1411
  %1517 = vmatpush1.msra.mxu0 %v1410
  %1518 = vmatprep.subr.mxu0 %v1415
  %1519 = vmatpush1.msra.mxu0 %v1414
  %1520 = vmatprep.subr.mxu0 0.0
  %1521 = vmatpush1.msra.mxu0 0.0
  %1522 = vmatprep.subr.mxu0 0.0
  %1523 = vmatpush1.msra.mxu0 0.0
  %1524 = vmatprep.subr.mxu0 0.0
  %1525 = vmatpush1.msra.mxu0 0.0
  %1526 = vmatprep.subr.mxu0 0.0
  %1527 = vmatpush1.msra.mxu0 0.0
  %1528 = vmatprep.subr.mxu0 0.0
  %1529 = vmatpush1.msra.mxu0 0.0
  %1530 = vmatprep.subr.mxu0 0.0
  %1531 = vmatpush1.msra.mxu0 0.0
  %1532 = vmatprep.subr.mxu0 0.0
  %1533 = vmatpush1.msra.mxu0 0.0
  %1534 = vmatprep.subr.mxu0 0.0
  %1535 = vmatpush1.msra.mxu0 0.0
  %1536 = vmatprep.subr.mxu0 0.0
  %1537 = vmatpush1.msra.mxu0 0.0
  %1538 = vmatprep.subr.mxu0 0.0
  %1539 = vmatpush1.msra.mxu0 0.0
  %1540 = vmatprep.subr.mxu0 0.0
  %1541 = vmatpush1.msra.mxu0 0.0
  %1542 = vmatprep.subr.mxu0 0.0
  %1543 = vmatpush1.msra.mxu0 0.0
  %1544 = vmatprep.subr.mxu0 0.0
  %1545 = vmatpush1.msra.mxu0 0.0
  %1546 = vmatprep.subr.mxu0 0.0
  %1547 = vmatpush1.msra.mxu0 0.0
  %1548 = vmatprep.subr.mxu0 0.0
  %1549 = vmatpush1.msra.mxu0 0.0
  %1550 = vmatprep.subr.mxu0 0.0
  %1551 = vmatpush1.msra.mxu0 0.0
  %1552 = vmatprep.subr.mxu0 0.0
  %1553 = vmatpush1.msra.mxu0 0.0
  %1554 = vmatprep.subr.mxu0 0.0
  %1555 = vmatpush1.msra.mxu0 0.0
  %1556 = vmatprep.subr.mxu0 0.0
  %1557 = vmatpush1.msra.mxu0 0.0
  %1558 = vmatprep.subr.mxu0 0.0
  %1559 = vmatpush1.msra.mxu0 0.0
  %1560 = vmatprep.subr.mxu0 0.0
  %1561 = vmatpush1.msra.mxu0 0.0
  %1562 = vmatprep.subr.mxu0 0.0
  %1563 = vmatpush1.msra.mxu0 0.0
  %1564 = vmatprep.mubr.f32.mxu0 0.0
  %1565 = vmatmul.mubr.f32.gmra.mrb[0].mxu0 %v1418
  %v1566 = vpop.f32.mrb[0].mxu0
  %v1567 = vadd.f32 %v1044, %v1566
  %v1568 = vpop.f32.mrb[0].mxu0
  %v1569 = vadd.f32 %v1046, %v1568
  %1570 = vmatprep.mubr.f32.mxu0 0.0
  %1571 = vmatmul.mubr.f32.gmra.mrb[0].mxu0 %v1421
  %v1572 = vpop.f32.mrb[0].mxu0
  %v1573 = vadd.f32 %v1050, %v1572
  %v1574 = vpop.f32.mrb[0].mxu0
  %v1575 = vadd.f32 %v1052, %v1574
  %1576 = vdwg.mxu0
  %v1577 = vtanh.pop %v1490
  %v1578 = vtanh.pop %v1492
  %v1579 = vtanh.pop %v1567
  %v1580 = vtanh.pop %v1569
  %v1581 = vtanh.pop %v1496
  %v1582 = vtanh.pop %v1498
  %v1583 = vtanh.pop %v1573
  %v1584 = vtanh.pop %v1575
  %v1585 = vsub.f32 1.0, %v1087
  %v1586 = vsub.f32 1.0, %v1089
  %v1587 = vsub.f32 1.0, %v1091
  %v1588 = vsub.f32 1.0, %v1093
  %v1589 = vsub.f32 1.0, %v1095
  %v1590 = vsub.f32 1.0, %v1097
  %v1591 = vsub.f32 1.0, %v1099
  %v1592 = vsub.f32 1.0, %v1101
  %v1593 = vmul.f32 %v1585, %v20
  %v1594 = vmul.f32 %v1586, %v21
  %v1595 = vmul.f32 %v1587, %v22
  %v1596 = vmul.f32 %v1588, %v23
  %v1597 = vmul.f32 %v1589, %v24
  %v1598 = vmul.f32 %v1590, %v25
  %v1599 = vmul.f32 %v1591, %v26
  %v1600 = vmul.f32 %v1592, %v27
  %v1601 = vmul.f32 %v1087, %v1577
  %v1602 = vmul.f32 %v1089, %v1578
  %v1603 = vmul.f32 %v1091, %v1579
  %v1604 = vmul.f32 %v1093, %v1580
  %v1605 = vmul.f32 %v1095, %v1581
  %v1606 = vmul.f32 %v1097, %v1582
  %v1607 = vmul.f32 %v1099, %v1583
  %v1608 = vmul.f32 %v1101, %v1584
  %v1609 = vadd.f32 %v1593, %v1601
  %v1610 = vadd.f32 %v1594, %v1602
  %v1611 = vadd.f32 %v1595, %v1603
  %v1612 = vadd.f32 %v1596, %v1604
  %v1613 = vadd.f32 %v1597, %v1605
  %v1614 = vadd.f32 %v1598, %v1606
  %v1615 = vadd.f32 %v1599, %v1607
  %v1616 = vadd.f32 %v1600, %v1608
  %1617 = vst [vmem:[%s5] sm:$0xff] %v1609
  %1618 = vst [vmem:[%s5 + $0x8] sm:$0xff] %v1610
  %1619 = vst [vmem:[%s5 + $0x10] sm:$0xff] %v1611
  %1620 = vst [vmem:[%s5 + $0x18] sm:$0xff] %v1612
  %1621 = vst [vmem:[%s5 + $0x20] sm:$0xff] %v1613
  %1622 = vst [vmem:[%s5 + $0x28] sm:$0xff] %v1614
  %1623 = vst [vmem:[%s5 + $0x30] sm:$0xff] %v1615
  %1624 = vst [vmem:[%s5 + $0x38] sm:$0xff] %v1616
  // Predicated region
  $region22: #{sep_conv_gru3d_forward.5} parent=0 // pred_check
    _
  $region23: #{sep_conv_gru3d_forward.5} parent=0 // pred_check_branch
    %1626 = sbr.rel (0) target = $region25
  $region24: #{sep_conv_gru3d_forward.5} parent=0 // pred_region
    _
  $region25: #{sep_conv_gru3d_forward.5} parent=0 // pred_fallthru
    _
  // Predicated region
  $region26: #{sep_conv_gru3d_forward.5} parent=0 // pred_check
    _
  $region27: #{sep_conv_gru3d_forward.5} parent=0 // pred_check_branch
    %1628 = sbr.rel (0) target = $region29
  $region28: #{sep_conv_gru3d_forward.5} parent=0 // pred_region
    _
  $region29: #{sep_conv_gru3d_forward.5} parent=0 // pred_fallthru
    _

</llo_original>
